<compile_context>
chip_gen: v7x
topology: tpu7x:2x2x1
jax: 0.10.0
libtpu: 0.0.40
codegen_flags: <defaults>
</compile_context>

<pallas_src>
import numpy as np

import jax
import jax.numpy as jnp
from jax.experimental import pallas as pl
from jax.experimental.pallas import tpu as pltpu


# ----------------------------------------------------------------------------
# Fused kernel: rows = batch samples, lanes = (pool-corner | spatial | channel)
# ----------------------------------------------------------------------------
def _fused_net_kernel(x_ref, w1_ref, w2_ref, wf1_ref, wf2_ref, b_ref,
                      o_ref, p1_ref, ft_ref):
    f32, bf16 = jnp.float32, jnp.bfloat16

    w1 = w1_ref[...]      # (256, 1024)  bf16 conv1: 2 pooled rows x 4 corners
    w2 = w2_ref[...]      # (1024, 1024) bf16 conv2: 2 pooled rows x 4 corners
    wf1 = wf1_ref[...]    # (512, 128)   bf16 fc1 (NCHW flatten folded in)
    wf2 = wf2_ref[...]    # (128, 128)   bf16 fc2
    b = b_ref[...]        # (4, 128)     f32  packed biases
    b1, b2, bf1, bf2 = b[0:1], b[1:2], b[2:3], b[3:4]

    def pool4(a):         # (bt, 512) -> (bt, 128): max over the 2x2 pool corners
        return jnp.maximum(jnp.maximum(a[:, 0:128], a[:, 128:256]),
                           jnp.maximum(a[:, 256:384], a[:, 384:512]))

    # conv1 (1->10, 5x5) + 2x2 max-pool + ReLU: 6 matmuls, each K=256 aligned
    # slice of the re-laid-out image producing two pooled output rows (g=0,1).
    for j in range(6):
        sl = x_ref[:, pl.ds(256 * j, 256)]                       # (bt, 256) bf16
        acc = jnp.dot(sl, w1, preferred_element_type=f32)        # (bt, 1024) f32
        for g in range(2):                                       # pooled row 2j+g
            row = jnp.maximum(pool4(acc[:, 512 * g: 512 * g + 512]) + b1, 0.0)
            p1_ref[:, pl.ds(128 * (2 * j + g), 128)] = row.astype(bf16)

    # conv2 (10->20, 5x5) + 2x2 max-pool + ReLU: 2 matmuls (K=1024, N=1024).
    # TODO(synk): Dropout2d / F.dropout are identity here (eval-mode inference).
    for j2 in range(2):
        sl2 = p1_ref[:, pl.ds(512 * j2, 1024)]                   # (bt, 1024) bf16
        acc2 = jnp.dot(sl2, w2, preferred_element_type=f32)      # (bt, 1024) f32
        for g in range(2):                                       # pooled row 2j2+g
            row = jnp.maximum(pool4(acc2[:, 512 * g: 512 * g + 512]) + b2, 0.0)
            ft_ref[:, pl.ds(128 * (2 * j2 + g), 128)] = row.astype(bf16)

    # fc1 + ReLU, fc2 (PyTorch view(-1,320) NCHW order folded into wf1).
    y1 = jnp.maximum(
        jnp.dot(ft_ref[...], wf1, preferred_element_type=f32) + bf1, 0.0)
    o_ref[...] = jnp.dot(y1.astype(bf16), wf2, preferred_element_type=f32) + bf2


# ----------------------------------------------------------------------------
# One-time weight baking (layout transforms folded into the parameters)
# ----------------------------------------------------------------------------
def prepare_params(params):
    w1 = np.asarray(params["conv1_w"], np.float32)   # (10, 1, 5, 5)
    b1 = np.asarray(params["conv1_b"], np.float32)   # (10,)
    w2 = np.asarray(params["conv2_w"], np.float32)   # (20, 10, 5, 5)
    b2 = np.asarray(params["conv2_b"], np.float32)   # (20,)
    wf1 = np.asarray(params["fc1_w"], np.float32)    # (50, 320)
    bf1 = np.asarray(params["fc1_b"], np.float32)    # (50,)
    wf2 = np.asarray(params["fc2_w"], np.float32)    # (10, 50)
    bf2 = np.asarray(params["fc2_b"], np.float32)    # (10,)

    # conv1 block-Toeplitz, two pooled output rows (g) per matmul:
    #   input lane  = (2g + pi + di)*28 + (2*oj + pj + dj)     (image rows 4j..4j+7)
    #   output lane = 512*g + (2*pi + pj)*128 + oj*10 + co
    W1m = np.zeros((256, 1024), np.float32)
    for g in range(2):
        for pi in range(2):
            for pj in range(2):
                for oj in range(12):
                    cb = 512 * g + (2 * pi + pj) * 128 + oj * 10
                    for di in range(5):
                        for dj in range(5):
                            r = (2 * g + pi + di) * 28 + (2 * oj + pj + dj)
                            W1m[r, cb:cb + 10] = w1[:, 0, di, dj]

    # conv2 block-Toeplitz, two pooled output rows (g) per matmul:
    #   input lane  = (2g + pi + di)*128 + (2*oj2 + pj + dj)*10 + c1
    #   output lane = 512*g + (2*pi + pj)*128 + oj2*20 + c2
    W2m = np.zeros((1024, 1024), np.float32)
    for g in range(2):
        for pi in range(2):
            for pj in range(2):
                for oj2 in range(4):
                    cb = 512 * g + (2 * pi + pj) * 128 + oj2 * 20
                    for c1 in range(10):
                        for di in range(5):
                            for dj in range(5):
                                r = ((2 * g + pi + di) * 128
                                     + (2 * oj2 + pj + dj) * 10 + c1)
                                W2m[r, cb:cb + 20] = w2[:, c1, di, dj]

    # fc1: our feature lane = oi2*128 + oj2*20 + c2 ;
    #      PyTorch view(-1, 320) NCHW flat index = c2*16 + oi2*4 + oj2
    Wf1p = np.zeros((512, 128), np.float32)
    for oi2 in range(4):
        for oj2 in range(4):
            for c2 in range(20):
                Wf1p[oi2 * 128 + oj2 * 20 + c2, :50] = wf1[:, c2 * 16 + oi2 * 4 + oj2]

    Wf2p = np.zeros((128, 128), np.float32)
    Wf2p[:50, :10] = wf2.T

    biases = np.zeros((4, 128), np.float32)
    biases[0, :120] = np.tile(b1, 12)     # conv1 bias, lane = oj*10 + co
    biases[1, :80] = np.tile(b2, 4)       # conv2 bias, lane = oj2*20 + c2
    biases[2, :50] = bf1
    biases[3, :10] = bf2

    return {
        "w1": jnp.asarray(W1m, jnp.bfloat16),
        "w2": jnp.asarray(W2m, jnp.bfloat16),
        "wf1": jnp.asarray(Wf1p, jnp.bfloat16),
        "wf2": jnp.asarray(Wf2p, jnp.bfloat16),
        "bias": jnp.asarray(biases, jnp.float32),
    }


# ----------------------------------------------------------------------------
# Forward pass wrapper (single pallas_call, grid over batch tiles)
# ----------------------------------------------------------------------------
def _round_up(v, m):
    return (v + m - 1) // m * m


def _batch_tile():
    # v6e/v7x MXU is 256 wide -> 256-row tiles fill the array and halve the
    # per-grid-step overhead; v5e MXU is 4x128^2 so 128 is already native M.
    try:
        kind = jax.devices()[0].device_kind.lower()
        if "v5 lite" in kind or "v5e" in kind or "v5lite" in kind:
            return 128
    except Exception:
        pass
    return 256


def net_forward(prepared, x_nchw):
    n = x_nchw.shape[0]
    assert x_nchw.shape[1:] == (1, 28, 28)

    # Re-lay out each image as 6 lane-aligned 256-lane blocks (bf16): block j
    # holds image rows 4j..4j+7 (8*28 = 224 real lanes, zero-padded to 256), so
    # every conv1 operand slice in the kernel is a free 128-aligned view.
    x_img = x_nchw.reshape(n, 28, 28).astype(jnp.bfloat16)
    blocks = []
    for j in range(6):
        blk = x_img[:, 4 * j: 4 * j + 8, :].reshape(n, 224)
        blocks.append(jnp.pad(blk, ((0, 0), (0, 32))))
    x2d = jnp.concatenate(blocks, axis=1)                      # (n, 1536) bf16

    bt = min(_batch_tile(), _round_up(n, 16))   # 16 = bf16 sublane tile
    n_pad = _round_up(n, bt)
    if n_pad != n:
        x2d = jnp.pad(x2d, ((0, n_pad - n), (0, 0)))

    flops = 2 * (6 * 256 * 1024 + 2 * 1024 * 1024 + 512 * 128 + 128 * 128) * n_pad
    bytes_accessed = (n_pad * (1536 * 2 + 128 * 4)
                      + 2 * (256 * 1024 + 1024 * 1024 + 512 * 128 + 128 * 128)
                      + 4 * 128 * 4)

    out = pl.pallas_call(
        _fused_net_kernel,
        out_shape=jax.ShapeDtypeStruct((n_pad, 128), jnp.float32),
        grid=(n_pad // bt,),
        in_specs=[
            pl.BlockSpec((bt, 1536), lambda i: (i, 0)),        # images (per tile)
            pl.BlockSpec((256, 1024), lambda i: (0, 0)),       # conv1 W (resident)
            pl.BlockSpec((1024, 1024), lambda i: (0, 0)),      # conv2 W (resident)
            pl.BlockSpec((512, 128), lambda i: (0, 0)),        # fc1 W (resident)
            pl.BlockSpec((128, 128), lambda i: (0, 0)),        # fc2 W (resident)
            pl.BlockSpec((4, 128), lambda i: (0, 0)),          # packed biases
        ],
        out_specs=pl.BlockSpec((bt, 128), lambda i: (i, 0)),   # lane-dense logits
        scratch_shapes=[
            pltpu.VMEM((bt, 12 * 128), jnp.bfloat16),          # pooled conv1 acts
            pltpu.VMEM((bt, 4 * 128), jnp.bfloat16),           # pooled conv2 acts
        ],
        compiler_params=pltpu.CompilerParams(
            dimension_semantics=("parallel",),
            vmem_limit_bytes=32 * 1024 * 1024,
        ),
        cost_estimate=pl.CostEstimate(
            flops=flops, transcendentals=0, bytes_accessed=bytes_accessed),
    )(x2d, prepared["w1"], prepared["w2"], prepared["wf1"], prepared["wf2"],
      prepared["bias"])

    return out[:n, :10]


# ----------------------------------------------------------------------------
# PyTorch-style parameter init (matches nn.Conv2d / nn.Linear default ranges)
# ----------------------------------------------------------------------------
def init_params(key):
    def uniform(k, shape, fan_in):
        bound = 1.0 / jnp.sqrt(jnp.float32(fan_in))
        return jax.random.uniform(k, shape, jnp.float32, -bound, bound)

    ks = jax.random.split(key, 8)
    return {
        "conv1_w": uniform(ks[0], (10, 1, 5, 5), 1 * 5 * 5),
        "conv1_b": uniform(ks[1], (10,), 1 * 5 * 5),
        "conv2_w": uniform(ks[2], (20, 10, 5, 5), 10 * 5 * 5),
        "conv2_b": uniform(ks[3], (20,), 10 * 5 * 5),
        "fc1_w": uniform(ks[4], (50, 320), 320),
        "fc1_b": uniform(ks[5], (50,), 320),
        "fc2_w": uniform(ks[6], (10, 50), 50),
        "fc2_b": uniform(ks[7], (10,), 50),
    }


if __name__ == "__main__":
    key = jax.random.PRNGKey(0)
    k_param, k_x = jax.random.split(key)
    params = init_params(k_param)
    prepared = prepare_params(params)

    # MNIST-shaped input (28x28 is required for the view(-1, 320) to hold).
    x = jax.random.normal(k_x, (2, 1, 28, 28), dtype=jnp.float32)

    fwd = jax.jit(net_forward)
    out = jax.block_until_ready(fwd(prepared, x))
    assert out.shape == (2, 10) and out.dtype == jnp.float32
    assert bool(jnp.all(jnp.isfinite(out)))
    print("KERNEL_OK")
</pallas_src>

<mosaic_0001>
module attributes {stable_mosaic.version = 11 : i64} {
  func.func @_fused_net_kernel(%arg0: i32, %arg1: memref<16x1536xbf16, #tpu.memory_space<vmem>>, %arg2: memref<256x1024xbf16, #tpu.memory_space<vmem>>, %arg3: memref<1024x1024xbf16, #tpu.memory_space<vmem>>, %arg4: memref<512x128xbf16, #tpu.memory_space<vmem>>, %arg5: memref<128x128xbf16, #tpu.memory_space<vmem>>, %arg6: memref<4x128xf32, #tpu.memory_space<vmem>>, %arg7: memref<16x128xf32, #tpu.memory_space<vmem>>, %arg8: memref<16x1536xbf16, #tpu.memory_space<vmem>>, %arg9: memref<16x512xbf16, #tpu.memory_space<vmem>>) attributes {dimension_semantics = [#tpu.dimension_semantics<parallel>], iteration_bounds = array<i64: 1>, scalar_prefetch = 0 : i64, scratch_operands = 2 : i64, tpu.core_type = #tpu.core_type<tc>, window_params = [{transform_indices = @transform_0, window_bounds = array<i64: 16, 1536>}, {pipeline_mode = #tpu.pipeline_mode<synchronous>, transform_indices = @transform_1, window_bounds = array<i64: 256, 1024>}, {pipeline_mode = #tpu.pipeline_mode<synchronous>, transform_indices = @transform_2, window_bounds = array<i64: 1024, 1024>}, {pipeline_mode = #tpu.pipeline_mode<synchronous>, transform_indices = @transform_3, window_bounds = array<i64: 512, 128>}, {pipeline_mode = #tpu.pipeline_mode<synchronous>, transform_indices = @transform_4, window_bounds = array<i64: 128, 128>}, {pipeline_mode = #tpu.pipeline_mode<synchronous>, transform_indices = @transform_5, window_bounds = array<i64: 4, 128>}, {transform_indices = @transform_6, window_bounds = array<i64: 16, 128>}]} {
    %c0 = arith.constant 0 : index
    %c0_0 = arith.constant 0 : index
    %0 = vector.load %arg2[%c0, %c0_0] : memref<256x1024xbf16, #tpu.memory_space<vmem>>, vector<256x1024xbf16>
    %c0_1 = arith.constant 0 : index
    %c0_2 = arith.constant 0 : index
    %1 = vector.load %arg3[%c0_1, %c0_2] : memref<1024x1024xbf16, #tpu.memory_space<vmem>>, vector<1024x1024xbf16>
    %c0_3 = arith.constant 0 : index
    %c0_4 = arith.constant 0 : index
    %2 = vector.load %arg4[%c0_3, %c0_4] : memref<512x128xbf16, #tpu.memory_space<vmem>>, vector<512x128xbf16>
    %c0_5 = arith.constant 0 : index
    %c0_6 = arith.constant 0 : index
    %3 = vector.load %arg5[%c0_5, %c0_6] : memref<128x128xbf16, #tpu.memory_space<vmem>>, vector<128x128xbf16>
    %c0_7 = arith.constant 0 : index
    %c0_8 = arith.constant 0 : index
    %4 = vector.load %arg6[%c0_7, %c0_8] : memref<4x128xf32, #tpu.memory_space<vmem>>, vector<4x128xf32>
    %5 = vector.extract_strided_slice %4 {offsets = [0, 0], sizes = [1, 128], strides = [1, 1]} : vector<4x128xf32> to vector<1x128xf32>
    %6 = vector.extract_strided_slice %4 {offsets = [1, 0], sizes = [1, 128], strides = [1, 1]} : vector<4x128xf32> to vector<1x128xf32>
    %7 = vector.extract_strided_slice %4 {offsets = [2, 0], sizes = [1, 128], strides = [1, 1]} : vector<4x128xf32> to vector<1x128xf32>
    %8 = vector.extract_strided_slice %4 {offsets = [3, 0], sizes = [1, 128], strides = [1, 1]} : vector<4x128xf32> to vector<1x128xf32>
    %c0_9 = arith.constant 0 : index
    %c0_10 = arith.constant 0 : index
    %9 = vector.load %arg1[%c0_9, %c0_10] : memref<16x1536xbf16, #tpu.memory_space<vmem>>, vector<16x256xbf16>
    %cst = arith.constant dense<0.000000e+00> : vector<16x1024xf32>
    %10 = tpu.matmul %9, %0, %cst {dimension_numbers = #tpu.dot_dimension_numbers<[1], [0], [0], [1], [0, 0, 1, 1], [], []>} : vector<16x256xbf16>, vector<256x1024xbf16>, vector<16x1024xf32> -> vector<16x1024xf32>
    %11 = vector.extract_strided_slice %10 {offsets = [0, 0], sizes = [16, 512], strides = [1, 1]} : vector<16x1024xf32> to vector<16x512xf32>
    %12 = vector.extract_strided_slice %11 {offsets = [0, 0], sizes = [16, 128], strides = [1, 1]} : vector<16x512xf32> to vector<16x128xf32>
    %13 = vector.extract_strided_slice %11 {offsets = [0, 128], sizes = [16, 128], strides = [1, 1]} : vector<16x512xf32> to vector<16x128xf32>
    %14 = arith.maximumf %12, %13 : vector<16x128xf32>
    %15 = vector.extract_strided_slice %11 {offsets = [0, 256], sizes = [16, 128], strides = [1, 1]} : vector<16x512xf32> to vector<16x128xf32>
    %16 = vector.extract_strided_slice %11 {offsets = [0, 384], sizes = [16, 128], strides = [1, 1]} : vector<16x512xf32> to vector<16x128xf32>
    %17 = arith.maximumf %15, %16 : vector<16x128xf32>
    %18 = arith.maximumf %14, %17 : vector<16x128xf32>
    %19 = vector.broadcast %5 : vector<1x128xf32> to vector<16x128xf32>
    %20 = arith.addf %18, %19 : vector<16x128xf32>
    %cst_11 = arith.constant 0.000000e+00 : f32
    %21 = vector.broadcast %cst_11 : f32 to vector<16x128xf32>
    %22 = arith.maximumf %20, %21 : vector<16x128xf32>
    %23 = arith.truncf %22 : vector<16x128xf32> to vector<16x128xbf16>
    %c0_12 = arith.constant 0 : index
    %c0_13 = arith.constant 0 : index
    %24 = vector.load %arg8[%c0_12, %c0_13] : memref<16x1536xbf16, #tpu.memory_space<vmem>>, vector<16x128xbf16>
    tpu.vector_store %arg8[%c0_12, %c0_13], %23 {strides = array<i32>} : memref<16x1536xbf16, #tpu.memory_space<vmem>>, vector<16x128xbf16>,
    %25 = vector.extract_strided_slice %10 {offsets = [0, 512], sizes = [16, 512], strides = [1, 1]} : vector<16x1024xf32> to vector<16x512xf32>
    %26 = vector.extract_strided_slice %25 {offsets = [0, 0], sizes = [16, 128], strides = [1, 1]} : vector<16x512xf32> to vector<16x128xf32>
    %27 = vector.extract_strided_slice %25 {offsets = [0, 128], sizes = [16, 128], strides = [1, 1]} : vector<16x512xf32> to vector<16x128xf32>
    %28 = arith.maximumf %26, %27 : vector<16x128xf32>
    %29 = vector.extract_strided_slice %25 {offsets = [0, 256], sizes = [16, 128], strides = [1, 1]} : vector<16x512xf32> to vector<16x128xf32>
    %30 = vector.extract_strided_slice %25 {offsets = [0, 384], sizes = [16, 128], strides = [1, 1]} : vector<16x512xf32> to vector<16x128xf32>
    %31 = arith.maximumf %29, %30 : vector<16x128xf32>
    %32 = arith.maximumf %28, %31 : vector<16x128xf32>
    %33 = vector.broadcast %5 : vector<1x128xf32> to vector<16x128xf32>
    %34 = arith.addf %32, %33 : vector<16x128xf32>
    %cst_14 = arith.constant 0.000000e+00 : f32
    %35 = vector.broadcast %cst_14 : f32 to vector<16x128xf32>
    %36 = arith.maximumf %34, %35 : vector<16x128xf32>
    %37 = arith.truncf %36 : vector<16x128xf32> to vector<16x128xbf16>
    %c0_15 = arith.constant 0 : index
    %c128 = arith.constant 128 : index
    %38 = vector.load %arg8[%c0_15, %c128] : memref<16x1536xbf16, #tpu.memory_space<vmem>>, vector<16x128xbf16>
    tpu.vector_store %arg8[%c0_15, %c128], %37 {strides = array<i32>} : memref<16x1536xbf16, #tpu.memory_space<vmem>>, vector<16x128xbf16>,
    %c0_16 = arith.constant 0 : index
    %c256 = arith.constant 256 : index
    %39 = vector.load %arg1[%c0_16, %c256] : memref<16x1536xbf16, #tpu.memory_space<vmem>>, vector<16x256xbf16>
    %cst_17 = arith.constant dense<0.000000e+00> : vector<16x1024xf32>
    %40 = tpu.matmul %39, %0, %cst_17 {dimension_numbers = #tpu.dot_dimension_numbers<[1], [0], [0], [1], [0, 0, 1, 1], [], []>} : vector<16x256xbf16>, vector<256x1024xbf16>, vector<16x1024xf32> -> vector<16x1024xf32>
    %41 = vector.extract_strided_slice %40 {offsets = [0, 0], sizes = [16, 512], strides = [1, 1]} : vector<16x1024xf32> to vector<16x512xf32>
    %42 = vector.extract_strided_slice %41 {offsets = [0, 0], sizes = [16, 128], strides = [1, 1]} : vector<16x512xf32> to vector<16x128xf32>
    %43 = vector.extract_strided_slice %41 {offsets = [0, 128], sizes = [16, 128], strides = [1, 1]} : vector<16x512xf32> to vector<16x128xf32>
    %44 = arith.maximumf %42, %43 : vector<16x128xf32>
    %45 = vector.extract_strided_slice %41 {offsets = [0, 256], sizes = [16, 128], strides = [1, 1]} : vector<16x512xf32> to vector<16x128xf32>
    %46 = vector.extract_strided_slice %41 {offsets = [0, 384], sizes = [16, 128], strides = [1, 1]} : vector<16x512xf32> to vector<16x128xf32>
    %47 = arith.maximumf %45, %46 : vector<16x128xf32>
    %48 = arith.maximumf %44, %47 : vector<16x128xf32>
    %49 = vector.broadcast %5 : vector<1x128xf32> to vector<16x128xf32>
    %50 = arith.addf %48, %49 : vector<16x128xf32>
    %cst_18 = arith.constant 0.000000e+00 : f32
    %51 = vector.broadcast %cst_18 : f32 to vector<16x128xf32>
    %52 = arith.maximumf %50, %51 : vector<16x128xf32>
    %53 = arith.truncf %52 : vector<16x128xf32> to vector<16x128xbf16>
    %c0_19 = arith.constant 0 : index
    %c256_20 = arith.constant 256 : index
    %54 = vector.load %arg8[%c0_19, %c256_20] : memref<16x1536xbf16, #tpu.memory_space<vmem>>, vector<16x128xbf16>
    tpu.vector_store %arg8[%c0_19, %c256_20], %53 {strides = array<i32>} : memref<16x1536xbf16, #tpu.memory_space<vmem>>, vector<16x128xbf16>,
    %55 = vector.extract_strided_slice %40 {offsets = [0, 512], sizes = [16, 512], strides = [1, 1]} : vector<16x1024xf32> to vector<16x512xf32>
    %56 = vector.extract_strided_slice %55 {offsets = [0, 0], sizes = [16, 128], strides = [1, 1]} : vector<16x512xf32> to vector<16x128xf32>
    %57 = vector.extract_strided_slice %55 {offsets = [0, 128], sizes = [16, 128], strides = [1, 1]} : vector<16x512xf32> to vector<16x128xf32>
    %58 = arith.maximumf %56, %57 : vector<16x128xf32>
    %59 = vector.extract_strided_slice %55 {offsets = [0, 256], sizes = [16, 128], strides = [1, 1]} : vector<16x512xf32> to vector<16x128xf32>
    %60 = vector.extract_strided_slice %55 {offsets = [0, 384], sizes = [16, 128], strides = [1, 1]} : vector<16x512xf32> to vector<16x128xf32>
    %61 = arith.maximumf %59, %60 : vector<16x128xf32>
    %62 = arith.maximumf %58, %61 : vector<16x128xf32>
    %63 = vector.broadcast %5 : vector<1x128xf32> to vector<16x128xf32>
    %64 = arith.addf %62, %63 : vector<16x128xf32>
    %cst_21 = arith.constant 0.000000e+00 : f32
    %65 = vector.broadcast %cst_21 : f32 to vector<16x128xf32>
    %66 = arith.maximumf %64, %65 : vector<16x128xf32>
    %67 = arith.truncf %66 : vector<16x128xf32> to vector<16x128xbf16>
    %c0_22 = arith.constant 0 : index
    %c384 = arith.constant 384 : index
    %68 = vector.load %arg8[%c0_22, %c384] : memref<16x1536xbf16, #tpu.memory_space<vmem>>, vector<16x128xbf16>
    tpu.vector_store %arg8[%c0_22, %c384], %67 {strides = array<i32>} : memref<16x1536xbf16, #tpu.memory_space<vmem>>, vector<16x128xbf16>,
    %c0_23 = arith.constant 0 : index
    %c512 = arith.constant 512 : index
    %69 = vector.load %arg1[%c0_23, %c512] : memref<16x1536xbf16, #tpu.memory_space<vmem>>, vector<16x256xbf16>
    %cst_24 = arith.constant dense<0.000000e+00> : vector<16x1024xf32>
    %70 = tpu.matmul %69, %0, %cst_24 {dimension_numbers = #tpu.dot_dimension_numbers<[1], [0], [0], [1], [0, 0, 1, 1], [], []>} : vector<16x256xbf16>, vector<256x1024xbf16>, vector<16x1024xf32> -> vector<16x1024xf32>
    %71 = vector.extract_strided_slice %70 {offsets = [0, 0], sizes = [16, 512], strides = [1, 1]} : vector<16x1024xf32> to vector<16x512xf32>
    %72 = vector.extract_strided_slice %71 {offsets = [0, 0], sizes = [16, 128], strides = [1, 1]} : vector<16x512xf32> to vector<16x128xf32>
    %73 = vector.extract_strided_slice %71 {offsets = [0, 128], sizes = [16, 128], strides = [1, 1]} : vector<16x512xf32> to vector<16x128xf32>
    %74 = arith.maximumf %72, %73 : vector<16x128xf32>
    %75 = vector.extract_strided_slice %71 {offsets = [0, 256], sizes = [16, 128], strides = [1, 1]} : vector<16x512xf32> to vector<16x128xf32>
    %76 = vector.extract_strided_slice %71 {offsets = [0, 384], sizes = [16, 128], strides = [1, 1]} : vector<16x512xf32> to vector<16x128xf32>
    %77 = arith.maximumf %75, %76 : vector<16x128xf32>
    %78 = arith.maximumf %74, %77 : vector<16x128xf32>
    %79 = vector.broadcast %5 : vector<1x128xf32> to vector<16x128xf32>
    %80 = arith.addf %78, %79 : vector<16x128xf32>
    %cst_25 = arith.constant 0.000000e+00 : f32
    %81 = vector.broadcast %cst_25 : f32 to vector<16x128xf32>
    %82 = arith.maximumf %80, %81 : vector<16x128xf32>
    %83 = arith.truncf %82 : vector<16x128xf32> to vector<16x128xbf16>
    %c0_26 = arith.constant 0 : index
    %c512_27 = arith.constant 512 : index
    %84 = vector.load %arg8[%c0_26, %c512_27] : memref<16x1536xbf16, #tpu.memory_space<vmem>>, vector<16x128xbf16>
    tpu.vector_store %arg8[%c0_26, %c512_27], %83 {strides = array<i32>} : memref<16x1536xbf16, #tpu.memory_space<vmem>>, vector<16x128xbf16>,
    %85 = vector.extract_strided_slice %70 {offsets = [0, 512], sizes = [16, 512], strides = [1, 1]} : vector<16x1024xf32> to vector<16x512xf32>
    %86 = vector.extract_strided_slice %85 {offsets = [0, 0], sizes = [16, 128], strides = [1, 1]} : vector<16x512xf32> to vector<16x128xf32>
    %87 = vector.extract_strided_slice %85 {offsets = [0, 128], sizes = [16, 128], strides = [1, 1]} : vector<16x512xf32> to vector<16x128xf32>
    %88 = arith.maximumf %86, %87 : vector<16x128xf32>
    %89 = vector.extract_strided_slice %85 {offsets = [0, 256], sizes = [16, 128], strides = [1, 1]} : vector<16x512xf32> to vector<16x128xf32>
    %90 = vector.extract_strided_slice %85 {offsets = [0, 384], sizes = [16, 128], strides = [1, 1]} : vector<16x512xf32> to vector<16x128xf32>
    %91 = arith.maximumf %89, %90 : vector<16x128xf32>
    %92 = arith.maximumf %88, %91 : vector<16x128xf32>
    %93 = vector.broadcast %5 : vector<1x128xf32> to vector<16x128xf32>
    %94 = arith.addf %92, %93 : vector<16x128xf32>
    %cst_28 = arith.constant 0.000000e+00 : f32
    %95 = vector.broadcast %cst_28 : f32 to vector<16x128xf32>
    %96 = arith.maximumf %94, %95 : vector<16x128xf32>
    %97 = arith.truncf %96 : vector<16x128xf32> to vector<16x128xbf16>
    %c0_29 = arith.constant 0 : index
    %c640 = arith.constant 640 : index
    %98 = vector.load %arg8[%c0_29, %c640] : memref<16x1536xbf16, #tpu.memory_space<vmem>>, vector<16x128xbf16>
    tpu.vector_store %arg8[%c0_29, %c640], %97 {strides = array<i32>} : memref<16x1536xbf16, #tpu.memory_space<vmem>>, vector<16x128xbf16>,
    %c0_30 = arith.constant 0 : index
    %c768 = arith.constant 768 : index
    %99 = vector.load %arg1[%c0_30, %c768] : memref<16x1536xbf16, #tpu.memory_space<vmem>>, vector<16x256xbf16>
    %cst_31 = arith.constant dense<0.000000e+00> : vector<16x1024xf32>
    %100 = tpu.matmul %99, %0, %cst_31 {dimension_numbers = #tpu.dot_dimension_numbers<[1], [0], [0], [1], [0, 0, 1, 1], [], []>} : vector<16x256xbf16>, vector<256x1024xbf16>, vector<16x1024xf32> -> vector<16x1024xf32>
    %101 = vector.extract_strided_slice %100 {offsets = [0, 0], sizes = [16, 512], strides = [1, 1]} : vector<16x1024xf32> to vector<16x512xf32>
    %102 = vector.extract_strided_slice %101 {offsets = [0, 0], sizes = [16, 128], strides = [1, 1]} : vector<16x512xf32> to vector<16x128xf32>
    %103 = vector.extract_strided_slice %101 {offsets = [0, 128], sizes = [16, 128], strides = [1, 1]} : vector<16x512xf32> to vector<16x128xf32>
    %104 = arith.maximumf %102, %103 : vector<16x128xf32>
    %105 = vector.extract_strided_slice %101 {offsets = [0, 256], sizes = [16, 128], strides = [1, 1]} : vector<16x512xf32> to vector<16x128xf32>
    %106 = vector.extract_strided_slice %101 {offsets = [0, 384], sizes = [16, 128], strides = [1, 1]} : vector<16x512xf32> to vector<16x128xf32>
    %107 = arith.maximumf %105, %106 : vector<16x128xf32>
    %108 = arith.maximumf %104, %107 : vector<16x128xf32>
    %109 = vector.broadcast %5 : vector<1x128xf32> to vector<16x128xf32>
    %110 = arith.addf %108, %109 : vector<16x128xf32>
    %cst_32 = arith.constant 0.000000e+00 : f32
    %111 = vector.broadcast %cst_32 : f32 to vector<16x128xf32>
    %112 = arith.maximumf %110, %111 : vector<16x128xf32>
    %113 = arith.truncf %112 : vector<16x128xf32> to vector<16x128xbf16>
    %c0_33 = arith.constant 0 : index
    %c768_34 = arith.constant 768 : index
    %114 = vector.load %arg8[%c0_33, %c768_34] : memref<16x1536xbf16, #tpu.memory_space<vmem>>, vector<16x128xbf16>
    tpu.vector_store %arg8[%c0_33, %c768_34], %113 {strides = array<i32>} : memref<16x1536xbf16, #tpu.memory_space<vmem>>, vector<16x128xbf16>,
    %115 = vector.extract_strided_slice %100 {offsets = [0, 512], sizes = [16, 512], strides = [1, 1]} : vector<16x1024xf32> to vector<16x512xf32>
    %116 = vector.extract_strided_slice %115 {offsets = [0, 0], sizes = [16, 128], strides = [1, 1]} : vector<16x512xf32> to vector<16x128xf32>
    %117 = vector.extract_strided_slice %115 {offsets = [0, 128], sizes = [16, 128], strides = [1, 1]} : vector<16x512xf32> to vector<16x128xf32>
    %118 = arith.maximumf %116, %117 : vector<16x128xf32>
    %119 = vector.extract_strided_slice %115 {offsets = [0, 256], sizes = [16, 128], strides = [1, 1]} : vector<16x512xf32> to vector<16x128xf32>
    %120 = vector.extract_strided_slice %115 {offsets = [0, 384], sizes = [16, 128], strides = [1, 1]} : vector<16x512xf32> to vector<16x128xf32>
    %121 = arith.maximumf %119, %120 : vector<16x128xf32>
    %122 = arith.maximumf %118, %121 : vector<16x128xf32>
    %123 = vector.broadcast %5 : vector<1x128xf32> to vector<16x128xf32>
    %124 = arith.addf %122, %123 : vector<16x128xf32>
    %cst_35 = arith.constant 0.000000e+00 : f32
    %125 = vector.broadcast %cst_35 : f32 to vector<16x128xf32>
    %126 = arith.maximumf %124, %125 : vector<16x128xf32>
    %127 = arith.truncf %126 : vector<16x128xf32> to vector<16x128xbf16>
    %c0_36 = arith.constant 0 : index
    %c896 = arith.constant 896 : index
    %128 = vector.load %arg8[%c0_36, %c896] : memref<16x1536xbf16, #tpu.memory_space<vmem>>, vector<16x128xbf16>
    tpu.vector_store %arg8[%c0_36, %c896], %127 {strides = array<i32>} : memref<16x1536xbf16, #tpu.memory_space<vmem>>, vector<16x128xbf16>,
    %c0_37 = arith.constant 0 : index
    %c1024 = arith.constant 1024 : index
    %129 = vector.load %arg1[%c0_37, %c1024] : memref<16x1536xbf16, #tpu.memory_space<vmem>>, vector<16x256xbf16>
    %cst_38 = arith.constant dense<0.000000e+00> : vector<16x1024xf32>
    %130 = tpu.matmul %129, %0, %cst_38 {dimension_numbers = #tpu.dot_dimension_numbers<[1], [0], [0], [1], [0, 0, 1, 1], [], []>} : vector<16x256xbf16>, vector<256x1024xbf16>, vector<16x1024xf32> -> vector<16x1024xf32>
    %131 = vector.extract_strided_slice %130 {offsets = [0, 0], sizes = [16, 512], strides = [1, 1]} : vector<16x1024xf32> to vector<16x512xf32>
    %132 = vector.extract_strided_slice %131 {offsets = [0, 0], sizes = [16, 128], strides = [1, 1]} : vector<16x512xf32> to vector<16x128xf32>
    %133 = vector.extract_strided_slice %131 {offsets = [0, 128], sizes = [16, 128], strides = [1, 1]} : vector<16x512xf32> to vector<16x128xf32>
    %134 = arith.maximumf %132, %133 : vector<16x128xf32>
    %135 = vector.extract_strided_slice %131 {offsets = [0, 256], sizes = [16, 128], strides = [1, 1]} : vector<16x512xf32> to vector<16x128xf32>
    %136 = vector.extract_strided_slice %131 {offsets = [0, 384], sizes = [16, 128], strides = [1, 1]} : vector<16x512xf32> to vector<16x128xf32>
    %137 = arith.maximumf %135, %136 : vector<16x128xf32>
    %138 = arith.maximumf %134, %137 : vector<16x128xf32>
    %139 = vector.broadcast %5 : vector<1x128xf32> to vector<16x128xf32>
    %140 = arith.addf %138, %139 : vector<16x128xf32>
    %cst_39 = arith.constant 0.000000e+00 : f32
    %141 = vector.broadcast %cst_39 : f32 to vector<16x128xf32>
    %142 = arith.maximumf %140, %141 : vector<16x128xf32>
    %143 = arith.truncf %142 : vector<16x128xf32> to vector<16x128xbf16>
    %c0_40 = arith.constant 0 : index
    %c1024_41 = arith.constant 1024 : index
    %144 = vector.load %arg8[%c0_40, %c1024_41] : memref<16x1536xbf16, #tpu.memory_space<vmem>>, vector<16x128xbf16>
    tpu.vector_store %arg8[%c0_40, %c1024_41], %143 {strides = array<i32>} : memref<16x1536xbf16, #tpu.memory_space<vmem>>, vector<16x128xbf16>,
    %145 = vector.extract_strided_slice %130 {offsets = [0, 512], sizes = [16, 512], strides = [1, 1]} : vector<16x1024xf32> to vector<16x512xf32>
    %146 = vector.extract_strided_slice %145 {offsets = [0, 0], sizes = [16, 128], strides = [1, 1]} : vector<16x512xf32> to vector<16x128xf32>
    %147 = vector.extract_strided_slice %145 {offsets = [0, 128], sizes = [16, 128], strides = [1, 1]} : vector<16x512xf32> to vector<16x128xf32>
    %148 = arith.maximumf %146, %147 : vector<16x128xf32>
    %149 = vector.extract_strided_slice %145 {offsets = [0, 256], sizes = [16, 128], strides = [1, 1]} : vector<16x512xf32> to vector<16x128xf32>
    %150 = vector.extract_strided_slice %145 {offsets = [0, 384], sizes = [16, 128], strides = [1, 1]} : vector<16x512xf32> to vector<16x128xf32>
    %151 = arith.maximumf %149, %150 : vector<16x128xf32>
    %152 = arith.maximumf %148, %151 : vector<16x128xf32>
    %153 = vector.broadcast %5 : vector<1x128xf32> to vector<16x128xf32>
    %154 = arith.addf %152, %153 : vector<16x128xf32>
    %cst_42 = arith.constant 0.000000e+00 : f32
    %155 = vector.broadcast %cst_42 : f32 to vector<16x128xf32>
    %156 = arith.maximumf %154, %155 : vector<16x128xf32>
    %157 = arith.truncf %156 : vector<16x128xf32> to vector<16x128xbf16>
    %c0_43 = arith.constant 0 : index
    %c1152 = arith.constant 1152 : index
    %158 = vector.load %arg8[%c0_43, %c1152] : memref<16x1536xbf16, #tpu.memory_space<vmem>>, vector<16x128xbf16>
    tpu.vector_store %arg8[%c0_43, %c1152], %157 {strides = array<i32>} : memref<16x1536xbf16, #tpu.memory_space<vmem>>, vector<16x128xbf16>,
    %c0_44 = arith.constant 0 : index
    %c1280 = arith.constant 1280 : index
    %159 = vector.load %arg1[%c0_44, %c1280] : memref<16x1536xbf16, #tpu.memory_space<vmem>>, vector<16x256xbf16>
    %cst_45 = arith.constant dense<0.000000e+00> : vector<16x1024xf32>
    %160 = tpu.matmul %159, %0, %cst_45 {dimension_numbers = #tpu.dot_dimension_numbers<[1], [0], [0], [1], [0, 0, 1, 1], [], []>} : vector<16x256xbf16>, vector<256x1024xbf16>, vector<16x1024xf32> -> vector<16x1024xf32>
    %161 = vector.extract_strided_slice %160 {offsets = [0, 0], sizes = [16, 512], strides = [1, 1]} : vector<16x1024xf32> to vector<16x512xf32>
    %162 = vector.extract_strided_slice %161 {offsets = [0, 0], sizes = [16, 128], strides = [1, 1]} : vector<16x512xf32> to vector<16x128xf32>
    %163 = vector.extract_strided_slice %161 {offsets = [0, 128], sizes = [16, 128], strides = [1, 1]} : vector<16x512xf32> to vector<16x128xf32>
    %164 = arith.maximumf %162, %163 : vector<16x128xf32>
    %165 = vector.extract_strided_slice %161 {offsets = [0, 256], sizes = [16, 128], strides = [1, 1]} : vector<16x512xf32> to vector<16x128xf32>
    %166 = vector.extract_strided_slice %161 {offsets = [0, 384], sizes = [16, 128], strides = [1, 1]} : vector<16x512xf32> to vector<16x128xf32>
    %167 = arith.maximumf %165, %166 : vector<16x128xf32>
    %168 = arith.maximumf %164, %167 : vector<16x128xf32>
    %169 = vector.broadcast %5 : vector<1x128xf32> to vector<16x128xf32>
    %170 = arith.addf %168, %169 : vector<16x128xf32>
    %cst_46 = arith.constant 0.000000e+00 : f32
    %171 = vector.broadcast %cst_46 : f32 to vector<16x128xf32>
    %172 = arith.maximumf %170, %171 : vector<16x128xf32>
    %173 = arith.truncf %172 : vector<16x128xf32> to vector<16x128xbf16>
    %c0_47 = arith.constant 0 : index
    %c1280_48 = arith.constant 1280 : index
    %174 = vector.load %arg8[%c0_47, %c1280_48] : memref<16x1536xbf16, #tpu.memory_space<vmem>>, vector<16x128xbf16>
    tpu.vector_store %arg8[%c0_47, %c1280_48], %173 {strides = array<i32>} : memref<16x1536xbf16, #tpu.memory_space<vmem>>, vector<16x128xbf16>,
    %175 = vector.extract_strided_slice %160 {offsets = [0, 512], sizes = [16, 512], strides = [1, 1]} : vector<16x1024xf32> to vector<16x512xf32>
    %176 = vector.extract_strided_slice %175 {offsets = [0, 0], sizes = [16, 128], strides = [1, 1]} : vector<16x512xf32> to vector<16x128xf32>
    %177 = vector.extract_strided_slice %175 {offsets = [0, 128], sizes = [16, 128], strides = [1, 1]} : vector<16x512xf32> to vector<16x128xf32>
    %178 = arith.maximumf %176, %177 : vector<16x128xf32>
    %179 = vector.extract_strided_slice %175 {offsets = [0, 256], sizes = [16, 128], strides = [1, 1]} : vector<16x512xf32> to vector<16x128xf32>
    %180 = vector.extract_strided_slice %175 {offsets = [0, 384], sizes = [16, 128], strides = [1, 1]} : vector<16x512xf32> to vector<16x128xf32>
    %181 = arith.maximumf %179, %180 : vector<16x128xf32>
    %182 = arith.maximumf %178, %181 : vector<16x128xf32>
    %183 = vector.broadcast %5 : vector<1x128xf32> to vector<16x128xf32>
    %184 = arith.addf %182, %183 : vector<16x128xf32>
    %cst_49 = arith.constant 0.000000e+00 : f32
    %185 = vector.broadcast %cst_49 : f32 to vector<16x128xf32>
    %186 = arith.maximumf %184, %185 : vector<16x128xf32>
    %187 = arith.truncf %186 : vector<16x128xf32> to vector<16x128xbf16>
    %c0_50 = arith.constant 0 : index
    %c1408 = arith.constant 1408 : index
    %188 = vector.load %arg8[%c0_50, %c1408] : memref<16x1536xbf16, #tpu.memory_space<vmem>>, vector<16x128xbf16>
    tpu.vector_store %arg8[%c0_50, %c1408], %187 {strides = array<i32>} : memref<16x1536xbf16, #tpu.memory_space<vmem>>, vector<16x128xbf16>,
    %c0_51 = arith.constant 0 : index
    %c0_52 = arith.constant 0 : index
    %189 = vector.load %arg8[%c0_51, %c0_52] : memref<16x1536xbf16, #tpu.memory_space<vmem>>, vector<16x1024xbf16>
    %cst_53 = arith.constant dense<0.000000e+00> : vector<16x1024xf32>
    %190 = tpu.matmul %189, %1, %cst_53 {dimension_numbers = #tpu.dot_dimension_numbers<[1], [0], [0], [1], [0, 0, 1, 1], [], []>} : vector<16x1024xbf16>, vector<1024x1024xbf16>, vector<16x1024xf32> -> vector<16x1024xf32>
    %191 = vector.extract_strided_slice %190 {offsets = [0, 0], sizes = [16, 512], strides = [1, 1]} : vector<16x1024xf32> to vector<16x512xf32>
    %192 = vector.extract_strided_slice %191 {offsets = [0, 0], sizes = [16, 128], strides = [1, 1]} : vector<16x512xf32> to vector<16x128xf32>
    %193 = vector.extract_strided_slice %191 {offsets = [0, 128], sizes = [16, 128], strides = [1, 1]} : vector<16x512xf32> to vector<16x128xf32>
    %194 = arith.maximumf %192, %193 : vector<16x128xf32>
    %195 = vector.extract_strided_slice %191 {offsets = [0, 256], sizes = [16, 128], strides = [1, 1]} : vector<16x512xf32> to vector<16x128xf32>
    %196 = vector.extract_strided_slice %191 {offsets = [0, 384], sizes = [16, 128], strides = [1, 1]} : vector<16x512xf32> to vector<16x128xf32>
    %197 = arith.maximumf %195, %196 : vector<16x128xf32>
    %198 = arith.maximumf %194, %197 : vector<16x128xf32>
    %199 = vector.broadcast %6 : vector<1x128xf32> to vector<16x128xf32>
    %200 = arith.addf %198, %199 : vector<16x128xf32>
    %cst_54 = arith.constant 0.000000e+00 : f32
    %201 = vector.broadcast %cst_54 : f32 to vector<16x128xf32>
    %202 = arith.maximumf %200, %201 : vector<16x128xf32>
    %203 = arith.truncf %202 : vector<16x128xf32> to vector<16x128xbf16>
    %c0_55 = arith.constant 0 : index
    %c0_56 = arith.constant 0 : index
    %204 = vector.load %arg9[%c0_55, %c0_56] : memref<16x512xbf16, #tpu.memory_space<vmem>>, vector<16x128xbf16>
    tpu.vector_store %arg9[%c0_55, %c0_56], %203 {strides = array<i32>} : memref<16x512xbf16, #tpu.memory_space<vmem>>, vector<16x128xbf16>,
    %205 = vector.extract_strided_slice %190 {offsets = [0, 512], sizes = [16, 512], strides = [1, 1]} : vector<16x1024xf32> to vector<16x512xf32>
    %206 = vector.extract_strided_slice %205 {offsets = [0, 0], sizes = [16, 128], strides = [1, 1]} : vector<16x512xf32> to vector<16x128xf32>
    %207 = vector.extract_strided_slice %205 {offsets = [0, 128], sizes = [16, 128], strides = [1, 1]} : vector<16x512xf32> to vector<16x128xf32>
    %208 = arith.maximumf %206, %207 : vector<16x128xf32>
    %209 = vector.extract_strided_slice %205 {offsets = [0, 256], sizes = [16, 128], strides = [1, 1]} : vector<16x512xf32> to vector<16x128xf32>
    %210 = vector.extract_strided_slice %205 {offsets = [0, 384], sizes = [16, 128], strides = [1, 1]} : vector<16x512xf32> to vector<16x128xf32>
    %211 = arith.maximumf %209, %210 : vector<16x128xf32>
    %212 = arith.maximumf %208, %211 : vector<16x128xf32>
    %213 = vector.broadcast %6 : vector<1x128xf32> to vector<16x128xf32>
    %214 = arith.addf %212, %213 : vector<16x128xf32>
    %cst_57 = arith.constant 0.000000e+00 : f32
    %215 = vector.broadcast %cst_57 : f32 to vector<16x128xf32>
    %216 = arith.maximumf %214, %215 : vector<16x128xf32>
    %217 = arith.truncf %216 : vector<16x128xf32> to vector<16x128xbf16>
    %c0_58 = arith.constant 0 : index
    %c128_59 = arith.constant 128 : index
    %218 = vector.load %arg9[%c0_58, %c128_59] : memref<16x512xbf16, #tpu.memory_space<vmem>>, vector<16x128xbf16>
    tpu.vector_store %arg9[%c0_58, %c128_59], %217 {strides = array<i32>} : memref<16x512xbf16, #tpu.memory_space<vmem>>, vector<16x128xbf16>,
    %c0_60 = arith.constant 0 : index
    %c512_61 = arith.constant 512 : index
    %219 = vector.load %arg8[%c0_60, %c512_61] : memref<16x1536xbf16, #tpu.memory_space<vmem>>, vector<16x1024xbf16>
    %cst_62 = arith.constant dense<0.000000e+00> : vector<16x1024xf32>
    %220 = tpu.matmul %219, %1, %cst_62 {dimension_numbers = #tpu.dot_dimension_numbers<[1], [0], [0], [1], [0, 0, 1, 1], [], []>} : vector<16x1024xbf16>, vector<1024x1024xbf16>, vector<16x1024xf32> -> vector<16x1024xf32>
    %221 = vector.extract_strided_slice %220 {offsets = [0, 0], sizes = [16, 512], strides = [1, 1]} : vector<16x1024xf32> to vector<16x512xf32>
    %222 = vector.extract_strided_slice %221 {offsets = [0, 0], sizes = [16, 128], strides = [1, 1]} : vector<16x512xf32> to vector<16x128xf32>
    %223 = vector.extract_strided_slice %221 {offsets = [0, 128], sizes = [16, 128], strides = [1, 1]} : vector<16x512xf32> to vector<16x128xf32>
    %224 = arith.maximumf %222, %223 : vector<16x128xf32>
    %225 = vector.extract_strided_slice %221 {offsets = [0, 256], sizes = [16, 128], strides = [1, 1]} : vector<16x512xf32> to vector<16x128xf32>
    %226 = vector.extract_strided_slice %221 {offsets = [0, 384], sizes = [16, 128], strides = [1, 1]} : vector<16x512xf32> to vector<16x128xf32>
    %227 = arith.maximumf %225, %226 : vector<16x128xf32>
    %228 = arith.maximumf %224, %227 : vector<16x128xf32>
    %229 = vector.broadcast %6 : vector<1x128xf32> to vector<16x128xf32>
    %230 = arith.addf %228, %229 : vector<16x128xf32>
    %cst_63 = arith.constant 0.000000e+00 : f32
    %231 = vector.broadcast %cst_63 : f32 to vector<16x128xf32>
    %232 = arith.maximumf %230, %231 : vector<16x128xf32>
    %233 = arith.truncf %232 : vector<16x128xf32> to vector<16x128xbf16>
    %c0_64 = arith.constant 0 : index
    %c256_65 = arith.constant 256 : index
    %234 = vector.load %arg9[%c0_64, %c256_65] : memref<16x512xbf16, #tpu.memory_space<vmem>>, vector<16x128xbf16>
    tpu.vector_store %arg9[%c0_64, %c256_65], %233 {strides = array<i32>} : memref<16x512xbf16, #tpu.memory_space<vmem>>, vector<16x128xbf16>,
    %235 = vector.extract_strided_slice %220 {offsets = [0, 512], sizes = [16, 512], strides = [1, 1]} : vector<16x1024xf32> to vector<16x512xf32>
    %236 = vector.extract_strided_slice %235 {offsets = [0, 0], sizes = [16, 128], strides = [1, 1]} : vector<16x512xf32> to vector<16x128xf32>
    %237 = vector.extract_strided_slice %235 {offsets = [0, 128], sizes = [16, 128], strides = [1, 1]} : vector<16x512xf32> to vector<16x128xf32>
    %238 = arith.maximumf %236, %237 : vector<16x128xf32>
    %239 = vector.extract_strided_slice %235 {offsets = [0, 256], sizes = [16, 128], strides = [1, 1]} : vector<16x512xf32> to vector<16x128xf32>
    %240 = vector.extract_strided_slice %235 {offsets = [0, 384], sizes = [16, 128], strides = [1, 1]} : vector<16x512xf32> to vector<16x128xf32>
    %241 = arith.maximumf %239, %240 : vector<16x128xf32>
    %242 = arith.maximumf %238, %241 : vector<16x128xf32>
    %243 = vector.broadcast %6 : vector<1x128xf32> to vector<16x128xf32>
    %244 = arith.addf %242, %243 : vector<16x128xf32>
    %cst_66 = arith.constant 0.000000e+00 : f32
    %245 = vector.broadcast %cst_66 : f32 to vector<16x128xf32>
    %246 = arith.maximumf %244, %245 : vector<16x128xf32>
    %247 = arith.truncf %246 : vector<16x128xf32> to vector<16x128xbf16>
    %c0_67 = arith.constant 0 : index
    %c384_68 = arith.constant 384 : index
    %248 = vector.load %arg9[%c0_67, %c384_68] : memref<16x512xbf16, #tpu.memory_space<vmem>>, vector<16x128xbf16>
    tpu.vector_store %arg9[%c0_67, %c384_68], %247 {strides = array<i32>} : memref<16x512xbf16, #tpu.memory_space<vmem>>, vector<16x128xbf16>,
    %c0_69 = arith.constant 0 : index
    %c0_70 = arith.constant 0 : index
    %249 = vector.load %arg9[%c0_69, %c0_70] : memref<16x512xbf16, #tpu.memory_space<vmem>>, vector<16x512xbf16>
    %cst_71 = arith.constant dense<0.000000e+00> : vector<16x128xf32>
    %250 = tpu.matmul %249, %2, %cst_71 {dimension_numbers = #tpu.dot_dimension_numbers<[1], [0], [0], [1], [0, 0, 1, 1], [], []>} : vector<16x512xbf16>, vector<512x128xbf16>, vector<16x128xf32> -> vector<16x128xf32>
    %251 = vector.broadcast %7 : vector<1x128xf32> to vector<16x128xf32>
    %252 = arith.addf %250, %251 : vector<16x128xf32>
    %cst_72 = arith.constant 0.000000e+00 : f32
    %253 = vector.broadcast %cst_72 : f32 to vector<16x128xf32>
    %254 = arith.maximumf %252, %253 : vector<16x128xf32>
    %255 = arith.truncf %254 : vector<16x128xf32> to vector<16x128xbf16>
    %cst_73 = arith.constant dense<0.000000e+00> : vector<16x128xf32>
    %256 = tpu.matmul %255, %3, %cst_73 {dimension_numbers = #tpu.dot_dimension_numbers<[1], [0], [0], [1], [0, 0, 1, 1], [], []>} : vector<16x128xbf16>, vector<128x128xbf16>, vector<16x128xf32> -> vector<16x128xf32>
    %257 = vector.broadcast %8 : vector<1x128xf32> to vector<16x128xf32>
    %258 = arith.addf %256, %257 : vector<16x128xf32>
    %c0_74 = arith.constant 0 : index
    %c0_75 = arith.constant 0 : index
    %259 = vector.load %arg7[%c0_74, %c0_75] : memref<16x128xf32, #tpu.memory_space<vmem>>, vector<16x128xf32>
    tpu.vector_store %arg7[%c0_74, %c0_75], %258 {strides = array<i32>} : memref<16x128xf32, #tpu.memory_space<vmem>>, vector<16x128xf32>,
    return
  }
  func.func @transform_0(%arg0: i32) -> (i32, i32) {
    %c0_i32 = arith.constant 0 : i32
    %c0_i32_0 = arith.constant 0 : i32
    return %arg0, %c0_i32 : i32, i32
  }
  func.func @transform_1(%arg0: i32) -> (i32, i32) {
    %c0_i32 = arith.constant 0 : i32
    %c0_i32_0 = arith.constant 0 : i32
    %c0_i32_1 = arith.constant 0 : i32
    return %c0_i32, %c0_i32_0 : i32, i32
  }
  func.func @transform_2(%arg0: i32) -> (i32, i32) {
    %c0_i32 = arith.constant 0 : i32
    %c0_i32_0 = arith.constant 0 : i32
    %c0_i32_1 = arith.constant 0 : i32
    return %c0_i32, %c0_i32_0 : i32, i32
  }
  func.func @transform_3(%arg0: i32) -> (i32, i32) {
    %c0_i32 = arith.constant 0 : i32
    %c0_i32_0 = arith.constant 0 : i32
    %c0_i32_1 = arith.constant 0 : i32
    return %c0_i32, %c0_i32_0 : i32, i32
  }
  func.func @transform_4(%arg0: i32) -> (i32, i32) {
    %c0_i32 = arith.constant 0 : i32
    %c0_i32_0 = arith.constant 0 : i32
    %c0_i32_1 = arith.constant 0 : i32
    return %c0_i32, %c0_i32_0 : i32, i32
  }
  func.func @transform_5(%arg0: i32) -> (i32, i32) {
    %c0_i32 = arith.constant 0 : i32
    %c0_i32_0 = arith.constant 0 : i32
    %c0_i32_1 = arith.constant 0 : i32
    return %c0_i32, %c0_i32_0 : i32, i32
  }
  func.func @transform_6(%arg0: i32) -> (i32, i32) {
    %c0_i32 = arith.constant 0 : i32
    %c0_i32_0 = arith.constant 0 : i32
    return %arg0, %c0_i32 : i32, i32
  }
}

</mosaic_0001>

<llo_original>
// kernel: net_forward.1
$region0: #{net_forward.1}
  #allocation0 [shape = 'u32[]', space=smem, size = 0x4, offset = 0x4, fixed_abs, tag = 'smem constant byte address 0x4 - core index']
  #allocation1 [shape = 'u32[144,128]{1,0:T(1,128)}', space=vmem, size = 0x12000, scoped, tag = 'internal scratch']
  #allocation2 [shape = 'bf16[16,1536]{1,0:T(16,128)(2,1)}', space=vmem, size = 0xc000, scoped, tag = 'scratch operand']
  #allocation3 [shape = 'bf16[16,512]{1,0:T(16,128)(2,1)}', space=vmem, size = 0x4000, scoped, tag = 'scratch operand']
  %s0 = inlined_call_operand.vmem [shape: bf16[16,1536], index: 0, kind: input, shape index: {}]
  %s1 = inlined_call_operand.hbm [shape: bf16[256,1024], index: 1, kind: input, shape index: {}]
  %s2 = inlined_call_operand.hbm [shape: bf16[1024,1024], index: 2, kind: input, shape index: {}]
  %s3 = inlined_call_operand.hbm [shape: bf16[512,128], index: 3, kind: input, shape index: {}]
  %s4 = inlined_call_operand.hbm [shape: bf16[128,128], index: 4, kind: input, shape index: {}]
  %s5 = inlined_call_operand.hbm [shape: f32[4,128], index: 5, kind: input, shape index: {}]
  %s6 = inlined_call_operand.vmem [shape: f32[16,128], index: 6, kind: output, shape index: {}]
  %s7 = sld [smem:[#allocation0]]
  $region54: #{net_forward.1} parent=0
    _
  %s9 = ssub.s32 1, %s7
  %s10 = scalar_select 0, %s9, %s7
  $region1: #{net_forward.1} parent=0
    #allocation4 [shape = 'u8[524288]{0}', space=vmem, size = 0x80000, scoped, tag = 'input window, operand 1, single buffered']
    #allocation5 [shape = 's32[1]{0}', space=sflag, size = 0x4, scoped, tag = 'scoped memory for net_forward.1']
    #allocation6 [shape = 'u8[2097152]{0}', space=vmem, size = 0x200000, scoped, tag = 'input window, operand 2, single buffered']
    #allocation7 [shape = 's32[1]{0}', space=sflag, size = 0x4, scoped, tag = 'scoped memory for net_forward.1']
    #allocation8 [shape = 'u8[131072]{0}', space=vmem, size = 0x20000, scoped, tag = 'input window, operand 3, single buffered']
    #allocation9 [shape = 'u8[32768]{0}', space=vmem, size = 0x8000, scoped, tag = 'input window, operand 4, single buffered']
    #allocation10 [shape = 's32[1]{0}', space=sflag, size = 0x4, scoped, tag = 'scoped memory for net_forward.1']
    #allocation11 [shape = 'u8[2048]{0}', space=vmem, size = 0x800, scoped, tag = 'input window, operand 5, single buffered']
    %11 = vsyncpa [#allocation5], 0
    %12 = vsyncpa [#allocation7], 0
    %13 = vsyncpa [#allocation10], 0
    // Predicated region
    $region2: #{net_forward.1} parent=1 // pred_check
      _
    $region3: #{net_forward.1} parent=1 // pred_check_branch
      %15 = sbr.rel (0) target = $region5
    $region4: #{net_forward.1} parent=1 // pred_region
      _
    $region5: #{net_forward.1} parent=1 // pred_fallthru
      _
    // Predicated region
    $region6: #{net_forward.1} parent=1 // pred_check
      _
    $region7: #{net_forward.1} parent=1 // pred_check_branch
      %17 = sbr.rel (0) target = $region9
    $region8: #{net_forward.1} parent=1 // pred_region
      %s19 = ssub.s32 16384, 16384
      %20 = vsyncadd [#allocation5], %s19
      %s21 = sshll.u32 [#allocation4], 4
      %s22 = int_to_ptr.vmem [resolvable:$true] %s21
      %27 = dma.hbm_to_vmem [thread:$0]  %s1, 16384, %s22, [#allocation5], 512, 512, 32
    $region9: #{net_forward.1} parent=1 // pred_fallthru
      _
    // Predicated region
    $region10: #{net_forward.1} parent=1 // pred_check
      _
    $region11: #{net_forward.1} parent=1 // pred_check_branch
      %29 = sbr.rel (0) target = $region13
    $region12: #{net_forward.1} parent=1 // pred_region
      %s31 = ssub.s32 65536, 65536
      %32 = vsyncadd [#allocation7], %s31
      %s33 = sshll.u32 [#allocation6], 4
      %s34 = int_to_ptr.vmem [resolvable:$true] %s33
      %39 = dma.hbm_to_vmem [thread:$0]  %s2, 65536, %s34, [#allocation7], 512, 512, 32
    $region13: #{net_forward.1} parent=1 // pred_fallthru
      _
    // Predicated region
    $region14: #{net_forward.1} parent=1 // pred_check
      _
    $region15: #{net_forward.1} parent=1 // pred_check_branch
      %41 = sbr.rel (0) target = $region17
    $region16: #{net_forward.1} parent=1 // pred_region
      %s43 = ssub.s32 4096, 4096
      %44 = vsyncadd [#allocation7], %s43
      %s45 = sshll.u32 [#allocation8], 4
      %s46 = int_to_ptr.vmem [resolvable:$true] %s45
      %51 = dma.hbm_to_vmem [thread:$0]  %s3, 4096, %s46, [#allocation7], 64, 64, 4
    $region17: #{net_forward.1} parent=1 // pred_fallthru
      _
    // Predicated region
    $region18: #{net_forward.1} parent=1 // pred_check
      _
    $region19: #{net_forward.1} parent=1 // pred_check_branch
      %53 = sbr.rel (0) target = $region21
    $region20: #{net_forward.1} parent=1 // pred_region
      %s55 = ssub.s32 1024, 1024
      %56 = vsyncadd [#allocation10], %s55
      %s57 = sshll.u32 [#allocation9], 4
      %s58 = int_to_ptr.vmem [resolvable:$true] %s57
      %63 = dma.hbm_to_vmem [thread:$0]  %s4, 1024, %s58, [#allocation10], 64, 64, 4
    $region21: #{net_forward.1} parent=1 // pred_fallthru
      _
    // Predicated region
    $region22: #{net_forward.1} parent=1 // pred_check
      _
    $region23: #{net_forward.1} parent=1 // pred_check_branch
      %65 = sbr.rel (0) target = $region25
    $region24: #{net_forward.1} parent=1 // pred_region
      %s67 = ssub.s32 64, 64
      %68 = vsyncadd [#allocation10], %s67
      %s70 = sshll.u32 [#allocation11], 4
      %s71 = int_to_ptr.vmem [resolvable:$true] %s70
      %73 = dma.hbm_to_vmem [thread:$0]  %s5, 64, %s71, [#allocation10]
    $region25: #{net_forward.1} parent=1 // pred_fallthru
      _
    // Predicated region
    $region26: #{net_forward.1} parent=1 // pred_check
      _
    $region27: #{net_forward.1} parent=1 // pred_check_branch
      %75 = sbr.rel (0) target = $region29
    $region28: #{net_forward.1} parent=1 // pred_region
      %76 = dma.done [#allocation5], 16384
    $region29: #{net_forward.1} parent=1 // pred_fallthru
      _
    // Predicated region
    $region30: #{net_forward.1} parent=1 // pred_check
      _
    $region31: #{net_forward.1} parent=1 // pred_check_branch
      %78 = sbr.rel (0) target = $region33
    $region32: #{net_forward.1} parent=1 // pred_region
      %79 = dma.done [#allocation7], 65536
    $region33: #{net_forward.1} parent=1 // pred_fallthru
      _
    // Predicated region
    $region34: #{net_forward.1} parent=1 // pred_check
      _
    $region35: #{net_forward.1} parent=1 // pred_check_branch
      %81 = sbr.rel (0) target = $region37
    $region36: #{net_forward.1} parent=1 // pred_region
      %82 = dma.done [#allocation7], 4096
    $region37: #{net_forward.1} parent=1 // pred_fallthru
      _
    // Predicated region
    $region38: #{net_forward.1} parent=1 // pred_check
      _
    $region39: #{net_forward.1} parent=1 // pred_check_branch
      %84 = sbr.rel (0) target = $region41
    $region40: #{net_forward.1} parent=1 // pred_region
      %85 = dma.done [#allocation10], 1024
    $region41: #{net_forward.1} parent=1 // pred_fallthru
      _
    // Predicated region
    $region42: #{net_forward.1} parent=1 // pred_check
      _
    $region43: #{net_forward.1} parent=1 // pred_check_branch
      %87 = sbr.rel (0) target = $region45
    $region44: #{net_forward.1} parent=1 // pred_region
      %88 = dma.done [#allocation10], 64
    $region45: #{net_forward.1} parent=1 // pred_fallthru
      _
    %v90 = vld [vmem:[#allocation4] sm:$0xff]
    %v91 = vld [vmem:[#allocation4 + $0x8] sm:$0xff]
    %v92 = vld [vmem:[#allocation4 + $0x10] sm:$0xff]
    %v93 = vld [vmem:[#allocation4 + $0x18] sm:$0xff]
    %v94 = vld [vmem:[#allocation4 + $0x20] sm:$0xff]
    %v95 = vld [vmem:[#allocation4 + $0x28] sm:$0xff]
    %v96 = vld [vmem:[#allocation4 + $0x30] sm:$0xff]
    %v97 = vld [vmem:[#allocation4 + $0x38] sm:$0xff]
    %v98 = vld [vmem:[#allocation4 + $0x40] sm:$0xff]
    %v99 = vld [vmem:[#allocation4 + $0x48] sm:$0xff]
    %v100 = vld [vmem:[#allocation4 + $0x50] sm:$0xff]
    %v101 = vld [vmem:[#allocation4 + $0x58] sm:$0xff]
    %v102 = vld [vmem:[#allocation4 + $0x60] sm:$0xff]
    %v103 = vld [vmem:[#allocation4 + $0x68] sm:$0xff]
    %v104 = vld [vmem:[#allocation4 + $0x70] sm:$0xff]
    %v105 = vld [vmem:[#allocation4 + $0x78] sm:$0xff]
    %v106 = vld [vmem:[#allocation4 + $0x80] sm:$0xff]
    %v107 = vld [vmem:[#allocation4 + $0x88] sm:$0xff]
    %v108 = vld [vmem:[#allocation4 + $0x90] sm:$0xff]
    %v109 = vld [vmem:[#allocation4 + $0x98] sm:$0xff]
    %v110 = vld [vmem:[#allocation4 + $0xa0] sm:$0xff]
    %v111 = vld [vmem:[#allocation4 + $0xa8] sm:$0xff]
    %v112 = vld [vmem:[#allocation4 + $0xb0] sm:$0xff]
    %v113 = vld [vmem:[#allocation4 + $0xb8] sm:$0xff]
    %v114 = vld [vmem:[#allocation4 + $0xc0] sm:$0xff]
    %v115 = vld [vmem:[#allocation4 + $0xc8] sm:$0xff]
    %v116 = vld [vmem:[#allocation4 + $0xd0] sm:$0xff]
    %v117 = vld [vmem:[#allocation4 + $0xd8] sm:$0xff]
    %v118 = vld [vmem:[#allocation4 + $0xe0] sm:$0xff]
    %v119 = vld [vmem:[#allocation4 + $0xe8] sm:$0xff]
    %v120 = vld [vmem:[#allocation4 + $0xf0] sm:$0xff]
    %v121 = vld [vmem:[#allocation4 + $0xf8] sm:$0xff]
    %v122 = vld [vmem:[#allocation4 + $0x100] sm:$0xff]
    %v123 = vld [vmem:[#allocation4 + $0x108] sm:$0xff]
    %v124 = vld [vmem:[#allocation4 + $0x110] sm:$0xff]
    %v125 = vld [vmem:[#allocation4 + $0x118] sm:$0xff]
    %v126 = vld [vmem:[#allocation4 + $0x120] sm:$0xff]
    %v127 = vld [vmem:[#allocation4 + $0x128] sm:$0xff]
    %v128 = vld [vmem:[#allocation4 + $0x130] sm:$0xff]
    %v129 = vld [vmem:[#allocation4 + $0x138] sm:$0xff]
    %v130 = vld [vmem:[#allocation4 + $0x140] sm:$0xff]
    %v131 = vld [vmem:[#allocation4 + $0x148] sm:$0xff]
    %v132 = vld [vmem:[#allocation4 + $0x150] sm:$0xff]
    %v133 = vld [vmem:[#allocation4 + $0x158] sm:$0xff]
    %v134 = vld [vmem:[#allocation4 + $0x160] sm:$0xff]
    %v135 = vld [vmem:[#allocation4 + $0x168] sm:$0xff]
    %v136 = vld [vmem:[#allocation4 + $0x170] sm:$0xff]
    %v137 = vld [vmem:[#allocation4 + $0x178] sm:$0xff]
    %v138 = vld [vmem:[#allocation4 + $0x180] sm:$0xff]
    %v139 = vld [vmem:[#allocation4 + $0x188] sm:$0xff]
    %v140 = vld [vmem:[#allocation4 + $0x190] sm:$0xff]
    %v141 = vld [vmem:[#allocation4 + $0x198] sm:$0xff]
    %v142 = vld [vmem:[#allocation4 + $0x1a0] sm:$0xff]
    %v143 = vld [vmem:[#allocation4 + $0x1a8] sm:$0xff]
    %v144 = vld [vmem:[#allocation4 + $0x1b0] sm:$0xff]
    %v145 = vld [vmem:[#allocation4 + $0x1b8] sm:$0xff]
    %v146 = vld [vmem:[#allocation4 + $0x1c0] sm:$0xff]
    %v147 = vld [vmem:[#allocation4 + $0x1c8] sm:$0xff]
    %v148 = vld [vmem:[#allocation4 + $0x1d0] sm:$0xff]
    %v149 = vld [vmem:[#allocation4 + $0x1d8] sm:$0xff]
    %v150 = vld [vmem:[#allocation4 + $0x1e0] sm:$0xff]
    %v151 = vld [vmem:[#allocation4 + $0x1e8] sm:$0xff]
    %v152 = vld [vmem:[#allocation4 + $0x1f0] sm:$0xff]
    %v153 = vld [vmem:[#allocation4 + $0x1f8] sm:$0xff]
    %v154 = vld [vmem:[#allocation4 + $0x200] sm:$0xff]
    %v155 = vld [vmem:[#allocation4 + $0x208] sm:$0xff]
    %v156 = vld [vmem:[#allocation4 + $0x210] sm:$0xff]
    %v157 = vld [vmem:[#allocation4 + $0x218] sm:$0xff]
    %v158 = vld [vmem:[#allocation4 + $0x220] sm:$0xff]
    %v159 = vld [vmem:[#allocation4 + $0x228] sm:$0xff]
    %v160 = vld [vmem:[#allocation4 + $0x230] sm:$0xff]
    %v161 = vld [vmem:[#allocation4 + $0x238] sm:$0xff]
    %v162 = vld [vmem:[#allocation4 + $0x240] sm:$0xff]
    %v163 = vld [vmem:[#allocation4 + $0x248] sm:$0xff]
    %v164 = vld [vmem:[#allocation4 + $0x250] sm:$0xff]
    %v165 = vld [vmem:[#allocation4 + $0x258] sm:$0xff]
    %v166 = vld [vmem:[#allocation4 + $0x260] sm:$0xff]
    %v167 = vld [vmem:[#allocation4 + $0x268] sm:$0xff]
    %v168 = vld [vmem:[#allocation4 + $0x270] sm:$0xff]
    %v169 = vld [vmem:[#allocation4 + $0x278] sm:$0xff]
    %v170 = vld [vmem:[#allocation4 + $0x280] sm:$0xff]
    %v171 = vld [vmem:[#allocation4 + $0x288] sm:$0xff]
    %v172 = vld [vmem:[#allocation4 + $0x290] sm:$0xff]
    %v173 = vld [vmem:[#allocation4 + $0x298] sm:$0xff]
    %v174 = vld [vmem:[#allocation4 + $0x2a0] sm:$0xff]
    %v175 = vld [vmem:[#allocation4 + $0x2a8] sm:$0xff]
    %v176 = vld [vmem:[#allocation4 + $0x2b0] sm:$0xff]
    %v177 = vld [vmem:[#allocation4 + $0x2b8] sm:$0xff]
    %v178 = vld [vmem:[#allocation4 + $0x2c0] sm:$0xff]
    %v179 = vld [vmem:[#allocation4 + $0x2c8] sm:$0xff]
    %v180 = vld [vmem:[#allocation4 + $0x2d0] sm:$0xff]
    %v181 = vld [vmem:[#allocation4 + $0x2d8] sm:$0xff]
    %v182 = vld [vmem:[#allocation4 + $0x2e0] sm:$0xff]
    %v183 = vld [vmem:[#allocation4 + $0x2e8] sm:$0xff]
    %v184 = vld [vmem:[#allocation4 + $0x2f0] sm:$0xff]
    %v185 = vld [vmem:[#allocation4 + $0x2f8] sm:$0xff]
    %v186 = vld [vmem:[#allocation4 + $0x300] sm:$0xff]
    %v187 = vld [vmem:[#allocation4 + $0x308] sm:$0xff]
    %v188 = vld [vmem:[#allocation4 + $0x310] sm:$0xff]
    %v189 = vld [vmem:[#allocation4 + $0x318] sm:$0xff]
    %v190 = vld [vmem:[#allocation4 + $0x320] sm:$0xff]
    %v191 = vld [vmem:[#allocation4 + $0x328] sm:$0xff]
    %v192 = vld [vmem:[#allocation4 + $0x330] sm:$0xff]
    %v193 = vld [vmem:[#allocation4 + $0x338] sm:$0xff]
    %v194 = vld [vmem:[#allocation4 + $0x340] sm:$0xff]
    %v195 = vld [vmem:[#allocation4 + $0x348] sm:$0xff]
    %v196 = vld [vmem:[#allocation4 + $0x350] sm:$0xff]
    %v197 = vld [vmem:[#allocation4 + $0x358] sm:$0xff]
    %v198 = vld [vmem:[#allocation4 + $0x360] sm:$0xff]
    %v199 = vld [vmem:[#allocation4 + $0x368] sm:$0xff]
    %v200 = vld [vmem:[#allocation4 + $0x370] sm:$0xff]
    %v201 = vld [vmem:[#allocation4 + $0x378] sm:$0xff]
    %v202 = vld [vmem:[#allocation4 + $0x380] sm:$0xff]
    %v203 = vld [vmem:[#allocation4 + $0x388] sm:$0xff]
    %v204 = vld [vmem:[#allocation4 + $0x390] sm:$0xff]
    %v205 = vld [vmem:[#allocation4 + $0x398] sm:$0xff]
    %v206 = vld [vmem:[#allocation4 + $0x3a0] sm:$0xff]
    %v207 = vld [vmem:[#allocation4 + $0x3a8] sm:$0xff]
    %v208 = vld [vmem:[#allocation4 + $0x3b0] sm:$0xff]
    %v209 = vld [vmem:[#allocation4 + $0x3b8] sm:$0xff]
    %v210 = vld [vmem:[#allocation4 + $0x3c0] sm:$0xff]
    %v211 = vld [vmem:[#allocation4 + $0x3c8] sm:$0xff]
    %v212 = vld [vmem:[#allocation4 + $0x3d0] sm:$0xff]
    %v213 = vld [vmem:[#allocation4 + $0x3d8] sm:$0xff]
    %v214 = vld [vmem:[#allocation4 + $0x3e0] sm:$0xff]
    %v215 = vld [vmem:[#allocation4 + $0x3e8] sm:$0xff]
    %v216 = vld [vmem:[#allocation4 + $0x3f0] sm:$0xff]
    %v217 = vld [vmem:[#allocation4 + $0x3f8] sm:$0xff]
    %v218 = vld [vmem:[#allocation6] sm:$0xff]
    %v219 = vld [vmem:[#allocation6 + $0x8] sm:$0xff]
    %v220 = vld [vmem:[#allocation6 + $0x10] sm:$0xff]
    %v221 = vld [vmem:[#allocation6 + $0x18] sm:$0xff]
    %v222 = vld [vmem:[#allocation6 + $0x20] sm:$0xff]
    %v223 = vld [vmem:[#allocation6 + $0x28] sm:$0xff]
    %v224 = vld [vmem:[#allocation6 + $0x30] sm:$0xff]
    %v225 = vld [vmem:[#allocation6 + $0x38] sm:$0xff]
    %v226 = vld [vmem:[#allocation6 + $0x40] sm:$0xff]
    %v227 = vld [vmem:[#allocation6 + $0x48] sm:$0xff]
    %v228 = vld [vmem:[#allocation6 + $0x50] sm:$0xff]
    %v229 = vld [vmem:[#allocation6 + $0x58] sm:$0xff]
    %v230 = vld [vmem:[#allocation6 + $0x60] sm:$0xff]
    %v231 = vld [vmem:[#allocation6 + $0x68] sm:$0xff]
    %v232 = vld [vmem:[#allocation6 + $0x70] sm:$0xff]
    %v233 = vld [vmem:[#allocation6 + $0x78] sm:$0xff]
    %v234 = vld [vmem:[#allocation6 + $0x80] sm:$0xff]
    %v235 = vld [vmem:[#allocation6 + $0x88] sm:$0xff]
    %v236 = vld [vmem:[#allocation6 + $0x90] sm:$0xff]
    %v237 = vld [vmem:[#allocation6 + $0x98] sm:$0xff]
    %v238 = vld [vmem:[#allocation6 + $0xa0] sm:$0xff]
    %v239 = vld [vmem:[#allocation6 + $0xa8] sm:$0xff]
    %v240 = vld [vmem:[#allocation6 + $0xb0] sm:$0xff]
    %v241 = vld [vmem:[#allocation6 + $0xb8] sm:$0xff]
    %v242 = vld [vmem:[#allocation6 + $0xc0] sm:$0xff]
    %v243 = vld [vmem:[#allocation6 + $0xc8] sm:$0xff]
    %v244 = vld [vmem:[#allocation6 + $0xd0] sm:$0xff]
    %v245 = vld [vmem:[#allocation6 + $0xd8] sm:$0xff]
    %v246 = vld [vmem:[#allocation6 + $0xe0] sm:$0xff]
    %v247 = vld [vmem:[#allocation6 + $0xe8] sm:$0xff]
    %v248 = vld [vmem:[#allocation6 + $0xf0] sm:$0xff]
    %v249 = vld [vmem:[#allocation6 + $0xf8] sm:$0xff]
    %v250 = vld [vmem:[#allocation6 + $0x100] sm:$0xff]
    %v251 = vld [vmem:[#allocation6 + $0x108] sm:$0xff]
    %v252 = vld [vmem:[#allocation6 + $0x110] sm:$0xff]
    %v253 = vld [vmem:[#allocation6 + $0x118] sm:$0xff]
    %v254 = vld [vmem:[#allocation6 + $0x120] sm:$0xff]
    %v255 = vld [vmem:[#allocation6 + $0x128] sm:$0xff]
    %v256 = vld [vmem:[#allocation6 + $0x130] sm:$0xff]
    %v257 = vld [vmem:[#allocation6 + $0x138] sm:$0xff]
    %v258 = vld [vmem:[#allocation6 + $0x140] sm:$0xff]
    %v259 = vld [vmem:[#allocation6 + $0x148] sm:$0xff]
    %v260 = vld [vmem:[#allocation6 + $0x150] sm:$0xff]
    %v261 = vld [vmem:[#allocation6 + $0x158] sm:$0xff]
    %v262 = vld [vmem:[#allocation6 + $0x160] sm:$0xff]
    %v263 = vld [vmem:[#allocation6 + $0x168] sm:$0xff]
    %v264 = vld [vmem:[#allocation6 + $0x170] sm:$0xff]
    %v265 = vld [vmem:[#allocation6 + $0x178] sm:$0xff]
    %v266 = vld [vmem:[#allocation6 + $0x180] sm:$0xff]
    %v267 = vld [vmem:[#allocation6 + $0x188] sm:$0xff]
    %v268 = vld [vmem:[#allocation6 + $0x190] sm:$0xff]
    %v269 = vld [vmem:[#allocation6 + $0x198] sm:$0xff]
    %v270 = vld [vmem:[#allocation6 + $0x1a0] sm:$0xff]
    %v271 = vld [vmem:[#allocation6 + $0x1a8] sm:$0xff]
    %v272 = vld [vmem:[#allocation6 + $0x1b0] sm:$0xff]
    %v273 = vld [vmem:[#allocation6 + $0x1b8] sm:$0xff]
    %v274 = vld [vmem:[#allocation6 + $0x1c0] sm:$0xff]
    %v275 = vld [vmem:[#allocation6 + $0x1c8] sm:$0xff]
    %v276 = vld [vmem:[#allocation6 + $0x1d0] sm:$0xff]
    %v277 = vld [vmem:[#allocation6 + $0x1d8] sm:$0xff]
    %v278 = vld [vmem:[#allocation6 + $0x1e0] sm:$0xff]
    %v279 = vld [vmem:[#allocation6 + $0x1e8] sm:$0xff]
    %v280 = vld [vmem:[#allocation6 + $0x1f0] sm:$0xff]
    %v281 = vld [vmem:[#allocation6 + $0x1f8] sm:$0xff]
    %v282 = vld [vmem:[#allocation6 + $0x200] sm:$0xff]
    %v283 = vld [vmem:[#allocation6 + $0x208] sm:$0xff]
    %v284 = vld [vmem:[#allocation6 + $0x210] sm:$0xff]
    %v285 = vld [vmem:[#allocation6 + $0x218] sm:$0xff]
    %v286 = vld [vmem:[#allocation6 + $0x220] sm:$0xff]
    %v287 = vld [vmem:[#allocation6 + $0x228] sm:$0xff]
    %v288 = vld [vmem:[#allocation6 + $0x230] sm:$0xff]
    %v289 = vld [vmem:[#allocation6 + $0x238] sm:$0xff]
    %v290 = vld [vmem:[#allocation6 + $0x240] sm:$0xff]
    %v291 = vld [vmem:[#allocation6 + $0x248] sm:$0xff]
    %v292 = vld [vmem:[#allocation6 + $0x250] sm:$0xff]
    %v293 = vld [vmem:[#allocation6 + $0x258] sm:$0xff]
    %v294 = vld [vmem:[#allocation6 + $0x260] sm:$0xff]
    %v295 = vld [vmem:[#allocation6 + $0x268] sm:$0xff]
    %v296 = vld [vmem:[#allocation6 + $0x270] sm:$0xff]
    %v297 = vld [vmem:[#allocation6 + $0x278] sm:$0xff]
    %v298 = vld [vmem:[#allocation6 + $0x280] sm:$0xff]
    %v299 = vld [vmem:[#allocation6 + $0x288] sm:$0xff]
    %v300 = vld [vmem:[#allocation6 + $0x290] sm:$0xff]
    %v301 = vld [vmem:[#allocation6 + $0x298] sm:$0xff]
    %v302 = vld [vmem:[#allocation6 + $0x2a0] sm:$0xff]
    %v303 = vld [vmem:[#allocation6 + $0x2a8] sm:$0xff]
    %v304 = vld [vmem:[#allocation6 + $0x2b0] sm:$0xff]
    %v305 = vld [vmem:[#allocation6 + $0x2b8] sm:$0xff]
    %v306 = vld [vmem:[#allocation6 + $0x2c0] sm:$0xff]
    %v307 = vld [vmem:[#allocation6 + $0x2c8] sm:$0xff]
    %v308 = vld [vmem:[#allocation6 + $0x2d0] sm:$0xff]
    %v309 = vld [vmem:[#allocation6 + $0x2d8] sm:$0xff]
    %v310 = vld [vmem:[#allocation6 + $0x2e0] sm:$0xff]
    %v311 = vld [vmem:[#allocation6 + $0x2e8] sm:$0xff]
    %v312 = vld [vmem:[#allocation6 + $0x2f0] sm:$0xff]
    %v313 = vld [vmem:[#allocation6 + $0x2f8] sm:$0xff]
    %v314 = vld [vmem:[#allocation6 + $0x300] sm:$0xff]
    %v315 = vld [vmem:[#allocation6 + $0x308] sm:$0xff]
    %v316 = vld [vmem:[#allocation6 + $0x310] sm:$0xff]
    %v317 = vld [vmem:[#allocation6 + $0x318] sm:$0xff]
    %v318 = vld [vmem:[#allocation6 + $0x320] sm:$0xff]
    %v319 = vld [vmem:[#allocation6 + $0x328] sm:$0xff]
    %v320 = vld [vmem:[#allocation6 + $0x330] sm:$0xff]
    %v321 = vld [vmem:[#allocation6 + $0x338] sm:$0xff]
    %v322 = vld [vmem:[#allocation6 + $0x340] sm:$0xff]
    %v323 = vld [vmem:[#allocation6 + $0x348] sm:$0xff]
    %v324 = vld [vmem:[#allocation6 + $0x350] sm:$0xff]
    %v325 = vld [vmem:[#allocation6 + $0x358] sm:$0xff]
    %v326 = vld [vmem:[#allocation6 + $0x360] sm:$0xff]
    %v327 = vld [vmem:[#allocation6 + $0x368] sm:$0xff]
    %v328 = vld [vmem:[#allocation6 + $0x370] sm:$0xff]
    %v329 = vld [vmem:[#allocation6 + $0x378] sm:$0xff]
    %v330 = vld [vmem:[#allocation6 + $0x380] sm:$0xff]
    %v331 = vld [vmem:[#allocation6 + $0x388] sm:$0xff]
    %v332 = vld [vmem:[#allocation6 + $0x390] sm:$0xff]
    %v333 = vld [vmem:[#allocation6 + $0x398] sm:$0xff]
    %v334 = vld [vmem:[#allocation6 + $0x3a0] sm:$0xff]
    %v335 = vld [vmem:[#allocation6 + $0x3a8] sm:$0xff]
    %v336 = vld [vmem:[#allocation6 + $0x3b0] sm:$0xff]
    %v337 = vld [vmem:[#allocation6 + $0x3b8] sm:$0xff]
    %v338 = vld [vmem:[#allocation6 + $0x3c0] sm:$0xff]
    %v339 = vld [vmem:[#allocation6 + $0x3c8] sm:$0xff]
    %v340 = vld [vmem:[#allocation6 + $0x3d0] sm:$0xff]
    %v341 = vld [vmem:[#allocation6 + $0x3d8] sm:$0xff]
    %v342 = vld [vmem:[#allocation6 + $0x3e0] sm:$0xff]
    %v343 = vld [vmem:[#allocation6 + $0x3e8] sm:$0xff]
    %v344 = vld [vmem:[#allocation6 + $0x3f0] sm:$0xff]
    %v345 = vld [vmem:[#allocation6 + $0x3f8] sm:$0xff]
    %v346 = vld [vmem:[#allocation6 + $0x400] sm:$0xff]
    %v347 = vld [vmem:[#allocation6 + $0x408] sm:$0xff]
    %v348 = vld [vmem:[#allocation6 + $0x410] sm:$0xff]
    %v349 = vld [vmem:[#allocation6 + $0x418] sm:$0xff]
    %v350 = vld [vmem:[#allocation6 + $0x420] sm:$0xff]
    %v351 = vld [vmem:[#allocation6 + $0x428] sm:$0xff]
    %v352 = vld [vmem:[#allocation6 + $0x430] sm:$0xff]
    %v353 = vld [vmem:[#allocation6 + $0x438] sm:$0xff]
    %v354 = vld [vmem:[#allocation6 + $0x440] sm:$0xff]
    %v355 = vld [vmem:[#allocation6 + $0x448] sm:$0xff]
    %v356 = vld [vmem:[#allocation6 + $0x450] sm:$0xff]
    %v357 = vld [vmem:[#allocation6 + $0x458] sm:$0xff]
    %v358 = vld [vmem:[#allocation6 + $0x460] sm:$0xff]
    %v359 = vld [vmem:[#allocation6 + $0x468] sm:$0xff]
    %v360 = vld [vmem:[#allocation6 + $0x470] sm:$0xff]
    %v361 = vld [vmem:[#allocation6 + $0x478] sm:$0xff]
    %v362 = vld [vmem:[#allocation6 + $0x480] sm:$0xff]
    %v363 = vld [vmem:[#allocation6 + $0x488] sm:$0xff]
    %v364 = vld [vmem:[#allocation6 + $0x490] sm:$0xff]
    %v365 = vld [vmem:[#allocation6 + $0x498] sm:$0xff]
    %v366 = vld [vmem:[#allocation6 + $0x4a0] sm:$0xff]
    %v367 = vld [vmem:[#allocation6 + $0x4a8] sm:$0xff]
    %v368 = vld [vmem:[#allocation6 + $0x4b0] sm:$0xff]
    %v369 = vld [vmem:[#allocation6 + $0x4b8] sm:$0xff]
    %v370 = vld [vmem:[#allocation6 + $0x4c0] sm:$0xff]
    %v371 = vld [vmem:[#allocation6 + $0x4c8] sm:$0xff]
    %v372 = vld [vmem:[#allocation6 + $0x4d0] sm:$0xff]
    %v373 = vld [vmem:[#allocation6 + $0x4d8] sm:$0xff]
    %v374 = vld [vmem:[#allocation6 + $0x4e0] sm:$0xff]
    %v375 = vld [vmem:[#allocation6 + $0x4e8] sm:$0xff]
    %v376 = vld [vmem:[#allocation6 + $0x4f0] sm:$0xff]
    %v377 = vld [vmem:[#allocation6 + $0x4f8] sm:$0xff]
    %v378 = vld [vmem:[#allocation6 + $0x500] sm:$0xff]
    %v379 = vld [vmem:[#allocation6 + $0x508] sm:$0xff]
    %v380 = vld [vmem:[#allocation6 + $0x510] sm:$0xff]
    %v381 = vld [vmem:[#allocation6 + $0x518] sm:$0xff]
    %v382 = vld [vmem:[#allocation6 + $0x520] sm:$0xff]
    %v383 = vld [vmem:[#allocation6 + $0x528] sm:$0xff]
    %v384 = vld [vmem:[#allocation6 + $0x530] sm:$0xff]
    %v385 = vld [vmem:[#allocation6 + $0x538] sm:$0xff]
    %v386 = vld [vmem:[#allocation6 + $0x540] sm:$0xff]
    %v387 = vld [vmem:[#allocation6 + $0x548] sm:$0xff]
    %v388 = vld [vmem:[#allocation6 + $0x550] sm:$0xff]
    %v389 = vld [vmem:[#allocation6 + $0x558] sm:$0xff]
    %v390 = vld [vmem:[#allocation6 + $0x560] sm:$0xff]
    %v391 = vld [vmem:[#allocation6 + $0x568] sm:$0xff]
    %v392 = vld [vmem:[#allocation6 + $0x570] sm:$0xff]
    %v393 = vld [vmem:[#allocation6 + $0x578] sm:$0xff]
    %v394 = vld [vmem:[#allocation6 + $0x580] sm:$0xff]
    %v395 = vld [vmem:[#allocation6 + $0x588] sm:$0xff]
    %v396 = vld [vmem:[#allocation6 + $0x590] sm:$0xff]
    %v397 = vld [vmem:[#allocation6 + $0x598] sm:$0xff]
    %v398 = vld [vmem:[#allocation6 + $0x5a0] sm:$0xff]
    %v399 = vld [vmem:[#allocation6 + $0x5a8] sm:$0xff]
    %v400 = vld [vmem:[#allocation6 + $0x5b0] sm:$0xff]
    %v401 = vld [vmem:[#allocation6 + $0x5b8] sm:$0xff]
    %v402 = vld [vmem:[#allocation6 + $0x5c0] sm:$0xff]
    %v403 = vld [vmem:[#allocation6 + $0x5c8] sm:$0xff]
    %v404 = vld [vmem:[#allocation6 + $0x5d0] sm:$0xff]
    %v405 = vld [vmem:[#allocation6 + $0x5d8] sm:$0xff]
    %v406 = vld [vmem:[#allocation6 + $0x5e0] sm:$0xff]
    %v407 = vld [vmem:[#allocation6 + $0x5e8] sm:$0xff]
    %v408 = vld [vmem:[#allocation6 + $0x5f0] sm:$0xff]
    %v409 = vld [vmem:[#allocation6 + $0x5f8] sm:$0xff]
    %v410 = vld [vmem:[#allocation6 + $0x600] sm:$0xff]
    %v411 = vld [vmem:[#allocation6 + $0x608] sm:$0xff]
    %v412 = vld [vmem:[#allocation6 + $0x610] sm:$0xff]
    %v413 = vld [vmem:[#allocation6 + $0x618] sm:$0xff]
    %v414 = vld [vmem:[#allocation6 + $0x620] sm:$0xff]
    %v415 = vld [vmem:[#allocation6 + $0x628] sm:$0xff]
    %v416 = vld [vmem:[#allocation6 + $0x630] sm:$0xff]
    %v417 = vld [vmem:[#allocation6 + $0x638] sm:$0xff]
    %v418 = vld [vmem:[#allocation6 + $0x640] sm:$0xff]
    %v419 = vld [vmem:[#allocation6 + $0x648] sm:$0xff]
    %v420 = vld [vmem:[#allocation6 + $0x650] sm:$0xff]
    %v421 = vld [vmem:[#allocation6 + $0x658] sm:$0xff]
    %v422 = vld [vmem:[#allocation6 + $0x660] sm:$0xff]
    %v423 = vld [vmem:[#allocation6 + $0x668] sm:$0xff]
    %v424 = vld [vmem:[#allocation6 + $0x670] sm:$0xff]
    %v425 = vld [vmem:[#allocation6 + $0x678] sm:$0xff]
    %v426 = vld [vmem:[#allocation6 + $0x680] sm:$0xff]
    %v427 = vld [vmem:[#allocation6 + $0x688] sm:$0xff]
    %v428 = vld [vmem:[#allocation6 + $0x690] sm:$0xff]
    %v429 = vld [vmem:[#allocation6 + $0x698] sm:$0xff]
    %v430 = vld [vmem:[#allocation6 + $0x6a0] sm:$0xff]
    %v431 = vld [vmem:[#allocation6 + $0x6a8] sm:$0xff]
    %v432 = vld [vmem:[#allocation6 + $0x6b0] sm:$0xff]
    %v433 = vld [vmem:[#allocation6 + $0x6b8] sm:$0xff]
    %v434 = vld [vmem:[#allocation6 + $0x6c0] sm:$0xff]
    %v435 = vld [vmem:[#allocation6 + $0x6c8] sm:$0xff]
    %v436 = vld [vmem:[#allocation6 + $0x6d0] sm:$0xff]
    %v437 = vld [vmem:[#allocation6 + $0x6d8] sm:$0xff]
    %v438 = vld [vmem:[#allocation6 + $0x6e0] sm:$0xff]
    %v439 = vld [vmem:[#allocation6 + $0x6e8] sm:$0xff]
    %v440 = vld [vmem:[#allocation6 + $0x6f0] sm:$0xff]
    %v441 = vld [vmem:[#allocation6 + $0x6f8] sm:$0xff]
    %v442 = vld [vmem:[#allocation6 + $0x700] sm:$0xff]
    %v443 = vld [vmem:[#allocation6 + $0x708] sm:$0xff]
    %v444 = vld [vmem:[#allocation6 + $0x710] sm:$0xff]
    %v445 = vld [vmem:[#allocation6 + $0x718] sm:$0xff]
    %v446 = vld [vmem:[#allocation6 + $0x720] sm:$0xff]
    %v447 = vld [vmem:[#allocation6 + $0x728] sm:$0xff]
    %v448 = vld [vmem:[#allocation6 + $0x730] sm:$0xff]
    %v449 = vld [vmem:[#allocation6 + $0x738] sm:$0xff]
    %v450 = vld [vmem:[#allocation6 + $0x740] sm:$0xff]
    %v451 = vld [vmem:[#allocation6 + $0x748] sm:$0xff]
    %v452 = vld [vmem:[#allocation6 + $0x750] sm:$0xff]
    %v453 = vld [vmem:[#allocation6 + $0x758] sm:$0xff]
    %v454 = vld [vmem:[#allocation6 + $0x760] sm:$0xff]
    %v455 = vld [vmem:[#allocation6 + $0x768] sm:$0xff]
    %v456 = vld [vmem:[#allocation6 + $0x770] sm:$0xff]
    %v457 = vld [vmem:[#allocation6 + $0x778] sm:$0xff]
    %v458 = vld [vmem:[#allocation6 + $0x780] sm:$0xff]
    %v459 = vld [vmem:[#allocation6 + $0x788] sm:$0xff]
    %v460 = vld [vmem:[#allocation6 + $0x790] sm:$0xff]
    %v461 = vld [vmem:[#allocation6 + $0x798] sm:$0xff]
    %v462 = vld [vmem:[#allocation6 + $0x7a0] sm:$0xff]
    %v463 = vld [vmem:[#allocation6 + $0x7a8] sm:$0xff]
    %v464 = vld [vmem:[#allocation6 + $0x7b0] sm:$0xff]
    %v465 = vld [vmem:[#allocation6 + $0x7b8] sm:$0xff]
    %v466 = vld [vmem:[#allocation6 + $0x7c0] sm:$0xff]
    %v467 = vld [vmem:[#allocation6 + $0x7c8] sm:$0xff]
    %v468 = vld [vmem:[#allocation6 + $0x7d0] sm:$0xff]
    %v469 = vld [vmem:[#allocation6 + $0x7d8] sm:$0xff]
    %v470 = vld [vmem:[#allocation6 + $0x7e0] sm:$0xff]
    %v471 = vld [vmem:[#allocation6 + $0x7e8] sm:$0xff]
    %v472 = vld [vmem:[#allocation6 + $0x7f0] sm:$0xff]
    %v473 = vld [vmem:[#allocation6 + $0x7f8] sm:$0xff]
    %v474 = vld [vmem:[#allocation6 + $0x800] sm:$0xff]
    %v475 = vld [vmem:[#allocation6 + $0x808] sm:$0xff]
    %v476 = vld [vmem:[#allocation6 + $0x810] sm:$0xff]
    %v477 = vld [vmem:[#allocation6 + $0x818] sm:$0xff]
    %v478 = vld [vmem:[#allocation6 + $0x820] sm:$0xff]
    %v479 = vld [vmem:[#allocation6 + $0x828] sm:$0xff]
    %v480 = vld [vmem:[#allocation6 + $0x830] sm:$0xff]
    %v481 = vld [vmem:[#allocation6 + $0x838] sm:$0xff]
    %v482 = vld [vmem:[#allocation6 + $0x840] sm:$0xff]
    %v483 = vld [vmem:[#allocation6 + $0x848] sm:$0xff]
    %v484 = vld [vmem:[#allocation6 + $0x850] sm:$0xff]
    %v485 = vld [vmem:[#allocation6 + $0x858] sm:$0xff]
    %v486 = vld [vmem:[#allocation6 + $0x860] sm:$0xff]
    %v487 = vld [vmem:[#allocation6 + $0x868] sm:$0xff]
    %v488 = vld [vmem:[#allocation6 + $0x870] sm:$0xff]
    %v489 = vld [vmem:[#allocation6 + $0x878] sm:$0xff]
    %v490 = vld [vmem:[#allocation6 + $0x880] sm:$0xff]
    %v491 = vld [vmem:[#allocation6 + $0x888] sm:$0xff]
    %v492 = vld [vmem:[#allocation6 + $0x890] sm:$0xff]
    %v493 = vld [vmem:[#allocation6 + $0x898] sm:$0xff]
    %v494 = vld [vmem:[#allocation6 + $0x8a0] sm:$0xff]
    %v495 = vld [vmem:[#allocation6 + $0x8a8] sm:$0xff]
    %v496 = vld [vmem:[#allocation6 + $0x8b0] sm:$0xff]
    %v497 = vld [vmem:[#allocation6 + $0x8b8] sm:$0xff]
    %v498 = vld [vmem:[#allocation6 + $0x8c0] sm:$0xff]
    %v499 = vld [vmem:[#allocation6 + $0x8c8] sm:$0xff]
    %v500 = vld [vmem:[#allocation6 + $0x8d0] sm:$0xff]
    %v501 = vld [vmem:[#allocation6 + $0x8d8] sm:$0xff]
    %v502 = vld [vmem:[#allocation6 + $0x8e0] sm:$0xff]
    %v503 = vld [vmem:[#allocation6 + $0x8e8] sm:$0xff]
    %v504 = vld [vmem:[#allocation6 + $0x8f0] sm:$0xff]
    %v505 = vld [vmem:[#allocation6 + $0x8f8] sm:$0xff]
    %v506 = vld [vmem:[#allocation6 + $0x900] sm:$0xff]
    %v507 = vld [vmem:[#allocation6 + $0x908] sm:$0xff]
    %v508 = vld [vmem:[#allocation6 + $0x910] sm:$0xff]
    %v509 = vld [vmem:[#allocation6 + $0x918] sm:$0xff]
    %v510 = vld [vmem:[#allocation6 + $0x920] sm:$0xff]
    %v511 = vld [vmem:[#allocation6 + $0x928] sm:$0xff]
    %v512 = vld [vmem:[#allocation6 + $0x930] sm:$0xff]
    %v513 = vld [vmem:[#allocation6 + $0x938] sm:$0xff]
    %v514 = vld [vmem:[#allocation6 + $0x940] sm:$0xff]
    %v515 = vld [vmem:[#allocation6 + $0x948] sm:$0xff]
    %v516 = vld [vmem:[#allocation6 + $0x950] sm:$0xff]
    %v517 = vld [vmem:[#allocation6 + $0x958] sm:$0xff]
    %v518 = vld [vmem:[#allocation6 + $0x960] sm:$0xff]
    %v519 = vld [vmem:[#allocation6 + $0x968] sm:$0xff]
    %v520 = vld [vmem:[#allocation6 + $0x970] sm:$0xff]
    %v521 = vld [vmem:[#allocation6 + $0x978] sm:$0xff]
    %v522 = vld [vmem:[#allocation6 + $0x980] sm:$0xff]
    %v523 = vld [vmem:[#allocation6 + $0x988] sm:$0xff]
    %v524 = vld [vmem:[#allocation6 + $0x990] sm:$0xff]
    %v525 = vld [vmem:[#allocation6 + $0x998] sm:$0xff]
    %v526 = vld [vmem:[#allocation6 + $0x9a0] sm:$0xff]
    %v527 = vld [vmem:[#allocation6 + $0x9a8] sm:$0xff]
    %v528 = vld [vmem:[#allocation6 + $0x9b0] sm:$0xff]
    %v529 = vld [vmem:[#allocation6 + $0x9b8] sm:$0xff]
    %v530 = vld [vmem:[#allocation6 + $0x9c0] sm:$0xff]
    %v531 = vld [vmem:[#allocation6 + $0x9c8] sm:$0xff]
    %v532 = vld [vmem:[#allocation6 + $0x9d0] sm:$0xff]
    %v533 = vld [vmem:[#allocation6 + $0x9d8] sm:$0xff]
    %v534 = vld [vmem:[#allocation6 + $0x9e0] sm:$0xff]
    %v535 = vld [vmem:[#allocation6 + $0x9e8] sm:$0xff]
    %v536 = vld [vmem:[#allocation6 + $0x9f0] sm:$0xff]
    %v537 = vld [vmem:[#allocation6 + $0x9f8] sm:$0xff]
    %v538 = vld [vmem:[#allocation6 + $0xa00] sm:$0xff]
    %v539 = vld [vmem:[#allocation6 + $0xa08] sm:$0xff]
    %v540 = vld [vmem:[#allocation6 + $0xa10] sm:$0xff]
    %v541 = vld [vmem:[#allocation6 + $0xa18] sm:$0xff]
    %v542 = vld [vmem:[#allocation6 + $0xa20] sm:$0xff]
    %v543 = vld [vmem:[#allocation6 + $0xa28] sm:$0xff]
    %v544 = vld [vmem:[#allocation6 + $0xa30] sm:$0xff]
    %v545 = vld [vmem:[#allocation6 + $0xa38] sm:$0xff]
    %v546 = vld [vmem:[#allocation6 + $0xa40] sm:$0xff]
    %v547 = vld [vmem:[#allocation6 + $0xa48] sm:$0xff]
    %v548 = vld [vmem:[#allocation6 + $0xa50] sm:$0xff]
    %v549 = vld [vmem:[#allocation6 + $0xa58] sm:$0xff]
    %v550 = vld [vmem:[#allocation6 + $0xa60] sm:$0xff]
    %v551 = vld [vmem:[#allocation6 + $0xa68] sm:$0xff]
    %v552 = vld [vmem:[#allocation6 + $0xa70] sm:$0xff]
    %v553 = vld [vmem:[#allocation6 + $0xa78] sm:$0xff]
    %v554 = vld [vmem:[#allocation6 + $0xa80] sm:$0xff]
    %v555 = vld [vmem:[#allocation6 + $0xa88] sm:$0xff]
    %v556 = vld [vmem:[#allocation6 + $0xa90] sm:$0xff]
    %v557 = vld [vmem:[#allocation6 + $0xa98] sm:$0xff]
    %v558 = vld [vmem:[#allocation6 + $0xaa0] sm:$0xff]
    %v559 = vld [vmem:[#allocation6 + $0xaa8] sm:$0xff]
    %v560 = vld [vmem:[#allocation6 + $0xab0] sm:$0xff]
    %v561 = vld [vmem:[#allocation6 + $0xab8] sm:$0xff]
    %v562 = vld [vmem:[#allocation6 + $0xac0] sm:$0xff]
    %v563 = vld [vmem:[#allocation6 + $0xac8] sm:$0xff]
    %v564 = vld [vmem:[#allocation6 + $0xad0] sm:$0xff]
    %v565 = vld [vmem:[#allocation6 + $0xad8] sm:$0xff]
    %v566 = vld [vmem:[#allocation6 + $0xae0] sm:$0xff]
    %v567 = vld [vmem:[#allocation6 + $0xae8] sm:$0xff]
    %v568 = vld [vmem:[#allocation6 + $0xaf0] sm:$0xff]
    %v569 = vld [vmem:[#allocation6 + $0xaf8] sm:$0xff]
    %v570 = vld [vmem:[#allocation6 + $0xb00] sm:$0xff]
    %v571 = vld [vmem:[#allocation6 + $0xb08] sm:$0xff]
    %v572 = vld [vmem:[#allocation6 + $0xb10] sm:$0xff]
    %v573 = vld [vmem:[#allocation6 + $0xb18] sm:$0xff]
    %v574 = vld [vmem:[#allocation6 + $0xb20] sm:$0xff]
    %v575 = vld [vmem:[#allocation6 + $0xb28] sm:$0xff]
    %v576 = vld [vmem:[#allocation6 + $0xb30] sm:$0xff]
    %v577 = vld [vmem:[#allocation6 + $0xb38] sm:$0xff]
    %v578 = vld [vmem:[#allocation6 + $0xb40] sm:$0xff]
    %v579 = vld [vmem:[#allocation6 + $0xb48] sm:$0xff]
    %v580 = vld [vmem:[#allocation6 + $0xb50] sm:$0xff]
    %v581 = vld [vmem:[#allocation6 + $0xb58] sm:$0xff]
    %v582 = vld [vmem:[#allocation6 + $0xb60] sm:$0xff]
    %v583 = vld [vmem:[#allocation6 + $0xb68] sm:$0xff]
    %v584 = vld [vmem:[#allocation6 + $0xb70] sm:$0xff]
    %v585 = vld [vmem:[#allocation6 + $0xb78] sm:$0xff]
    %v586 = vld [vmem:[#allocation6 + $0xb80] sm:$0xff]
    %v587 = vld [vmem:[#allocation6 + $0xb88] sm:$0xff]
    %v588 = vld [vmem:[#allocation6 + $0xb90] sm:$0xff]
    %v589 = vld [vmem:[#allocation6 + $0xb98] sm:$0xff]
    %v590 = vld [vmem:[#allocation6 + $0xba0] sm:$0xff]
    %v591 = vld [vmem:[#allocation6 + $0xba8] sm:$0xff]
    %v592 = vld [vmem:[#allocation6 + $0xbb0] sm:$0xff]
    %v593 = vld [vmem:[#allocation6 + $0xbb8] sm:$0xff]
    %v594 = vld [vmem:[#allocation6 + $0xbc0] sm:$0xff]
    %v595 = vld [vmem:[#allocation6 + $0xbc8] sm:$0xff]
    %v596 = vld [vmem:[#allocation6 + $0xbd0] sm:$0xff]
    %v597 = vld [vmem:[#allocation6 + $0xbd8] sm:$0xff]
    %v598 = vld [vmem:[#allocation6 + $0xbe0] sm:$0xff]
    %v599 = vld [vmem:[#allocation6 + $0xbe8] sm:$0xff]
    %v600 = vld [vmem:[#allocation6 + $0xbf0] sm:$0xff]
    %v601 = vld [vmem:[#allocation6 + $0xbf8] sm:$0xff]
    %v602 = vld [vmem:[#allocation6 + $0xc00] sm:$0xff]
    %v603 = vld [vmem:[#allocation6 + $0xc08] sm:$0xff]
    %v604 = vld [vmem:[#allocation6 + $0xc10] sm:$0xff]
    %v605 = vld [vmem:[#allocation6 + $0xc18] sm:$0xff]
    %v606 = vld [vmem:[#allocation6 + $0xc20] sm:$0xff]
    %v607 = vld [vmem:[#allocation6 + $0xc28] sm:$0xff]
    %v608 = vld [vmem:[#allocation6 + $0xc30] sm:$0xff]
    %v609 = vld [vmem:[#allocation6 + $0xc38] sm:$0xff]
    %v610 = vld [vmem:[#allocation6 + $0xc40] sm:$0xff]
    %v611 = vld [vmem:[#allocation6 + $0xc48] sm:$0xff]
    %v612 = vld [vmem:[#allocation6 + $0xc50] sm:$0xff]
    %v613 = vld [vmem:[#allocation6 + $0xc58] sm:$0xff]
    %v614 = vld [vmem:[#allocation6 + $0xc60] sm:$0xff]
    %v615 = vld [vmem:[#allocation6 + $0xc68] sm:$0xff]
    %v616 = vld [vmem:[#allocation6 + $0xc70] sm:$0xff]
    %v617 = vld [vmem:[#allocation6 + $0xc78] sm:$0xff]
    %v618 = vld [vmem:[#allocation6 + $0xc80] sm:$0xff]
    %v619 = vld [vmem:[#allocation6 + $0xc88] sm:$0xff]
    %v620 = vld [vmem:[#allocation6 + $0xc90] sm:$0xff]
    %v621 = vld [vmem:[#allocation6 + $0xc98] sm:$0xff]
    %v622 = vld [vmem:[#allocation6 + $0xca0] sm:$0xff]
    %v623 = vld [vmem:[#allocation6 + $0xca8] sm:$0xff]
    %v624 = vld [vmem:[#allocation6 + $0xcb0] sm:$0xff]
    %v625 = vld [vmem:[#allocation6 + $0xcb8] sm:$0xff]
    %v626 = vld [vmem:[#allocation6 + $0xcc0] sm:$0xff]
    %v627 = vld [vmem:[#allocation6 + $0xcc8] sm:$0xff]
    %v628 = vld [vmem:[#allocation6 + $0xcd0] sm:$0xff]
    %v629 = vld [vmem:[#allocation6 + $0xcd8] sm:$0xff]
    %v630 = vld [vmem:[#allocation6 + $0xce0] sm:$0xff]
    %v631 = vld [vmem:[#allocation6 + $0xce8] sm:$0xff]
    %v632 = vld [vmem:[#allocation6 + $0xcf0] sm:$0xff]
    %v633 = vld [vmem:[#allocation6 + $0xcf8] sm:$0xff]
    %v634 = vld [vmem:[#allocation6 + $0xd00] sm:$0xff]
    %v635 = vld [vmem:[#allocation6 + $0xd08] sm:$0xff]
    %v636 = vld [vmem:[#allocation6 + $0xd10] sm:$0xff]
    %v637 = vld [vmem:[#allocation6 + $0xd18] sm:$0xff]
    %v638 = vld [vmem:[#allocation6 + $0xd20] sm:$0xff]
    %v639 = vld [vmem:[#allocation6 + $0xd28] sm:$0xff]
    %v640 = vld [vmem:[#allocation6 + $0xd30] sm:$0xff]
    %v641 = vld [vmem:[#allocation6 + $0xd38] sm:$0xff]
    %v642 = vld [vmem:[#allocation6 + $0xd40] sm:$0xff]
    %v643 = vld [vmem:[#allocation6 + $0xd48] sm:$0xff]
    %v644 = vld [vmem:[#allocation6 + $0xd50] sm:$0xff]
    %v645 = vld [vmem:[#allocation6 + $0xd58] sm:$0xff]
    %v646 = vld [vmem:[#allocation6 + $0xd60] sm:$0xff]
    %v647 = vld [vmem:[#allocation6 + $0xd68] sm:$0xff]
    %v648 = vld [vmem:[#allocation6 + $0xd70] sm:$0xff]
    %v649 = vld [vmem:[#allocation6 + $0xd78] sm:$0xff]
    %v650 = vld [vmem:[#allocation6 + $0xd80] sm:$0xff]
    %v651 = vld [vmem:[#allocation6 + $0xd88] sm:$0xff]
    %v652 = vld [vmem:[#allocation6 + $0xd90] sm:$0xff]
    %v653 = vld [vmem:[#allocation6 + $0xd98] sm:$0xff]
    %v654 = vld [vmem:[#allocation6 + $0xda0] sm:$0xff]
    %v655 = vld [vmem:[#allocation6 + $0xda8] sm:$0xff]
    %v656 = vld [vmem:[#allocation6 + $0xdb0] sm:$0xff]
    %v657 = vld [vmem:[#allocation6 + $0xdb8] sm:$0xff]
    %v658 = vld [vmem:[#allocation6 + $0xdc0] sm:$0xff]
    %v659 = vld [vmem:[#allocation6 + $0xdc8] sm:$0xff]
    %v660 = vld [vmem:[#allocation6 + $0xdd0] sm:$0xff]
    %v661 = vld [vmem:[#allocation6 + $0xdd8] sm:$0xff]
    %v662 = vld [vmem:[#allocation6 + $0xde0] sm:$0xff]
    %v663 = vld [vmem:[#allocation6 + $0xde8] sm:$0xff]
    %v664 = vld [vmem:[#allocation6 + $0xdf0] sm:$0xff]
    %v665 = vld [vmem:[#allocation6 + $0xdf8] sm:$0xff]
    %v666 = vld [vmem:[#allocation6 + $0xe00] sm:$0xff]
    %v667 = vld [vmem:[#allocation6 + $0xe08] sm:$0xff]
    %v668 = vld [vmem:[#allocation6 + $0xe10] sm:$0xff]
    %v669 = vld [vmem:[#allocation6 + $0xe18] sm:$0xff]
    %v670 = vld [vmem:[#allocation6 + $0xe20] sm:$0xff]
    %v671 = vld [vmem:[#allocation6 + $0xe28] sm:$0xff]
    %v672 = vld [vmem:[#allocation6 + $0xe30] sm:$0xff]
    %v673 = vld [vmem:[#allocation6 + $0xe38] sm:$0xff]
    %v674 = vld [vmem:[#allocation6 + $0xe40] sm:$0xff]
    %v675 = vld [vmem:[#allocation6 + $0xe48] sm:$0xff]
    %v676 = vld [vmem:[#allocation6 + $0xe50] sm:$0xff]
    %v677 = vld [vmem:[#allocation6 + $0xe58] sm:$0xff]
    %v678 = vld [vmem:[#allocation6 + $0xe60] sm:$0xff]
    %v679 = vld [vmem:[#allocation6 + $0xe68] sm:$0xff]
    %v680 = vld [vmem:[#allocation6 + $0xe70] sm:$0xff]
    %v681 = vld [vmem:[#allocation6 + $0xe78] sm:$0xff]
    %v682 = vld [vmem:[#allocation6 + $0xe80] sm:$0xff]
    %v683 = vld [vmem:[#allocation6 + $0xe88] sm:$0xff]
    %v684 = vld [vmem:[#allocation6 + $0xe90] sm:$0xff]
    %v685 = vld [vmem:[#allocation6 + $0xe98] sm:$0xff]
    %v686 = vld [vmem:[#allocation6 + $0xea0] sm:$0xff]
    %v687 = vld [vmem:[#allocation6 + $0xea8] sm:$0xff]
    %v688 = vld [vmem:[#allocation6 + $0xeb0] sm:$0xff]
    %v689 = vld [vmem:[#allocation6 + $0xeb8] sm:$0xff]
    %v690 = vld [vmem:[#allocation6 + $0xec0] sm:$0xff]
    %v691 = vld [vmem:[#allocation6 + $0xec8] sm:$0xff]
    %v692 = vld [vmem:[#allocation6 + $0xed0] sm:$0xff]
    %v693 = vld [vmem:[#allocation6 + $0xed8] sm:$0xff]
    %v694 = vld [vmem:[#allocation6 + $0xee0] sm:$0xff]
    %v695 = vld [vmem:[#allocation6 + $0xee8] sm:$0xff]
    %v696 = vld [vmem:[#allocation6 + $0xef0] sm:$0xff]
    %v697 = vld [vmem:[#allocation6 + $0xef8] sm:$0xff]
    %v698 = vld [vmem:[#allocation6 + $0xf00] sm:$0xff]
    %v699 = vld [vmem:[#allocation6 + $0xf08] sm:$0xff]
    %v700 = vld [vmem:[#allocation6 + $0xf10] sm:$0xff]
    %v701 = vld [vmem:[#allocation6 + $0xf18] sm:$0xff]
    %v702 = vld [vmem:[#allocation6 + $0xf20] sm:$0xff]
    %v703 = vld [vmem:[#allocation6 + $0xf28] sm:$0xff]
    %v704 = vld [vmem:[#allocation6 + $0xf30] sm:$0xff]
    %v705 = vld [vmem:[#allocation6 + $0xf38] sm:$0xff]
    %v706 = vld [vmem:[#allocation6 + $0xf40] sm:$0xff]
    %v707 = vld [vmem:[#allocation6 + $0xf48] sm:$0xff]
    %v708 = vld [vmem:[#allocation6 + $0xf50] sm:$0xff]
    %v709 = vld [vmem:[#allocation6 + $0xf58] sm:$0xff]
    %v710 = vld [vmem:[#allocation6 + $0xf60] sm:$0xff]
    %v711 = vld [vmem:[#allocation6 + $0xf68] sm:$0xff]
    %v712 = vld [vmem:[#allocation6 + $0xf70] sm:$0xff]
    %v713 = vld [vmem:[#allocation6 + $0xf78] sm:$0xff]
    %v714 = vld [vmem:[#allocation6 + $0xf80] sm:$0xff]
    %v715 = vld [vmem:[#allocation6 + $0xf88] sm:$0xff]
    %v716 = vld [vmem:[#allocation6 + $0xf90] sm:$0xff]
    %v717 = vld [vmem:[#allocation6 + $0xf98] sm:$0xff]
    %v718 = vld [vmem:[#allocation6 + $0xfa0] sm:$0xff]
    %v719 = vld [vmem:[#allocation6 + $0xfa8] sm:$0xff]
    %v720 = vld [vmem:[#allocation6 + $0xfb0] sm:$0xff]
    %v721 = vld [vmem:[#allocation6 + $0xfb8] sm:$0xff]
    %v722 = vld [vmem:[#allocation6 + $0xfc0] sm:$0xff]
    %v723 = vld [vmem:[#allocation6 + $0xfc8] sm:$0xff]
    %v724 = vld [vmem:[#allocation6 + $0xfd0] sm:$0xff]
    %v725 = vld [vmem:[#allocation6 + $0xfd8] sm:$0xff]
    %v726 = vld [vmem:[#allocation6 + $0xfe0] sm:$0xff]
    %v727 = vld [vmem:[#allocation6 + $0xfe8] sm:$0xff]
    %v728 = vld [vmem:[#allocation6 + $0xff0] sm:$0xff]
    %v729 = vld [vmem:[#allocation6 + $0xff8] sm:$0xff]
    %v730 = vld [vmem:[#allocation8] sm:$0xf]
    %v731 = vld [vmem:[#allocation8 + $0x4] sm:$0xf]
    %v732 = vld [vmem:[#allocation8 + $0x8] sm:$0xf]
    %v733 = vld [vmem:[#allocation8 + $0xc] sm:$0xf]
    %v734 = vld [vmem:[#allocation8 + $0x10] sm:$0xf]
    %v735 = vld [vmem:[#allocation8 + $0x14] sm:$0xf]
    %v736 = vld [vmem:[#allocation8 + $0x18] sm:$0xf]
    %v737 = vld [vmem:[#allocation8 + $0x1c] sm:$0xf]
    %v738 = vld [vmem:[#allocation8 + $0x20] sm:$0xf]
    %v739 = vld [vmem:[#allocation8 + $0x24] sm:$0xf]
    %v740 = vld [vmem:[#allocation8 + $0x28] sm:$0xf]
    %v741 = vld [vmem:[#allocation8 + $0x2c] sm:$0xf]
    %v742 = vld [vmem:[#allocation8 + $0x30] sm:$0xf]
    %v743 = vld [vmem:[#allocation8 + $0x34] sm:$0xf]
    %v744 = vld [vmem:[#allocation8 + $0x38] sm:$0xf]
    %v745 = vld [vmem:[#allocation8 + $0x3c] sm:$0xf]
    %v746 = vld [vmem:[#allocation8 + $0x40] sm:$0xf]
    %v747 = vld [vmem:[#allocation8 + $0x44] sm:$0xf]
    %v748 = vld [vmem:[#allocation8 + $0x48] sm:$0xf]
    %v749 = vld [vmem:[#allocation8 + $0x4c] sm:$0xf]
    %v750 = vld [vmem:[#allocation8 + $0x50] sm:$0xf]
    %v751 = vld [vmem:[#allocation8 + $0x54] sm:$0xf]
    %v752 = vld [vmem:[#allocation8 + $0x58] sm:$0xf]
    %v753 = vld [vmem:[#allocation8 + $0x5c] sm:$0xf]
    %v754 = vld [vmem:[#allocation8 + $0x60] sm:$0xf]
    %v755 = vld [vmem:[#allocation8 + $0x64] sm:$0xf]
    %v756 = vld [vmem:[#allocation8 + $0x68] sm:$0xf]
    %v757 = vld [vmem:[#allocation8 + $0x6c] sm:$0xf]
    %v758 = vld [vmem:[#allocation8 + $0x70] sm:$0xf]
    %v759 = vld [vmem:[#allocation8 + $0x74] sm:$0xf]
    %v760 = vld [vmem:[#allocation8 + $0x78] sm:$0xf]
    %v761 = vld [vmem:[#allocation8 + $0x7c] sm:$0xf]
    %v762 = vld [vmem:[#allocation8 + $0x80] sm:$0xf]
    %v763 = vld [vmem:[#allocation8 + $0x84] sm:$0xf]
    %v764 = vld [vmem:[#allocation8 + $0x88] sm:$0xf]
    %v765 = vld [vmem:[#allocation8 + $0x8c] sm:$0xf]
    %v766 = vld [vmem:[#allocation8 + $0x90] sm:$0xf]
    %v767 = vld [vmem:[#allocation8 + $0x94] sm:$0xf]
    %v768 = vld [vmem:[#allocation8 + $0x98] sm:$0xf]
    %v769 = vld [vmem:[#allocation8 + $0x9c] sm:$0xf]
    %v770 = vld [vmem:[#allocation8 + $0xa0] sm:$0xf]
    %v771 = vld [vmem:[#allocation8 + $0xa4] sm:$0xf]
    %v772 = vld [vmem:[#allocation8 + $0xa8] sm:$0xf]
    %v773 = vld [vmem:[#allocation8 + $0xac] sm:$0xf]
    %v774 = vld [vmem:[#allocation8 + $0xb0] sm:$0xf]
    %v775 = vld [vmem:[#allocation8 + $0xb4] sm:$0xf]
    %v776 = vld [vmem:[#allocation8 + $0xb8] sm:$0xf]
    %v777 = vld [vmem:[#allocation8 + $0xbc] sm:$0xf]
    %v778 = vld [vmem:[#allocation8 + $0xc0] sm:$0xf]
    %v779 = vld [vmem:[#allocation8 + $0xc4] sm:$0xf]
    %v780 = vld [vmem:[#allocation8 + $0xc8] sm:$0xf]
    %v781 = vld [vmem:[#allocation8 + $0xcc] sm:$0xf]
    %v782 = vld [vmem:[#allocation8 + $0xd0] sm:$0xf]
    %v783 = vld [vmem:[#allocation8 + $0xd4] sm:$0xf]
    %v784 = vld [vmem:[#allocation8 + $0xd8] sm:$0xf]
    %v785 = vld [vmem:[#allocation8 + $0xdc] sm:$0xf]
    %v786 = vld [vmem:[#allocation8 + $0xe0] sm:$0xf]
    %v787 = vld [vmem:[#allocation8 + $0xe4] sm:$0xf]
    %v788 = vld [vmem:[#allocation8 + $0xe8] sm:$0xf]
    %v789 = vld [vmem:[#allocation8 + $0xec] sm:$0xf]
    %v790 = vld [vmem:[#allocation8 + $0xf0] sm:$0xf]
    %v791 = vld [vmem:[#allocation8 + $0xf4] sm:$0xf]
    %v792 = vld [vmem:[#allocation8 + $0xf8] sm:$0xf]
    %v793 = vld [vmem:[#allocation8 + $0xfc] sm:$0xf]
    %v794 = vld [vmem:[#allocation9] sm:$0xf]
    %v795 = vld [vmem:[#allocation9 + $0x4] sm:$0xf]
    %v796 = vld [vmem:[#allocation9 + $0x8] sm:$0xf]
    %v797 = vld [vmem:[#allocation9 + $0xc] sm:$0xf]
    %v798 = vld [vmem:[#allocation9 + $0x10] sm:$0xf]
    %v799 = vld [vmem:[#allocation9 + $0x14] sm:$0xf]
    %v800 = vld [vmem:[#allocation9 + $0x18] sm:$0xf]
    %v801 = vld [vmem:[#allocation9 + $0x1c] sm:$0xf]
    %v802 = vld [vmem:[#allocation9 + $0x20] sm:$0xf]
    %v803 = vld [vmem:[#allocation9 + $0x24] sm:$0xf]
    %v804 = vld [vmem:[#allocation9 + $0x28] sm:$0xf]
    %v805 = vld [vmem:[#allocation9 + $0x2c] sm:$0xf]
    %v806 = vld [vmem:[#allocation9 + $0x30] sm:$0xf]
    %v807 = vld [vmem:[#allocation9 + $0x34] sm:$0xf]
    %v808 = vld [vmem:[#allocation9 + $0x38] sm:$0xf]
    %v809 = vld [vmem:[#allocation9 + $0x3c] sm:$0xf]
    %v810 = vld [vmem:[#allocation11] sm:$0xf]
    %v811 = vld [vmem:[%s0] sm:$0xff]
    %v812 = vld [vmem:[%s0 + $0x30] sm:$0xff]
    %v815 = vunpack.c.l.b16 %v811
    %v816 = vunpack.c.h.b16 %v811
    %v817 = vunpack.c.l.b16 %v812
    %v818 = vunpack.c.h.b16 %v812
    %v819 = vpack.c.b16 %v817, %v815
    %v820 = vpack.c.b16 %v818, %v816
    %v951 = vunpack.c.l.b16 %v90
    %v952 = vunpack.c.h.b16 %v90
    %v953 = vunpack.c.l.b16 %v91
    %v954 = vunpack.c.h.b16 %v91
    %v955 = vunpack.c.l.b16 %v92
    %v956 = vunpack.c.h.b16 %v92
    %v957 = vunpack.c.l.b16 %v93
    %v958 = vunpack.c.h.b16 %v93
    %v959 = vunpack.c.l.b16 %v94
    %v960 = vunpack.c.h.b16 %v94
    %v961 = vunpack.c.l.b16 %v95
    %v962 = vunpack.c.h.b16 %v95
    %v963 = vunpack.c.l.b16 %v96
    %v964 = vunpack.c.h.b16 %v96
    %v965 = vunpack.c.l.b16 %v97
    %v966 = vunpack.c.h.b16 %v97
    %v967 = vunpack.c.l.b16 %v98
    %v968 = vunpack.c.h.b16 %v98
    %v969 = vunpack.c.l.b16 %v99
    %v970 = vunpack.c.h.b16 %v99
    %v971 = vunpack.c.l.b16 %v100
    %v972 = vunpack.c.h.b16 %v100
    %v973 = vunpack.c.l.b16 %v101
    %v974 = vunpack.c.h.b16 %v101
    %v975 = vunpack.c.l.b16 %v102
    %v976 = vunpack.c.h.b16 %v102
    %v977 = vunpack.c.l.b16 %v103
    %v978 = vunpack.c.h.b16 %v103
    %v979 = vunpack.c.l.b16 %v104
    %v980 = vunpack.c.h.b16 %v104
    %v981 = vunpack.c.l.b16 %v105
    %v982 = vunpack.c.h.b16 %v105
    %v983 = vunpack.c.l.b16 %v106
    %v984 = vunpack.c.h.b16 %v106
    %v985 = vunpack.c.l.b16 %v107
    %v986 = vunpack.c.h.b16 %v107
    %v987 = vunpack.c.l.b16 %v108
    %v988 = vunpack.c.h.b16 %v108
    %v989 = vunpack.c.l.b16 %v109
    %v990 = vunpack.c.h.b16 %v109
    %v991 = vunpack.c.l.b16 %v110
    %v992 = vunpack.c.h.b16 %v110
    %v993 = vunpack.c.l.b16 %v111
    %v994 = vunpack.c.h.b16 %v111
    %v995 = vunpack.c.l.b16 %v112
    %v996 = vunpack.c.h.b16 %v112
    %v997 = vunpack.c.l.b16 %v113
    %v998 = vunpack.c.h.b16 %v113
    %v999 = vunpack.c.l.b16 %v114
    %v1000 = vunpack.c.h.b16 %v114
    %v1001 = vunpack.c.l.b16 %v115
    %v1002 = vunpack.c.h.b16 %v115
    %v1003 = vunpack.c.l.b16 %v116
    %v1004 = vunpack.c.h.b16 %v116
    %v1005 = vunpack.c.l.b16 %v117
    %v1006 = vunpack.c.h.b16 %v117
    %v1007 = vunpack.c.l.b16 %v118
    %v1008 = vunpack.c.h.b16 %v118
    %v1009 = vunpack.c.l.b16 %v119
    %v1010 = vunpack.c.h.b16 %v119
    %v1011 = vunpack.c.l.b16 %v120
    %v1012 = vunpack.c.h.b16 %v120
    %v1013 = vunpack.c.l.b16 %v121
    %v1014 = vunpack.c.h.b16 %v121
    %v1015 = vunpack.c.l.b16 %v122
    %v1016 = vunpack.c.h.b16 %v122
    %v1017 = vunpack.c.l.b16 %v123
    %v1018 = vunpack.c.h.b16 %v123
    %v1019 = vunpack.c.l.b16 %v124
    %v1020 = vunpack.c.h.b16 %v124
    %v1021 = vunpack.c.l.b16 %v125
    %v1022 = vunpack.c.h.b16 %v125
    %v1023 = vunpack.c.l.b16 %v126
    %v1024 = vunpack.c.h.b16 %v126
    %v1025 = vunpack.c.l.b16 %v127
    %v1026 = vunpack.c.h.b16 %v127
    %v1027 = vunpack.c.l.b16 %v128
    %v1028 = vunpack.c.h.b16 %v128
    %v1029 = vunpack.c.l.b16 %v129
    %v1030 = vunpack.c.h.b16 %v129
    %v1031 = vunpack.c.l.b16 %v130
    %v1032 = vunpack.c.h.b16 %v130
    %v1033 = vunpack.c.l.b16 %v131
    %v1034 = vunpack.c.h.b16 %v131
    %v1035 = vunpack.c.l.b16 %v132
    %v1036 = vunpack.c.h.b16 %v132
    %v1037 = vunpack.c.l.b16 %v133
    %v1038 = vunpack.c.h.b16 %v133
    %v1039 = vunpack.c.l.b16 %v134
    %v1040 = vunpack.c.h.b16 %v134
    %v1041 = vunpack.c.l.b16 %v135
    %v1042 = vunpack.c.h.b16 %v135
    %v1043 = vunpack.c.l.b16 %v136
    %v1044 = vunpack.c.h.b16 %v136
    %v1045 = vunpack.c.l.b16 %v137
    %v1046 = vunpack.c.h.b16 %v137
    %v1047 = vunpack.c.l.b16 %v138
    %v1048 = vunpack.c.h.b16 %v138
    %v1049 = vunpack.c.l.b16 %v139
    %v1050 = vunpack.c.h.b16 %v139
    %v1051 = vunpack.c.l.b16 %v140
    %v1052 = vunpack.c.h.b16 %v140
    %v1053 = vunpack.c.l.b16 %v141
    %v1054 = vunpack.c.h.b16 %v141
    %v1055 = vunpack.c.l.b16 %v142
    %v1056 = vunpack.c.h.b16 %v142
    %v1057 = vunpack.c.l.b16 %v143
    %v1058 = vunpack.c.h.b16 %v143
    %v1059 = vunpack.c.l.b16 %v144
    %v1060 = vunpack.c.h.b16 %v144
    %v1061 = vunpack.c.l.b16 %v145
    %v1062 = vunpack.c.h.b16 %v145
    %v1063 = vunpack.c.l.b16 %v146
    %v1064 = vunpack.c.h.b16 %v146
    %v1065 = vunpack.c.l.b16 %v147
    %v1066 = vunpack.c.h.b16 %v147
    %v1067 = vunpack.c.l.b16 %v148
    %v1068 = vunpack.c.h.b16 %v148
    %v1069 = vunpack.c.l.b16 %v149
    %v1070 = vunpack.c.h.b16 %v149
    %v1071 = vunpack.c.l.b16 %v150
    %v1072 = vunpack.c.h.b16 %v150
    %v1073 = vunpack.c.l.b16 %v151
    %v1074 = vunpack.c.h.b16 %v151
    %v1075 = vunpack.c.l.b16 %v152
    %v1076 = vunpack.c.h.b16 %v152
    %v1077 = vunpack.c.l.b16 %v153
    %v1078 = vunpack.c.h.b16 %v153
    %v1079 = vunpack.c.l.b16 %v154
    %v1080 = vunpack.c.h.b16 %v154
    %v1081 = vunpack.c.l.b16 %v155
    %v1082 = vunpack.c.h.b16 %v155
    %v1083 = vunpack.c.l.b16 %v156
    %v1084 = vunpack.c.h.b16 %v156
    %v1085 = vunpack.c.l.b16 %v157
    %v1086 = vunpack.c.h.b16 %v157
    %v1087 = vunpack.c.l.b16 %v158
    %v1088 = vunpack.c.h.b16 %v158
    %v1089 = vunpack.c.l.b16 %v159
    %v1090 = vunpack.c.h.b16 %v159
    %v1091 = vunpack.c.l.b16 %v160
    %v1092 = vunpack.c.h.b16 %v160
    %v1093 = vunpack.c.l.b16 %v161
    %v1094 = vunpack.c.h.b16 %v161
    %v1095 = vunpack.c.l.b16 %v162
    %v1096 = vunpack.c.h.b16 %v162
    %v1097 = vunpack.c.l.b16 %v163
    %v1098 = vunpack.c.h.b16 %v163
    %v1099 = vunpack.c.l.b16 %v164
    %v1100 = vunpack.c.h.b16 %v164
    %v1101 = vunpack.c.l.b16 %v165
    %v1102 = vunpack.c.h.b16 %v165
    %v1103 = vunpack.c.l.b16 %v166
    %v1104 = vunpack.c.h.b16 %v166
    %v1105 = vunpack.c.l.b16 %v167
    %v1106 = vunpack.c.h.b16 %v167
    %v1107 = vunpack.c.l.b16 %v168
    %v1108 = vunpack.c.h.b16 %v168
    %v1109 = vunpack.c.l.b16 %v169
    %v1110 = vunpack.c.h.b16 %v169
    %v1111 = vunpack.c.l.b16 %v170
    %v1112 = vunpack.c.h.b16 %v170
    %v1113 = vunpack.c.l.b16 %v171
    %v1114 = vunpack.c.h.b16 %v171
    %v1115 = vunpack.c.l.b16 %v172
    %v1116 = vunpack.c.h.b16 %v172
    %v1117 = vunpack.c.l.b16 %v173
    %v1118 = vunpack.c.h.b16 %v173
    %v1119 = vunpack.c.l.b16 %v174
    %v1120 = vunpack.c.h.b16 %v174
    %v1121 = vunpack.c.l.b16 %v175
    %v1122 = vunpack.c.h.b16 %v175
    %v1123 = vunpack.c.l.b16 %v176
    %v1124 = vunpack.c.h.b16 %v176
    %v1125 = vunpack.c.l.b16 %v177
    %v1126 = vunpack.c.h.b16 %v177
    %v1127 = vunpack.c.l.b16 %v178
    %v1128 = vunpack.c.h.b16 %v178
    %v1129 = vunpack.c.l.b16 %v179
    %v1130 = vunpack.c.h.b16 %v179
    %v1131 = vunpack.c.l.b16 %v180
    %v1132 = vunpack.c.h.b16 %v180
    %v1133 = vunpack.c.l.b16 %v181
    %v1134 = vunpack.c.h.b16 %v181
    %v1135 = vunpack.c.l.b16 %v182
    %v1136 = vunpack.c.h.b16 %v182
    %v1137 = vunpack.c.l.b16 %v183
    %v1138 = vunpack.c.h.b16 %v183
    %v1139 = vunpack.c.l.b16 %v184
    %v1140 = vunpack.c.h.b16 %v184
    %v1141 = vunpack.c.l.b16 %v185
    %v1142 = vunpack.c.h.b16 %v185
    %v1143 = vunpack.c.l.b16 %v186
    %v1144 = vunpack.c.h.b16 %v186
    %v1145 = vunpack.c.l.b16 %v187
    %v1146 = vunpack.c.h.b16 %v187
    %v1147 = vunpack.c.l.b16 %v188
    %v1148 = vunpack.c.h.b16 %v188
    %v1149 = vunpack.c.l.b16 %v189
    %v1150 = vunpack.c.h.b16 %v189
    %v1151 = vunpack.c.l.b16 %v190
    %v1152 = vunpack.c.h.b16 %v190
    %v1153 = vunpack.c.l.b16 %v191
    %v1154 = vunpack.c.h.b16 %v191
    %v1155 = vunpack.c.l.b16 %v192
    %v1156 = vunpack.c.h.b16 %v192
    %v1157 = vunpack.c.l.b16 %v193
    %v1158 = vunpack.c.h.b16 %v193
    %v1159 = vunpack.c.l.b16 %v194
    %v1160 = vunpack.c.h.b16 %v194
    %v1161 = vunpack.c.l.b16 %v195
    %v1162 = vunpack.c.h.b16 %v195
    %v1163 = vunpack.c.l.b16 %v196
    %v1164 = vunpack.c.h.b16 %v196
    %v1165 = vunpack.c.l.b16 %v197
    %v1166 = vunpack.c.h.b16 %v197
    %v1167 = vunpack.c.l.b16 %v198
    %v1168 = vunpack.c.h.b16 %v198
    %v1169 = vunpack.c.l.b16 %v199
    %v1170 = vunpack.c.h.b16 %v199
    %v1171 = vunpack.c.l.b16 %v200
    %v1172 = vunpack.c.h.b16 %v200
    %v1173 = vunpack.c.l.b16 %v201
    %v1174 = vunpack.c.h.b16 %v201
    %v1175 = vunpack.c.l.b16 %v202
    %v1176 = vunpack.c.h.b16 %v202
    %v1177 = vunpack.c.l.b16 %v203
    %v1178 = vunpack.c.h.b16 %v203
    %v1179 = vunpack.c.l.b16 %v204
    %v1180 = vunpack.c.h.b16 %v204
    %v1181 = vunpack.c.l.b16 %v205
    %v1182 = vunpack.c.h.b16 %v205
    %v1183 = vunpack.c.l.b16 %v206
    %v1184 = vunpack.c.h.b16 %v206
    %v1185 = vunpack.c.l.b16 %v207
    %v1186 = vunpack.c.h.b16 %v207
    %v1187 = vunpack.c.l.b16 %v208
    %v1188 = vunpack.c.h.b16 %v208
    %v1189 = vunpack.c.l.b16 %v209
    %v1190 = vunpack.c.h.b16 %v209
    %v1191 = vunpack.c.l.b16 %v210
    %v1192 = vunpack.c.h.b16 %v210
    %v1193 = vunpack.c.l.b16 %v211
    %v1194 = vunpack.c.h.b16 %v211
    %v1195 = vunpack.c.l.b16 %v212
    %v1196 = vunpack.c.h.b16 %v212
    %v1197 = vunpack.c.l.b16 %v213
    %v1198 = vunpack.c.h.b16 %v213
    %v1199 = vunpack.c.l.b16 %v214
    %v1200 = vunpack.c.h.b16 %v214
    %v1201 = vunpack.c.l.b16 %v215
    %v1202 = vunpack.c.h.b16 %v215
    %v1203 = vunpack.c.l.b16 %v216
    %v1204 = vunpack.c.h.b16 %v216
    %v1205 = vunpack.c.l.b16 %v217
    %v1206 = vunpack.c.h.b16 %v217
    %v1207 = vpack.c.b16 %v959, %v951
    %v1208 = vpack.c.b16 %v960, %v952
    %v1209 = vpack.c.b16 %v961, %v953
    %v1210 = vpack.c.b16 %v962, %v954
    %v1211 = vpack.c.b16 %v963, %v955
    %v1212 = vpack.c.b16 %v964, %v956
    %v1213 = vpack.c.b16 %v965, %v957
    %v1214 = vpack.c.b16 %v966, %v958
    %v1215 = vpack.c.b16 %v975, %v967
    %v1216 = vpack.c.b16 %v976, %v968
    %v1217 = vpack.c.b16 %v977, %v969
    %v1218 = vpack.c.b16 %v978, %v970
    %v1219 = vpack.c.b16 %v979, %v971
    %v1220 = vpack.c.b16 %v980, %v972
    %v1221 = vpack.c.b16 %v981, %v973
    %v1222 = vpack.c.b16 %v982, %v974
    %v1223 = vpack.c.b16 %v991, %v983
    %v1224 = vpack.c.b16 %v992, %v984
    %v1225 = vpack.c.b16 %v993, %v985
    %v1226 = vpack.c.b16 %v994, %v986
    %v1227 = vpack.c.b16 %v995, %v987
    %v1228 = vpack.c.b16 %v996, %v988
    %v1229 = vpack.c.b16 %v997, %v989
    %v1230 = vpack.c.b16 %v998, %v990
    %v1231 = vpack.c.b16 %v1007, %v999
    %v1232 = vpack.c.b16 %v1008, %v1000
    %v1233 = vpack.c.b16 %v1009, %v1001
    %v1234 = vpack.c.b16 %v1010, %v1002
    %v1235 = vpack.c.b16 %v1011, %v1003
    %v1236 = vpack.c.b16 %v1012, %v1004
    %v1237 = vpack.c.b16 %v1013, %v1005
    %v1238 = vpack.c.b16 %v1014, %v1006
    %v1239 = vpack.c.b16 %v1023, %v1015
    %v1240 = vpack.c.b16 %v1024, %v1016
    %v1241 = vpack.c.b16 %v1025, %v1017
    %v1242 = vpack.c.b16 %v1026, %v1018
    %v1243 = vpack.c.b16 %v1027, %v1019
    %v1244 = vpack.c.b16 %v1028, %v1020
    %v1245 = vpack.c.b16 %v1029, %v1021
    %v1246 = vpack.c.b16 %v1030, %v1022
    %v1247 = vpack.c.b16 %v1039, %v1031
    %v1248 = vpack.c.b16 %v1040, %v1032
    %v1249 = vpack.c.b16 %v1041, %v1033
    %v1250 = vpack.c.b16 %v1042, %v1034
    %v1251 = vpack.c.b16 %v1043, %v1035
    %v1252 = vpack.c.b16 %v1044, %v1036
    %v1253 = vpack.c.b16 %v1045, %v1037
    %v1254 = vpack.c.b16 %v1046, %v1038
    %v1255 = vpack.c.b16 %v1055, %v1047
    %v1256 = vpack.c.b16 %v1056, %v1048
    %v1257 = vpack.c.b16 %v1057, %v1049
    %v1258 = vpack.c.b16 %v1058, %v1050
    %v1259 = vpack.c.b16 %v1059, %v1051
    %v1260 = vpack.c.b16 %v1060, %v1052
    %v1261 = vpack.c.b16 %v1061, %v1053
    %v1262 = vpack.c.b16 %v1062, %v1054
    %v1263 = vpack.c.b16 %v1071, %v1063
    %v1264 = vpack.c.b16 %v1072, %v1064
    %v1265 = vpack.c.b16 %v1073, %v1065
    %v1266 = vpack.c.b16 %v1074, %v1066
    %v1267 = vpack.c.b16 %v1075, %v1067
    %v1268 = vpack.c.b16 %v1076, %v1068
    %v1269 = vpack.c.b16 %v1077, %v1069
    %v1270 = vpack.c.b16 %v1078, %v1070
    %v1271 = vpack.c.b16 %v1087, %v1079
    %v1272 = vpack.c.b16 %v1088, %v1080
    %v1273 = vpack.c.b16 %v1089, %v1081
    %v1274 = vpack.c.b16 %v1090, %v1082
    %v1275 = vpack.c.b16 %v1091, %v1083
    %v1276 = vpack.c.b16 %v1092, %v1084
    %v1277 = vpack.c.b16 %v1093, %v1085
    %v1278 = vpack.c.b16 %v1094, %v1086
    %v1279 = vpack.c.b16 %v1103, %v1095
    %v1280 = vpack.c.b16 %v1104, %v1096
    %v1281 = vpack.c.b16 %v1105, %v1097
    %v1282 = vpack.c.b16 %v1106, %v1098
    %v1283 = vpack.c.b16 %v1107, %v1099
    %v1284 = vpack.c.b16 %v1108, %v1100
    %v1285 = vpack.c.b16 %v1109, %v1101
    %v1286 = vpack.c.b16 %v1110, %v1102
    %v1287 = vpack.c.b16 %v1119, %v1111
    %v1288 = vpack.c.b16 %v1120, %v1112
    %v1289 = vpack.c.b16 %v1121, %v1113
    %v1290 = vpack.c.b16 %v1122, %v1114
    %v1291 = vpack.c.b16 %v1123, %v1115
    %v1292 = vpack.c.b16 %v1124, %v1116
    %v1293 = vpack.c.b16 %v1125, %v1117
    %v1294 = vpack.c.b16 %v1126, %v1118
    %v1295 = vpack.c.b16 %v1135, %v1127
    %v1296 = vpack.c.b16 %v1136, %v1128
    %v1297 = vpack.c.b16 %v1137, %v1129
    %v1298 = vpack.c.b16 %v1138, %v1130
    %v1299 = vpack.c.b16 %v1139, %v1131
    %v1300 = vpack.c.b16 %v1140, %v1132
    %v1301 = vpack.c.b16 %v1141, %v1133
    %v1302 = vpack.c.b16 %v1142, %v1134
    %v1303 = vpack.c.b16 %v1151, %v1143
    %v1304 = vpack.c.b16 %v1152, %v1144
    %v1305 = vpack.c.b16 %v1153, %v1145
    %v1306 = vpack.c.b16 %v1154, %v1146
    %v1307 = vpack.c.b16 %v1155, %v1147
    %v1308 = vpack.c.b16 %v1156, %v1148
    %v1309 = vpack.c.b16 %v1157, %v1149
    %v1310 = vpack.c.b16 %v1158, %v1150
    %v1311 = vpack.c.b16 %v1167, %v1159
    %v1312 = vpack.c.b16 %v1168, %v1160
    %v1313 = vpack.c.b16 %v1169, %v1161
    %v1314 = vpack.c.b16 %v1170, %v1162
    %v1315 = vpack.c.b16 %v1171, %v1163
    %v1316 = vpack.c.b16 %v1172, %v1164
    %v1317 = vpack.c.b16 %v1173, %v1165
    %v1318 = vpack.c.b16 %v1174, %v1166
    %v1319 = vpack.c.b16 %v1183, %v1175
    %v1320 = vpack.c.b16 %v1184, %v1176
    %v1321 = vpack.c.b16 %v1185, %v1177
    %v1322 = vpack.c.b16 %v1186, %v1178
    %v1323 = vpack.c.b16 %v1187, %v1179
    %v1324 = vpack.c.b16 %v1188, %v1180
    %v1325 = vpack.c.b16 %v1189, %v1181
    %v1326 = vpack.c.b16 %v1190, %v1182
    %v1327 = vpack.c.b16 %v1199, %v1191
    %v1328 = vpack.c.b16 %v1200, %v1192
    %v1329 = vpack.c.b16 %v1201, %v1193
    %v1330 = vpack.c.b16 %v1202, %v1194
    %v1331 = vpack.c.b16 %v1203, %v1195
    %v1332 = vpack.c.b16 %v1204, %v1196
    %v1333 = vpack.c.b16 %v1205, %v1197
    %v1334 = vpack.c.b16 %v1206, %v1198
    %1463 = vmatprep.subr.bf16.mxu0 %v1208
    %1464 = vmatpush1.bf16.msra.mxu0 %v1207
    %1465 = vmatprep.subr.bf16.mxu0 %v1216
    %1466 = vmatpush1.bf16.msra.mxu0 %v1215
    %1467 = vmatprep.subr.bf16.mxu0 %v1224
    %1468 = vmatpush1.bf16.msra.mxu0 %v1223
    %1469 = vmatprep.subr.bf16.mxu0 %v1232
    %1470 = vmatpush1.bf16.msra.mxu0 %v1231
    %1471 = vmatprep.subr.bf16.mxu0 %v1240
    %1472 = vmatpush1.bf16.msra.mxu0 %v1239
    %1473 = vmatprep.subr.bf16.mxu0 %v1248
    %1474 = vmatpush1.bf16.msra.mxu0 %v1247
    %1475 = vmatprep.subr.bf16.mxu0 %v1256
    %1476 = vmatpush1.bf16.msra.mxu0 %v1255
    %1477 = vmatprep.subr.bf16.mxu0 %v1264
    %1478 = vmatpush1.bf16.msra.mxu0 %v1263
    %1479 = vmatprep.subr.bf16.mxu0 %v1272
    %1480 = vmatpush1.bf16.msra.mxu0 %v1271
    %1481 = vmatprep.subr.bf16.mxu0 %v1280
    %1482 = vmatpush1.bf16.msra.mxu0 %v1279
    %1483 = vmatprep.subr.bf16.mxu0 %v1288
    %1484 = vmatpush1.bf16.msra.mxu0 %v1287
    %1485 = vmatprep.subr.bf16.mxu0 %v1296
    %1486 = vmatpush1.bf16.msra.mxu0 %v1295
    %1487 = vmatprep.subr.bf16.mxu0 %v1304
    %1488 = vmatpush1.bf16.msra.mxu0 %v1303
    %1489 = vmatprep.subr.bf16.mxu0 %v1312
    %1490 = vmatpush1.bf16.msra.mxu0 %v1311
    %1491 = vmatprep.subr.bf16.mxu0 %v1320
    %1492 = vmatpush1.bf16.msra.mxu0 %v1319
    %1493 = vmatprep.subr.bf16.mxu0 %v1328
    %1494 = vmatpush1.bf16.msra.mxu0 %v1327
    %1495 = vmatprep.mubr.bf16.mxu0 %v820
    %1496 = vmatmul.mubr.bf16.gmra.mrb[0].mxu0 %v819
    %v1497 = vpop.f32.mrb[0].mxu0
    %v1498 = vadd.f32 0.0, %v1497
    %v1499 = vpop.f32.mrb[0].mxu0
    %v1500 = vadd.f32 0.0, %v1499
    %v1501 = vpop.f32.mrb[0].mxu0
    %v1502 = vadd.f32 0.0, %v1501
    %v1503 = vpop.f32.mrb[0].mxu0
    %v1504 = vadd.f32 0.0, %v1503
    %1505 = vdwg.mxu0
    %1506 = vmatprep.subr.bf16.mxu0 %v1210
    %1507 = vmatpush1.bf16.msra.mxu0 %v1209
    %1508 = vmatprep.subr.bf16.mxu0 %v1218
    %1509 = vmatpush1.bf16.msra.mxu0 %v1217
    %1510 = vmatprep.subr.bf16.mxu0 %v1226
    %1511 = vmatpush1.bf16.msra.mxu0 %v1225
    %1512 = vmatprep.subr.bf16.mxu0 %v1234
    %1513 = vmatpush1.bf16.msra.mxu0 %v1233
    %1514 = vmatprep.subr.bf16.mxu0 %v1242
    %1515 = vmatpush1.bf16.msra.mxu0 %v1241
    %1516 = vmatprep.subr.bf16.mxu0 %v1250
    %1517 = vmatpush1.bf16.msra.mxu0 %v1249
    %1518 = vmatprep.subr.bf16.mxu0 %v1258
    %1519 = vmatpush1.bf16.msra.mxu0 %v1257
    %1520 = vmatprep.subr.bf16.mxu0 %v1266
    %1521 = vmatpush1.bf16.msra.mxu0 %v1265
    %1522 = vmatprep.subr.bf16.mxu0 %v1274
    %1523 = vmatpush1.bf16.msra.mxu0 %v1273
    %1524 = vmatprep.subr.bf16.mxu0 %v1282
    %1525 = vmatpush1.bf16.msra.mxu0 %v1281
    %1526 = vmatprep.subr.bf16.mxu0 %v1290
    %1527 = vmatpush1.bf16.msra.mxu0 %v1289
    %1528 = vmatprep.subr.bf16.mxu0 %v1298
    %1529 = vmatpush1.bf16.msra.mxu0 %v1297
    %1530 = vmatprep.subr.bf16.mxu0 %v1306
    %1531 = vmatpush1.bf16.msra.mxu0 %v1305
    %1532 = vmatprep.subr.bf16.mxu0 %v1314
    %1533 = vmatpush1.bf16.msra.mxu0 %v1313
    %1534 = vmatprep.subr.bf16.mxu0 %v1322
    %1535 = vmatpush1.bf16.msra.mxu0 %v1321
    %1536 = vmatprep.subr.bf16.mxu0 %v1330
    %1537 = vmatpush1.bf16.msra.mxu0 %v1329
    %1538 = vmatprep.mubr.bf16.mxu0 %v820
    %1539 = vmatmul.mubr.bf16.gmra.mrb[0].mxu0 %v819
    %v1540 = vpop.f32.mrb[0].mxu0
    %v1541 = vadd.f32 0.0, %v1540
    %v1542 = vpop.f32.mrb[0].mxu0
    %v1543 = vadd.f32 0.0, %v1542
    %v1544 = vpop.f32.mrb[0].mxu0
    %v1545 = vadd.f32 0.0, %v1544
    %v1546 = vpop.f32.mrb[0].mxu0
    %v1547 = vadd.f32 0.0, %v1546
    %1548 = vdwg.mxu0
    %1549 = vmatprep.subr.bf16.mxu0 %v1212
    %1550 = vmatpush1.bf16.msra.mxu0 %v1211
    %1551 = vmatprep.subr.bf16.mxu0 %v1220
    %1552 = vmatpush1.bf16.msra.mxu0 %v1219
    %1553 = vmatprep.subr.bf16.mxu0 %v1228
    %1554 = vmatpush1.bf16.msra.mxu0 %v1227
    %1555 = vmatprep.subr.bf16.mxu0 %v1236
    %1556 = vmatpush1.bf16.msra.mxu0 %v1235
    %1557 = vmatprep.subr.bf16.mxu0 %v1244
    %1558 = vmatpush1.bf16.msra.mxu0 %v1243
    %1559 = vmatprep.subr.bf16.mxu0 %v1252
    %1560 = vmatpush1.bf16.msra.mxu0 %v1251
    %1561 = vmatprep.subr.bf16.mxu0 %v1260
    %1562 = vmatpush1.bf16.msra.mxu0 %v1259
    %1563 = vmatprep.subr.bf16.mxu0 %v1268
    %1564 = vmatpush1.bf16.msra.mxu0 %v1267
    %1565 = vmatprep.subr.bf16.mxu0 %v1276
    %1566 = vmatpush1.bf16.msra.mxu0 %v1275
    %1567 = vmatprep.subr.bf16.mxu0 %v1284
    %1568 = vmatpush1.bf16.msra.mxu0 %v1283
    %1569 = vmatprep.subr.bf16.mxu0 %v1292
    %1570 = vmatpush1.bf16.msra.mxu0 %v1291
    %1571 = vmatprep.subr.bf16.mxu0 %v1300
    %1572 = vmatpush1.bf16.msra.mxu0 %v1299
    %1573 = vmatprep.subr.bf16.mxu0 %v1308
    %1574 = vmatpush1.bf16.msra.mxu0 %v1307
    %1575 = vmatprep.subr.bf16.mxu0 %v1316
    %1576 = vmatpush1.bf16.msra.mxu0 %v1315
    %1577 = vmatprep.subr.bf16.mxu0 %v1324
    %1578 = vmatpush1.bf16.msra.mxu0 %v1323
    %1579 = vmatprep.subr.bf16.mxu0 %v1332
    %1580 = vmatpush1.bf16.msra.mxu0 %v1331
    %1581 = vmatprep.mubr.bf16.mxu0 %v820
    %1582 = vmatmul.mubr.bf16.gmra.mrb[0].mxu0 %v819
    %v1583 = vpop.f32.mrb[0].mxu0
    %v1584 = vadd.f32 0.0, %v1583
    %v1585 = vpop.f32.mrb[0].mxu0
    %v1586 = vadd.f32 0.0, %v1585
    %v1587 = vpop.f32.mrb[0].mxu0
    %v1588 = vadd.f32 0.0, %v1587
    %v1589 = vpop.f32.mrb[0].mxu0
    %v1590 = vadd.f32 0.0, %v1589
    %1591 = vdwg.mxu0
    %1592 = vmatprep.subr.bf16.mxu0 %v1214
    %1593 = vmatpush1.bf16.msra.mxu0 %v1213
    %1594 = vmatprep.subr.bf16.mxu0 %v1222
    %1595 = vmatpush1.bf16.msra.mxu0 %v1221
    %1596 = vmatprep.subr.bf16.mxu0 %v1230
    %1597 = vmatpush1.bf16.msra.mxu0 %v1229
    %1598 = vmatprep.subr.bf16.mxu0 %v1238
    %1599 = vmatpush1.bf16.msra.mxu0 %v1237
    %1600 = vmatprep.subr.bf16.mxu0 %v1246
    %1601 = vmatpush1.bf16.msra.mxu0 %v1245
    %1602 = vmatprep.subr.bf16.mxu0 %v1254
    %1603 = vmatpush1.bf16.msra.mxu0 %v1253
    %1604 = vmatprep.subr.bf16.mxu0 %v1262
    %1605 = vmatpush1.bf16.msra.mxu0 %v1261
    %1606 = vmatprep.subr.bf16.mxu0 %v1270
    %1607 = vmatpush1.bf16.msra.mxu0 %v1269
    %1608 = vmatprep.subr.bf16.mxu0 %v1278
    %1609 = vmatpush1.bf16.msra.mxu0 %v1277
    %1610 = vmatprep.subr.bf16.mxu0 %v1286
    %1611 = vmatpush1.bf16.msra.mxu0 %v1285
    %1612 = vmatprep.subr.bf16.mxu0 %v1294
    %1613 = vmatpush1.bf16.msra.mxu0 %v1293
    %1614 = vmatprep.subr.bf16.mxu0 %v1302
    %1615 = vmatpush1.bf16.msra.mxu0 %v1301
    %1616 = vmatprep.subr.bf16.mxu0 %v1310
    %1617 = vmatpush1.bf16.msra.mxu0 %v1309
    %1618 = vmatprep.subr.bf16.mxu0 %v1318
    %1619 = vmatpush1.bf16.msra.mxu0 %v1317
    %1620 = vmatprep.subr.bf16.mxu0 %v1326
    %1621 = vmatpush1.bf16.msra.mxu0 %v1325
    %1622 = vmatprep.subr.bf16.mxu0 %v1334
    %1623 = vmatpush1.bf16.msra.mxu0 %v1333
    %1624 = vmatprep.mubr.bf16.mxu0 %v820
    %1625 = vmatmul.mubr.bf16.gmra.mrb[0].mxu0 %v819
    %v1626 = vpop.f32.mrb[0].mxu0
    %v1627 = vadd.f32 0.0, %v1626
    %v1628 = vpop.f32.mrb[0].mxu0
    %v1629 = vadd.f32 0.0, %v1628
    %v1630 = vpop.f32.mrb[0].mxu0
    %v1631 = vadd.f32 0.0, %v1630
    %v1632 = vpop.f32.mrb[0].mxu0
    %v1633 = vadd.f32 0.0, %v1632
    %1634 = vdwg.mxu0
    %v1635 = vmax.f32 %v1498, %v1500
    %v1636 = vmax.f32 %v1502, %v1504
    %v1637 = vmax.f32 %v1541, %v1543
    %v1638 = vmax.f32 %v1545, %v1547
    %v1639 = vmax.f32 %v1635, %v1637
    %v1640 = vmax.f32 %v1636, %v1638
    %v1641 = vlaneseq
    %v1642 = vshrl.u32 %v1641, 7
    %v1643 = vsub.s32 0, %v1642
    %v1644 = vrot.slane %v810, %v1643
    %v1645 = vadd.f32 %v1639, %v1644
    %v1646 = vadd.f32 %v1640, %v1644
    %v1647 = vmax.f32 %v1645, 0.0
    %v1648 = vmax.f32 %v1646, 0.0
    %v1649 = vpack.c.bf16 %v1648, %v1647
    %1650 = vst [vmem:[#allocation2] sm:$0xff] %v1649
    %v1651 = vmax.f32 %v1584, %v1586
    %v1652 = vmax.f32 %v1588, %v1590
    %v1653 = vmax.f32 %v1627, %v1629
    %v1654 = vmax.f32 %v1631, %v1633
    %v1655 = vmax.f32 %v1651, %v1653
    %v1656 = vmax.f32 %v1652, %v1654
    %v1657 = vadd.f32 %v1655, %v1644
    %v1658 = vadd.f32 %v1656, %v1644
    %v1659 = vmax.f32 %v1657, 0.0
    %v1660 = vmax.f32 %v1658, 0.0
    %v1661 = vpack.c.bf16 %v1660, %v1659
    %1662 = vst [vmem:[#allocation2 + $0x8] sm:$0xff] %v1661
    %v1663 = vld [vmem:[%s0 + $0x8] sm:$0xff]
    %v1664 = vld [vmem:[%s0 + $0x38] sm:$0xff]
    %v1667 = vunpack.c.l.b16 %v1663
    %v1668 = vunpack.c.h.b16 %v1663
    %v1669 = vunpack.c.l.b16 %v1664
    %v1670 = vunpack.c.h.b16 %v1664
    %v1671 = vpack.c.b16 %v1669, %v1667
    %v1672 = vpack.c.b16 %v1670, %v1668
    %1675 = vmatprep.subr.bf16.mxu0 %v1208
    %1676 = vmatpush1.bf16.msra.mxu0 %v1207
    %1677 = vmatprep.subr.bf16.mxu0 %v1216
    %1678 = vmatpush1.bf16.msra.mxu0 %v1215
    %1679 = vmatprep.subr.bf16.mxu0 %v1224
    %1680 = vmatpush1.bf16.msra.mxu0 %v1223
    %1681 = vmatprep.subr.bf16.mxu0 %v1232
    %1682 = vmatpush1.bf16.msra.mxu0 %v1231
    %1683 = vmatprep.subr.bf16.mxu0 %v1240
    %1684 = vmatpush1.bf16.msra.mxu0 %v1239
    %1685 = vmatprep.subr.bf16.mxu0 %v1248
    %1686 = vmatpush1.bf16.msra.mxu0 %v1247
    %1687 = vmatprep.subr.bf16.mxu0 %v1256
    %1688 = vmatpush1.bf16.msra.mxu0 %v1255
    %1689 = vmatprep.subr.bf16.mxu0 %v1264
    %1690 = vmatpush1.bf16.msra.mxu0 %v1263
    %1691 = vmatprep.subr.bf16.mxu0 %v1272
    %1692 = vmatpush1.bf16.msra.mxu0 %v1271
    %1693 = vmatprep.subr.bf16.mxu0 %v1280
    %1694 = vmatpush1.bf16.msra.mxu0 %v1279
    %1695 = vmatprep.subr.bf16.mxu0 %v1288
    %1696 = vmatpush1.bf16.msra.mxu0 %v1287
    %1697 = vmatprep.subr.bf16.mxu0 %v1296
    %1698 = vmatpush1.bf16.msra.mxu0 %v1295
    %1699 = vmatprep.subr.bf16.mxu0 %v1304
    %1700 = vmatpush1.bf16.msra.mxu0 %v1303
    %1701 = vmatprep.subr.bf16.mxu0 %v1312
    %1702 = vmatpush1.bf16.msra.mxu0 %v1311
    %1703 = vmatprep.subr.bf16.mxu0 %v1320
    %1704 = vmatpush1.bf16.msra.mxu0 %v1319
    %1705 = vmatprep.subr.bf16.mxu0 %v1328
    %1706 = vmatpush1.bf16.msra.mxu0 %v1327
    %1707 = vmatprep.mubr.bf16.mxu0 %v1672
    %1708 = vmatmul.mubr.bf16.gmra.mrb[0].mxu0 %v1671
    %v1709 = vpop.f32.mrb[0].mxu0
    %v1710 = vadd.f32 0.0, %v1709
    %v1711 = vpop.f32.mrb[0].mxu0
    %v1712 = vadd.f32 0.0, %v1711
    %v1713 = vpop.f32.mrb[0].mxu0
    %v1714 = vadd.f32 0.0, %v1713
    %v1715 = vpop.f32.mrb[0].mxu0
    %v1716 = vadd.f32 0.0, %v1715
    %1717 = vdwg.mxu0
    %1718 = vmatprep.subr.bf16.mxu0 %v1210
    %1719 = vmatpush1.bf16.msra.mxu0 %v1209
    %1720 = vmatprep.subr.bf16.mxu0 %v1218
    %1721 = vmatpush1.bf16.msra.mxu0 %v1217
    %1722 = vmatprep.subr.bf16.mxu0 %v1226
    %1723 = vmatpush1.bf16.msra.mxu0 %v1225
    %1724 = vmatprep.subr.bf16.mxu0 %v1234
    %1725 = vmatpush1.bf16.msra.mxu0 %v1233
    %1726 = vmatprep.subr.bf16.mxu0 %v1242
    %1727 = vmatpush1.bf16.msra.mxu0 %v1241
    %1728 = vmatprep.subr.bf16.mxu0 %v1250
    %1729 = vmatpush1.bf16.msra.mxu0 %v1249
    %1730 = vmatprep.subr.bf16.mxu0 %v1258
    %1731 = vmatpush1.bf16.msra.mxu0 %v1257
    %1732 = vmatprep.subr.bf16.mxu0 %v1266
    %1733 = vmatpush1.bf16.msra.mxu0 %v1265
    %1734 = vmatprep.subr.bf16.mxu0 %v1274
    %1735 = vmatpush1.bf16.msra.mxu0 %v1273
    %1736 = vmatprep.subr.bf16.mxu0 %v1282
    %1737 = vmatpush1.bf16.msra.mxu0 %v1281
    %1738 = vmatprep.subr.bf16.mxu0 %v1290
    %1739 = vmatpush1.bf16.msra.mxu0 %v1289
    %1740 = vmatprep.subr.bf16.mxu0 %v1298
    %1741 = vmatpush1.bf16.msra.mxu0 %v1297
    %1742 = vmatprep.subr.bf16.mxu0 %v1306
    %1743 = vmatpush1.bf16.msra.mxu0 %v1305
    %1744 = vmatprep.subr.bf16.mxu0 %v1314
    %1745 = vmatpush1.bf16.msra.mxu0 %v1313
    %1746 = vmatprep.subr.bf16.mxu0 %v1322
    %1747 = vmatpush1.bf16.msra.mxu0 %v1321
    %1748 = vmatprep.subr.bf16.mxu0 %v1330
    %1749 = vmatpush1.bf16.msra.mxu0 %v1329
    %1750 = vmatprep.mubr.bf16.mxu0 %v1672
    %1751 = vmatmul.mubr.bf16.gmra.mrb[0].mxu0 %v1671
    %v1752 = vpop.f32.mrb[0].mxu0
    %v1753 = vadd.f32 0.0, %v1752
    %v1754 = vpop.f32.mrb[0].mxu0
    %v1755 = vadd.f32 0.0, %v1754
    %v1756 = vpop.f32.mrb[0].mxu0
    %v1757 = vadd.f32 0.0, %v1756
    %v1758 = vpop.f32.mrb[0].mxu0
    %v1759 = vadd.f32 0.0, %v1758
    %1760 = vdwg.mxu0
    %1761 = vmatprep.subr.bf16.mxu0 %v1212
    %1762 = vmatpush1.bf16.msra.mxu0 %v1211
    %1763 = vmatprep.subr.bf16.mxu0 %v1220
    %1764 = vmatpush1.bf16.msra.mxu0 %v1219
    %1765 = vmatprep.subr.bf16.mxu0 %v1228
    %1766 = vmatpush1.bf16.msra.mxu0 %v1227
    %1767 = vmatprep.subr.bf16.mxu0 %v1236
    %1768 = vmatpush1.bf16.msra.mxu0 %v1235
    %1769 = vmatprep.subr.bf16.mxu0 %v1244
    %1770 = vmatpush1.bf16.msra.mxu0 %v1243
    %1771 = vmatprep.subr.bf16.mxu0 %v1252
    %1772 = vmatpush1.bf16.msra.mxu0 %v1251
    %1773 = vmatprep.subr.bf16.mxu0 %v1260
    %1774 = vmatpush1.bf16.msra.mxu0 %v1259
    %1775 = vmatprep.subr.bf16.mxu0 %v1268
    %1776 = vmatpush1.bf16.msra.mxu0 %v1267
    %1777 = vmatprep.subr.bf16.mxu0 %v1276
    %1778 = vmatpush1.bf16.msra.mxu0 %v1275
    %1779 = vmatprep.subr.bf16.mxu0 %v1284
    %1780 = vmatpush1.bf16.msra.mxu0 %v1283
    %1781 = vmatprep.subr.bf16.mxu0 %v1292
    %1782 = vmatpush1.bf16.msra.mxu0 %v1291
    %1783 = vmatprep.subr.bf16.mxu0 %v1300
    %1784 = vmatpush1.bf16.msra.mxu0 %v1299
    %1785 = vmatprep.subr.bf16.mxu0 %v1308
    %1786 = vmatpush1.bf16.msra.mxu0 %v1307
    %1787 = vmatprep.subr.bf16.mxu0 %v1316
    %1788 = vmatpush1.bf16.msra.mxu0 %v1315
    %1789 = vmatprep.subr.bf16.mxu0 %v1324
    %1790 = vmatpush1.bf16.msra.mxu0 %v1323
    %1791 = vmatprep.subr.bf16.mxu0 %v1332
    %1792 = vmatpush1.bf16.msra.mxu0 %v1331
    %1793 = vmatprep.mubr.bf16.mxu0 %v1672
    %1794 = vmatmul.mubr.bf16.gmra.mrb[0].mxu0 %v1671
    %v1795 = vpop.f32.mrb[0].mxu0
    %v1796 = vadd.f32 0.0, %v1795
    %v1797 = vpop.f32.mrb[0].mxu0
    %v1798 = vadd.f32 0.0, %v1797
    %v1799 = vpop.f32.mrb[0].mxu0
    %v1800 = vadd.f32 0.0, %v1799
    %v1801 = vpop.f32.mrb[0].mxu0
    %v1802 = vadd.f32 0.0, %v1801
    %1803 = vdwg.mxu0
    %1804 = vmatprep.subr.bf16.mxu0 %v1214
    %1805 = vmatpush1.bf16.msra.mxu0 %v1213
    %1806 = vmatprep.subr.bf16.mxu0 %v1222
    %1807 = vmatpush1.bf16.msra.mxu0 %v1221
    %1808 = vmatprep.subr.bf16.mxu0 %v1230
    %1809 = vmatpush1.bf16.msra.mxu0 %v1229
    %1810 = vmatprep.subr.bf16.mxu0 %v1238
    %1811 = vmatpush1.bf16.msra.mxu0 %v1237
    %1812 = vmatprep.subr.bf16.mxu0 %v1246
    %1813 = vmatpush1.bf16.msra.mxu0 %v1245
    %1814 = vmatprep.subr.bf16.mxu0 %v1254
    %1815 = vmatpush1.bf16.msra.mxu0 %v1253
    %1816 = vmatprep.subr.bf16.mxu0 %v1262
    %1817 = vmatpush1.bf16.msra.mxu0 %v1261
    %1818 = vmatprep.subr.bf16.mxu0 %v1270
    %1819 = vmatpush1.bf16.msra.mxu0 %v1269
    %1820 = vmatprep.subr.bf16.mxu0 %v1278
    %1821 = vmatpush1.bf16.msra.mxu0 %v1277
    %1822 = vmatprep.subr.bf16.mxu0 %v1286
    %1823 = vmatpush1.bf16.msra.mxu0 %v1285
    %1824 = vmatprep.subr.bf16.mxu0 %v1294
    %1825 = vmatpush1.bf16.msra.mxu0 %v1293
    %1826 = vmatprep.subr.bf16.mxu0 %v1302
    %1827 = vmatpush1.bf16.msra.mxu0 %v1301
    %1828 = vmatprep.subr.bf16.mxu0 %v1310
    %1829 = vmatpush1.bf16.msra.mxu0 %v1309
    %1830 = vmatprep.subr.bf16.mxu0 %v1318
    %1831 = vmatpush1.bf16.msra.mxu0 %v1317
    %1832 = vmatprep.subr.bf16.mxu0 %v1326
    %1833 = vmatpush1.bf16.msra.mxu0 %v1325
    %1834 = vmatprep.subr.bf16.mxu0 %v1334
    %1835 = vmatpush1.bf16.msra.mxu0 %v1333
    %1836 = vmatprep.mubr.bf16.mxu0 %v1672
    %1837 = vmatmul.mubr.bf16.gmra.mrb[0].mxu0 %v1671
    %v1838 = vpop.f32.mrb[0].mxu0
    %v1839 = vadd.f32 0.0, %v1838
    %v1840 = vpop.f32.mrb[0].mxu0
    %v1841 = vadd.f32 0.0, %v1840
    %v1842 = vpop.f32.mrb[0].mxu0
    %v1843 = vadd.f32 0.0, %v1842
    %v1844 = vpop.f32.mrb[0].mxu0
    %v1845 = vadd.f32 0.0, %v1844
    %1846 = vdwg.mxu0
    %v1847 = vmax.f32 %v1710, %v1712
    %v1848 = vmax.f32 %v1714, %v1716
    %v1849 = vmax.f32 %v1753, %v1755
    %v1850 = vmax.f32 %v1757, %v1759
    %v1851 = vmax.f32 %v1847, %v1849
    %v1852 = vmax.f32 %v1848, %v1850
    %v1853 = vadd.f32 %v1851, %v1644
    %v1854 = vadd.f32 %v1852, %v1644
    %v1855 = vmax.f32 %v1853, 0.0
    %v1856 = vmax.f32 %v1854, 0.0
    %v1857 = vpack.c.bf16 %v1856, %v1855
    %1858 = vst [vmem:[#allocation2 + $0x10] sm:$0xff] %v1857
    %v1859 = vmax.f32 %v1796, %v1798
    %v1860 = vmax.f32 %v1800, %v1802
    %v1861 = vmax.f32 %v1839, %v1841
    %v1862 = vmax.f32 %v1843, %v1845
    %v1863 = vmax.f32 %v1859, %v1861
    %v1864 = vmax.f32 %v1860, %v1862
    %v1865 = vadd.f32 %v1863, %v1644
    %v1866 = vadd.f32 %v1864, %v1644
    %v1867 = vmax.f32 %v1865, 0.0
    %v1868 = vmax.f32 %v1866, 0.0
    %v1869 = vpack.c.bf16 %v1868, %v1867
    %1870 = vst [vmem:[#allocation2 + $0x18] sm:$0xff] %v1869
    %v1871 = vld [vmem:[%s0 + $0x10] sm:$0xff]
    %v1872 = vld [vmem:[%s0 + $0x40] sm:$0xff]
    %v1875 = vunpack.c.l.b16 %v1871
    %v1876 = vunpack.c.h.b16 %v1871
    %v1877 = vunpack.c.l.b16 %v1872
    %v1878 = vunpack.c.h.b16 %v1872
    %v1879 = vpack.c.b16 %v1877, %v1875
    %v1880 = vpack.c.b16 %v1878, %v1876
    %1883 = vmatprep.subr.bf16.mxu0 %v1208
    %1884 = vmatpush1.bf16.msra.mxu0 %v1207
    %1885 = vmatprep.subr.bf16.mxu0 %v1216
    %1886 = vmatpush1.bf16.msra.mxu0 %v1215
    %1887 = vmatprep.subr.bf16.mxu0 %v1224
    %1888 = vmatpush1.bf16.msra.mxu0 %v1223
    %1889 = vmatprep.subr.bf16.mxu0 %v1232
    %1890 = vmatpush1.bf16.msra.mxu0 %v1231
    %1891 = vmatprep.subr.bf16.mxu0 %v1240
    %1892 = vmatpush1.bf16.msra.mxu0 %v1239
    %1893 = vmatprep.subr.bf16.mxu0 %v1248
    %1894 = vmatpush1.bf16.msra.mxu0 %v1247
    %1895 = vmatprep.subr.bf16.mxu0 %v1256
    %1896 = vmatpush1.bf16.msra.mxu0 %v1255
    %1897 = vmatprep.subr.bf16.mxu0 %v1264
    %1898 = vmatpush1.bf16.msra.mxu0 %v1263
    %1899 = vmatprep.subr.bf16.mxu0 %v1272
    %1900 = vmatpush1.bf16.msra.mxu0 %v1271
    %1901 = vmatprep.subr.bf16.mxu0 %v1280
    %1902 = vmatpush1.bf16.msra.mxu0 %v1279
    %1903 = vmatprep.subr.bf16.mxu0 %v1288
    %1904 = vmatpush1.bf16.msra.mxu0 %v1287
    %1905 = vmatprep.subr.bf16.mxu0 %v1296
    %1906 = vmatpush1.bf16.msra.mxu0 %v1295
    %1907 = vmatprep.subr.bf16.mxu0 %v1304
    %1908 = vmatpush1.bf16.msra.mxu0 %v1303
    %1909 = vmatprep.subr.bf16.mxu0 %v1312
    %1910 = vmatpush1.bf16.msra.mxu0 %v1311
    %1911 = vmatprep.subr.bf16.mxu0 %v1320
    %1912 = vmatpush1.bf16.msra.mxu0 %v1319
    %1913 = vmatprep.subr.bf16.mxu0 %v1328
    %1914 = vmatpush1.bf16.msra.mxu0 %v1327
    %1915 = vmatprep.mubr.bf16.mxu0 %v1880
    %1916 = vmatmul.mubr.bf16.gmra.mrb[0].mxu0 %v1879
    %v1917 = vpop.f32.mrb[0].mxu0
    %v1918 = vadd.f32 0.0, %v1917
    %v1919 = vpop.f32.mrb[0].mxu0
    %v1920 = vadd.f32 0.0, %v1919
    %v1921 = vpop.f32.mrb[0].mxu0
    %v1922 = vadd.f32 0.0, %v1921
    %v1923 = vpop.f32.mrb[0].mxu0
    %v1924 = vadd.f32 0.0, %v1923
    %1925 = vdwg.mxu0
    %1926 = vmatprep.subr.bf16.mxu0 %v1210
    %1927 = vmatpush1.bf16.msra.mxu0 %v1209
    %1928 = vmatprep.subr.bf16.mxu0 %v1218
    %1929 = vmatpush1.bf16.msra.mxu0 %v1217
    %1930 = vmatprep.subr.bf16.mxu0 %v1226
    %1931 = vmatpush1.bf16.msra.mxu0 %v1225
    %1932 = vmatprep.subr.bf16.mxu0 %v1234
    %1933 = vmatpush1.bf16.msra.mxu0 %v1233
    %1934 = vmatprep.subr.bf16.mxu0 %v1242
    %1935 = vmatpush1.bf16.msra.mxu0 %v1241
    %1936 = vmatprep.subr.bf16.mxu0 %v1250
    %1937 = vmatpush1.bf16.msra.mxu0 %v1249
    %1938 = vmatprep.subr.bf16.mxu0 %v1258
    %1939 = vmatpush1.bf16.msra.mxu0 %v1257
    %1940 = vmatprep.subr.bf16.mxu0 %v1266
    %1941 = vmatpush1.bf16.msra.mxu0 %v1265
    %1942 = vmatprep.subr.bf16.mxu0 %v1274
    %1943 = vmatpush1.bf16.msra.mxu0 %v1273
    %1944 = vmatprep.subr.bf16.mxu0 %v1282
    %1945 = vmatpush1.bf16.msra.mxu0 %v1281
    %1946 = vmatprep.subr.bf16.mxu0 %v1290
    %1947 = vmatpush1.bf16.msra.mxu0 %v1289
    %1948 = vmatprep.subr.bf16.mxu0 %v1298
    %1949 = vmatpush1.bf16.msra.mxu0 %v1297
    %1950 = vmatprep.subr.bf16.mxu0 %v1306
    %1951 = vmatpush1.bf16.msra.mxu0 %v1305
    %1952 = vmatprep.subr.bf16.mxu0 %v1314
    %1953 = vmatpush1.bf16.msra.mxu0 %v1313
    %1954 = vmatprep.subr.bf16.mxu0 %v1322
    %1955 = vmatpush1.bf16.msra.mxu0 %v1321
    %1956 = vmatprep.subr.bf16.mxu0 %v1330
    %1957 = vmatpush1.bf16.msra.mxu0 %v1329
    %1958 = vmatprep.mubr.bf16.mxu0 %v1880
    %1959 = vmatmul.mubr.bf16.gmra.mrb[0].mxu0 %v1879
    %v1960 = vpop.f32.mrb[0].mxu0
    %v1961 = vadd.f32 0.0, %v1960
    %v1962 = vpop.f32.mrb[0].mxu0
    %v1963 = vadd.f32 0.0, %v1962
    %v1964 = vpop.f32.mrb[0].mxu0
    %v1965 = vadd.f32 0.0, %v1964
    %v1966 = vpop.f32.mrb[0].mxu0
    %v1967 = vadd.f32 0.0, %v1966
    %1968 = vdwg.mxu0
    %1969 = vmatprep.subr.bf16.mxu0 %v1212
    %1970 = vmatpush1.bf16.msra.mxu0 %v1211
    %1971 = vmatprep.subr.bf16.mxu0 %v1220
    %1972 = vmatpush1.bf16.msra.mxu0 %v1219
    %1973 = vmatprep.subr.bf16.mxu0 %v1228
    %1974 = vmatpush1.bf16.msra.mxu0 %v1227
    %1975 = vmatprep.subr.bf16.mxu0 %v1236
    %1976 = vmatpush1.bf16.msra.mxu0 %v1235
    %1977 = vmatprep.subr.bf16.mxu0 %v1244
    %1978 = vmatpush1.bf16.msra.mxu0 %v1243
    %1979 = vmatprep.subr.bf16.mxu0 %v1252
    %1980 = vmatpush1.bf16.msra.mxu0 %v1251
    %1981 = vmatprep.subr.bf16.mxu0 %v1260
    %1982 = vmatpush1.bf16.msra.mxu0 %v1259
    %1983 = vmatprep.subr.bf16.mxu0 %v1268
    %1984 = vmatpush1.bf16.msra.mxu0 %v1267
    %1985 = vmatprep.subr.bf16.mxu0 %v1276
    %1986 = vmatpush1.bf16.msra.mxu0 %v1275
    %1987 = vmatprep.subr.bf16.mxu0 %v1284
    %1988 = vmatpush1.bf16.msra.mxu0 %v1283
    %1989 = vmatprep.subr.bf16.mxu0 %v1292
    %1990 = vmatpush1.bf16.msra.mxu0 %v1291
    %1991 = vmatprep.subr.bf16.mxu0 %v1300
    %1992 = vmatpush1.bf16.msra.mxu0 %v1299
    %1993 = vmatprep.subr.bf16.mxu0 %v1308
    %1994 = vmatpush1.bf16.msra.mxu0 %v1307
    %1995 = vmatprep.subr.bf16.mxu0 %v1316
    %1996 = vmatpush1.bf16.msra.mxu0 %v1315
    %1997 = vmatprep.subr.bf16.mxu0 %v1324
    %1998 = vmatpush1.bf16.msra.mxu0 %v1323
    %1999 = vmatprep.subr.bf16.mxu0 %v1332
    %2000 = vmatpush1.bf16.msra.mxu0 %v1331
    %2001 = vmatprep.mubr.bf16.mxu0 %v1880
    %2002 = vmatmul.mubr.bf16.gmra.mrb[0].mxu0 %v1879
    %v2003 = vpop.f32.mrb[0].mxu0
    %v2004 = vadd.f32 0.0, %v2003
    %v2005 = vpop.f32.mrb[0].mxu0
    %v2006 = vadd.f32 0.0, %v2005
    %v2007 = vpop.f32.mrb[0].mxu0
    %v2008 = vadd.f32 0.0, %v2007
    %v2009 = vpop.f32.mrb[0].mxu0
    %v2010 = vadd.f32 0.0, %v2009
    %2011 = vdwg.mxu0
    %2012 = vmatprep.subr.bf16.mxu0 %v1214
    %2013 = vmatpush1.bf16.msra.mxu0 %v1213
    %2014 = vmatprep.subr.bf16.mxu0 %v1222
    %2015 = vmatpush1.bf16.msra.mxu0 %v1221
    %2016 = vmatprep.subr.bf16.mxu0 %v1230
    %2017 = vmatpush1.bf16.msra.mxu0 %v1229
    %2018 = vmatprep.subr.bf16.mxu0 %v1238
    %2019 = vmatpush1.bf16.msra.mxu0 %v1237
    %2020 = vmatprep.subr.bf16.mxu0 %v1246
    %2021 = vmatpush1.bf16.msra.mxu0 %v1245
    %2022 = vmatprep.subr.bf16.mxu0 %v1254
    %2023 = vmatpush1.bf16.msra.mxu0 %v1253
    %2024 = vmatprep.subr.bf16.mxu0 %v1262
    %2025 = vmatpush1.bf16.msra.mxu0 %v1261
    %2026 = vmatprep.subr.bf16.mxu0 %v1270
    %2027 = vmatpush1.bf16.msra.mxu0 %v1269
    %2028 = vmatprep.subr.bf16.mxu0 %v1278
    %2029 = vmatpush1.bf16.msra.mxu0 %v1277
    %2030 = vmatprep.subr.bf16.mxu0 %v1286
    %2031 = vmatpush1.bf16.msra.mxu0 %v1285
    %2032 = vmatprep.subr.bf16.mxu0 %v1294
    %2033 = vmatpush1.bf16.msra.mxu0 %v1293
    %2034 = vmatprep.subr.bf16.mxu0 %v1302
    %2035 = vmatpush1.bf16.msra.mxu0 %v1301
    %2036 = vmatprep.subr.bf16.mxu0 %v1310
    %2037 = vmatpush1.bf16.msra.mxu0 %v1309
    %2038 = vmatprep.subr.bf16.mxu0 %v1318
    %2039 = vmatpush1.bf16.msra.mxu0 %v1317
    %2040 = vmatprep.subr.bf16.mxu0 %v1326
    %2041 = vmatpush1.bf16.msra.mxu0 %v1325
    %2042 = vmatprep.subr.bf16.mxu0 %v1334
    %2043 = vmatpush1.bf16.msra.mxu0 %v1333
    %2044 = vmatprep.mubr.bf16.mxu0 %v1880
    %2045 = vmatmul.mubr.bf16.gmra.mrb[0].mxu0 %v1879
    %v2046 = vpop.f32.mrb[0].mxu0
    %v2047 = vadd.f32 0.0, %v2046
    %v2048 = vpop.f32.mrb[0].mxu0
    %v2049 = vadd.f32 0.0, %v2048
    %v2050 = vpop.f32.mrb[0].mxu0
    %v2051 = vadd.f32 0.0, %v2050
    %v2052 = vpop.f32.mrb[0].mxu0
    %v2053 = vadd.f32 0.0, %v2052
    %2054 = vdwg.mxu0
    %v2055 = vmax.f32 %v1918, %v1920
    %v2056 = vmax.f32 %v1922, %v1924
    %v2057 = vmax.f32 %v1961, %v1963
    %v2058 = vmax.f32 %v1965, %v1967
    %v2059 = vmax.f32 %v2055, %v2057
    %v2060 = vmax.f32 %v2056, %v2058
    %v2061 = vadd.f32 %v2059, %v1644
    %v2062 = vadd.f32 %v2060, %v1644
    %v2063 = vmax.f32 %v2061, 0.0
    %v2064 = vmax.f32 %v2062, 0.0
    %v2065 = vpack.c.bf16 %v2064, %v2063
    %2066 = vst [vmem:[#allocation2 + $0x20] sm:$0xff] %v2065
    %v2067 = vmax.f32 %v2004, %v2006
    %v2068 = vmax.f32 %v2008, %v2010
    %v2069 = vmax.f32 %v2047, %v2049
    %v2070 = vmax.f32 %v2051, %v2053
    %v2071 = vmax.f32 %v2067, %v2069
    %v2072 = vmax.f32 %v2068, %v2070
    %v2073 = vadd.f32 %v2071, %v1644
    %v2074 = vadd.f32 %v2072, %v1644
    %v2075 = vmax.f32 %v2073, 0.0
    %v2076 = vmax.f32 %v2074, 0.0
    %v2077 = vpack.c.bf16 %v2076, %v2075
    %2078 = vst [vmem:[#allocation2 + $0x28] sm:$0xff] %v2077
    %v2079 = vld [vmem:[%s0 + $0x18] sm:$0xff]
    %v2080 = vld [vmem:[%s0 + $0x48] sm:$0xff]
    %v2083 = vunpack.c.l.b16 %v2079
    %v2084 = vunpack.c.h.b16 %v2079
    %v2085 = vunpack.c.l.b16 %v2080
    %v2086 = vunpack.c.h.b16 %v2080
    %v2087 = vpack.c.b16 %v2085, %v2083
    %v2088 = vpack.c.b16 %v2086, %v2084
    %2091 = vmatprep.subr.bf16.mxu0 %v1208
    %2092 = vmatpush1.bf16.msra.mxu0 %v1207
    %2093 = vmatprep.subr.bf16.mxu0 %v1216
    %2094 = vmatpush1.bf16.msra.mxu0 %v1215
    %2095 = vmatprep.subr.bf16.mxu0 %v1224
    %2096 = vmatpush1.bf16.msra.mxu0 %v1223
    %2097 = vmatprep.subr.bf16.mxu0 %v1232
    %2098 = vmatpush1.bf16.msra.mxu0 %v1231
    %2099 = vmatprep.subr.bf16.mxu0 %v1240
    %2100 = vmatpush1.bf16.msra.mxu0 %v1239
    %2101 = vmatprep.subr.bf16.mxu0 %v1248
    %2102 = vmatpush1.bf16.msra.mxu0 %v1247
    %2103 = vmatprep.subr.bf16.mxu0 %v1256
    %2104 = vmatpush1.bf16.msra.mxu0 %v1255
    %2105 = vmatprep.subr.bf16.mxu0 %v1264
    %2106 = vmatpush1.bf16.msra.mxu0 %v1263
    %2107 = vmatprep.subr.bf16.mxu0 %v1272
    %2108 = vmatpush1.bf16.msra.mxu0 %v1271
    %2109 = vmatprep.subr.bf16.mxu0 %v1280
    %2110 = vmatpush1.bf16.msra.mxu0 %v1279
    %2111 = vmatprep.subr.bf16.mxu0 %v1288
    %2112 = vmatpush1.bf16.msra.mxu0 %v1287
    %2113 = vmatprep.subr.bf16.mxu0 %v1296
    %2114 = vmatpush1.bf16.msra.mxu0 %v1295
    %2115 = vmatprep.subr.bf16.mxu0 %v1304
    %2116 = vmatpush1.bf16.msra.mxu0 %v1303
    %2117 = vmatprep.subr.bf16.mxu0 %v1312
    %2118 = vmatpush1.bf16.msra.mxu0 %v1311
    %2119 = vmatprep.subr.bf16.mxu0 %v1320
    %2120 = vmatpush1.bf16.msra.mxu0 %v1319
    %2121 = vmatprep.subr.bf16.mxu0 %v1328
    %2122 = vmatpush1.bf16.msra.mxu0 %v1327
    %2123 = vmatprep.mubr.bf16.mxu0 %v2088
    %2124 = vmatmul.mubr.bf16.gmra.mrb[0].mxu0 %v2087
    %v2125 = vpop.f32.mrb[0].mxu0
    %v2126 = vadd.f32 0.0, %v2125
    %v2127 = vpop.f32.mrb[0].mxu0
    %v2128 = vadd.f32 0.0, %v2127
    %v2129 = vpop.f32.mrb[0].mxu0
    %v2130 = vadd.f32 0.0, %v2129
    %v2131 = vpop.f32.mrb[0].mxu0
    %v2132 = vadd.f32 0.0, %v2131
    %2133 = vdwg.mxu0
    %2134 = vmatprep.subr.bf16.mxu0 %v1210
    %2135 = vmatpush1.bf16.msra.mxu0 %v1209
    %2136 = vmatprep.subr.bf16.mxu0 %v1218
    %2137 = vmatpush1.bf16.msra.mxu0 %v1217
    %2138 = vmatprep.subr.bf16.mxu0 %v1226
    %2139 = vmatpush1.bf16.msra.mxu0 %v1225
    %2140 = vmatprep.subr.bf16.mxu0 %v1234
    %2141 = vmatpush1.bf16.msra.mxu0 %v1233
    %2142 = vmatprep.subr.bf16.mxu0 %v1242
    %2143 = vmatpush1.bf16.msra.mxu0 %v1241
    %2144 = vmatprep.subr.bf16.mxu0 %v1250
    %2145 = vmatpush1.bf16.msra.mxu0 %v1249
    %2146 = vmatprep.subr.bf16.mxu0 %v1258
    %2147 = vmatpush1.bf16.msra.mxu0 %v1257
    %2148 = vmatprep.subr.bf16.mxu0 %v1266
    %2149 = vmatpush1.bf16.msra.mxu0 %v1265
    %2150 = vmatprep.subr.bf16.mxu0 %v1274
    %2151 = vmatpush1.bf16.msra.mxu0 %v1273
    %2152 = vmatprep.subr.bf16.mxu0 %v1282
    %2153 = vmatpush1.bf16.msra.mxu0 %v1281
    %2154 = vmatprep.subr.bf16.mxu0 %v1290
    %2155 = vmatpush1.bf16.msra.mxu0 %v1289
    %2156 = vmatprep.subr.bf16.mxu0 %v1298
    %2157 = vmatpush1.bf16.msra.mxu0 %v1297
    %2158 = vmatprep.subr.bf16.mxu0 %v1306
    %2159 = vmatpush1.bf16.msra.mxu0 %v1305
    %2160 = vmatprep.subr.bf16.mxu0 %v1314
    %2161 = vmatpush1.bf16.msra.mxu0 %v1313
    %2162 = vmatprep.subr.bf16.mxu0 %v1322
    %2163 = vmatpush1.bf16.msra.mxu0 %v1321
    %2164 = vmatprep.subr.bf16.mxu0 %v1330
    %2165 = vmatpush1.bf16.msra.mxu0 %v1329
    %2166 = vmatprep.mubr.bf16.mxu0 %v2088
    %2167 = vmatmul.mubr.bf16.gmra.mrb[0].mxu0 %v2087
    %v2168 = vpop.f32.mrb[0].mxu0
    %v2169 = vadd.f32 0.0, %v2168
    %v2170 = vpop.f32.mrb[0].mxu0
    %v2171 = vadd.f32 0.0, %v2170
    %v2172 = vpop.f32.mrb[0].mxu0
    %v2173 = vadd.f32 0.0, %v2172
    %v2174 = vpop.f32.mrb[0].mxu0
    %v2175 = vadd.f32 0.0, %v2174
    %2176 = vdwg.mxu0
    %2177 = vmatprep.subr.bf16.mxu0 %v1212
    %2178 = vmatpush1.bf16.msra.mxu0 %v1211
    %2179 = vmatprep.subr.bf16.mxu0 %v1220
    %2180 = vmatpush1.bf16.msra.mxu0 %v1219
    %2181 = vmatprep.subr.bf16.mxu0 %v1228
    %2182 = vmatpush1.bf16.msra.mxu0 %v1227
    %2183 = vmatprep.subr.bf16.mxu0 %v1236
    %2184 = vmatpush1.bf16.msra.mxu0 %v1235
    %2185 = vmatprep.subr.bf16.mxu0 %v1244
    %2186 = vmatpush1.bf16.msra.mxu0 %v1243
    %2187 = vmatprep.subr.bf16.mxu0 %v1252
    %2188 = vmatpush1.bf16.msra.mxu0 %v1251
    %2189 = vmatprep.subr.bf16.mxu0 %v1260
    %2190 = vmatpush1.bf16.msra.mxu0 %v1259
    %2191 = vmatprep.subr.bf16.mxu0 %v1268
    %2192 = vmatpush1.bf16.msra.mxu0 %v1267
    %2193 = vmatprep.subr.bf16.mxu0 %v1276
    %2194 = vmatpush1.bf16.msra.mxu0 %v1275
    %2195 = vmatprep.subr.bf16.mxu0 %v1284
    %2196 = vmatpush1.bf16.msra.mxu0 %v1283
    %2197 = vmatprep.subr.bf16.mxu0 %v1292
    %2198 = vmatpush1.bf16.msra.mxu0 %v1291
    %2199 = vmatprep.subr.bf16.mxu0 %v1300
    %2200 = vmatpush1.bf16.msra.mxu0 %v1299
    %2201 = vmatprep.subr.bf16.mxu0 %v1308
    %2202 = vmatpush1.bf16.msra.mxu0 %v1307
    %2203 = vmatprep.subr.bf16.mxu0 %v1316
    %2204 = vmatpush1.bf16.msra.mxu0 %v1315
    %2205 = vmatprep.subr.bf16.mxu0 %v1324
    %2206 = vmatpush1.bf16.msra.mxu0 %v1323
    %2207 = vmatprep.subr.bf16.mxu0 %v1332
    %2208 = vmatpush1.bf16.msra.mxu0 %v1331
    %2209 = vmatprep.mubr.bf16.mxu0 %v2088
    %2210 = vmatmul.mubr.bf16.gmra.mrb[0].mxu0 %v2087
    %v2211 = vpop.f32.mrb[0].mxu0
    %v2212 = vadd.f32 0.0, %v2211
    %v2213 = vpop.f32.mrb[0].mxu0
    %v2214 = vadd.f32 0.0, %v2213
    %v2215 = vpop.f32.mrb[0].mxu0
    %v2216 = vadd.f32 0.0, %v2215
    %v2217 = vpop.f32.mrb[0].mxu0
    %v2218 = vadd.f32 0.0, %v2217
    %2219 = vdwg.mxu0
    %2220 = vmatprep.subr.bf16.mxu0 %v1214
    %2221 = vmatpush1.bf16.msra.mxu0 %v1213
    %2222 = vmatprep.subr.bf16.mxu0 %v1222
    %2223 = vmatpush1.bf16.msra.mxu0 %v1221
    %2224 = vmatprep.subr.bf16.mxu0 %v1230
    %2225 = vmatpush1.bf16.msra.mxu0 %v1229
    %2226 = vmatprep.subr.bf16.mxu0 %v1238
    %2227 = vmatpush1.bf16.msra.mxu0 %v1237
    %2228 = vmatprep.subr.bf16.mxu0 %v1246
    %2229 = vmatpush1.bf16.msra.mxu0 %v1245
    %2230 = vmatprep.subr.bf16.mxu0 %v1254
    %2231 = vmatpush1.bf16.msra.mxu0 %v1253
    %2232 = vmatprep.subr.bf16.mxu0 %v1262
    %2233 = vmatpush1.bf16.msra.mxu0 %v1261
    %2234 = vmatprep.subr.bf16.mxu0 %v1270
    %2235 = vmatpush1.bf16.msra.mxu0 %v1269
    %2236 = vmatprep.subr.bf16.mxu0 %v1278
    %2237 = vmatpush1.bf16.msra.mxu0 %v1277
    %2238 = vmatprep.subr.bf16.mxu0 %v1286
    %2239 = vmatpush1.bf16.msra.mxu0 %v1285
    %2240 = vmatprep.subr.bf16.mxu0 %v1294
    %2241 = vmatpush1.bf16.msra.mxu0 %v1293
    %2242 = vmatprep.subr.bf16.mxu0 %v1302
    %2243 = vmatpush1.bf16.msra.mxu0 %v1301
    %2244 = vmatprep.subr.bf16.mxu0 %v1310
    %2245 = vmatpush1.bf16.msra.mxu0 %v1309
    %2246 = vmatprep.subr.bf16.mxu0 %v1318
    %2247 = vmatpush1.bf16.msra.mxu0 %v1317
    %2248 = vmatprep.subr.bf16.mxu0 %v1326
    %2249 = vmatpush1.bf16.msra.mxu0 %v1325
    %2250 = vmatprep.subr.bf16.mxu0 %v1334
    %2251 = vmatpush1.bf16.msra.mxu0 %v1333
    %2252 = vmatprep.mubr.bf16.mxu0 %v2088
    %2253 = vmatmul.mubr.bf16.gmra.mrb[0].mxu0 %v2087
    %v2254 = vpop.f32.mrb[0].mxu0
    %v2255 = vadd.f32 0.0, %v2254
    %v2256 = vpop.f32.mrb[0].mxu0
    %v2257 = vadd.f32 0.0, %v2256
    %v2258 = vpop.f32.mrb[0].mxu0
    %v2259 = vadd.f32 0.0, %v2258
    %v2260 = vpop.f32.mrb[0].mxu0
    %v2261 = vadd.f32 0.0, %v2260
    %2262 = vdwg.mxu0
    %v2263 = vmax.f32 %v2126, %v2128
    %v2264 = vmax.f32 %v2130, %v2132
    %v2265 = vmax.f32 %v2169, %v2171
    %v2266 = vmax.f32 %v2173, %v2175
    %v2267 = vmax.f32 %v2263, %v2265
    %v2268 = vmax.f32 %v2264, %v2266
    %v2269 = vadd.f32 %v2267, %v1644
    %v2270 = vadd.f32 %v2268, %v1644
    %v2271 = vmax.f32 %v2269, 0.0
    %v2272 = vmax.f32 %v2270, 0.0
    %v2273 = vpack.c.bf16 %v2272, %v2271
    %2274 = vst [vmem:[#allocation2 + $0x30] sm:$0xff] %v2273
    %v2275 = vmax.f32 %v2212, %v2214
    %v2276 = vmax.f32 %v2216, %v2218
    %v2277 = vmax.f32 %v2255, %v2257
    %v2278 = vmax.f32 %v2259, %v2261
    %v2279 = vmax.f32 %v2275, %v2277
    %v2280 = vmax.f32 %v2276, %v2278
    %v2281 = vadd.f32 %v2279, %v1644
    %v2282 = vadd.f32 %v2280, %v1644
    %v2283 = vmax.f32 %v2281, 0.0
    %v2284 = vmax.f32 %v2282, 0.0
    %v2285 = vpack.c.bf16 %v2284, %v2283
    %2286 = vst [vmem:[#allocation2 + $0x38] sm:$0xff] %v2285
    %v2287 = vld [vmem:[%s0 + $0x20] sm:$0xff]
    %v2288 = vld [vmem:[%s0 + $0x50] sm:$0xff]
    %v2291 = vunpack.c.l.b16 %v2287
    %v2292 = vunpack.c.h.b16 %v2287
    %v2293 = vunpack.c.l.b16 %v2288
    %v2294 = vunpack.c.h.b16 %v2288
    %v2295 = vpack.c.b16 %v2293, %v2291
    %v2296 = vpack.c.b16 %v2294, %v2292
    %2299 = vmatprep.subr.bf16.mxu0 %v1208
    %2300 = vmatpush1.bf16.msra.mxu0 %v1207
    %2301 = vmatprep.subr.bf16.mxu0 %v1216
    %2302 = vmatpush1.bf16.msra.mxu0 %v1215
    %2303 = vmatprep.subr.bf16.mxu0 %v1224
    %2304 = vmatpush1.bf16.msra.mxu0 %v1223
    %2305 = vmatprep.subr.bf16.mxu0 %v1232
    %2306 = vmatpush1.bf16.msra.mxu0 %v1231
    %2307 = vmatprep.subr.bf16.mxu0 %v1240
    %2308 = vmatpush1.bf16.msra.mxu0 %v1239
    %2309 = vmatprep.subr.bf16.mxu0 %v1248
    %2310 = vmatpush1.bf16.msra.mxu0 %v1247
    %2311 = vmatprep.subr.bf16.mxu0 %v1256
    %2312 = vmatpush1.bf16.msra.mxu0 %v1255
    %2313 = vmatprep.subr.bf16.mxu0 %v1264
    %2314 = vmatpush1.bf16.msra.mxu0 %v1263
    %2315 = vmatprep.subr.bf16.mxu0 %v1272
    %2316 = vmatpush1.bf16.msra.mxu0 %v1271
    %2317 = vmatprep.subr.bf16.mxu0 %v1280
    %2318 = vmatpush1.bf16.msra.mxu0 %v1279
    %2319 = vmatprep.subr.bf16.mxu0 %v1288
    %2320 = vmatpush1.bf16.msra.mxu0 %v1287
    %2321 = vmatprep.subr.bf16.mxu0 %v1296
    %2322 = vmatpush1.bf16.msra.mxu0 %v1295
    %2323 = vmatprep.subr.bf16.mxu0 %v1304
    %2324 = vmatpush1.bf16.msra.mxu0 %v1303
    %2325 = vmatprep.subr.bf16.mxu0 %v1312
    %2326 = vmatpush1.bf16.msra.mxu0 %v1311
    %2327 = vmatprep.subr.bf16.mxu0 %v1320
    %2328 = vmatpush1.bf16.msra.mxu0 %v1319
    %2329 = vmatprep.subr.bf16.mxu0 %v1328
    %2330 = vmatpush1.bf16.msra.mxu0 %v1327
    %2331 = vmatprep.mubr.bf16.mxu0 %v2296
    %2332 = vmatmul.mubr.bf16.gmra.mrb[0].mxu0 %v2295
    %v2333 = vpop.f32.mrb[0].mxu0
    %v2334 = vadd.f32 0.0, %v2333
    %v2335 = vpop.f32.mrb[0].mxu0
    %v2336 = vadd.f32 0.0, %v2335
    %v2337 = vpop.f32.mrb[0].mxu0
    %v2338 = vadd.f32 0.0, %v2337
    %v2339 = vpop.f32.mrb[0].mxu0
    %v2340 = vadd.f32 0.0, %v2339
    %2341 = vdwg.mxu0
    %2342 = vmatprep.subr.bf16.mxu0 %v1210
    %2343 = vmatpush1.bf16.msra.mxu0 %v1209
    %2344 = vmatprep.subr.bf16.mxu0 %v1218
    %2345 = vmatpush1.bf16.msra.mxu0 %v1217
    %2346 = vmatprep.subr.bf16.mxu0 %v1226
    %2347 = vmatpush1.bf16.msra.mxu0 %v1225
    %2348 = vmatprep.subr.bf16.mxu0 %v1234
    %2349 = vmatpush1.bf16.msra.mxu0 %v1233
    %2350 = vmatprep.subr.bf16.mxu0 %v1242
    %2351 = vmatpush1.bf16.msra.mxu0 %v1241
    %2352 = vmatprep.subr.bf16.mxu0 %v1250
    %2353 = vmatpush1.bf16.msra.mxu0 %v1249
    %2354 = vmatprep.subr.bf16.mxu0 %v1258
    %2355 = vmatpush1.bf16.msra.mxu0 %v1257
    %2356 = vmatprep.subr.bf16.mxu0 %v1266
    %2357 = vmatpush1.bf16.msra.mxu0 %v1265
    %2358 = vmatprep.subr.bf16.mxu0 %v1274
    %2359 = vmatpush1.bf16.msra.mxu0 %v1273
    %2360 = vmatprep.subr.bf16.mxu0 %v1282
    %2361 = vmatpush1.bf16.msra.mxu0 %v1281
    %2362 = vmatprep.subr.bf16.mxu0 %v1290
    %2363 = vmatpush1.bf16.msra.mxu0 %v1289
    %2364 = vmatprep.subr.bf16.mxu0 %v1298
    %2365 = vmatpush1.bf16.msra.mxu0 %v1297
    %2366 = vmatprep.subr.bf16.mxu0 %v1306
    %2367 = vmatpush1.bf16.msra.mxu0 %v1305
    %2368 = vmatprep.subr.bf16.mxu0 %v1314
    %2369 = vmatpush1.bf16.msra.mxu0 %v1313
    %2370 = vmatprep.subr.bf16.mxu0 %v1322
    %2371 = vmatpush1.bf16.msra.mxu0 %v1321
    %2372 = vmatprep.subr.bf16.mxu0 %v1330
    %2373 = vmatpush1.bf16.msra.mxu0 %v1329
    %2374 = vmatprep.mubr.bf16.mxu0 %v2296
    %2375 = vmatmul.mubr.bf16.gmra.mrb[0].mxu0 %v2295
    %v2376 = vpop.f32.mrb[0].mxu0
    %v2377 = vadd.f32 0.0, %v2376
    %v2378 = vpop.f32.mrb[0].mxu0
    %v2379 = vadd.f32 0.0, %v2378
    %v2380 = vpop.f32.mrb[0].mxu0
    %v2381 = vadd.f32 0.0, %v2380
    %v2382 = vpop.f32.mrb[0].mxu0
    %v2383 = vadd.f32 0.0, %v2382
    %2384 = vdwg.mxu0
    %2385 = vmatprep.subr.bf16.mxu0 %v1212
    %2386 = vmatpush1.bf16.msra.mxu0 %v1211
    %2387 = vmatprep.subr.bf16.mxu0 %v1220
    %2388 = vmatpush1.bf16.msra.mxu0 %v1219
    %2389 = vmatprep.subr.bf16.mxu0 %v1228
    %2390 = vmatpush1.bf16.msra.mxu0 %v1227
    %2391 = vmatprep.subr.bf16.mxu0 %v1236
    %2392 = vmatpush1.bf16.msra.mxu0 %v1235
    %2393 = vmatprep.subr.bf16.mxu0 %v1244
    %2394 = vmatpush1.bf16.msra.mxu0 %v1243
    %2395 = vmatprep.subr.bf16.mxu0 %v1252
    %2396 = vmatpush1.bf16.msra.mxu0 %v1251
    %2397 = vmatprep.subr.bf16.mxu0 %v1260
    %2398 = vmatpush1.bf16.msra.mxu0 %v1259
    %2399 = vmatprep.subr.bf16.mxu0 %v1268
    %2400 = vmatpush1.bf16.msra.mxu0 %v1267
    %2401 = vmatprep.subr.bf16.mxu0 %v1276
    %2402 = vmatpush1.bf16.msra.mxu0 %v1275
    %2403 = vmatprep.subr.bf16.mxu0 %v1284
    %2404 = vmatpush1.bf16.msra.mxu0 %v1283
    %2405 = vmatprep.subr.bf16.mxu0 %v1292
    %2406 = vmatpush1.bf16.msra.mxu0 %v1291
    %2407 = vmatprep.subr.bf16.mxu0 %v1300
    %2408 = vmatpush1.bf16.msra.mxu0 %v1299
    %2409 = vmatprep.subr.bf16.mxu0 %v1308
    %2410 = vmatpush1.bf16.msra.mxu0 %v1307
    %2411 = vmatprep.subr.bf16.mxu0 %v1316
    %2412 = vmatpush1.bf16.msra.mxu0 %v1315
    %2413 = vmatprep.subr.bf16.mxu0 %v1324
    %2414 = vmatpush1.bf16.msra.mxu0 %v1323
    %2415 = vmatprep.subr.bf16.mxu0 %v1332
    %2416 = vmatpush1.bf16.msra.mxu0 %v1331
    %2417 = vmatprep.mubr.bf16.mxu0 %v2296
    %2418 = vmatmul.mubr.bf16.gmra.mrb[0].mxu0 %v2295
    %v2419 = vpop.f32.mrb[0].mxu0
    %v2420 = vadd.f32 0.0, %v2419
    %v2421 = vpop.f32.mrb[0].mxu0
    %v2422 = vadd.f32 0.0, %v2421
    %v2423 = vpop.f32.mrb[0].mxu0
    %v2424 = vadd.f32 0.0, %v2423
    %v2425 = vpop.f32.mrb[0].mxu0
    %v2426 = vadd.f32 0.0, %v2425
    %2427 = vdwg.mxu0
    %2428 = vmatprep.subr.bf16.mxu0 %v1214
    %2429 = vmatpush1.bf16.msra.mxu0 %v1213
    %2430 = vmatprep.subr.bf16.mxu0 %v1222
    %2431 = vmatpush1.bf16.msra.mxu0 %v1221
    %2432 = vmatprep.subr.bf16.mxu0 %v1230
    %2433 = vmatpush1.bf16.msra.mxu0 %v1229
    %2434 = vmatprep.subr.bf16.mxu0 %v1238
    %2435 = vmatpush1.bf16.msra.mxu0 %v1237
    %2436 = vmatprep.subr.bf16.mxu0 %v1246
    %2437 = vmatpush1.bf16.msra.mxu0 %v1245
    %2438 = vmatprep.subr.bf16.mxu0 %v1254
    %2439 = vmatpush1.bf16.msra.mxu0 %v1253
    %2440 = vmatprep.subr.bf16.mxu0 %v1262
    %2441 = vmatpush1.bf16.msra.mxu0 %v1261
    %2442 = vmatprep.subr.bf16.mxu0 %v1270
    %2443 = vmatpush1.bf16.msra.mxu0 %v1269
    %2444 = vmatprep.subr.bf16.mxu0 %v1278
    %2445 = vmatpush1.bf16.msra.mxu0 %v1277
    %2446 = vmatprep.subr.bf16.mxu0 %v1286
    %2447 = vmatpush1.bf16.msra.mxu0 %v1285
    %2448 = vmatprep.subr.bf16.mxu0 %v1294
    %2449 = vmatpush1.bf16.msra.mxu0 %v1293
    %2450 = vmatprep.subr.bf16.mxu0 %v1302
    %2451 = vmatpush1.bf16.msra.mxu0 %v1301
    %2452 = vmatprep.subr.bf16.mxu0 %v1310
    %2453 = vmatpush1.bf16.msra.mxu0 %v1309
    %2454 = vmatprep.subr.bf16.mxu0 %v1318
    %2455 = vmatpush1.bf16.msra.mxu0 %v1317
    %2456 = vmatprep.subr.bf16.mxu0 %v1326
    %2457 = vmatpush1.bf16.msra.mxu0 %v1325
    %2458 = vmatprep.subr.bf16.mxu0 %v1334
    %2459 = vmatpush1.bf16.msra.mxu0 %v1333
    %2460 = vmatprep.mubr.bf16.mxu0 %v2296
    %2461 = vmatmul.mubr.bf16.gmra.mrb[0].mxu0 %v2295
    %v2462 = vpop.f32.mrb[0].mxu0
    %v2463 = vadd.f32 0.0, %v2462
    %v2464 = vpop.f32.mrb[0].mxu0
    %v2465 = vadd.f32 0.0, %v2464
    %v2466 = vpop.f32.mrb[0].mxu0
    %v2467 = vadd.f32 0.0, %v2466
    %v2468 = vpop.f32.mrb[0].mxu0
    %v2469 = vadd.f32 0.0, %v2468
    %2470 = vdwg.mxu0
    %v2471 = vmax.f32 %v2334, %v2336
    %v2472 = vmax.f32 %v2338, %v2340
    %v2473 = vmax.f32 %v2377, %v2379
    %v2474 = vmax.f32 %v2381, %v2383
    %v2475 = vmax.f32 %v2471, %v2473
    %v2476 = vmax.f32 %v2472, %v2474
    %v2477 = vadd.f32 %v2475, %v1644
    %v2478 = vadd.f32 %v2476, %v1644
    %v2479 = vmax.f32 %v2477, 0.0
    %v2480 = vmax.f32 %v2478, 0.0
    %v2481 = vpack.c.bf16 %v2480, %v2479
    %2482 = vst [vmem:[#allocation2 + $0x40] sm:$0xff] %v2481
    %v2483 = vmax.f32 %v2420, %v2422
    %v2484 = vmax.f32 %v2424, %v2426
    %v2485 = vmax.f32 %v2463, %v2465
    %v2486 = vmax.f32 %v2467, %v2469
    %v2487 = vmax.f32 %v2483, %v2485
    %v2488 = vmax.f32 %v2484, %v2486
    %v2489 = vadd.f32 %v2487, %v1644
    %v2490 = vadd.f32 %v2488, %v1644
    %v2491 = vmax.f32 %v2489, 0.0
    %v2492 = vmax.f32 %v2490, 0.0
    %v2493 = vpack.c.bf16 %v2492, %v2491
    %2494 = vst [vmem:[#allocation2 + $0x48] sm:$0xff] %v2493
    %v2495 = vld [vmem:[%s0 + $0x28] sm:$0xff]
    %v2496 = vld [vmem:[%s0 + $0x58] sm:$0xff]
    %v2499 = vunpack.c.l.b16 %v2495
    %v2500 = vunpack.c.h.b16 %v2495
    %v2501 = vunpack.c.l.b16 %v2496
    %v2502 = vunpack.c.h.b16 %v2496
    %v2503 = vpack.c.b16 %v2501, %v2499
    %v2504 = vpack.c.b16 %v2502, %v2500
    %2507 = vmatprep.subr.bf16.mxu0 %v1208
    %2508 = vmatpush1.bf16.msra.mxu0 %v1207
    %2509 = vmatprep.subr.bf16.mxu0 %v1216
    %2510 = vmatpush1.bf16.msra.mxu0 %v1215
    %2511 = vmatprep.subr.bf16.mxu0 %v1224
    %2512 = vmatpush1.bf16.msra.mxu0 %v1223
    %2513 = vmatprep.subr.bf16.mxu0 %v1232
    %2514 = vmatpush1.bf16.msra.mxu0 %v1231
    %2515 = vmatprep.subr.bf16.mxu0 %v1240
    %2516 = vmatpush1.bf16.msra.mxu0 %v1239
    %2517 = vmatprep.subr.bf16.mxu0 %v1248
    %2518 = vmatpush1.bf16.msra.mxu0 %v1247
    %2519 = vmatprep.subr.bf16.mxu0 %v1256
    %2520 = vmatpush1.bf16.msra.mxu0 %v1255
    %2521 = vmatprep.subr.bf16.mxu0 %v1264
    %2522 = vmatpush1.bf16.msra.mxu0 %v1263
    %2523 = vmatprep.subr.bf16.mxu0 %v1272
    %2524 = vmatpush1.bf16.msra.mxu0 %v1271
    %2525 = vmatprep.subr.bf16.mxu0 %v1280
    %2526 = vmatpush1.bf16.msra.mxu0 %v1279
    %2527 = vmatprep.subr.bf16.mxu0 %v1288
    %2528 = vmatpush1.bf16.msra.mxu0 %v1287
    %2529 = vmatprep.subr.bf16.mxu0 %v1296
    %2530 = vmatpush1.bf16.msra.mxu0 %v1295
    %2531 = vmatprep.subr.bf16.mxu0 %v1304
    %2532 = vmatpush1.bf16.msra.mxu0 %v1303
    %2533 = vmatprep.subr.bf16.mxu0 %v1312
    %2534 = vmatpush1.bf16.msra.mxu0 %v1311
    %2535 = vmatprep.subr.bf16.mxu0 %v1320
    %2536 = vmatpush1.bf16.msra.mxu0 %v1319
    %2537 = vmatprep.subr.bf16.mxu0 %v1328
    %2538 = vmatpush1.bf16.msra.mxu0 %v1327
    %2539 = vmatprep.mubr.bf16.mxu0 %v2504
    %2540 = vmatmul.mubr.bf16.gmra.mrb[0].mxu0 %v2503
    %v2541 = vpop.f32.mrb[0].mxu0
    %v2542 = vadd.f32 0.0, %v2541
    %v2543 = vpop.f32.mrb[0].mxu0
    %v2544 = vadd.f32 0.0, %v2543
    %v2545 = vpop.f32.mrb[0].mxu0
    %v2546 = vadd.f32 0.0, %v2545
    %v2547 = vpop.f32.mrb[0].mxu0
    %v2548 = vadd.f32 0.0, %v2547
    %2549 = vdwg.mxu0
    %2550 = vmatprep.subr.bf16.mxu0 %v1210
    %2551 = vmatpush1.bf16.msra.mxu0 %v1209
    %2552 = vmatprep.subr.bf16.mxu0 %v1218
    %2553 = vmatpush1.bf16.msra.mxu0 %v1217
    %2554 = vmatprep.subr.bf16.mxu0 %v1226
    %2555 = vmatpush1.bf16.msra.mxu0 %v1225
    %2556 = vmatprep.subr.bf16.mxu0 %v1234
    %2557 = vmatpush1.bf16.msra.mxu0 %v1233
    %2558 = vmatprep.subr.bf16.mxu0 %v1242
    %2559 = vmatpush1.bf16.msra.mxu0 %v1241
    %2560 = vmatprep.subr.bf16.mxu0 %v1250
    %2561 = vmatpush1.bf16.msra.mxu0 %v1249
    %2562 = vmatprep.subr.bf16.mxu0 %v1258
    %2563 = vmatpush1.bf16.msra.mxu0 %v1257
    %2564 = vmatprep.subr.bf16.mxu0 %v1266
    %2565 = vmatpush1.bf16.msra.mxu0 %v1265
    %2566 = vmatprep.subr.bf16.mxu0 %v1274
    %2567 = vmatpush1.bf16.msra.mxu0 %v1273
    %2568 = vmatprep.subr.bf16.mxu0 %v1282
    %2569 = vmatpush1.bf16.msra.mxu0 %v1281
    %2570 = vmatprep.subr.bf16.mxu0 %v1290
    %2571 = vmatpush1.bf16.msra.mxu0 %v1289
    %2572 = vmatprep.subr.bf16.mxu0 %v1298
    %2573 = vmatpush1.bf16.msra.mxu0 %v1297
    %2574 = vmatprep.subr.bf16.mxu0 %v1306
    %2575 = vmatpush1.bf16.msra.mxu0 %v1305
    %2576 = vmatprep.subr.bf16.mxu0 %v1314
    %2577 = vmatpush1.bf16.msra.mxu0 %v1313
    %2578 = vmatprep.subr.bf16.mxu0 %v1322
    %2579 = vmatpush1.bf16.msra.mxu0 %v1321
    %2580 = vmatprep.subr.bf16.mxu0 %v1330
    %2581 = vmatpush1.bf16.msra.mxu0 %v1329
    %2582 = vmatprep.mubr.bf16.mxu0 %v2504
    %2583 = vmatmul.mubr.bf16.gmra.mrb[0].mxu0 %v2503
    %v2584 = vpop.f32.mrb[0].mxu0
    %v2585 = vadd.f32 0.0, %v2584
    %v2586 = vpop.f32.mrb[0].mxu0
    %v2587 = vadd.f32 0.0, %v2586
    %v2588 = vpop.f32.mrb[0].mxu0
    %v2589 = vadd.f32 0.0, %v2588
    %v2590 = vpop.f32.mrb[0].mxu0
    %v2591 = vadd.f32 0.0, %v2590
    %2592 = vdwg.mxu0
    %2593 = vmatprep.subr.bf16.mxu0 %v1212
    %2594 = vmatpush1.bf16.msra.mxu0 %v1211
    %2595 = vmatprep.subr.bf16.mxu0 %v1220
    %2596 = vmatpush1.bf16.msra.mxu0 %v1219
    %2597 = vmatprep.subr.bf16.mxu0 %v1228
    %2598 = vmatpush1.bf16.msra.mxu0 %v1227
    %2599 = vmatprep.subr.bf16.mxu0 %v1236
    %2600 = vmatpush1.bf16.msra.mxu0 %v1235
    %2601 = vmatprep.subr.bf16.mxu0 %v1244
    %2602 = vmatpush1.bf16.msra.mxu0 %v1243
    %2603 = vmatprep.subr.bf16.mxu0 %v1252
    %2604 = vmatpush1.bf16.msra.mxu0 %v1251
    %2605 = vmatprep.subr.bf16.mxu0 %v1260
    %2606 = vmatpush1.bf16.msra.mxu0 %v1259
    %2607 = vmatprep.subr.bf16.mxu0 %v1268
    %2608 = vmatpush1.bf16.msra.mxu0 %v1267
    %2609 = vmatprep.subr.bf16.mxu0 %v1276
    %2610 = vmatpush1.bf16.msra.mxu0 %v1275
    %2611 = vmatprep.subr.bf16.mxu0 %v1284
    %2612 = vmatpush1.bf16.msra.mxu0 %v1283
    %2613 = vmatprep.subr.bf16.mxu0 %v1292
    %2614 = vmatpush1.bf16.msra.mxu0 %v1291
    %2615 = vmatprep.subr.bf16.mxu0 %v1300
    %2616 = vmatpush1.bf16.msra.mxu0 %v1299
    %2617 = vmatprep.subr.bf16.mxu0 %v1308
    %2618 = vmatpush1.bf16.msra.mxu0 %v1307
    %2619 = vmatprep.subr.bf16.mxu0 %v1316
    %2620 = vmatpush1.bf16.msra.mxu0 %v1315
    %2621 = vmatprep.subr.bf16.mxu0 %v1324
    %2622 = vmatpush1.bf16.msra.mxu0 %v1323
    %2623 = vmatprep.subr.bf16.mxu0 %v1332
    %2624 = vmatpush1.bf16.msra.mxu0 %v1331
    %2625 = vmatprep.mubr.bf16.mxu0 %v2504
    %2626 = vmatmul.mubr.bf16.gmra.mrb[0].mxu0 %v2503
    %v2627 = vpop.f32.mrb[0].mxu0
    %v2628 = vadd.f32 0.0, %v2627
    %v2629 = vpop.f32.mrb[0].mxu0
    %v2630 = vadd.f32 0.0, %v2629
    %v2631 = vpop.f32.mrb[0].mxu0
    %v2632 = vadd.f32 0.0, %v2631
    %v2633 = vpop.f32.mrb[0].mxu0
    %v2634 = vadd.f32 0.0, %v2633
    %2635 = vdwg.mxu0
    %2636 = vmatprep.subr.bf16.mxu0 %v1214
    %2637 = vmatpush1.bf16.msra.mxu0 %v1213
    %2638 = vmatprep.subr.bf16.mxu0 %v1222
    %2639 = vmatpush1.bf16.msra.mxu0 %v1221
    %2640 = vmatprep.subr.bf16.mxu0 %v1230
    %2641 = vmatpush1.bf16.msra.mxu0 %v1229
    %2642 = vmatprep.subr.bf16.mxu0 %v1238
    %2643 = vmatpush1.bf16.msra.mxu0 %v1237
    %2644 = vmatprep.subr.bf16.mxu0 %v1246
    %2645 = vmatpush1.bf16.msra.mxu0 %v1245
    %2646 = vmatprep.subr.bf16.mxu0 %v1254
    %2647 = vmatpush1.bf16.msra.mxu0 %v1253
    %2648 = vmatprep.subr.bf16.mxu0 %v1262
    %2649 = vmatpush1.bf16.msra.mxu0 %v1261
    %2650 = vmatprep.subr.bf16.mxu0 %v1270
    %2651 = vmatpush1.bf16.msra.mxu0 %v1269
    %2652 = vmatprep.subr.bf16.mxu0 %v1278
    %2653 = vmatpush1.bf16.msra.mxu0 %v1277
    %2654 = vmatprep.subr.bf16.mxu0 %v1286
    %2655 = vmatpush1.bf16.msra.mxu0 %v1285
    %2656 = vmatprep.subr.bf16.mxu0 %v1294
    %2657 = vmatpush1.bf16.msra.mxu0 %v1293
    %2658 = vmatprep.subr.bf16.mxu0 %v1302
    %2659 = vmatpush1.bf16.msra.mxu0 %v1301
    %2660 = vmatprep.subr.bf16.mxu0 %v1310
    %2661 = vmatpush1.bf16.msra.mxu0 %v1309
    %2662 = vmatprep.subr.bf16.mxu0 %v1318
    %2663 = vmatpush1.bf16.msra.mxu0 %v1317
    %2664 = vmatprep.subr.bf16.mxu0 %v1326
    %2665 = vmatpush1.bf16.msra.mxu0 %v1325
    %2666 = vmatprep.subr.bf16.mxu0 %v1334
    %2667 = vmatpush1.bf16.msra.mxu0 %v1333
    %2668 = vmatprep.mubr.bf16.mxu0 %v2504
    %2669 = vmatmul.mubr.bf16.gmra.mrb[0].mxu0 %v2503
    %v2670 = vpop.f32.mrb[0].mxu0
    %v2671 = vadd.f32 0.0, %v2670
    %v2672 = vpop.f32.mrb[0].mxu0
    %v2673 = vadd.f32 0.0, %v2672
    %v2674 = vpop.f32.mrb[0].mxu0
    %v2675 = vadd.f32 0.0, %v2674
    %v2676 = vpop.f32.mrb[0].mxu0
    %v2677 = vadd.f32 0.0, %v2676
    %2678 = vdwg.mxu0
    %v2679 = vmax.f32 %v2542, %v2544
    %v2680 = vmax.f32 %v2546, %v2548
    %v2681 = vmax.f32 %v2585, %v2587
    %v2682 = vmax.f32 %v2589, %v2591
    %v2683 = vmax.f32 %v2679, %v2681
    %v2684 = vmax.f32 %v2680, %v2682
    %v2685 = vadd.f32 %v2683, %v1644
    %v2686 = vadd.f32 %v2684, %v1644
    %v2687 = vmax.f32 %v2685, 0.0
    %v2688 = vmax.f32 %v2686, 0.0
    %v2689 = vpack.c.bf16 %v2688, %v2687
    %2690 = vst [vmem:[#allocation2 + $0x50] sm:$0xff] %v2689
    %v2691 = vmax.f32 %v2628, %v2630
    %v2692 = vmax.f32 %v2632, %v2634
    %v2693 = vmax.f32 %v2671, %v2673
    %v2694 = vmax.f32 %v2675, %v2677
    %v2695 = vmax.f32 %v2691, %v2693
    %v2696 = vmax.f32 %v2692, %v2694
    %v2697 = vadd.f32 %v2695, %v1644
    %v2698 = vadd.f32 %v2696, %v1644
    %v2699 = vmax.f32 %v2697, 0.0
    %v2700 = vmax.f32 %v2698, 0.0
    %v2701 = vpack.c.bf16 %v2700, %v2699
    %2702 = vst [vmem:[#allocation2 + $0x58] sm:$0xff] %v2701
    %v2703 = vld [vmem:[#allocation2] sm:$0xff]
    %v2704 = vld [vmem:[#allocation2 + $0x8] sm:$0xff]
    %v2705 = vld [vmem:[#allocation2 + $0x10] sm:$0xff]
    %v2706 = vld [vmem:[#allocation2 + $0x18] sm:$0xff]
    %v2707 = vld [vmem:[#allocation2 + $0x20] sm:$0xff]
    %v2708 = vld [vmem:[#allocation2 + $0x28] sm:$0xff]
    %v2709 = vld [vmem:[#allocation2 + $0x30] sm:$0xff]
    %v2710 = vld [vmem:[#allocation2 + $0x38] sm:$0xff]
    %v3223 = vunpack.c.l.b16 %v218
    %v3224 = vunpack.c.h.b16 %v218
    %v3225 = vunpack.c.l.b16 %v219
    %v3226 = vunpack.c.h.b16 %v219
    %v3227 = vunpack.c.l.b16 %v220
    %v3228 = vunpack.c.h.b16 %v220
    %v3229 = vunpack.c.l.b16 %v221
    %v3230 = vunpack.c.h.b16 %v221
    %v3231 = vunpack.c.l.b16 %v222
    %v3232 = vunpack.c.h.b16 %v222
    %v3233 = vunpack.c.l.b16 %v223
    %v3234 = vunpack.c.h.b16 %v223
    %v3235 = vunpack.c.l.b16 %v224
    %v3236 = vunpack.c.h.b16 %v224
    %v3237 = vunpack.c.l.b16 %v225
    %v3238 = vunpack.c.h.b16 %v225
    %v3239 = vunpack.c.l.b16 %v226
    %v3240 = vunpack.c.h.b16 %v226
    %v3241 = vunpack.c.l.b16 %v227
    %v3242 = vunpack.c.h.b16 %v227
    %v3243 = vunpack.c.l.b16 %v228
    %v3244 = vunpack.c.h.b16 %v228
    %v3245 = vunpack.c.l.b16 %v229
    %v3246 = vunpack.c.h.b16 %v229
    %v3247 = vunpack.c.l.b16 %v230
    %v3248 = vunpack.c.h.b16 %v230
    %v3249 = vunpack.c.l.b16 %v231
    %v3250 = vunpack.c.h.b16 %v231
    %v3251 = vunpack.c.l.b16 %v232
    %v3252 = vunpack.c.h.b16 %v232
    %v3253 = vunpack.c.l.b16 %v233
    %v3254 = vunpack.c.h.b16 %v233
    %v3255 = vunpack.c.l.b16 %v234
    %v3256 = vunpack.c.h.b16 %v234
    %v3257 = vunpack.c.l.b16 %v235
    %v3258 = vunpack.c.h.b16 %v235
    %v3259 = vunpack.c.l.b16 %v236
    %v3260 = vunpack.c.h.b16 %v236
    %v3261 = vunpack.c.l.b16 %v237
    %v3262 = vunpack.c.h.b16 %v237
    %v3263 = vunpack.c.l.b16 %v238
    %v3264 = vunpack.c.h.b16 %v238
    %v3265 = vunpack.c.l.b16 %v239
    %v3266 = vunpack.c.h.b16 %v239
    %v3267 = vunpack.c.l.b16 %v240
    %v3268 = vunpack.c.h.b16 %v240
    %v3269 = vunpack.c.l.b16 %v241
    %v3270 = vunpack.c.h.b16 %v241
    %v3271 = vunpack.c.l.b16 %v242
    %v3272 = vunpack.c.h.b16 %v242
    %v3273 = vunpack.c.l.b16 %v243
    %v3274 = vunpack.c.h.b16 %v243
    %v3275 = vunpack.c.l.b16 %v244
    %v3276 = vunpack.c.h.b16 %v244
    %v3277 = vunpack.c.l.b16 %v245
    %v3278 = vunpack.c.h.b16 %v245
    %v3279 = vunpack.c.l.b16 %v246
    %v3280 = vunpack.c.h.b16 %v246
    %v3281 = vunpack.c.l.b16 %v247
    %v3282 = vunpack.c.h.b16 %v247
    %v3283 = vunpack.c.l.b16 %v248
    %v3284 = vunpack.c.h.b16 %v248
    %v3285 = vunpack.c.l.b16 %v249
    %v3286 = vunpack.c.h.b16 %v249
    %v3287 = vunpack.c.l.b16 %v250
    %v3288 = vunpack.c.h.b16 %v250
    %v3289 = vunpack.c.l.b16 %v251
    %v3290 = vunpack.c.h.b16 %v251
    %v3291 = vunpack.c.l.b16 %v252
    %v3292 = vunpack.c.h.b16 %v252
    %v3293 = vunpack.c.l.b16 %v253
    %v3294 = vunpack.c.h.b16 %v253
    %v3295 = vunpack.c.l.b16 %v254
    %v3296 = vunpack.c.h.b16 %v254
    %v3297 = vunpack.c.l.b16 %v255
    %v3298 = vunpack.c.h.b16 %v255
    %v3299 = vunpack.c.l.b16 %v256
    %v3300 = vunpack.c.h.b16 %v256
    %v3301 = vunpack.c.l.b16 %v257
    %v3302 = vunpack.c.h.b16 %v257
    %v3303 = vunpack.c.l.b16 %v258
    %v3304 = vunpack.c.h.b16 %v258
    %v3305 = vunpack.c.l.b16 %v259
    %v3306 = vunpack.c.h.b16 %v259
    %v3307 = vunpack.c.l.b16 %v260
    %v3308 = vunpack.c.h.b16 %v260
    %v3309 = vunpack.c.l.b16 %v261
    %v3310 = vunpack.c.h.b16 %v261
    %v3311 = vunpack.c.l.b16 %v262
    %v3312 = vunpack.c.h.b16 %v262
    %v3313 = vunpack.c.l.b16 %v263
    %v3314 = vunpack.c.h.b16 %v263
    %v3315 = vunpack.c.l.b16 %v264
    %v3316 = vunpack.c.h.b16 %v264
    %v3317 = vunpack.c.l.b16 %v265
    %v3318 = vunpack.c.h.b16 %v265
    %v3319 = vunpack.c.l.b16 %v266
    %v3320 = vunpack.c.h.b16 %v266
    %v3321 = vunpack.c.l.b16 %v267
    %v3322 = vunpack.c.h.b16 %v267
    %v3323 = vunpack.c.l.b16 %v268
    %v3324 = vunpack.c.h.b16 %v268
    %v3325 = vunpack.c.l.b16 %v269
    %v3326 = vunpack.c.h.b16 %v269
    %v3327 = vunpack.c.l.b16 %v270
    %v3328 = vunpack.c.h.b16 %v270
    %v3329 = vunpack.c.l.b16 %v271
    %v3330 = vunpack.c.h.b16 %v271
    %v3331 = vunpack.c.l.b16 %v272
    %v3332 = vunpack.c.h.b16 %v272
    %v3333 = vunpack.c.l.b16 %v273
    %v3334 = vunpack.c.h.b16 %v273
    %v3335 = vunpack.c.l.b16 %v274
    %v3336 = vunpack.c.h.b16 %v274
    %v3337 = vunpack.c.l.b16 %v275
    %v3338 = vunpack.c.h.b16 %v275
    %v3339 = vunpack.c.l.b16 %v276
    %v3340 = vunpack.c.h.b16 %v276
    %v3341 = vunpack.c.l.b16 %v277
    %v3342 = vunpack.c.h.b16 %v277
    %v3343 = vunpack.c.l.b16 %v278
    %v3344 = vunpack.c.h.b16 %v278
    %v3345 = vunpack.c.l.b16 %v279
    %v3346 = vunpack.c.h.b16 %v279
    %v3347 = vunpack.c.l.b16 %v280
    %v3348 = vunpack.c.h.b16 %v280
    %v3349 = vunpack.c.l.b16 %v281
    %v3350 = vunpack.c.h.b16 %v281
    %v3351 = vunpack.c.l.b16 %v282
    %v3352 = vunpack.c.h.b16 %v282
    %v3353 = vunpack.c.l.b16 %v283
    %v3354 = vunpack.c.h.b16 %v283
    %v3355 = vunpack.c.l.b16 %v284
    %v3356 = vunpack.c.h.b16 %v284
    %v3357 = vunpack.c.l.b16 %v285
    %v3358 = vunpack.c.h.b16 %v285
    %v3359 = vunpack.c.l.b16 %v286
    %v3360 = vunpack.c.h.b16 %v286
    %v3361 = vunpack.c.l.b16 %v287
    %v3362 = vunpack.c.h.b16 %v287
    %v3363 = vunpack.c.l.b16 %v288
    %v3364 = vunpack.c.h.b16 %v288
    %v3365 = vunpack.c.l.b16 %v289
    %v3366 = vunpack.c.h.b16 %v289
    %v3367 = vunpack.c.l.b16 %v290
    %v3368 = vunpack.c.h.b16 %v290
    %v3369 = vunpack.c.l.b16 %v291
    %v3370 = vunpack.c.h.b16 %v291
    %v3371 = vunpack.c.l.b16 %v292
    %v3372 = vunpack.c.h.b16 %v292
    %v3373 = vunpack.c.l.b16 %v293
    %v3374 = vunpack.c.h.b16 %v293
    %v3375 = vunpack.c.l.b16 %v294
    %v3376 = vunpack.c.h.b16 %v294
    %v3377 = vunpack.c.l.b16 %v295
    %v3378 = vunpack.c.h.b16 %v295
    %v3379 = vunpack.c.l.b16 %v296
    %v3380 = vunpack.c.h.b16 %v296
    %v3381 = vunpack.c.l.b16 %v297
    %v3382 = vunpack.c.h.b16 %v297
    %v3383 = vunpack.c.l.b16 %v298
    %v3384 = vunpack.c.h.b16 %v298
    %v3385 = vunpack.c.l.b16 %v299
    %v3386 = vunpack.c.h.b16 %v299
    %v3387 = vunpack.c.l.b16 %v300
    %v3388 = vunpack.c.h.b16 %v300
    %v3389 = vunpack.c.l.b16 %v301
    %v3390 = vunpack.c.h.b16 %v301
    %v3391 = vunpack.c.l.b16 %v302
    %v3392 = vunpack.c.h.b16 %v302
    %v3393 = vunpack.c.l.b16 %v303
    %v3394 = vunpack.c.h.b16 %v303
    %v3395 = vunpack.c.l.b16 %v304
    %v3396 = vunpack.c.h.b16 %v304
    %v3397 = vunpack.c.l.b16 %v305
    %v3398 = vunpack.c.h.b16 %v305
    %v3399 = vunpack.c.l.b16 %v306
    %v3400 = vunpack.c.h.b16 %v306
    %v3401 = vunpack.c.l.b16 %v307
    %v3402 = vunpack.c.h.b16 %v307
    %v3403 = vunpack.c.l.b16 %v308
    %v3404 = vunpack.c.h.b16 %v308
    %v3405 = vunpack.c.l.b16 %v309
    %v3406 = vunpack.c.h.b16 %v309
    %v3407 = vunpack.c.l.b16 %v310
    %v3408 = vunpack.c.h.b16 %v310
    %v3409 = vunpack.c.l.b16 %v311
    %v3410 = vunpack.c.h.b16 %v311
    %v3411 = vunpack.c.l.b16 %v312
    %v3412 = vunpack.c.h.b16 %v312
    %v3413 = vunpack.c.l.b16 %v313
    %v3414 = vunpack.c.h.b16 %v313
    %v3415 = vunpack.c.l.b16 %v314
    %v3416 = vunpack.c.h.b16 %v314
    %v3417 = vunpack.c.l.b16 %v315
    %v3418 = vunpack.c.h.b16 %v315
    %v3419 = vunpack.c.l.b16 %v316
    %v3420 = vunpack.c.h.b16 %v316
    %v3421 = vunpack.c.l.b16 %v317
    %v3422 = vunpack.c.h.b16 %v317
    %v3423 = vunpack.c.l.b16 %v318
    %v3424 = vunpack.c.h.b16 %v318
    %v3425 = vunpack.c.l.b16 %v319
    %v3426 = vunpack.c.h.b16 %v319
    %v3427 = vunpack.c.l.b16 %v320
    %v3428 = vunpack.c.h.b16 %v320
    %v3429 = vunpack.c.l.b16 %v321
    %v3430 = vunpack.c.h.b16 %v321
    %v3431 = vunpack.c.l.b16 %v322
    %v3432 = vunpack.c.h.b16 %v322
    %v3433 = vunpack.c.l.b16 %v323
    %v3434 = vunpack.c.h.b16 %v323
    %v3435 = vunpack.c.l.b16 %v324
    %v3436 = vunpack.c.h.b16 %v324
    %v3437 = vunpack.c.l.b16 %v325
    %v3438 = vunpack.c.h.b16 %v325
    %v3439 = vunpack.c.l.b16 %v326
    %v3440 = vunpack.c.h.b16 %v326
    %v3441 = vunpack.c.l.b16 %v327
    %v3442 = vunpack.c.h.b16 %v327
    %v3443 = vunpack.c.l.b16 %v328
    %v3444 = vunpack.c.h.b16 %v328
    %v3445 = vunpack.c.l.b16 %v329
    %v3446 = vunpack.c.h.b16 %v329
    %v3447 = vunpack.c.l.b16 %v330
    %v3448 = vunpack.c.h.b16 %v330
    %v3449 = vunpack.c.l.b16 %v331
    %v3450 = vunpack.c.h.b16 %v331
    %v3451 = vunpack.c.l.b16 %v332
    %v3452 = vunpack.c.h.b16 %v332
    %v3453 = vunpack.c.l.b16 %v333
    %v3454 = vunpack.c.h.b16 %v333
    %v3455 = vunpack.c.l.b16 %v334
    %v3456 = vunpack.c.h.b16 %v334
    %v3457 = vunpack.c.l.b16 %v335
    %v3458 = vunpack.c.h.b16 %v335
    %v3459 = vunpack.c.l.b16 %v336
    %v3460 = vunpack.c.h.b16 %v336
    %v3461 = vunpack.c.l.b16 %v337
    %v3462 = vunpack.c.h.b16 %v337
    %v3463 = vunpack.c.l.b16 %v338
    %v3464 = vunpack.c.h.b16 %v338
    %v3465 = vunpack.c.l.b16 %v339
    %v3466 = vunpack.c.h.b16 %v339
    %v3467 = vunpack.c.l.b16 %v340
    %v3468 = vunpack.c.h.b16 %v340
    %v3469 = vunpack.c.l.b16 %v341
    %v3470 = vunpack.c.h.b16 %v341
    %v3471 = vunpack.c.l.b16 %v342
    %v3472 = vunpack.c.h.b16 %v342
    %v3473 = vunpack.c.l.b16 %v343
    %v3474 = vunpack.c.h.b16 %v343
    %v3475 = vunpack.c.l.b16 %v344
    %v3476 = vunpack.c.h.b16 %v344
    %v3477 = vunpack.c.l.b16 %v345
    %v3478 = vunpack.c.h.b16 %v345
    %v3479 = vunpack.c.l.b16 %v346
    %v3480 = vunpack.c.h.b16 %v346
    %v3481 = vunpack.c.l.b16 %v347
    %v3482 = vunpack.c.h.b16 %v347
    %v3483 = vunpack.c.l.b16 %v348
    %v3484 = vunpack.c.h.b16 %v348
    %v3485 = vunpack.c.l.b16 %v349
    %v3486 = vunpack.c.h.b16 %v349
    %v3487 = vunpack.c.l.b16 %v350
    %v3488 = vunpack.c.h.b16 %v350
    %v3489 = vunpack.c.l.b16 %v351
    %v3490 = vunpack.c.h.b16 %v351
    %v3491 = vunpack.c.l.b16 %v352
    %v3492 = vunpack.c.h.b16 %v352
    %v3493 = vunpack.c.l.b16 %v353
    %v3494 = vunpack.c.h.b16 %v353
    %v3495 = vunpack.c.l.b16 %v354
    %v3496 = vunpack.c.h.b16 %v354
    %v3497 = vunpack.c.l.b16 %v355
    %v3498 = vunpack.c.h.b16 %v355
    %v3499 = vunpack.c.l.b16 %v356
    %v3500 = vunpack.c.h.b16 %v356
    %v3501 = vunpack.c.l.b16 %v357
    %v3502 = vunpack.c.h.b16 %v357
    %v3503 = vunpack.c.l.b16 %v358
    %v3504 = vunpack.c.h.b16 %v358
    %v3505 = vunpack.c.l.b16 %v359
    %v3506 = vunpack.c.h.b16 %v359
    %v3507 = vunpack.c.l.b16 %v360
    %v3508 = vunpack.c.h.b16 %v360
    %v3509 = vunpack.c.l.b16 %v361
    %v3510 = vunpack.c.h.b16 %v361
    %v3511 = vunpack.c.l.b16 %v362
    %v3512 = vunpack.c.h.b16 %v362
    %v3513 = vunpack.c.l.b16 %v363
    %v3514 = vunpack.c.h.b16 %v363
    %v3515 = vunpack.c.l.b16 %v364
    %v3516 = vunpack.c.h.b16 %v364
    %v3517 = vunpack.c.l.b16 %v365
    %v3518 = vunpack.c.h.b16 %v365
    %v3519 = vunpack.c.l.b16 %v366
    %v3520 = vunpack.c.h.b16 %v366
    %v3521 = vunpack.c.l.b16 %v367
    %v3522 = vunpack.c.h.b16 %v367
    %v3523 = vunpack.c.l.b16 %v368
    %v3524 = vunpack.c.h.b16 %v368
    %v3525 = vunpack.c.l.b16 %v369
    %v3526 = vunpack.c.h.b16 %v369
    %v3527 = vunpack.c.l.b16 %v370
    %v3528 = vunpack.c.h.b16 %v370
    %v3529 = vunpack.c.l.b16 %v371
    %v3530 = vunpack.c.h.b16 %v371
    %v3531 = vunpack.c.l.b16 %v372
    %v3532 = vunpack.c.h.b16 %v372
    %v3533 = vunpack.c.l.b16 %v373
    %v3534 = vunpack.c.h.b16 %v373
    %v3535 = vunpack.c.l.b16 %v374
    %v3536 = vunpack.c.h.b16 %v374
    %v3537 = vunpack.c.l.b16 %v375
    %v3538 = vunpack.c.h.b16 %v375
    %v3539 = vunpack.c.l.b16 %v376
    %v3540 = vunpack.c.h.b16 %v376
    %v3541 = vunpack.c.l.b16 %v377
    %v3542 = vunpack.c.h.b16 %v377
    %v3543 = vunpack.c.l.b16 %v378
    %v3544 = vunpack.c.h.b16 %v378
    %v3545 = vunpack.c.l.b16 %v379
    %v3546 = vunpack.c.h.b16 %v379
    %v3547 = vunpack.c.l.b16 %v380
    %v3548 = vunpack.c.h.b16 %v380
    %v3549 = vunpack.c.l.b16 %v381
    %v3550 = vunpack.c.h.b16 %v381
    %v3551 = vunpack.c.l.b16 %v382
    %v3552 = vunpack.c.h.b16 %v382
    %v3553 = vunpack.c.l.b16 %v383
    %v3554 = vunpack.c.h.b16 %v383
    %v3555 = vunpack.c.l.b16 %v384
    %v3556 = vunpack.c.h.b16 %v384
    %v3557 = vunpack.c.l.b16 %v385
    %v3558 = vunpack.c.h.b16 %v385
    %v3559 = vunpack.c.l.b16 %v386
    %v3560 = vunpack.c.h.b16 %v386
    %v3561 = vunpack.c.l.b16 %v387
    %v3562 = vunpack.c.h.b16 %v387
    %v3563 = vunpack.c.l.b16 %v388
    %v3564 = vunpack.c.h.b16 %v388
    %v3565 = vunpack.c.l.b16 %v389
    %v3566 = vunpack.c.h.b16 %v389
    %v3567 = vunpack.c.l.b16 %v390
    %v3568 = vunpack.c.h.b16 %v390
    %v3569 = vunpack.c.l.b16 %v391
    %v3570 = vunpack.c.h.b16 %v391
    %v3571 = vunpack.c.l.b16 %v392
    %v3572 = vunpack.c.h.b16 %v392
    %v3573 = vunpack.c.l.b16 %v393
    %v3574 = vunpack.c.h.b16 %v393
    %v3575 = vunpack.c.l.b16 %v394
    %v3576 = vunpack.c.h.b16 %v394
    %v3577 = vunpack.c.l.b16 %v395
    %v3578 = vunpack.c.h.b16 %v395
    %v3579 = vunpack.c.l.b16 %v396
    %v3580 = vunpack.c.h.b16 %v396
    %v3581 = vunpack.c.l.b16 %v397
    %v3582 = vunpack.c.h.b16 %v397
    %v3583 = vunpack.c.l.b16 %v398
    %v3584 = vunpack.c.h.b16 %v398
    %v3585 = vunpack.c.l.b16 %v399
    %v3586 = vunpack.c.h.b16 %v399
    %v3587 = vunpack.c.l.b16 %v400
    %v3588 = vunpack.c.h.b16 %v400
    %v3589 = vunpack.c.l.b16 %v401
    %v3590 = vunpack.c.h.b16 %v401
    %v3591 = vunpack.c.l.b16 %v402
    %v3592 = vunpack.c.h.b16 %v402
    %v3593 = vunpack.c.l.b16 %v403
    %v3594 = vunpack.c.h.b16 %v403
    %v3595 = vunpack.c.l.b16 %v404
    %v3596 = vunpack.c.h.b16 %v404
    %v3597 = vunpack.c.l.b16 %v405
    %v3598 = vunpack.c.h.b16 %v405
    %v3599 = vunpack.c.l.b16 %v406
    %v3600 = vunpack.c.h.b16 %v406
    %v3601 = vunpack.c.l.b16 %v407
    %v3602 = vunpack.c.h.b16 %v407
    %v3603 = vunpack.c.l.b16 %v408
    %v3604 = vunpack.c.h.b16 %v408
    %v3605 = vunpack.c.l.b16 %v409
    %v3606 = vunpack.c.h.b16 %v409
    %v3607 = vunpack.c.l.b16 %v410
    %v3608 = vunpack.c.h.b16 %v410
    %v3609 = vunpack.c.l.b16 %v411
    %v3610 = vunpack.c.h.b16 %v411
    %v3611 = vunpack.c.l.b16 %v412
    %v3612 = vunpack.c.h.b16 %v412
    %v3613 = vunpack.c.l.b16 %v413
    %v3614 = vunpack.c.h.b16 %v413
    %v3615 = vunpack.c.l.b16 %v414
    %v3616 = vunpack.c.h.b16 %v414
    %v3617 = vunpack.c.l.b16 %v415
    %v3618 = vunpack.c.h.b16 %v415
    %v3619 = vunpack.c.l.b16 %v416
    %v3620 = vunpack.c.h.b16 %v416
    %v3621 = vunpack.c.l.b16 %v417
    %v3622 = vunpack.c.h.b16 %v417
    %v3623 = vunpack.c.l.b16 %v418
    %v3624 = vunpack.c.h.b16 %v418
    %v3625 = vunpack.c.l.b16 %v419
    %v3626 = vunpack.c.h.b16 %v419
    %v3627 = vunpack.c.l.b16 %v420
    %v3628 = vunpack.c.h.b16 %v420
    %v3629 = vunpack.c.l.b16 %v421
    %v3630 = vunpack.c.h.b16 %v421
    %v3631 = vunpack.c.l.b16 %v422
    %v3632 = vunpack.c.h.b16 %v422
    %v3633 = vunpack.c.l.b16 %v423
    %v3634 = vunpack.c.h.b16 %v423
    %v3635 = vunpack.c.l.b16 %v424
    %v3636 = vunpack.c.h.b16 %v424
    %v3637 = vunpack.c.l.b16 %v425
    %v3638 = vunpack.c.h.b16 %v425
    %v3639 = vunpack.c.l.b16 %v426
    %v3640 = vunpack.c.h.b16 %v426
    %v3641 = vunpack.c.l.b16 %v427
    %v3642 = vunpack.c.h.b16 %v427
    %v3643 = vunpack.c.l.b16 %v428
    %v3644 = vunpack.c.h.b16 %v428
    %v3645 = vunpack.c.l.b16 %v429
    %v3646 = vunpack.c.h.b16 %v429
    %v3647 = vunpack.c.l.b16 %v430
    %v3648 = vunpack.c.h.b16 %v430
    %v3649 = vunpack.c.l.b16 %v431
    %v3650 = vunpack.c.h.b16 %v431
    %v3651 = vunpack.c.l.b16 %v432
    %v3652 = vunpack.c.h.b16 %v432
    %v3653 = vunpack.c.l.b16 %v433
    %v3654 = vunpack.c.h.b16 %v433
    %v3655 = vunpack.c.l.b16 %v434
    %v3656 = vunpack.c.h.b16 %v434
    %v3657 = vunpack.c.l.b16 %v435
    %v3658 = vunpack.c.h.b16 %v435
    %v3659 = vunpack.c.l.b16 %v436
    %v3660 = vunpack.c.h.b16 %v436
    %v3661 = vunpack.c.l.b16 %v437
    %v3662 = vunpack.c.h.b16 %v437
    %v3663 = vunpack.c.l.b16 %v438
    %v3664 = vunpack.c.h.b16 %v438
    %v3665 = vunpack.c.l.b16 %v439
    %v3666 = vunpack.c.h.b16 %v439
    %v3667 = vunpack.c.l.b16 %v440
    %v3668 = vunpack.c.h.b16 %v440
    %v3669 = vunpack.c.l.b16 %v441
    %v3670 = vunpack.c.h.b16 %v441
    %v3671 = vunpack.c.l.b16 %v442
    %v3672 = vunpack.c.h.b16 %v442
    %v3673 = vunpack.c.l.b16 %v443
    %v3674 = vunpack.c.h.b16 %v443
    %v3675 = vunpack.c.l.b16 %v444
    %v3676 = vunpack.c.h.b16 %v444
    %v3677 = vunpack.c.l.b16 %v445
    %v3678 = vunpack.c.h.b16 %v445
    %v3679 = vunpack.c.l.b16 %v446
    %v3680 = vunpack.c.h.b16 %v446
    %v3681 = vunpack.c.l.b16 %v447
    %v3682 = vunpack.c.h.b16 %v447
    %v3683 = vunpack.c.l.b16 %v448
    %v3684 = vunpack.c.h.b16 %v448
    %v3685 = vunpack.c.l.b16 %v449
    %v3686 = vunpack.c.h.b16 %v449
    %v3687 = vunpack.c.l.b16 %v450
    %v3688 = vunpack.c.h.b16 %v450
    %v3689 = vunpack.c.l.b16 %v451
    %v3690 = vunpack.c.h.b16 %v451
    %v3691 = vunpack.c.l.b16 %v452
    %v3692 = vunpack.c.h.b16 %v452
    %v3693 = vunpack.c.l.b16 %v453
    %v3694 = vunpack.c.h.b16 %v453
    %v3695 = vunpack.c.l.b16 %v454
    %v3696 = vunpack.c.h.b16 %v454
    %v3697 = vunpack.c.l.b16 %v455
    %v3698 = vunpack.c.h.b16 %v455
    %v3699 = vunpack.c.l.b16 %v456
    %v3700 = vunpack.c.h.b16 %v456
    %v3701 = vunpack.c.l.b16 %v457
    %v3702 = vunpack.c.h.b16 %v457
    %v3703 = vunpack.c.l.b16 %v458
    %v3704 = vunpack.c.h.b16 %v458
    %v3705 = vunpack.c.l.b16 %v459
    %v3706 = vunpack.c.h.b16 %v459
    %v3707 = vunpack.c.l.b16 %v460
    %v3708 = vunpack.c.h.b16 %v460
    %v3709 = vunpack.c.l.b16 %v461
    %v3710 = vunpack.c.h.b16 %v461
    %v3711 = vunpack.c.l.b16 %v462
    %v3712 = vunpack.c.h.b16 %v462
    %v3713 = vunpack.c.l.b16 %v463
    %v3714 = vunpack.c.h.b16 %v463
    %v3715 = vunpack.c.l.b16 %v464
    %v3716 = vunpack.c.h.b16 %v464
    %v3717 = vunpack.c.l.b16 %v465
    %v3718 = vunpack.c.h.b16 %v465
    %v3719 = vunpack.c.l.b16 %v466
    %v3720 = vunpack.c.h.b16 %v466
    %v3721 = vunpack.c.l.b16 %v467
    %v3722 = vunpack.c.h.b16 %v467
    %v3723 = vunpack.c.l.b16 %v468
    %v3724 = vunpack.c.h.b16 %v468
    %v3725 = vunpack.c.l.b16 %v469
    %v3726 = vunpack.c.h.b16 %v469
    %v3727 = vunpack.c.l.b16 %v470
    %v3728 = vunpack.c.h.b16 %v470
    %v3729 = vunpack.c.l.b16 %v471
    %v3730 = vunpack.c.h.b16 %v471
    %v3731 = vunpack.c.l.b16 %v472
    %v3732 = vunpack.c.h.b16 %v472
    %v3733 = vunpack.c.l.b16 %v473
    %v3734 = vunpack.c.h.b16 %v473
    %v3735 = vunpack.c.l.b16 %v474
    %v3736 = vunpack.c.h.b16 %v474
    %v3737 = vunpack.c.l.b16 %v475
    %v3738 = vunpack.c.h.b16 %v475
    %v3739 = vunpack.c.l.b16 %v476
    %v3740 = vunpack.c.h.b16 %v476
    %v3741 = vunpack.c.l.b16 %v477
    %v3742 = vunpack.c.h.b16 %v477
    %v3743 = vunpack.c.l.b16 %v478
    %v3744 = vunpack.c.h.b16 %v478
    %v3745 = vunpack.c.l.b16 %v479
    %v3746 = vunpack.c.h.b16 %v479
    %v3747 = vunpack.c.l.b16 %v480
    %v3748 = vunpack.c.h.b16 %v480
    %v3749 = vunpack.c.l.b16 %v481
    %v3750 = vunpack.c.h.b16 %v481
    %v3751 = vunpack.c.l.b16 %v482
    %v3752 = vunpack.c.h.b16 %v482
    %v3753 = vunpack.c.l.b16 %v483
    %v3754 = vunpack.c.h.b16 %v483
    %v3755 = vunpack.c.l.b16 %v484
    %v3756 = vunpack.c.h.b16 %v484
    %v3757 = vunpack.c.l.b16 %v485
    %v3758 = vunpack.c.h.b16 %v485
    %v3759 = vunpack.c.l.b16 %v486
    %v3760 = vunpack.c.h.b16 %v486
    %v3761 = vunpack.c.l.b16 %v487
    %v3762 = vunpack.c.h.b16 %v487
    %v3763 = vunpack.c.l.b16 %v488
    %v3764 = vunpack.c.h.b16 %v488
    %v3765 = vunpack.c.l.b16 %v489
    %v3766 = vunpack.c.h.b16 %v489
    %v3767 = vunpack.c.l.b16 %v490
    %v3768 = vunpack.c.h.b16 %v490
    %v3769 = vunpack.c.l.b16 %v491
    %v3770 = vunpack.c.h.b16 %v491
    %v3771 = vunpack.c.l.b16 %v492
    %v3772 = vunpack.c.h.b16 %v492
    %v3773 = vunpack.c.l.b16 %v493
    %v3774 = vunpack.c.h.b16 %v493
    %v3775 = vunpack.c.l.b16 %v494
    %v3776 = vunpack.c.h.b16 %v494
    %v3777 = vunpack.c.l.b16 %v495
    %v3778 = vunpack.c.h.b16 %v495
    %v3779 = vunpack.c.l.b16 %v496
    %v3780 = vunpack.c.h.b16 %v496
    %v3781 = vunpack.c.l.b16 %v497
    %v3782 = vunpack.c.h.b16 %v497
    %v3783 = vunpack.c.l.b16 %v498
    %v3784 = vunpack.c.h.b16 %v498
    %v3785 = vunpack.c.l.b16 %v499
    %v3786 = vunpack.c.h.b16 %v499
    %v3787 = vunpack.c.l.b16 %v500
    %v3788 = vunpack.c.h.b16 %v500
    %v3789 = vunpack.c.l.b16 %v501
    %v3790 = vunpack.c.h.b16 %v501
    %v3791 = vunpack.c.l.b16 %v502
    %v3792 = vunpack.c.h.b16 %v502
    %v3793 = vunpack.c.l.b16 %v503
    %v3794 = vunpack.c.h.b16 %v503
    %v3795 = vunpack.c.l.b16 %v504
    %v3796 = vunpack.c.h.b16 %v504
    %v3797 = vunpack.c.l.b16 %v505
    %v3798 = vunpack.c.h.b16 %v505
    %v3799 = vunpack.c.l.b16 %v506
    %v3800 = vunpack.c.h.b16 %v506
    %v3801 = vunpack.c.l.b16 %v507
    %v3802 = vunpack.c.h.b16 %v507
    %v3803 = vunpack.c.l.b16 %v508
    %v3804 = vunpack.c.h.b16 %v508
    %v3805 = vunpack.c.l.b16 %v509
    %v3806 = vunpack.c.h.b16 %v509
    %v3807 = vunpack.c.l.b16 %v510
    %v3808 = vunpack.c.h.b16 %v510
    %v3809 = vunpack.c.l.b16 %v511
    %v3810 = vunpack.c.h.b16 %v511
    %v3811 = vunpack.c.l.b16 %v512
    %v3812 = vunpack.c.h.b16 %v512
    %v3813 = vunpack.c.l.b16 %v513
    %v3814 = vunpack.c.h.b16 %v513
    %v3815 = vunpack.c.l.b16 %v514
    %v3816 = vunpack.c.h.b16 %v514
    %v3817 = vunpack.c.l.b16 %v515
    %v3818 = vunpack.c.h.b16 %v515
    %v3819 = vunpack.c.l.b16 %v516
    %v3820 = vunpack.c.h.b16 %v516
    %v3821 = vunpack.c.l.b16 %v517
    %v3822 = vunpack.c.h.b16 %v517
    %v3823 = vunpack.c.l.b16 %v518
    %v3824 = vunpack.c.h.b16 %v518
    %v3825 = vunpack.c.l.b16 %v519
    %v3826 = vunpack.c.h.b16 %v519
    %v3827 = vunpack.c.l.b16 %v520
    %v3828 = vunpack.c.h.b16 %v520
    %v3829 = vunpack.c.l.b16 %v521
    %v3830 = vunpack.c.h.b16 %v521
    %v3831 = vunpack.c.l.b16 %v522
    %v3832 = vunpack.c.h.b16 %v522
    %v3833 = vunpack.c.l.b16 %v523
    %v3834 = vunpack.c.h.b16 %v523
    %v3835 = vunpack.c.l.b16 %v524
    %v3836 = vunpack.c.h.b16 %v524
    %v3837 = vunpack.c.l.b16 %v525
    %v3838 = vunpack.c.h.b16 %v525
    %v3839 = vunpack.c.l.b16 %v526
    %v3840 = vunpack.c.h.b16 %v526
    %v3841 = vunpack.c.l.b16 %v527
    %v3842 = vunpack.c.h.b16 %v527
    %v3843 = vunpack.c.l.b16 %v528
    %v3844 = vunpack.c.h.b16 %v528
    %v3845 = vunpack.c.l.b16 %v529
    %v3846 = vunpack.c.h.b16 %v529
    %v3847 = vunpack.c.l.b16 %v530
    %v3848 = vunpack.c.h.b16 %v530
    %v3849 = vunpack.c.l.b16 %v531
    %v3850 = vunpack.c.h.b16 %v531
    %v3851 = vunpack.c.l.b16 %v532
    %v3852 = vunpack.c.h.b16 %v532
    %v3853 = vunpack.c.l.b16 %v533
    %v3854 = vunpack.c.h.b16 %v533
    %v3855 = vunpack.c.l.b16 %v534
    %v3856 = vunpack.c.h.b16 %v534
    %v3857 = vunpack.c.l.b16 %v535
    %v3858 = vunpack.c.h.b16 %v535
    %v3859 = vunpack.c.l.b16 %v536
    %v3860 = vunpack.c.h.b16 %v536
    %v3861 = vunpack.c.l.b16 %v537
    %v3862 = vunpack.c.h.b16 %v537
    %v3863 = vunpack.c.l.b16 %v538
    %v3864 = vunpack.c.h.b16 %v538
    %v3865 = vunpack.c.l.b16 %v539
    %v3866 = vunpack.c.h.b16 %v539
    %v3867 = vunpack.c.l.b16 %v540
    %v3868 = vunpack.c.h.b16 %v540
    %v3869 = vunpack.c.l.b16 %v541
    %v3870 = vunpack.c.h.b16 %v541
    %v3871 = vunpack.c.l.b16 %v542
    %v3872 = vunpack.c.h.b16 %v542
    %v3873 = vunpack.c.l.b16 %v543
    %v3874 = vunpack.c.h.b16 %v543
    %v3875 = vunpack.c.l.b16 %v544
    %v3876 = vunpack.c.h.b16 %v544
    %v3877 = vunpack.c.l.b16 %v545
    %v3878 = vunpack.c.h.b16 %v545
    %v3879 = vunpack.c.l.b16 %v546
    %v3880 = vunpack.c.h.b16 %v546
    %v3881 = vunpack.c.l.b16 %v547
    %v3882 = vunpack.c.h.b16 %v547
    %v3883 = vunpack.c.l.b16 %v548
    %v3884 = vunpack.c.h.b16 %v548
    %v3885 = vunpack.c.l.b16 %v549
    %v3886 = vunpack.c.h.b16 %v549
    %v3887 = vunpack.c.l.b16 %v550
    %v3888 = vunpack.c.h.b16 %v550
    %v3889 = vunpack.c.l.b16 %v551
    %v3890 = vunpack.c.h.b16 %v551
    %v3891 = vunpack.c.l.b16 %v552
    %v3892 = vunpack.c.h.b16 %v552
    %v3893 = vunpack.c.l.b16 %v553
    %v3894 = vunpack.c.h.b16 %v553
    %v3895 = vunpack.c.l.b16 %v554
    %v3896 = vunpack.c.h.b16 %v554
    %v3897 = vunpack.c.l.b16 %v555
    %v3898 = vunpack.c.h.b16 %v555
    %v3899 = vunpack.c.l.b16 %v556
    %v3900 = vunpack.c.h.b16 %v556
    %v3901 = vunpack.c.l.b16 %v557
    %v3902 = vunpack.c.h.b16 %v557
    %v3903 = vunpack.c.l.b16 %v558
    %v3904 = vunpack.c.h.b16 %v558
    %v3905 = vunpack.c.l.b16 %v559
    %v3906 = vunpack.c.h.b16 %v559
    %v3907 = vunpack.c.l.b16 %v560
    %v3908 = vunpack.c.h.b16 %v560
    %v3909 = vunpack.c.l.b16 %v561
    %v3910 = vunpack.c.h.b16 %v561
    %v3911 = vunpack.c.l.b16 %v562
    %v3912 = vunpack.c.h.b16 %v562
    %v3913 = vunpack.c.l.b16 %v563
    %v3914 = vunpack.c.h.b16 %v563
    %v3915 = vunpack.c.l.b16 %v564
    %v3916 = vunpack.c.h.b16 %v564
    %v3917 = vunpack.c.l.b16 %v565
    %v3918 = vunpack.c.h.b16 %v565
    %v3919 = vunpack.c.l.b16 %v566
    %v3920 = vunpack.c.h.b16 %v566
    %v3921 = vunpack.c.l.b16 %v567
    %v3922 = vunpack.c.h.b16 %v567
    %v3923 = vunpack.c.l.b16 %v568
    %v3924 = vunpack.c.h.b16 %v568
    %v3925 = vunpack.c.l.b16 %v569
    %v3926 = vunpack.c.h.b16 %v569
    %v3927 = vunpack.c.l.b16 %v570
    %v3928 = vunpack.c.h.b16 %v570
    %v3929 = vunpack.c.l.b16 %v571
    %v3930 = vunpack.c.h.b16 %v571
    %v3931 = vunpack.c.l.b16 %v572
    %v3932 = vunpack.c.h.b16 %v572
    %v3933 = vunpack.c.l.b16 %v573
    %v3934 = vunpack.c.h.b16 %v573
    %v3935 = vunpack.c.l.b16 %v574
    %v3936 = vunpack.c.h.b16 %v574
    %v3937 = vunpack.c.l.b16 %v575
    %v3938 = vunpack.c.h.b16 %v575
    %v3939 = vunpack.c.l.b16 %v576
    %v3940 = vunpack.c.h.b16 %v576
    %v3941 = vunpack.c.l.b16 %v577
    %v3942 = vunpack.c.h.b16 %v577
    %v3943 = vunpack.c.l.b16 %v578
    %v3944 = vunpack.c.h.b16 %v578
    %v3945 = vunpack.c.l.b16 %v579
    %v3946 = vunpack.c.h.b16 %v579
    %v3947 = vunpack.c.l.b16 %v580
    %v3948 = vunpack.c.h.b16 %v580
    %v3949 = vunpack.c.l.b16 %v581
    %v3950 = vunpack.c.h.b16 %v581
    %v3951 = vunpack.c.l.b16 %v582
    %v3952 = vunpack.c.h.b16 %v582
    %v3953 = vunpack.c.l.b16 %v583
    %v3954 = vunpack.c.h.b16 %v583
    %v3955 = vunpack.c.l.b16 %v584
    %v3956 = vunpack.c.h.b16 %v584
    %v3957 = vunpack.c.l.b16 %v585
    %v3958 = vunpack.c.h.b16 %v585
    %v3959 = vunpack.c.l.b16 %v586
    %v3960 = vunpack.c.h.b16 %v586
    %v3961 = vunpack.c.l.b16 %v587
    %v3962 = vunpack.c.h.b16 %v587
    %v3963 = vunpack.c.l.b16 %v588
    %v3964 = vunpack.c.h.b16 %v588
    %v3965 = vunpack.c.l.b16 %v589
    %v3966 = vunpack.c.h.b16 %v589
    %v3967 = vunpack.c.l.b16 %v590
    %v3968 = vunpack.c.h.b16 %v590
    %v3969 = vunpack.c.l.b16 %v591
    %v3970 = vunpack.c.h.b16 %v591
    %v3971 = vunpack.c.l.b16 %v592
    %v3972 = vunpack.c.h.b16 %v592
    %v3973 = vunpack.c.l.b16 %v593
    %v3974 = vunpack.c.h.b16 %v593
    %v3975 = vunpack.c.l.b16 %v594
    %v3976 = vunpack.c.h.b16 %v594
    %v3977 = vunpack.c.l.b16 %v595
    %v3978 = vunpack.c.h.b16 %v595
    %v3979 = vunpack.c.l.b16 %v596
    %v3980 = vunpack.c.h.b16 %v596
    %v3981 = vunpack.c.l.b16 %v597
    %v3982 = vunpack.c.h.b16 %v597
    %v3983 = vunpack.c.l.b16 %v598
    %v3984 = vunpack.c.h.b16 %v598
    %v3985 = vunpack.c.l.b16 %v599
    %v3986 = vunpack.c.h.b16 %v599
    %v3987 = vunpack.c.l.b16 %v600
    %v3988 = vunpack.c.h.b16 %v600
    %v3989 = vunpack.c.l.b16 %v601
    %v3990 = vunpack.c.h.b16 %v601
    %v3991 = vunpack.c.l.b16 %v602
    %v3992 = vunpack.c.h.b16 %v602
    %v3993 = vunpack.c.l.b16 %v603
    %v3994 = vunpack.c.h.b16 %v603
    %v3995 = vunpack.c.l.b16 %v604
    %v3996 = vunpack.c.h.b16 %v604
    %v3997 = vunpack.c.l.b16 %v605
    %v3998 = vunpack.c.h.b16 %v605
    %v3999 = vunpack.c.l.b16 %v606
    %v4000 = vunpack.c.h.b16 %v606
    %v4001 = vunpack.c.l.b16 %v607
    %v4002 = vunpack.c.h.b16 %v607
    %v4003 = vunpack.c.l.b16 %v608
    %v4004 = vunpack.c.h.b16 %v608
    %v4005 = vunpack.c.l.b16 %v609
    %v4006 = vunpack.c.h.b16 %v609
    %v4007 = vunpack.c.l.b16 %v610
    %v4008 = vunpack.c.h.b16 %v610
    %v4009 = vunpack.c.l.b16 %v611
    %v4010 = vunpack.c.h.b16 %v611
    %v4011 = vunpack.c.l.b16 %v612
    %v4012 = vunpack.c.h.b16 %v612
    %v4013 = vunpack.c.l.b16 %v613
    %v4014 = vunpack.c.h.b16 %v613
    %v4015 = vunpack.c.l.b16 %v614
    %v4016 = vunpack.c.h.b16 %v614
    %v4017 = vunpack.c.l.b16 %v615
    %v4018 = vunpack.c.h.b16 %v615
    %v4019 = vunpack.c.l.b16 %v616
    %v4020 = vunpack.c.h.b16 %v616
    %v4021 = vunpack.c.l.b16 %v617
    %v4022 = vunpack.c.h.b16 %v617
    %v4023 = vunpack.c.l.b16 %v618
    %v4024 = vunpack.c.h.b16 %v618
    %v4025 = vunpack.c.l.b16 %v619
    %v4026 = vunpack.c.h.b16 %v619
    %v4027 = vunpack.c.l.b16 %v620
    %v4028 = vunpack.c.h.b16 %v620
    %v4029 = vunpack.c.l.b16 %v621
    %v4030 = vunpack.c.h.b16 %v621
    %v4031 = vunpack.c.l.b16 %v622
    %v4032 = vunpack.c.h.b16 %v622
    %v4033 = vunpack.c.l.b16 %v623
    %v4034 = vunpack.c.h.b16 %v623
    %v4035 = vunpack.c.l.b16 %v624
    %v4036 = vunpack.c.h.b16 %v624
    %v4037 = vunpack.c.l.b16 %v625
    %v4038 = vunpack.c.h.b16 %v625
    %v4039 = vunpack.c.l.b16 %v626
    %v4040 = vunpack.c.h.b16 %v626
    %v4041 = vunpack.c.l.b16 %v627
    %v4042 = vunpack.c.h.b16 %v627
    %v4043 = vunpack.c.l.b16 %v628
    %v4044 = vunpack.c.h.b16 %v628
    %v4045 = vunpack.c.l.b16 %v629
    %v4046 = vunpack.c.h.b16 %v629
    %v4047 = vunpack.c.l.b16 %v630
    %v4048 = vunpack.c.h.b16 %v630
    %v4049 = vunpack.c.l.b16 %v631
    %v4050 = vunpack.c.h.b16 %v631
    %v4051 = vunpack.c.l.b16 %v632
    %v4052 = vunpack.c.h.b16 %v632
    %v4053 = vunpack.c.l.b16 %v633
    %v4054 = vunpack.c.h.b16 %v633
    %v4055 = vunpack.c.l.b16 %v634
    %v4056 = vunpack.c.h.b16 %v634
    %v4057 = vunpack.c.l.b16 %v635
    %v4058 = vunpack.c.h.b16 %v635
    %v4059 = vunpack.c.l.b16 %v636
    %v4060 = vunpack.c.h.b16 %v636
    %v4061 = vunpack.c.l.b16 %v637
    %v4062 = vunpack.c.h.b16 %v637
    %v4063 = vunpack.c.l.b16 %v638
    %v4064 = vunpack.c.h.b16 %v638
    %v4065 = vunpack.c.l.b16 %v639
    %v4066 = vunpack.c.h.b16 %v639
    %v4067 = vunpack.c.l.b16 %v640
    %v4068 = vunpack.c.h.b16 %v640
    %v4069 = vunpack.c.l.b16 %v641
    %v4070 = vunpack.c.h.b16 %v641
    %v4071 = vunpack.c.l.b16 %v642
    %v4072 = vunpack.c.h.b16 %v642
    %v4073 = vunpack.c.l.b16 %v643
    %v4074 = vunpack.c.h.b16 %v643
    %v4075 = vunpack.c.l.b16 %v644
    %v4076 = vunpack.c.h.b16 %v644
    %v4077 = vunpack.c.l.b16 %v645
    %v4078 = vunpack.c.h.b16 %v645
    %v4079 = vunpack.c.l.b16 %v646
    %v4080 = vunpack.c.h.b16 %v646
    %v4081 = vunpack.c.l.b16 %v647
    %v4082 = vunpack.c.h.b16 %v647
    %v4083 = vunpack.c.l.b16 %v648
    %v4084 = vunpack.c.h.b16 %v648
    %v4085 = vunpack.c.l.b16 %v649
    %v4086 = vunpack.c.h.b16 %v649
    %v4087 = vunpack.c.l.b16 %v650
    %v4088 = vunpack.c.h.b16 %v650
    %v4089 = vunpack.c.l.b16 %v651
    %v4090 = vunpack.c.h.b16 %v651
    %v4091 = vunpack.c.l.b16 %v652
    %v4092 = vunpack.c.h.b16 %v652
    %v4093 = vunpack.c.l.b16 %v653
    %v4094 = vunpack.c.h.b16 %v653
    %v4095 = vunpack.c.l.b16 %v654
    %v4096 = vunpack.c.h.b16 %v654
    %v4097 = vunpack.c.l.b16 %v655
    %v4098 = vunpack.c.h.b16 %v655
    %v4099 = vunpack.c.l.b16 %v656
    %v4100 = vunpack.c.h.b16 %v656
    %v4101 = vunpack.c.l.b16 %v657
    %v4102 = vunpack.c.h.b16 %v657
    %v4103 = vunpack.c.l.b16 %v658
    %v4104 = vunpack.c.h.b16 %v658
    %v4105 = vunpack.c.l.b16 %v659
    %v4106 = vunpack.c.h.b16 %v659
    %v4107 = vunpack.c.l.b16 %v660
    %v4108 = vunpack.c.h.b16 %v660
    %v4109 = vunpack.c.l.b16 %v661
    %v4110 = vunpack.c.h.b16 %v661
    %v4111 = vunpack.c.l.b16 %v662
    %v4112 = vunpack.c.h.b16 %v662
    %v4113 = vunpack.c.l.b16 %v663
    %v4114 = vunpack.c.h.b16 %v663
    %v4115 = vunpack.c.l.b16 %v664
    %v4116 = vunpack.c.h.b16 %v664
    %v4117 = vunpack.c.l.b16 %v665
    %v4118 = vunpack.c.h.b16 %v665
    %v4119 = vunpack.c.l.b16 %v666
    %v4120 = vunpack.c.h.b16 %v666
    %v4121 = vunpack.c.l.b16 %v667
    %v4122 = vunpack.c.h.b16 %v667
    %v4123 = vunpack.c.l.b16 %v668
    %v4124 = vunpack.c.h.b16 %v668
    %v4125 = vunpack.c.l.b16 %v669
    %v4126 = vunpack.c.h.b16 %v669
    %v4127 = vunpack.c.l.b16 %v670
    %v4128 = vunpack.c.h.b16 %v670
    %v4129 = vunpack.c.l.b16 %v671
    %v4130 = vunpack.c.h.b16 %v671
    %v4131 = vunpack.c.l.b16 %v672
    %v4132 = vunpack.c.h.b16 %v672
    %v4133 = vunpack.c.l.b16 %v673
    %v4134 = vunpack.c.h.b16 %v673
    %v4135 = vunpack.c.l.b16 %v674
    %v4136 = vunpack.c.h.b16 %v674
    %v4137 = vunpack.c.l.b16 %v675
    %v4138 = vunpack.c.h.b16 %v675
    %v4139 = vunpack.c.l.b16 %v676
    %v4140 = vunpack.c.h.b16 %v676
    %v4141 = vunpack.c.l.b16 %v677
    %v4142 = vunpack.c.h.b16 %v677
    %v4143 = vunpack.c.l.b16 %v678
    %v4144 = vunpack.c.h.b16 %v678
    %v4145 = vunpack.c.l.b16 %v679
    %v4146 = vunpack.c.h.b16 %v679
    %v4147 = vunpack.c.l.b16 %v680
    %v4148 = vunpack.c.h.b16 %v680
    %v4149 = vunpack.c.l.b16 %v681
    %v4150 = vunpack.c.h.b16 %v681
    %v4151 = vunpack.c.l.b16 %v682
    %v4152 = vunpack.c.h.b16 %v682
    %v4153 = vunpack.c.l.b16 %v683
    %v4154 = vunpack.c.h.b16 %v683
    %v4155 = vunpack.c.l.b16 %v684
    %v4156 = vunpack.c.h.b16 %v684
    %v4157 = vunpack.c.l.b16 %v685
    %v4158 = vunpack.c.h.b16 %v685
    %v4159 = vunpack.c.l.b16 %v686
    %v4160 = vunpack.c.h.b16 %v686
    %v4161 = vunpack.c.l.b16 %v687
    %v4162 = vunpack.c.h.b16 %v687
    %v4163 = vunpack.c.l.b16 %v688
    %v4164 = vunpack.c.h.b16 %v688
    %v4165 = vunpack.c.l.b16 %v689
    %v4166 = vunpack.c.h.b16 %v689
    %v4167 = vunpack.c.l.b16 %v690
    %v4168 = vunpack.c.h.b16 %v690
    %v4169 = vunpack.c.l.b16 %v691
    %v4170 = vunpack.c.h.b16 %v691
    %v4171 = vunpack.c.l.b16 %v692
    %v4172 = vunpack.c.h.b16 %v692
    %v4173 = vunpack.c.l.b16 %v693
    %v4174 = vunpack.c.h.b16 %v693
    %v4175 = vunpack.c.l.b16 %v694
    %v4176 = vunpack.c.h.b16 %v694
    %v4177 = vunpack.c.l.b16 %v695
    %v4178 = vunpack.c.h.b16 %v695
    %v4179 = vunpack.c.l.b16 %v696
    %v4180 = vunpack.c.h.b16 %v696
    %v4181 = vunpack.c.l.b16 %v697
    %v4182 = vunpack.c.h.b16 %v697
    %v4183 = vunpack.c.l.b16 %v698
    %v4184 = vunpack.c.h.b16 %v698
    %v4185 = vunpack.c.l.b16 %v699
    %v4186 = vunpack.c.h.b16 %v699
    %v4187 = vunpack.c.l.b16 %v700
    %v4188 = vunpack.c.h.b16 %v700
    %v4189 = vunpack.c.l.b16 %v701
    %v4190 = vunpack.c.h.b16 %v701
    %v4191 = vunpack.c.l.b16 %v702
    %v4192 = vunpack.c.h.b16 %v702
    %v4193 = vunpack.c.l.b16 %v703
    %v4194 = vunpack.c.h.b16 %v703
    %v4195 = vunpack.c.l.b16 %v704
    %v4196 = vunpack.c.h.b16 %v704
    %v4197 = vunpack.c.l.b16 %v705
    %v4198 = vunpack.c.h.b16 %v705
    %v4199 = vunpack.c.l.b16 %v706
    %v4200 = vunpack.c.h.b16 %v706
    %v4201 = vunpack.c.l.b16 %v707
    %v4202 = vunpack.c.h.b16 %v707
    %v4203 = vunpack.c.l.b16 %v708
    %v4204 = vunpack.c.h.b16 %v708
    %v4205 = vunpack.c.l.b16 %v709
    %v4206 = vunpack.c.h.b16 %v709
    %v4207 = vunpack.c.l.b16 %v710
    %v4208 = vunpack.c.h.b16 %v710
    %v4209 = vunpack.c.l.b16 %v711
    %v4210 = vunpack.c.h.b16 %v711
    %v4211 = vunpack.c.l.b16 %v712
    %v4212 = vunpack.c.h.b16 %v712
    %v4213 = vunpack.c.l.b16 %v713
    %v4214 = vunpack.c.h.b16 %v713
    %v4215 = vunpack.c.l.b16 %v714
    %v4216 = vunpack.c.h.b16 %v714
    %v4217 = vunpack.c.l.b16 %v715
    %v4218 = vunpack.c.h.b16 %v715
    %v4219 = vunpack.c.l.b16 %v716
    %v4220 = vunpack.c.h.b16 %v716
    %v4221 = vunpack.c.l.b16 %v717
    %v4222 = vunpack.c.h.b16 %v717
    %v4223 = vunpack.c.l.b16 %v718
    %v4224 = vunpack.c.h.b16 %v718
    %v4225 = vunpack.c.l.b16 %v719
    %v4226 = vunpack.c.h.b16 %v719
    %v4227 = vunpack.c.l.b16 %v720
    %v4228 = vunpack.c.h.b16 %v720
    %v4229 = vunpack.c.l.b16 %v721
    %v4230 = vunpack.c.h.b16 %v721
    %v4231 = vunpack.c.l.b16 %v722
    %v4232 = vunpack.c.h.b16 %v722
    %v4233 = vunpack.c.l.b16 %v723
    %v4234 = vunpack.c.h.b16 %v723
    %v4235 = vunpack.c.l.b16 %v724
    %v4236 = vunpack.c.h.b16 %v724
    %v4237 = vunpack.c.l.b16 %v725
    %v4238 = vunpack.c.h.b16 %v725
    %v4239 = vunpack.c.l.b16 %v726
    %v4240 = vunpack.c.h.b16 %v726
    %v4241 = vunpack.c.l.b16 %v727
    %v4242 = vunpack.c.h.b16 %v727
    %v4243 = vunpack.c.l.b16 %v728
    %v4244 = vunpack.c.h.b16 %v728
    %v4245 = vunpack.c.l.b16 %v729
    %v4246 = vunpack.c.h.b16 %v729
    %v4247 = vpack.c.b16 %v3231, %v3223
    %v4248 = vpack.c.b16 %v3232, %v3224
    %v4249 = vpack.c.b16 %v3233, %v3225
    %v4250 = vpack.c.b16 %v3234, %v3226
    %v4251 = vpack.c.b16 %v3235, %v3227
    %v4252 = vpack.c.b16 %v3236, %v3228
    %v4253 = vpack.c.b16 %v3237, %v3229
    %v4254 = vpack.c.b16 %v3238, %v3230
    %v4255 = vpack.c.b16 %v3247, %v3239
    %v4256 = vpack.c.b16 %v3248, %v3240
    %v4257 = vpack.c.b16 %v3249, %v3241
    %v4258 = vpack.c.b16 %v3250, %v3242
    %v4259 = vpack.c.b16 %v3251, %v3243
    %v4260 = vpack.c.b16 %v3252, %v3244
    %v4261 = vpack.c.b16 %v3253, %v3245
    %v4262 = vpack.c.b16 %v3254, %v3246
    %v4263 = vpack.c.b16 %v3263, %v3255
    %v4264 = vpack.c.b16 %v3264, %v3256
    %v4265 = vpack.c.b16 %v3265, %v3257
    %v4266 = vpack.c.b16 %v3266, %v3258
    %v4267 = vpack.c.b16 %v3267, %v3259
    %v4268 = vpack.c.b16 %v3268, %v3260
    %v4269 = vpack.c.b16 %v3269, %v3261
    %v4270 = vpack.c.b16 %v3270, %v3262
    %v4271 = vpack.c.b16 %v3279, %v3271
    %v4272 = vpack.c.b16 %v3280, %v3272
    %v4273 = vpack.c.b16 %v3281, %v3273
    %v4274 = vpack.c.b16 %v3282, %v3274
    %v4275 = vpack.c.b16 %v3283, %v3275
    %v4276 = vpack.c.b16 %v3284, %v3276
    %v4277 = vpack.c.b16 %v3285, %v3277
    %v4278 = vpack.c.b16 %v3286, %v3278
    %v4279 = vpack.c.b16 %v3295, %v3287
    %v4280 = vpack.c.b16 %v3296, %v3288
    %v4281 = vpack.c.b16 %v3297, %v3289
    %v4282 = vpack.c.b16 %v3298, %v3290
    %v4283 = vpack.c.b16 %v3299, %v3291
    %v4284 = vpack.c.b16 %v3300, %v3292
    %v4285 = vpack.c.b16 %v3301, %v3293
    %v4286 = vpack.c.b16 %v3302, %v3294
    %v4287 = vpack.c.b16 %v3311, %v3303
    %v4288 = vpack.c.b16 %v3312, %v3304
    %v4289 = vpack.c.b16 %v3313, %v3305
    %v4290 = vpack.c.b16 %v3314, %v3306
    %v4291 = vpack.c.b16 %v3315, %v3307
    %v4292 = vpack.c.b16 %v3316, %v3308
    %v4293 = vpack.c.b16 %v3317, %v3309
    %v4294 = vpack.c.b16 %v3318, %v3310
    %v4295 = vpack.c.b16 %v3327, %v3319
    %v4296 = vpack.c.b16 %v3328, %v3320
    %v4297 = vpack.c.b16 %v3329, %v3321
    %v4298 = vpack.c.b16 %v3330, %v3322
    %v4299 = vpack.c.b16 %v3331, %v3323
    %v4300 = vpack.c.b16 %v3332, %v3324
    %v4301 = vpack.c.b16 %v3333, %v3325
    %v4302 = vpack.c.b16 %v3334, %v3326
    %v4303 = vpack.c.b16 %v3343, %v3335
    %v4304 = vpack.c.b16 %v3344, %v3336
    %v4305 = vpack.c.b16 %v3345, %v3337
    %v4306 = vpack.c.b16 %v3346, %v3338
    %v4307 = vpack.c.b16 %v3347, %v3339
    %v4308 = vpack.c.b16 %v3348, %v3340
    %v4309 = vpack.c.b16 %v3349, %v3341
    %v4310 = vpack.c.b16 %v3350, %v3342
    %v4311 = vpack.c.b16 %v3359, %v3351
    %v4312 = vpack.c.b16 %v3360, %v3352
    %v4313 = vpack.c.b16 %v3361, %v3353
    %v4314 = vpack.c.b16 %v3362, %v3354
    %v4315 = vpack.c.b16 %v3363, %v3355
    %v4316 = vpack.c.b16 %v3364, %v3356
    %v4317 = vpack.c.b16 %v3365, %v3357
    %v4318 = vpack.c.b16 %v3366, %v3358
    %v4319 = vpack.c.b16 %v3375, %v3367
    %v4320 = vpack.c.b16 %v3376, %v3368
    %v4321 = vpack.c.b16 %v3377, %v3369
    %v4322 = vpack.c.b16 %v3378, %v3370
    %v4323 = vpack.c.b16 %v3379, %v3371
    %v4324 = vpack.c.b16 %v3380, %v3372
    %v4325 = vpack.c.b16 %v3381, %v3373
    %v4326 = vpack.c.b16 %v3382, %v3374
    %v4327 = vpack.c.b16 %v3391, %v3383
    %v4328 = vpack.c.b16 %v3392, %v3384
    %v4329 = vpack.c.b16 %v3393, %v3385
    %v4330 = vpack.c.b16 %v3394, %v3386
    %v4331 = vpack.c.b16 %v3395, %v3387
    %v4332 = vpack.c.b16 %v3396, %v3388
    %v4333 = vpack.c.b16 %v3397, %v3389
    %v4334 = vpack.c.b16 %v3398, %v3390
    %v4335 = vpack.c.b16 %v3407, %v3399
    %v4336 = vpack.c.b16 %v3408, %v3400
    %v4337 = vpack.c.b16 %v3409, %v3401
    %v4338 = vpack.c.b16 %v3410, %v3402
    %v4339 = vpack.c.b16 %v3411, %v3403
    %v4340 = vpack.c.b16 %v3412, %v3404
    %v4341 = vpack.c.b16 %v3413, %v3405
    %v4342 = vpack.c.b16 %v3414, %v3406
    %v4343 = vpack.c.b16 %v3423, %v3415
    %v4344 = vpack.c.b16 %v3424, %v3416
    %v4345 = vpack.c.b16 %v3425, %v3417
    %v4346 = vpack.c.b16 %v3426, %v3418
    %v4347 = vpack.c.b16 %v3427, %v3419
    %v4348 = vpack.c.b16 %v3428, %v3420
    %v4349 = vpack.c.b16 %v3429, %v3421
    %v4350 = vpack.c.b16 %v3430, %v3422
    %v4351 = vpack.c.b16 %v3439, %v3431
    %v4352 = vpack.c.b16 %v3440, %v3432
    %v4353 = vpack.c.b16 %v3441, %v3433
    %v4354 = vpack.c.b16 %v3442, %v3434
    %v4355 = vpack.c.b16 %v3443, %v3435
    %v4356 = vpack.c.b16 %v3444, %v3436
    %v4357 = vpack.c.b16 %v3445, %v3437
    %v4358 = vpack.c.b16 %v3446, %v3438
    %v4359 = vpack.c.b16 %v3455, %v3447
    %v4360 = vpack.c.b16 %v3456, %v3448
    %v4361 = vpack.c.b16 %v3457, %v3449
    %v4362 = vpack.c.b16 %v3458, %v3450
    %v4363 = vpack.c.b16 %v3459, %v3451
    %v4364 = vpack.c.b16 %v3460, %v3452
    %v4365 = vpack.c.b16 %v3461, %v3453
    %v4366 = vpack.c.b16 %v3462, %v3454
    %v4367 = vpack.c.b16 %v3471, %v3463
    %v4368 = vpack.c.b16 %v3472, %v3464
    %v4369 = vpack.c.b16 %v3473, %v3465
    %v4370 = vpack.c.b16 %v3474, %v3466
    %v4371 = vpack.c.b16 %v3475, %v3467
    %v4372 = vpack.c.b16 %v3476, %v3468
    %v4373 = vpack.c.b16 %v3477, %v3469
    %v4374 = vpack.c.b16 %v3478, %v3470
    %v4375 = vpack.c.b16 %v3487, %v3479
    %v4376 = vpack.c.b16 %v3488, %v3480
    %v4377 = vpack.c.b16 %v3489, %v3481
    %v4378 = vpack.c.b16 %v3490, %v3482
    %v4379 = vpack.c.b16 %v3491, %v3483
    %v4380 = vpack.c.b16 %v3492, %v3484
    %v4381 = vpack.c.b16 %v3493, %v3485
    %v4382 = vpack.c.b16 %v3494, %v3486
    %v4383 = vpack.c.b16 %v3503, %v3495
    %v4384 = vpack.c.b16 %v3504, %v3496
    %v4385 = vpack.c.b16 %v3505, %v3497
    %v4386 = vpack.c.b16 %v3506, %v3498
    %v4387 = vpack.c.b16 %v3507, %v3499
    %v4388 = vpack.c.b16 %v3508, %v3500
    %v4389 = vpack.c.b16 %v3509, %v3501
    %v4390 = vpack.c.b16 %v3510, %v3502
    %v4391 = vpack.c.b16 %v3519, %v3511
    %v4392 = vpack.c.b16 %v3520, %v3512
    %v4393 = vpack.c.b16 %v3521, %v3513
    %v4394 = vpack.c.b16 %v3522, %v3514
    %v4395 = vpack.c.b16 %v3523, %v3515
    %v4396 = vpack.c.b16 %v3524, %v3516
    %v4397 = vpack.c.b16 %v3525, %v3517
    %v4398 = vpack.c.b16 %v3526, %v3518
    %v4399 = vpack.c.b16 %v3535, %v3527
    %v4400 = vpack.c.b16 %v3536, %v3528
    %v4401 = vpack.c.b16 %v3537, %v3529
    %v4402 = vpack.c.b16 %v3538, %v3530
    %v4403 = vpack.c.b16 %v3539, %v3531
    %v4404 = vpack.c.b16 %v3540, %v3532
    %v4405 = vpack.c.b16 %v3541, %v3533
    %v4406 = vpack.c.b16 %v3542, %v3534
    %v4407 = vpack.c.b16 %v3551, %v3543
    %v4408 = vpack.c.b16 %v3552, %v3544
    %v4409 = vpack.c.b16 %v3553, %v3545
    %v4410 = vpack.c.b16 %v3554, %v3546
    %v4411 = vpack.c.b16 %v3555, %v3547
    %v4412 = vpack.c.b16 %v3556, %v3548
    %v4413 = vpack.c.b16 %v3557, %v3549
    %v4414 = vpack.c.b16 %v3558, %v3550
    %v4415 = vpack.c.b16 %v3567, %v3559
    %v4416 = vpack.c.b16 %v3568, %v3560
    %v4417 = vpack.c.b16 %v3569, %v3561
    %v4418 = vpack.c.b16 %v3570, %v3562
    %v4419 = vpack.c.b16 %v3571, %v3563
    %v4420 = vpack.c.b16 %v3572, %v3564
    %v4421 = vpack.c.b16 %v3573, %v3565
    %v4422 = vpack.c.b16 %v3574, %v3566
    %v4423 = vpack.c.b16 %v3583, %v3575
    %v4424 = vpack.c.b16 %v3584, %v3576
    %v4425 = vpack.c.b16 %v3585, %v3577
    %v4426 = vpack.c.b16 %v3586, %v3578
    %v4427 = vpack.c.b16 %v3587, %v3579
    %v4428 = vpack.c.b16 %v3588, %v3580
    %v4429 = vpack.c.b16 %v3589, %v3581
    %v4430 = vpack.c.b16 %v3590, %v3582
    %v4431 = vpack.c.b16 %v3599, %v3591
    %v4432 = vpack.c.b16 %v3600, %v3592
    %v4433 = vpack.c.b16 %v3601, %v3593
    %v4434 = vpack.c.b16 %v3602, %v3594
    %v4435 = vpack.c.b16 %v3603, %v3595
    %v4436 = vpack.c.b16 %v3604, %v3596
    %v4437 = vpack.c.b16 %v3605, %v3597
    %v4438 = vpack.c.b16 %v3606, %v3598
    %v4439 = vpack.c.b16 %v3615, %v3607
    %v4440 = vpack.c.b16 %v3616, %v3608
    %v4441 = vpack.c.b16 %v3617, %v3609
    %v4442 = vpack.c.b16 %v3618, %v3610
    %v4443 = vpack.c.b16 %v3619, %v3611
    %v4444 = vpack.c.b16 %v3620, %v3612
    %v4445 = vpack.c.b16 %v3621, %v3613
    %v4446 = vpack.c.b16 %v3622, %v3614
    %v4447 = vpack.c.b16 %v3631, %v3623
    %v4448 = vpack.c.b16 %v3632, %v3624
    %v4449 = vpack.c.b16 %v3633, %v3625
    %v4450 = vpack.c.b16 %v3634, %v3626
    %v4451 = vpack.c.b16 %v3635, %v3627
    %v4452 = vpack.c.b16 %v3636, %v3628
    %v4453 = vpack.c.b16 %v3637, %v3629
    %v4454 = vpack.c.b16 %v3638, %v3630
    %v4455 = vpack.c.b16 %v3647, %v3639
    %v4456 = vpack.c.b16 %v3648, %v3640
    %v4457 = vpack.c.b16 %v3649, %v3641
    %v4458 = vpack.c.b16 %v3650, %v3642
    %v4459 = vpack.c.b16 %v3651, %v3643
    %v4460 = vpack.c.b16 %v3652, %v3644
    %v4461 = vpack.c.b16 %v3653, %v3645
    %v4462 = vpack.c.b16 %v3654, %v3646
    %v4463 = vpack.c.b16 %v3663, %v3655
    %v4464 = vpack.c.b16 %v3664, %v3656
    %v4465 = vpack.c.b16 %v3665, %v3657
    %v4466 = vpack.c.b16 %v3666, %v3658
    %v4467 = vpack.c.b16 %v3667, %v3659
    %v4468 = vpack.c.b16 %v3668, %v3660
    %v4469 = vpack.c.b16 %v3669, %v3661
    %v4470 = vpack.c.b16 %v3670, %v3662
    %v4471 = vpack.c.b16 %v3679, %v3671
    %v4472 = vpack.c.b16 %v3680, %v3672
    %v4473 = vpack.c.b16 %v3681, %v3673
    %v4474 = vpack.c.b16 %v3682, %v3674
    %v4475 = vpack.c.b16 %v3683, %v3675
    %v4476 = vpack.c.b16 %v3684, %v3676
    %v4477 = vpack.c.b16 %v3685, %v3677
    %v4478 = vpack.c.b16 %v3686, %v3678
    %v4479 = vpack.c.b16 %v3695, %v3687
    %v4480 = vpack.c.b16 %v3696, %v3688
    %v4481 = vpack.c.b16 %v3697, %v3689
    %v4482 = vpack.c.b16 %v3698, %v3690
    %v4483 = vpack.c.b16 %v3699, %v3691
    %v4484 = vpack.c.b16 %v3700, %v3692
    %v4485 = vpack.c.b16 %v3701, %v3693
    %v4486 = vpack.c.b16 %v3702, %v3694
    %v4487 = vpack.c.b16 %v3711, %v3703
    %v4488 = vpack.c.b16 %v3712, %v3704
    %v4489 = vpack.c.b16 %v3713, %v3705
    %v4490 = vpack.c.b16 %v3714, %v3706
    %v4491 = vpack.c.b16 %v3715, %v3707
    %v4492 = vpack.c.b16 %v3716, %v3708
    %v4493 = vpack.c.b16 %v3717, %v3709
    %v4494 = vpack.c.b16 %v3718, %v3710
    %v4495 = vpack.c.b16 %v3727, %v3719
    %v4496 = vpack.c.b16 %v3728, %v3720
    %v4497 = vpack.c.b16 %v3729, %v3721
    %v4498 = vpack.c.b16 %v3730, %v3722
    %v4499 = vpack.c.b16 %v3731, %v3723
    %v4500 = vpack.c.b16 %v3732, %v3724
    %v4501 = vpack.c.b16 %v3733, %v3725
    %v4502 = vpack.c.b16 %v3734, %v3726
    %v4503 = vpack.c.b16 %v3743, %v3735
    %v4504 = vpack.c.b16 %v3744, %v3736
    %v4505 = vpack.c.b16 %v3745, %v3737
    %v4506 = vpack.c.b16 %v3746, %v3738
    %v4507 = vpack.c.b16 %v3747, %v3739
    %v4508 = vpack.c.b16 %v3748, %v3740
    %v4509 = vpack.c.b16 %v3749, %v3741
    %v4510 = vpack.c.b16 %v3750, %v3742
    %v4511 = vpack.c.b16 %v3759, %v3751
    %v4512 = vpack.c.b16 %v3760, %v3752
    %v4513 = vpack.c.b16 %v3761, %v3753
    %v4514 = vpack.c.b16 %v3762, %v3754
    %v4515 = vpack.c.b16 %v3763, %v3755
    %v4516 = vpack.c.b16 %v3764, %v3756
    %v4517 = vpack.c.b16 %v3765, %v3757
    %v4518 = vpack.c.b16 %v3766, %v3758
    %v4519 = vpack.c.b16 %v3775, %v3767
    %v4520 = vpack.c.b16 %v3776, %v3768
    %v4521 = vpack.c.b16 %v3777, %v3769
    %v4522 = vpack.c.b16 %v3778, %v3770
    %v4523 = vpack.c.b16 %v3779, %v3771
    %v4524 = vpack.c.b16 %v3780, %v3772
    %v4525 = vpack.c.b16 %v3781, %v3773
    %v4526 = vpack.c.b16 %v3782, %v3774
    %v4527 = vpack.c.b16 %v3791, %v3783
    %v4528 = vpack.c.b16 %v3792, %v3784
    %v4529 = vpack.c.b16 %v3793, %v3785
    %v4530 = vpack.c.b16 %v3794, %v3786
    %v4531 = vpack.c.b16 %v3795, %v3787
    %v4532 = vpack.c.b16 %v3796, %v3788
    %v4533 = vpack.c.b16 %v3797, %v3789
    %v4534 = vpack.c.b16 %v3798, %v3790
    %v4535 = vpack.c.b16 %v3807, %v3799
    %v4536 = vpack.c.b16 %v3808, %v3800
    %v4537 = vpack.c.b16 %v3809, %v3801
    %v4538 = vpack.c.b16 %v3810, %v3802
    %v4539 = vpack.c.b16 %v3811, %v3803
    %v4540 = vpack.c.b16 %v3812, %v3804
    %v4541 = vpack.c.b16 %v3813, %v3805
    %v4542 = vpack.c.b16 %v3814, %v3806
    %v4543 = vpack.c.b16 %v3823, %v3815
    %v4544 = vpack.c.b16 %v3824, %v3816
    %v4545 = vpack.c.b16 %v3825, %v3817
    %v4546 = vpack.c.b16 %v3826, %v3818
    %v4547 = vpack.c.b16 %v3827, %v3819
    %v4548 = vpack.c.b16 %v3828, %v3820
    %v4549 = vpack.c.b16 %v3829, %v3821
    %v4550 = vpack.c.b16 %v3830, %v3822
    %v4551 = vpack.c.b16 %v3839, %v3831
    %v4552 = vpack.c.b16 %v3840, %v3832
    %v4553 = vpack.c.b16 %v3841, %v3833
    %v4554 = vpack.c.b16 %v3842, %v3834
    %v4555 = vpack.c.b16 %v3843, %v3835
    %v4556 = vpack.c.b16 %v3844, %v3836
    %v4557 = vpack.c.b16 %v3845, %v3837
    %v4558 = vpack.c.b16 %v3846, %v3838
    %v4559 = vpack.c.b16 %v3855, %v3847
    %v4560 = vpack.c.b16 %v3856, %v3848
    %v4561 = vpack.c.b16 %v3857, %v3849
    %v4562 = vpack.c.b16 %v3858, %v3850
    %v4563 = vpack.c.b16 %v3859, %v3851
    %v4564 = vpack.c.b16 %v3860, %v3852
    %v4565 = vpack.c.b16 %v3861, %v3853
    %v4566 = vpack.c.b16 %v3862, %v3854
    %v4567 = vpack.c.b16 %v3871, %v3863
    %v4568 = vpack.c.b16 %v3872, %v3864
    %v4569 = vpack.c.b16 %v3873, %v3865
    %v4570 = vpack.c.b16 %v3874, %v3866
    %v4571 = vpack.c.b16 %v3875, %v3867
    %v4572 = vpack.c.b16 %v3876, %v3868
    %v4573 = vpack.c.b16 %v3877, %v3869
    %v4574 = vpack.c.b16 %v3878, %v3870
    %v4575 = vpack.c.b16 %v3887, %v3879
    %v4576 = vpack.c.b16 %v3888, %v3880
    %v4577 = vpack.c.b16 %v3889, %v3881
    %v4578 = vpack.c.b16 %v3890, %v3882
    %v4579 = vpack.c.b16 %v3891, %v3883
    %v4580 = vpack.c.b16 %v3892, %v3884
    %v4581 = vpack.c.b16 %v3893, %v3885
    %v4582 = vpack.c.b16 %v3894, %v3886
    %v4583 = vpack.c.b16 %v3903, %v3895
    %v4584 = vpack.c.b16 %v3904, %v3896
    %v4585 = vpack.c.b16 %v3905, %v3897
    %v4586 = vpack.c.b16 %v3906, %v3898
    %v4587 = vpack.c.b16 %v3907, %v3899
    %v4588 = vpack.c.b16 %v3908, %v3900
    %v4589 = vpack.c.b16 %v3909, %v3901
    %v4590 = vpack.c.b16 %v3910, %v3902
    %v4591 = vpack.c.b16 %v3919, %v3911
    %v4592 = vpack.c.b16 %v3920, %v3912
    %v4593 = vpack.c.b16 %v3921, %v3913
    %v4594 = vpack.c.b16 %v3922, %v3914
    %v4595 = vpack.c.b16 %v3923, %v3915
    %v4596 = vpack.c.b16 %v3924, %v3916
    %v4597 = vpack.c.b16 %v3925, %v3917
    %v4598 = vpack.c.b16 %v3926, %v3918
    %v4599 = vpack.c.b16 %v3935, %v3927
    %v4600 = vpack.c.b16 %v3936, %v3928
    %v4601 = vpack.c.b16 %v3937, %v3929
    %v4602 = vpack.c.b16 %v3938, %v3930
    %v4603 = vpack.c.b16 %v3939, %v3931
    %v4604 = vpack.c.b16 %v3940, %v3932
    %v4605 = vpack.c.b16 %v3941, %v3933
    %v4606 = vpack.c.b16 %v3942, %v3934
    %v4607 = vpack.c.b16 %v3951, %v3943
    %v4608 = vpack.c.b16 %v3952, %v3944
    %v4609 = vpack.c.b16 %v3953, %v3945
    %v4610 = vpack.c.b16 %v3954, %v3946
    %v4611 = vpack.c.b16 %v3955, %v3947
    %v4612 = vpack.c.b16 %v3956, %v3948
    %v4613 = vpack.c.b16 %v3957, %v3949
    %v4614 = vpack.c.b16 %v3958, %v3950
    %v4615 = vpack.c.b16 %v3967, %v3959
    %v4616 = vpack.c.b16 %v3968, %v3960
    %v4617 = vpack.c.b16 %v3969, %v3961
    %v4618 = vpack.c.b16 %v3970, %v3962
    %v4619 = vpack.c.b16 %v3971, %v3963
    %v4620 = vpack.c.b16 %v3972, %v3964
    %v4621 = vpack.c.b16 %v3973, %v3965
    %v4622 = vpack.c.b16 %v3974, %v3966
    %v4623 = vpack.c.b16 %v3983, %v3975
    %v4624 = vpack.c.b16 %v3984, %v3976
    %v4625 = vpack.c.b16 %v3985, %v3977
    %v4626 = vpack.c.b16 %v3986, %v3978
    %v4627 = vpack.c.b16 %v3987, %v3979
    %v4628 = vpack.c.b16 %v3988, %v3980
    %v4629 = vpack.c.b16 %v3989, %v3981
    %v4630 = vpack.c.b16 %v3990, %v3982
    %v4631 = vpack.c.b16 %v3999, %v3991
    %v4632 = vpack.c.b16 %v4000, %v3992
    %v4633 = vpack.c.b16 %v4001, %v3993
    %v4634 = vpack.c.b16 %v4002, %v3994
    %v4635 = vpack.c.b16 %v4003, %v3995
    %v4636 = vpack.c.b16 %v4004, %v3996
    %v4637 = vpack.c.b16 %v4005, %v3997
    %v4638 = vpack.c.b16 %v4006, %v3998
    %v4639 = vpack.c.b16 %v4015, %v4007
    %v4640 = vpack.c.b16 %v4016, %v4008
    %v4641 = vpack.c.b16 %v4017, %v4009
    %v4642 = vpack.c.b16 %v4018, %v4010
    %v4643 = vpack.c.b16 %v4019, %v4011
    %v4644 = vpack.c.b16 %v4020, %v4012
    %v4645 = vpack.c.b16 %v4021, %v4013
    %v4646 = vpack.c.b16 %v4022, %v4014
    %v4647 = vpack.c.b16 %v4031, %v4023
    %v4648 = vpack.c.b16 %v4032, %v4024
    %v4649 = vpack.c.b16 %v4033, %v4025
    %v4650 = vpack.c.b16 %v4034, %v4026
    %v4651 = vpack.c.b16 %v4035, %v4027
    %v4652 = vpack.c.b16 %v4036, %v4028
    %v4653 = vpack.c.b16 %v4037, %v4029
    %v4654 = vpack.c.b16 %v4038, %v4030
    %v4655 = vpack.c.b16 %v4047, %v4039
    %v4656 = vpack.c.b16 %v4048, %v4040
    %v4657 = vpack.c.b16 %v4049, %v4041
    %v4658 = vpack.c.b16 %v4050, %v4042
    %v4659 = vpack.c.b16 %v4051, %v4043
    %v4660 = vpack.c.b16 %v4052, %v4044
    %v4661 = vpack.c.b16 %v4053, %v4045
    %v4662 = vpack.c.b16 %v4054, %v4046
    %v4663 = vpack.c.b16 %v4063, %v4055
    %v4664 = vpack.c.b16 %v4064, %v4056
    %v4665 = vpack.c.b16 %v4065, %v4057
    %v4666 = vpack.c.b16 %v4066, %v4058
    %v4667 = vpack.c.b16 %v4067, %v4059
    %v4668 = vpack.c.b16 %v4068, %v4060
    %v4669 = vpack.c.b16 %v4069, %v4061
    %v4670 = vpack.c.b16 %v4070, %v4062
    %v4671 = vpack.c.b16 %v4079, %v4071
    %v4672 = vpack.c.b16 %v4080, %v4072
    %v4673 = vpack.c.b16 %v4081, %v4073
    %v4674 = vpack.c.b16 %v4082, %v4074
    %v4675 = vpack.c.b16 %v4083, %v4075
    %v4676 = vpack.c.b16 %v4084, %v4076
    %v4677 = vpack.c.b16 %v4085, %v4077
    %v4678 = vpack.c.b16 %v4086, %v4078
    %v4679 = vpack.c.b16 %v4095, %v4087
    %v4680 = vpack.c.b16 %v4096, %v4088
    %v4681 = vpack.c.b16 %v4097, %v4089
    %v4682 = vpack.c.b16 %v4098, %v4090
    %v4683 = vpack.c.b16 %v4099, %v4091
    %v4684 = vpack.c.b16 %v4100, %v4092
    %v4685 = vpack.c.b16 %v4101, %v4093
    %v4686 = vpack.c.b16 %v4102, %v4094
    %v4687 = vpack.c.b16 %v4111, %v4103
    %v4688 = vpack.c.b16 %v4112, %v4104
    %v4689 = vpack.c.b16 %v4113, %v4105
    %v4690 = vpack.c.b16 %v4114, %v4106
    %v4691 = vpack.c.b16 %v4115, %v4107
    %v4692 = vpack.c.b16 %v4116, %v4108
    %v4693 = vpack.c.b16 %v4117, %v4109
    %v4694 = vpack.c.b16 %v4118, %v4110
    %v4695 = vpack.c.b16 %v4127, %v4119
    %v4696 = vpack.c.b16 %v4128, %v4120
    %v4697 = vpack.c.b16 %v4129, %v4121
    %v4698 = vpack.c.b16 %v4130, %v4122
    %v4699 = vpack.c.b16 %v4131, %v4123
    %v4700 = vpack.c.b16 %v4132, %v4124
    %v4701 = vpack.c.b16 %v4133, %v4125
    %v4702 = vpack.c.b16 %v4134, %v4126
    %v4703 = vpack.c.b16 %v4143, %v4135
    %v4704 = vpack.c.b16 %v4144, %v4136
    %v4705 = vpack.c.b16 %v4145, %v4137
    %v4706 = vpack.c.b16 %v4146, %v4138
    %v4707 = vpack.c.b16 %v4147, %v4139
    %v4708 = vpack.c.b16 %v4148, %v4140
    %v4709 = vpack.c.b16 %v4149, %v4141
    %v4710 = vpack.c.b16 %v4150, %v4142
    %v4711 = vpack.c.b16 %v4159, %v4151
    %v4712 = vpack.c.b16 %v4160, %v4152
    %v4713 = vpack.c.b16 %v4161, %v4153
    %v4714 = vpack.c.b16 %v4162, %v4154
    %v4715 = vpack.c.b16 %v4163, %v4155
    %v4716 = vpack.c.b16 %v4164, %v4156
    %v4717 = vpack.c.b16 %v4165, %v4157
    %v4718 = vpack.c.b16 %v4166, %v4158
    %v4719 = vpack.c.b16 %v4175, %v4167
    %v4720 = vpack.c.b16 %v4176, %v4168
    %v4721 = vpack.c.b16 %v4177, %v4169
    %v4722 = vpack.c.b16 %v4178, %v4170
    %v4723 = vpack.c.b16 %v4179, %v4171
    %v4724 = vpack.c.b16 %v4180, %v4172
    %v4725 = vpack.c.b16 %v4181, %v4173
    %v4726 = vpack.c.b16 %v4182, %v4174
    %v4727 = vpack.c.b16 %v4191, %v4183
    %v4728 = vpack.c.b16 %v4192, %v4184
    %v4729 = vpack.c.b16 %v4193, %v4185
    %v4730 = vpack.c.b16 %v4194, %v4186
    %v4731 = vpack.c.b16 %v4195, %v4187
    %v4732 = vpack.c.b16 %v4196, %v4188
    %v4733 = vpack.c.b16 %v4197, %v4189
    %v4734 = vpack.c.b16 %v4198, %v4190
    %v4735 = vpack.c.b16 %v4207, %v4199
    %v4736 = vpack.c.b16 %v4208, %v4200
    %v4737 = vpack.c.b16 %v4209, %v4201
    %v4738 = vpack.c.b16 %v4210, %v4202
    %v4739 = vpack.c.b16 %v4211, %v4203
    %v4740 = vpack.c.b16 %v4212, %v4204
    %v4741 = vpack.c.b16 %v4213, %v4205
    %v4742 = vpack.c.b16 %v4214, %v4206
    %v4743 = vpack.c.b16 %v4223, %v4215
    %v4744 = vpack.c.b16 %v4224, %v4216
    %v4745 = vpack.c.b16 %v4225, %v4217
    %v4746 = vpack.c.b16 %v4226, %v4218
    %v4747 = vpack.c.b16 %v4227, %v4219
    %v4748 = vpack.c.b16 %v4228, %v4220
    %v4749 = vpack.c.b16 %v4229, %v4221
    %v4750 = vpack.c.b16 %v4230, %v4222
    %v4751 = vpack.c.b16 %v4239, %v4231
    %v4752 = vpack.c.b16 %v4240, %v4232
    %v4753 = vpack.c.b16 %v4241, %v4233
    %v4754 = vpack.c.b16 %v4242, %v4234
    %v4755 = vpack.c.b16 %v4243, %v4235
    %v4756 = vpack.c.b16 %v4244, %v4236
    %v4757 = vpack.c.b16 %v4245, %v4237
    %v4758 = vpack.c.b16 %v4246, %v4238
    %5271 = vmatprep.subr.bf16.mxu0 %v4248
    %5272 = vmatpush1.bf16.msra.mxu0 %v4247
    %5273 = vmatprep.subr.bf16.mxu0 %v4256
    %5274 = vmatpush1.bf16.msra.mxu0 %v4255
    %5275 = vmatprep.subr.bf16.mxu0 %v4264
    %5276 = vmatpush1.bf16.msra.mxu0 %v4263
    %5277 = vmatprep.subr.bf16.mxu0 %v4272
    %5278 = vmatpush1.bf16.msra.mxu0 %v4271
    %5279 = vmatprep.subr.bf16.mxu0 %v4280
    %5280 = vmatpush1.bf16.msra.mxu0 %v4279
    %5281 = vmatprep.subr.bf16.mxu0 %v4288
    %5282 = vmatpush1.bf16.msra.mxu0 %v4287
    %5283 = vmatprep.subr.bf16.mxu0 %v4296
    %5284 = vmatpush1.bf16.msra.mxu0 %v4295
    %5285 = vmatprep.subr.bf16.mxu0 %v4304
    %5286 = vmatpush1.bf16.msra.mxu0 %v4303
    %5287 = vmatprep.subr.bf16.mxu0 %v4312
    %5288 = vmatpush1.bf16.msra.mxu0 %v4311
    %5289 = vmatprep.subr.bf16.mxu0 %v4320
    %5290 = vmatpush1.bf16.msra.mxu0 %v4319
    %5291 = vmatprep.subr.bf16.mxu0 %v4328
    %5292 = vmatpush1.bf16.msra.mxu0 %v4327
    %5293 = vmatprep.subr.bf16.mxu0 %v4336
    %5294 = vmatpush1.bf16.msra.mxu0 %v4335
    %5295 = vmatprep.subr.bf16.mxu0 %v4344
    %5296 = vmatpush1.bf16.msra.mxu0 %v4343
    %5297 = vmatprep.subr.bf16.mxu0 %v4352
    %5298 = vmatpush1.bf16.msra.mxu0 %v4351
    %5299 = vmatprep.subr.bf16.mxu0 %v4360
    %5300 = vmatpush1.bf16.msra.mxu0 %v4359
    %5301 = vmatprep.subr.bf16.mxu0 %v4368
    %5302 = vmatpush1.bf16.msra.mxu0 %v4367
    %5303 = vmatprep.mubr.bf16.mxu0 %v2704
    %5304 = vmatmul.mubr.bf16.gmra.mrb[0].mxu0 %v2703
    %v5305 = vpop.f32.mrb[0].mxu0
    %v5306 = vadd.f32 0.0, %v5305
    %v5307 = vpop.f32.mrb[0].mxu0
    %v5308 = vadd.f32 0.0, %v5307
    %v5309 = vpop.f32.mrb[0].mxu0
    %v5310 = vadd.f32 0.0, %v5309
    %v5311 = vpop.f32.mrb[0].mxu0
    %v5312 = vadd.f32 0.0, %v5311
    %5313 = vdwg.mxu0
    %5314 = vmatprep.subr.bf16.mxu0 %v4376
    %5315 = vmatpush1.bf16.msra.mxu0 %v4375
    %5316 = vmatprep.subr.bf16.mxu0 %v4384
    %5317 = vmatpush1.bf16.msra.mxu0 %v4383
    %5318 = vmatprep.subr.bf16.mxu0 %v4392
    %5319 = vmatpush1.bf16.msra.mxu0 %v4391
    %5320 = vmatprep.subr.bf16.mxu0 %v4400
    %5321 = vmatpush1.bf16.msra.mxu0 %v4399
    %5322 = vmatprep.subr.bf16.mxu0 %v4408
    %5323 = vmatpush1.bf16.msra.mxu0 %v4407
    %5324 = vmatprep.subr.bf16.mxu0 %v4416
    %5325 = vmatpush1.bf16.msra.mxu0 %v4415
    %5326 = vmatprep.subr.bf16.mxu0 %v4424
    %5327 = vmatpush1.bf16.msra.mxu0 %v4423
    %5328 = vmatprep.subr.bf16.mxu0 %v4432
    %5329 = vmatpush1.bf16.msra.mxu0 %v4431
    %5330 = vmatprep.subr.bf16.mxu0 %v4440
    %5331 = vmatpush1.bf16.msra.mxu0 %v4439
    %5332 = vmatprep.subr.bf16.mxu0 %v4448
    %5333 = vmatpush1.bf16.msra.mxu0 %v4447
    %5334 = vmatprep.subr.bf16.mxu0 %v4456
    %5335 = vmatpush1.bf16.msra.mxu0 %v4455
    %5336 = vmatprep.subr.bf16.mxu0 %v4464
    %5337 = vmatpush1.bf16.msra.mxu0 %v4463
    %5338 = vmatprep.subr.bf16.mxu0 %v4472
    %5339 = vmatpush1.bf16.msra.mxu0 %v4471
    %5340 = vmatprep.subr.bf16.mxu0 %v4480
    %5341 = vmatpush1.bf16.msra.mxu0 %v4479
    %5342 = vmatprep.subr.bf16.mxu0 %v4488
    %5343 = vmatpush1.bf16.msra.mxu0 %v4487
    %5344 = vmatprep.subr.bf16.mxu0 %v4496
    %5345 = vmatpush1.bf16.msra.mxu0 %v4495
    %5346 = vmatprep.mubr.bf16.mxu0 %v2706
    %5347 = vmatmul.mubr.bf16.gmra.mrb[0].mxu0 %v2705
    %v5348 = vpop.f32.mrb[0].mxu0
    %v5349 = vadd.f32 %v5306, %v5348
    %v5350 = vpop.f32.mrb[0].mxu0
    %v5351 = vadd.f32 %v5308, %v5350
    %v5352 = vpop.f32.mrb[0].mxu0
    %v5353 = vadd.f32 %v5310, %v5352
    %v5354 = vpop.f32.mrb[0].mxu0
    %v5355 = vadd.f32 %v5312, %v5354
    %5356 = vdwg.mxu0
    %5357 = vmatprep.subr.bf16.mxu0 %v4504
    %5358 = vmatpush1.bf16.msra.mxu0 %v4503
    %5359 = vmatprep.subr.bf16.mxu0 %v4512
    %5360 = vmatpush1.bf16.msra.mxu0 %v4511
    %5361 = vmatprep.subr.bf16.mxu0 %v4520
    %5362 = vmatpush1.bf16.msra.mxu0 %v4519
    %5363 = vmatprep.subr.bf16.mxu0 %v4528
    %5364 = vmatpush1.bf16.msra.mxu0 %v4527
    %5365 = vmatprep.subr.bf16.mxu0 %v4536
    %5366 = vmatpush1.bf16.msra.mxu0 %v4535
    %5367 = vmatprep.subr.bf16.mxu0 %v4544
    %5368 = vmatpush1.bf16.msra.mxu0 %v4543
    %5369 = vmatprep.subr.bf16.mxu0 %v4552
    %5370 = vmatpush1.bf16.msra.mxu0 %v4551
    %5371 = vmatprep.subr.bf16.mxu0 %v4560
    %5372 = vmatpush1.bf16.msra.mxu0 %v4559
    %5373 = vmatprep.subr.bf16.mxu0 %v4568
    %5374 = vmatpush1.bf16.msra.mxu0 %v4567
    %5375 = vmatprep.subr.bf16.mxu0 %v4576
    %5376 = vmatpush1.bf16.msra.mxu0 %v4575
    %5377 = vmatprep.subr.bf16.mxu0 %v4584
    %5378 = vmatpush1.bf16.msra.mxu0 %v4583
    %5379 = vmatprep.subr.bf16.mxu0 %v4592
    %5380 = vmatpush1.bf16.msra.mxu0 %v4591
    %5381 = vmatprep.subr.bf16.mxu0 %v4600
    %5382 = vmatpush1.bf16.msra.mxu0 %v4599
    %5383 = vmatprep.subr.bf16.mxu0 %v4608
    %5384 = vmatpush1.bf16.msra.mxu0 %v4607
    %5385 = vmatprep.subr.bf16.mxu0 %v4616
    %5386 = vmatpush1.bf16.msra.mxu0 %v4615
    %5387 = vmatprep.subr.bf16.mxu0 %v4624
    %5388 = vmatpush1.bf16.msra.mxu0 %v4623
    %5389 = vmatprep.mubr.bf16.mxu0 %v2708
    %5390 = vmatmul.mubr.bf16.gmra.mrb[0].mxu0 %v2707
    %v5391 = vpop.f32.mrb[0].mxu0
    %v5392 = vadd.f32 %v5349, %v5391
    %v5393 = vpop.f32.mrb[0].mxu0
    %v5394 = vadd.f32 %v5351, %v5393
    %v5395 = vpop.f32.mrb[0].mxu0
    %v5396 = vadd.f32 %v5353, %v5395
    %v5397 = vpop.f32.mrb[0].mxu0
    %v5398 = vadd.f32 %v5355, %v5397
    %5399 = vdwg.mxu0
    %5400 = vmatprep.subr.bf16.mxu0 %v4632
    %5401 = vmatpush1.bf16.msra.mxu0 %v4631
    %5402 = vmatprep.subr.bf16.mxu0 %v4640
    %5403 = vmatpush1.bf16.msra.mxu0 %v4639
    %5404 = vmatprep.subr.bf16.mxu0 %v4648
    %5405 = vmatpush1.bf16.msra.mxu0 %v4647
    %5406 = vmatprep.subr.bf16.mxu0 %v4656
    %5407 = vmatpush1.bf16.msra.mxu0 %v4655
    %5408 = vmatprep.subr.bf16.mxu0 %v4664
    %5409 = vmatpush1.bf16.msra.mxu0 %v4663
    %5410 = vmatprep.subr.bf16.mxu0 %v4672
    %5411 = vmatpush1.bf16.msra.mxu0 %v4671
    %5412 = vmatprep.subr.bf16.mxu0 %v4680
    %5413 = vmatpush1.bf16.msra.mxu0 %v4679
    %5414 = vmatprep.subr.bf16.mxu0 %v4688
    %5415 = vmatpush1.bf16.msra.mxu0 %v4687
    %5416 = vmatprep.subr.bf16.mxu0 %v4696
    %5417 = vmatpush1.bf16.msra.mxu0 %v4695
    %5418 = vmatprep.subr.bf16.mxu0 %v4704
    %5419 = vmatpush1.bf16.msra.mxu0 %v4703
    %5420 = vmatprep.subr.bf16.mxu0 %v4712
    %5421 = vmatpush1.bf16.msra.mxu0 %v4711
    %5422 = vmatprep.subr.bf16.mxu0 %v4720
    %5423 = vmatpush1.bf16.msra.mxu0 %v4719
    %5424 = vmatprep.subr.bf16.mxu0 %v4728
    %5425 = vmatpush1.bf16.msra.mxu0 %v4727
    %5426 = vmatprep.subr.bf16.mxu0 %v4736
    %5427 = vmatpush1.bf16.msra.mxu0 %v4735
    %5428 = vmatprep.subr.bf16.mxu0 %v4744
    %5429 = vmatpush1.bf16.msra.mxu0 %v4743
    %5430 = vmatprep.subr.bf16.mxu0 %v4752
    %5431 = vmatpush1.bf16.msra.mxu0 %v4751
    %5432 = vmatprep.mubr.bf16.mxu0 %v2710
    %5433 = vmatmul.mubr.bf16.gmra.mrb[0].mxu0 %v2709
    %v5434 = vpop.f32.mrb[0].mxu0
    %v5435 = vadd.f32 %v5392, %v5434
    %v5436 = vpop.f32.mrb[0].mxu0
    %v5437 = vadd.f32 %v5394, %v5436
    %v5438 = vpop.f32.mrb[0].mxu0
    %v5439 = vadd.f32 %v5396, %v5438
    %v5440 = vpop.f32.mrb[0].mxu0
    %v5441 = vadd.f32 %v5398, %v5440
    %5442 = vdwg.mxu0
    %5443 = vmatprep.subr.bf16.mxu0 %v4250
    %5444 = vmatpush1.bf16.msra.mxu0 %v4249
    %5445 = vmatprep.subr.bf16.mxu0 %v4258
    %5446 = vmatpush1.bf16.msra.mxu0 %v4257
    %5447 = vmatprep.subr.bf16.mxu0 %v4266
    %5448 = vmatpush1.bf16.msra.mxu0 %v4265
    %5449 = vmatprep.subr.bf16.mxu0 %v4274
    %5450 = vmatpush1.bf16.msra.mxu0 %v4273
    %5451 = vmatprep.subr.bf16.mxu0 %v4282
    %5452 = vmatpush1.bf16.msra.mxu0 %v4281
    %5453 = vmatprep.subr.bf16.mxu0 %v4290
    %5454 = vmatpush1.bf16.msra.mxu0 %v4289
    %5455 = vmatprep.subr.bf16.mxu0 %v4298
    %5456 = vmatpush1.bf16.msra.mxu0 %v4297
    %5457 = vmatprep.subr.bf16.mxu0 %v4306
    %5458 = vmatpush1.bf16.msra.mxu0 %v4305
    %5459 = vmatprep.subr.bf16.mxu0 %v4314
    %5460 = vmatpush1.bf16.msra.mxu0 %v4313
    %5461 = vmatprep.subr.bf16.mxu0 %v4322
    %5462 = vmatpush1.bf16.msra.mxu0 %v4321
    %5463 = vmatprep.subr.bf16.mxu0 %v4330
    %5464 = vmatpush1.bf16.msra.mxu0 %v4329
    %5465 = vmatprep.subr.bf16.mxu0 %v4338
    %5466 = vmatpush1.bf16.msra.mxu0 %v4337
    %5467 = vmatprep.subr.bf16.mxu0 %v4346
    %5468 = vmatpush1.bf16.msra.mxu0 %v4345
    %5469 = vmatprep.subr.bf16.mxu0 %v4354
    %5470 = vmatpush1.bf16.msra.mxu0 %v4353
    %5471 = vmatprep.subr.bf16.mxu0 %v4362
    %5472 = vmatpush1.bf16.msra.mxu0 %v4361
    %5473 = vmatprep.subr.bf16.mxu0 %v4370
    %5474 = vmatpush1.bf16.msra.mxu0 %v4369
    %5475 = vmatprep.mubr.bf16.mxu0 %v2704
    %5476 = vmatmul.mubr.bf16.gmra.mrb[0].mxu0 %v2703
    %v5477 = vpop.f32.mrb[0].mxu0
    %v5478 = vadd.f32 0.0, %v5477
    %v5479 = vpop.f32.mrb[0].mxu0
    %v5480 = vadd.f32 0.0, %v5479
    %v5481 = vpop.f32.mrb[0].mxu0
    %v5482 = vadd.f32 0.0, %v5481
    %v5483 = vpop.f32.mrb[0].mxu0
    %v5484 = vadd.f32 0.0, %v5483
    %5485 = vdwg.mxu0
    %5486 = vmatprep.subr.bf16.mxu0 %v4378
    %5487 = vmatpush1.bf16.msra.mxu0 %v4377
    %5488 = vmatprep.subr.bf16.mxu0 %v4386
    %5489 = vmatpush1.bf16.msra.mxu0 %v4385
    %5490 = vmatprep.subr.bf16.mxu0 %v4394
    %5491 = vmatpush1.bf16.msra.mxu0 %v4393
    %5492 = vmatprep.subr.bf16.mxu0 %v4402
    %5493 = vmatpush1.bf16.msra.mxu0 %v4401
    %5494 = vmatprep.subr.bf16.mxu0 %v4410
    %5495 = vmatpush1.bf16.msra.mxu0 %v4409
    %5496 = vmatprep.subr.bf16.mxu0 %v4418
    %5497 = vmatpush1.bf16.msra.mxu0 %v4417
    %5498 = vmatprep.subr.bf16.mxu0 %v4426
    %5499 = vmatpush1.bf16.msra.mxu0 %v4425
    %5500 = vmatprep.subr.bf16.mxu0 %v4434
    %5501 = vmatpush1.bf16.msra.mxu0 %v4433
    %5502 = vmatprep.subr.bf16.mxu0 %v4442
    %5503 = vmatpush1.bf16.msra.mxu0 %v4441
    %5504 = vmatprep.subr.bf16.mxu0 %v4450
    %5505 = vmatpush1.bf16.msra.mxu0 %v4449
    %5506 = vmatprep.subr.bf16.mxu0 %v4458
    %5507 = vmatpush1.bf16.msra.mxu0 %v4457
    %5508 = vmatprep.subr.bf16.mxu0 %v4466
    %5509 = vmatpush1.bf16.msra.mxu0 %v4465
    %5510 = vmatprep.subr.bf16.mxu0 %v4474
    %5511 = vmatpush1.bf16.msra.mxu0 %v4473
    %5512 = vmatprep.subr.bf16.mxu0 %v4482
    %5513 = vmatpush1.bf16.msra.mxu0 %v4481
    %5514 = vmatprep.subr.bf16.mxu0 %v4490
    %5515 = vmatpush1.bf16.msra.mxu0 %v4489
    %5516 = vmatprep.subr.bf16.mxu0 %v4498
    %5517 = vmatpush1.bf16.msra.mxu0 %v4497
    %5518 = vmatprep.mubr.bf16.mxu0 %v2706
    %5519 = vmatmul.mubr.bf16.gmra.mrb[0].mxu0 %v2705
    %v5520 = vpop.f32.mrb[0].mxu0
    %v5521 = vadd.f32 %v5478, %v5520
    %v5522 = vpop.f32.mrb[0].mxu0
    %v5523 = vadd.f32 %v5480, %v5522
    %v5524 = vpop.f32.mrb[0].mxu0
    %v5525 = vadd.f32 %v5482, %v5524
    %v5526 = vpop.f32.mrb[0].mxu0
    %v5527 = vadd.f32 %v5484, %v5526
    %5528 = vdwg.mxu0
    %5529 = vmatprep.subr.bf16.mxu0 %v4506
    %5530 = vmatpush1.bf16.msra.mxu0 %v4505
    %5531 = vmatprep.subr.bf16.mxu0 %v4514
    %5532 = vmatpush1.bf16.msra.mxu0 %v4513
    %5533 = vmatprep.subr.bf16.mxu0 %v4522
    %5534 = vmatpush1.bf16.msra.mxu0 %v4521
    %5535 = vmatprep.subr.bf16.mxu0 %v4530
    %5536 = vmatpush1.bf16.msra.mxu0 %v4529
    %5537 = vmatprep.subr.bf16.mxu0 %v4538
    %5538 = vmatpush1.bf16.msra.mxu0 %v4537
    %5539 = vmatprep.subr.bf16.mxu0 %v4546
    %5540 = vmatpush1.bf16.msra.mxu0 %v4545
    %5541 = vmatprep.subr.bf16.mxu0 %v4554
    %5542 = vmatpush1.bf16.msra.mxu0 %v4553
    %5543 = vmatprep.subr.bf16.mxu0 %v4562
    %5544 = vmatpush1.bf16.msra.mxu0 %v4561
    %5545 = vmatprep.subr.bf16.mxu0 %v4570
    %5546 = vmatpush1.bf16.msra.mxu0 %v4569
    %5547 = vmatprep.subr.bf16.mxu0 %v4578
    %5548 = vmatpush1.bf16.msra.mxu0 %v4577
    %5549 = vmatprep.subr.bf16.mxu0 %v4586
    %5550 = vmatpush1.bf16.msra.mxu0 %v4585
    %5551 = vmatprep.subr.bf16.mxu0 %v4594
    %5552 = vmatpush1.bf16.msra.mxu0 %v4593
    %5553 = vmatprep.subr.bf16.mxu0 %v4602
    %5554 = vmatpush1.bf16.msra.mxu0 %v4601
    %5555 = vmatprep.subr.bf16.mxu0 %v4610
    %5556 = vmatpush1.bf16.msra.mxu0 %v4609
    %5557 = vmatprep.subr.bf16.mxu0 %v4618
    %5558 = vmatpush1.bf16.msra.mxu0 %v4617
    %5559 = vmatprep.subr.bf16.mxu0 %v4626
    %5560 = vmatpush1.bf16.msra.mxu0 %v4625
    %5561 = vmatprep.mubr.bf16.mxu0 %v2708
    %5562 = vmatmul.mubr.bf16.gmra.mrb[0].mxu0 %v2707
    %v5563 = vpop.f32.mrb[0].mxu0
    %v5564 = vadd.f32 %v5521, %v5563
    %v5565 = vpop.f32.mrb[0].mxu0
    %v5566 = vadd.f32 %v5523, %v5565
    %v5567 = vpop.f32.mrb[0].mxu0
    %v5568 = vadd.f32 %v5525, %v5567
    %v5569 = vpop.f32.mrb[0].mxu0
    %v5570 = vadd.f32 %v5527, %v5569
    %5571 = vdwg.mxu0
    %5572 = vmatprep.subr.bf16.mxu0 %v4634
    %5573 = vmatpush1.bf16.msra.mxu0 %v4633
    %5574 = vmatprep.subr.bf16.mxu0 %v4642
    %5575 = vmatpush1.bf16.msra.mxu0 %v4641
    %5576 = vmatprep.subr.bf16.mxu0 %v4650
    %5577 = vmatpush1.bf16.msra.mxu0 %v4649
    %5578 = vmatprep.subr.bf16.mxu0 %v4658
    %5579 = vmatpush1.bf16.msra.mxu0 %v4657
    %5580 = vmatprep.subr.bf16.mxu0 %v4666
    %5581 = vmatpush1.bf16.msra.mxu0 %v4665
    %5582 = vmatprep.subr.bf16.mxu0 %v4674
    %5583 = vmatpush1.bf16.msra.mxu0 %v4673
    %5584 = vmatprep.subr.bf16.mxu0 %v4682
    %5585 = vmatpush1.bf16.msra.mxu0 %v4681
    %5586 = vmatprep.subr.bf16.mxu0 %v4690
    %5587 = vmatpush1.bf16.msra.mxu0 %v4689
    %5588 = vmatprep.subr.bf16.mxu0 %v4698
    %5589 = vmatpush1.bf16.msra.mxu0 %v4697
    %5590 = vmatprep.subr.bf16.mxu0 %v4706
    %5591 = vmatpush1.bf16.msra.mxu0 %v4705
    %5592 = vmatprep.subr.bf16.mxu0 %v4714
    %5593 = vmatpush1.bf16.msra.mxu0 %v4713
    %5594 = vmatprep.subr.bf16.mxu0 %v4722
    %5595 = vmatpush1.bf16.msra.mxu0 %v4721
    %5596 = vmatprep.subr.bf16.mxu0 %v4730
    %5597 = vmatpush1.bf16.msra.mxu0 %v4729
    %5598 = vmatprep.subr.bf16.mxu0 %v4738
    %5599 = vmatpush1.bf16.msra.mxu0 %v4737
    %5600 = vmatprep.subr.bf16.mxu0 %v4746
    %5601 = vmatpush1.bf16.msra.mxu0 %v4745
    %5602 = vmatprep.subr.bf16.mxu0 %v4754
    %5603 = vmatpush1.bf16.msra.mxu0 %v4753
    %5604 = vmatprep.mubr.bf16.mxu0 %v2710
    %5605 = vmatmul.mubr.bf16.gmra.mrb[0].mxu0 %v2709
    %v5606 = vpop.f32.mrb[0].mxu0
    %v5607 = vadd.f32 %v5564, %v5606
    %v5608 = vpop.f32.mrb[0].mxu0
    %v5609 = vadd.f32 %v5566, %v5608
    %v5610 = vpop.f32.mrb[0].mxu0
    %v5611 = vadd.f32 %v5568, %v5610
    %v5612 = vpop.f32.mrb[0].mxu0
    %v5613 = vadd.f32 %v5570, %v5612
    %5614 = vdwg.mxu0
    %5615 = vmatprep.subr.bf16.mxu0 %v4252
    %5616 = vmatpush1.bf16.msra.mxu0 %v4251
    %5617 = vmatprep.subr.bf16.mxu0 %v4260
    %5618 = vmatpush1.bf16.msra.mxu0 %v4259
    %5619 = vmatprep.subr.bf16.mxu0 %v4268
    %5620 = vmatpush1.bf16.msra.mxu0 %v4267
    %5621 = vmatprep.subr.bf16.mxu0 %v4276
    %5622 = vmatpush1.bf16.msra.mxu0 %v4275
    %5623 = vmatprep.subr.bf16.mxu0 %v4284
    %5624 = vmatpush1.bf16.msra.mxu0 %v4283
    %5625 = vmatprep.subr.bf16.mxu0 %v4292
    %5626 = vmatpush1.bf16.msra.mxu0 %v4291
    %5627 = vmatprep.subr.bf16.mxu0 %v4300
    %5628 = vmatpush1.bf16.msra.mxu0 %v4299
    %5629 = vmatprep.subr.bf16.mxu0 %v4308
    %5630 = vmatpush1.bf16.msra.mxu0 %v4307
    %5631 = vmatprep.subr.bf16.mxu0 %v4316
    %5632 = vmatpush1.bf16.msra.mxu0 %v4315
    %5633 = vmatprep.subr.bf16.mxu0 %v4324
    %5634 = vmatpush1.bf16.msra.mxu0 %v4323
    %5635 = vmatprep.subr.bf16.mxu0 %v4332
    %5636 = vmatpush1.bf16.msra.mxu0 %v4331
    %5637 = vmatprep.subr.bf16.mxu0 %v4340
    %5638 = vmatpush1.bf16.msra.mxu0 %v4339
    %5639 = vmatprep.subr.bf16.mxu0 %v4348
    %5640 = vmatpush1.bf16.msra.mxu0 %v4347
    %5641 = vmatprep.subr.bf16.mxu0 %v4356
    %5642 = vmatpush1.bf16.msra.mxu0 %v4355
    %5643 = vmatprep.subr.bf16.mxu0 %v4364
    %5644 = vmatpush1.bf16.msra.mxu0 %v4363
    %5645 = vmatprep.subr.bf16.mxu0 %v4372
    %5646 = vmatpush1.bf16.msra.mxu0 %v4371
    %5647 = vmatprep.mubr.bf16.mxu0 %v2704
    %5648 = vmatmul.mubr.bf16.gmra.mrb[0].mxu0 %v2703
    %v5649 = vpop.f32.mrb[0].mxu0
    %v5650 = vadd.f32 0.0, %v5649
    %v5651 = vpop.f32.mrb[0].mxu0
    %v5652 = vadd.f32 0.0, %v5651
    %v5653 = vpop.f32.mrb[0].mxu0
    %v5654 = vadd.f32 0.0, %v5653
    %v5655 = vpop.f32.mrb[0].mxu0
    %v5656 = vadd.f32 0.0, %v5655
    %5657 = vdwg.mxu0
    %5658 = vmatprep.subr.bf16.mxu0 %v4380
    %5659 = vmatpush1.bf16.msra.mxu0 %v4379
    %5660 = vmatprep.subr.bf16.mxu0 %v4388
    %5661 = vmatpush1.bf16.msra.mxu0 %v4387
    %5662 = vmatprep.subr.bf16.mxu0 %v4396
    %5663 = vmatpush1.bf16.msra.mxu0 %v4395
    %5664 = vmatprep.subr.bf16.mxu0 %v4404
    %5665 = vmatpush1.bf16.msra.mxu0 %v4403
    %5666 = vmatprep.subr.bf16.mxu0 %v4412
    %5667 = vmatpush1.bf16.msra.mxu0 %v4411
    %5668 = vmatprep.subr.bf16.mxu0 %v4420
    %5669 = vmatpush1.bf16.msra.mxu0 %v4419
    %5670 = vmatprep.subr.bf16.mxu0 %v4428
    %5671 = vmatpush1.bf16.msra.mxu0 %v4427
    %5672 = vmatprep.subr.bf16.mxu0 %v4436
    %5673 = vmatpush1.bf16.msra.mxu0 %v4435
    %5674 = vmatprep.subr.bf16.mxu0 %v4444
    %5675 = vmatpush1.bf16.msra.mxu0 %v4443
    %5676 = vmatprep.subr.bf16.mxu0 %v4452
    %5677 = vmatpush1.bf16.msra.mxu0 %v4451
    %5678 = vmatprep.subr.bf16.mxu0 %v4460
    %5679 = vmatpush1.bf16.msra.mxu0 %v4459
    %5680 = vmatprep.subr.bf16.mxu0 %v4468
    %5681 = vmatpush1.bf16.msra.mxu0 %v4467
    %5682 = vmatprep.subr.bf16.mxu0 %v4476
    %5683 = vmatpush1.bf16.msra.mxu0 %v4475
    %5684 = vmatprep.subr.bf16.mxu0 %v4484
    %5685 = vmatpush1.bf16.msra.mxu0 %v4483
    %5686 = vmatprep.subr.bf16.mxu0 %v4492
    %5687 = vmatpush1.bf16.msra.mxu0 %v4491
    %5688 = vmatprep.subr.bf16.mxu0 %v4500
    %5689 = vmatpush1.bf16.msra.mxu0 %v4499
    %5690 = vmatprep.mubr.bf16.mxu0 %v2706
    %5691 = vmatmul.mubr.bf16.gmra.mrb[0].mxu0 %v2705
    %v5692 = vpop.f32.mrb[0].mxu0
    %v5693 = vadd.f32 %v5650, %v5692
    %v5694 = vpop.f32.mrb[0].mxu0
    %v5695 = vadd.f32 %v5652, %v5694
    %v5696 = vpop.f32.mrb[0].mxu0
    %v5697 = vadd.f32 %v5654, %v5696
    %v5698 = vpop.f32.mrb[0].mxu0
    %v5699 = vadd.f32 %v5656, %v5698
    %5700 = vdwg.mxu0
    %5701 = vmatprep.subr.bf16.mxu0 %v4508
    %5702 = vmatpush1.bf16.msra.mxu0 %v4507
    %5703 = vmatprep.subr.bf16.mxu0 %v4516
    %5704 = vmatpush1.bf16.msra.mxu0 %v4515
    %5705 = vmatprep.subr.bf16.mxu0 %v4524
    %5706 = vmatpush1.bf16.msra.mxu0 %v4523
    %5707 = vmatprep.subr.bf16.mxu0 %v4532
    %5708 = vmatpush1.bf16.msra.mxu0 %v4531
    %5709 = vmatprep.subr.bf16.mxu0 %v4540
    %5710 = vmatpush1.bf16.msra.mxu0 %v4539
    %5711 = vmatprep.subr.bf16.mxu0 %v4548
    %5712 = vmatpush1.bf16.msra.mxu0 %v4547
    %5713 = vmatprep.subr.bf16.mxu0 %v4556
    %5714 = vmatpush1.bf16.msra.mxu0 %v4555
    %5715 = vmatprep.subr.bf16.mxu0 %v4564
    %5716 = vmatpush1.bf16.msra.mxu0 %v4563
    %5717 = vmatprep.subr.bf16.mxu0 %v4572
    %5718 = vmatpush1.bf16.msra.mxu0 %v4571
    %5719 = vmatprep.subr.bf16.mxu0 %v4580
    %5720 = vmatpush1.bf16.msra.mxu0 %v4579
    %5721 = vmatprep.subr.bf16.mxu0 %v4588
    %5722 = vmatpush1.bf16.msra.mxu0 %v4587
    %5723 = vmatprep.subr.bf16.mxu0 %v4596
    %5724 = vmatpush1.bf16.msra.mxu0 %v4595
    %5725 = vmatprep.subr.bf16.mxu0 %v4604
    %5726 = vmatpush1.bf16.msra.mxu0 %v4603
    %5727 = vmatprep.subr.bf16.mxu0 %v4612
    %5728 = vmatpush1.bf16.msra.mxu0 %v4611
    %5729 = vmatprep.subr.bf16.mxu0 %v4620
    %5730 = vmatpush1.bf16.msra.mxu0 %v4619
    %5731 = vmatprep.subr.bf16.mxu0 %v4628
    %5732 = vmatpush1.bf16.msra.mxu0 %v4627
    %5733 = vmatprep.mubr.bf16.mxu0 %v2708
    %5734 = vmatmul.mubr.bf16.gmra.mrb[0].mxu0 %v2707
    %v5735 = vpop.f32.mrb[0].mxu0
    %v5736 = vadd.f32 %v5693, %v5735
    %v5737 = vpop.f32.mrb[0].mxu0
    %v5738 = vadd.f32 %v5695, %v5737
    %v5739 = vpop.f32.mrb[0].mxu0
    %v5740 = vadd.f32 %v5697, %v5739
    %v5741 = vpop.f32.mrb[0].mxu0
    %v5742 = vadd.f32 %v5699, %v5741
    %5743 = vdwg.mxu0
    %5744 = vmatprep.subr.bf16.mxu0 %v4636
    %5745 = vmatpush1.bf16.msra.mxu0 %v4635
    %5746 = vmatprep.subr.bf16.mxu0 %v4644
    %5747 = vmatpush1.bf16.msra.mxu0 %v4643
    %5748 = vmatprep.subr.bf16.mxu0 %v4652
    %5749 = vmatpush1.bf16.msra.mxu0 %v4651
    %5750 = vmatprep.subr.bf16.mxu0 %v4660
    %5751 = vmatpush1.bf16.msra.mxu0 %v4659
    %5752 = vmatprep.subr.bf16.mxu0 %v4668
    %5753 = vmatpush1.bf16.msra.mxu0 %v4667
    %5754 = vmatprep.subr.bf16.mxu0 %v4676
    %5755 = vmatpush1.bf16.msra.mxu0 %v4675
    %5756 = vmatprep.subr.bf16.mxu0 %v4684
    %5757 = vmatpush1.bf16.msra.mxu0 %v4683
    %5758 = vmatprep.subr.bf16.mxu0 %v4692
    %5759 = vmatpush1.bf16.msra.mxu0 %v4691
    %5760 = vmatprep.subr.bf16.mxu0 %v4700
    %5761 = vmatpush1.bf16.msra.mxu0 %v4699
    %5762 = vmatprep.subr.bf16.mxu0 %v4708
    %5763 = vmatpush1.bf16.msra.mxu0 %v4707
    %5764 = vmatprep.subr.bf16.mxu0 %v4716
    %5765 = vmatpush1.bf16.msra.mxu0 %v4715
    %5766 = vmatprep.subr.bf16.mxu0 %v4724
    %5767 = vmatpush1.bf16.msra.mxu0 %v4723
    %5768 = vmatprep.subr.bf16.mxu0 %v4732
    %5769 = vmatpush1.bf16.msra.mxu0 %v4731
    %5770 = vmatprep.subr.bf16.mxu0 %v4740
    %5771 = vmatpush1.bf16.msra.mxu0 %v4739
    %5772 = vmatprep.subr.bf16.mxu0 %v4748
    %5773 = vmatpush1.bf16.msra.mxu0 %v4747
    %5774 = vmatprep.subr.bf16.mxu0 %v4756
    %5775 = vmatpush1.bf16.msra.mxu0 %v4755
    %5776 = vmatprep.mubr.bf16.mxu0 %v2710
    %5777 = vmatmul.mubr.bf16.gmra.mrb[0].mxu0 %v2709
    %v5778 = vpop.f32.mrb[0].mxu0
    %v5779 = vadd.f32 %v5736, %v5778
    %v5780 = vpop.f32.mrb[0].mxu0
    %v5781 = vadd.f32 %v5738, %v5780
    %v5782 = vpop.f32.mrb[0].mxu0
    %v5783 = vadd.f32 %v5740, %v5782
    %v5784 = vpop.f32.mrb[0].mxu0
    %v5785 = vadd.f32 %v5742, %v5784
    %5786 = vdwg.mxu0
    %5787 = vmatprep.subr.bf16.mxu0 %v4254
    %5788 = vmatpush1.bf16.msra.mxu0 %v4253
    %5789 = vmatprep.subr.bf16.mxu0 %v4262
    %5790 = vmatpush1.bf16.msra.mxu0 %v4261
    %5791 = vmatprep.subr.bf16.mxu0 %v4270
    %5792 = vmatpush1.bf16.msra.mxu0 %v4269
    %5793 = vmatprep.subr.bf16.mxu0 %v4278
    %5794 = vmatpush1.bf16.msra.mxu0 %v4277
    %5795 = vmatprep.subr.bf16.mxu0 %v4286
    %5796 = vmatpush1.bf16.msra.mxu0 %v4285
    %5797 = vmatprep.subr.bf16.mxu0 %v4294
    %5798 = vmatpush1.bf16.msra.mxu0 %v4293
    %5799 = vmatprep.subr.bf16.mxu0 %v4302
    %5800 = vmatpush1.bf16.msra.mxu0 %v4301
    %5801 = vmatprep.subr.bf16.mxu0 %v4310
    %5802 = vmatpush1.bf16.msra.mxu0 %v4309
    %5803 = vmatprep.subr.bf16.mxu0 %v4318
    %5804 = vmatpush1.bf16.msra.mxu0 %v4317
    %5805 = vmatprep.subr.bf16.mxu0 %v4326
    %5806 = vmatpush1.bf16.msra.mxu0 %v4325
    %5807 = vmatprep.subr.bf16.mxu0 %v4334
    %5808 = vmatpush1.bf16.msra.mxu0 %v4333
    %5809 = vmatprep.subr.bf16.mxu0 %v4342
    %5810 = vmatpush1.bf16.msra.mxu0 %v4341
    %5811 = vmatprep.subr.bf16.mxu0 %v4350
    %5812 = vmatpush1.bf16.msra.mxu0 %v4349
    %5813 = vmatprep.subr.bf16.mxu0 %v4358
    %5814 = vmatpush1.bf16.msra.mxu0 %v4357
    %5815 = vmatprep.subr.bf16.mxu0 %v4366
    %5816 = vmatpush1.bf16.msra.mxu0 %v4365
    %5817 = vmatprep.subr.bf16.mxu0 %v4374
    %5818 = vmatpush1.bf16.msra.mxu0 %v4373
    %5819 = vmatprep.mubr.bf16.mxu0 %v2704
    %5820 = vmatmul.mubr.bf16.gmra.mrb[0].mxu0 %v2703
    %v5821 = vpop.f32.mrb[0].mxu0
    %v5822 = vadd.f32 0.0, %v5821
    %v5823 = vpop.f32.mrb[0].mxu0
    %v5824 = vadd.f32 0.0, %v5823
    %v5825 = vpop.f32.mrb[0].mxu0
    %v5826 = vadd.f32 0.0, %v5825
    %v5827 = vpop.f32.mrb[0].mxu0
    %v5828 = vadd.f32 0.0, %v5827
    %5829 = vdwg.mxu0
    %5830 = vmatprep.subr.bf16.mxu0 %v4382
    %5831 = vmatpush1.bf16.msra.mxu0 %v4381
    %5832 = vmatprep.subr.bf16.mxu0 %v4390
    %5833 = vmatpush1.bf16.msra.mxu0 %v4389
    %5834 = vmatprep.subr.bf16.mxu0 %v4398
    %5835 = vmatpush1.bf16.msra.mxu0 %v4397
    %5836 = vmatprep.subr.bf16.mxu0 %v4406
    %5837 = vmatpush1.bf16.msra.mxu0 %v4405
    %5838 = vmatprep.subr.bf16.mxu0 %v4414
    %5839 = vmatpush1.bf16.msra.mxu0 %v4413
    %5840 = vmatprep.subr.bf16.mxu0 %v4422
    %5841 = vmatpush1.bf16.msra.mxu0 %v4421
    %5842 = vmatprep.subr.bf16.mxu0 %v4430
    %5843 = vmatpush1.bf16.msra.mxu0 %v4429
    %5844 = vmatprep.subr.bf16.mxu0 %v4438
    %5845 = vmatpush1.bf16.msra.mxu0 %v4437
    %5846 = vmatprep.subr.bf16.mxu0 %v4446
    %5847 = vmatpush1.bf16.msra.mxu0 %v4445
    %5848 = vmatprep.subr.bf16.mxu0 %v4454
    %5849 = vmatpush1.bf16.msra.mxu0 %v4453
    %5850 = vmatprep.subr.bf16.mxu0 %v4462
    %5851 = vmatpush1.bf16.msra.mxu0 %v4461
    %5852 = vmatprep.subr.bf16.mxu0 %v4470
    %5853 = vmatpush1.bf16.msra.mxu0 %v4469
    %5854 = vmatprep.subr.bf16.mxu0 %v4478
    %5855 = vmatpush1.bf16.msra.mxu0 %v4477
    %5856 = vmatprep.subr.bf16.mxu0 %v4486
    %5857 = vmatpush1.bf16.msra.mxu0 %v4485
    %5858 = vmatprep.subr.bf16.mxu0 %v4494
    %5859 = vmatpush1.bf16.msra.mxu0 %v4493
    %5860 = vmatprep.subr.bf16.mxu0 %v4502
    %5861 = vmatpush1.bf16.msra.mxu0 %v4501
    %5862 = vmatprep.mubr.bf16.mxu0 %v2706
    %5863 = vmatmul.mubr.bf16.gmra.mrb[0].mxu0 %v2705
    %v5864 = vpop.f32.mrb[0].mxu0
    %v5865 = vadd.f32 %v5822, %v5864
    %v5866 = vpop.f32.mrb[0].mxu0
    %v5867 = vadd.f32 %v5824, %v5866
    %v5868 = vpop.f32.mrb[0].mxu0
    %v5869 = vadd.f32 %v5826, %v5868
    %v5870 = vpop.f32.mrb[0].mxu0
    %v5871 = vadd.f32 %v5828, %v5870
    %5872 = vdwg.mxu0
    %5873 = vmatprep.subr.bf16.mxu0 %v4510
    %5874 = vmatpush1.bf16.msra.mxu0 %v4509
    %5875 = vmatprep.subr.bf16.mxu0 %v4518
    %5876 = vmatpush1.bf16.msra.mxu0 %v4517
    %5877 = vmatprep.subr.bf16.mxu0 %v4526
    %5878 = vmatpush1.bf16.msra.mxu0 %v4525
    %5879 = vmatprep.subr.bf16.mxu0 %v4534
    %5880 = vmatpush1.bf16.msra.mxu0 %v4533
    %5881 = vmatprep.subr.bf16.mxu0 %v4542
    %5882 = vmatpush1.bf16.msra.mxu0 %v4541
    %5883 = vmatprep.subr.bf16.mxu0 %v4550
    %5884 = vmatpush1.bf16.msra.mxu0 %v4549
    %5885 = vmatprep.subr.bf16.mxu0 %v4558
    %5886 = vmatpush1.bf16.msra.mxu0 %v4557
    %5887 = vmatprep.subr.bf16.mxu0 %v4566
    %5888 = vmatpush1.bf16.msra.mxu0 %v4565
    %5889 = vmatprep.subr.bf16.mxu0 %v4574
    %5890 = vmatpush1.bf16.msra.mxu0 %v4573
    %5891 = vmatprep.subr.bf16.mxu0 %v4582
    %5892 = vmatpush1.bf16.msra.mxu0 %v4581
    %5893 = vmatprep.subr.bf16.mxu0 %v4590
    %5894 = vmatpush1.bf16.msra.mxu0 %v4589
    %5895 = vmatprep.subr.bf16.mxu0 %v4598
    %5896 = vmatpush1.bf16.msra.mxu0 %v4597
    %5897 = vmatprep.subr.bf16.mxu0 %v4606
    %5898 = vmatpush1.bf16.msra.mxu0 %v4605
    %5899 = vmatprep.subr.bf16.mxu0 %v4614
    %5900 = vmatpush1.bf16.msra.mxu0 %v4613
    %5901 = vmatprep.subr.bf16.mxu0 %v4622
    %5902 = vmatpush1.bf16.msra.mxu0 %v4621
    %5903 = vmatprep.subr.bf16.mxu0 %v4630
    %5904 = vmatpush1.bf16.msra.mxu0 %v4629
    %5905 = vmatprep.mubr.bf16.mxu0 %v2708
    %5906 = vmatmul.mubr.bf16.gmra.mrb[0].mxu0 %v2707
    %v5907 = vpop.f32.mrb[0].mxu0
    %v5908 = vadd.f32 %v5865, %v5907
    %v5909 = vpop.f32.mrb[0].mxu0
    %v5910 = vadd.f32 %v5867, %v5909
    %v5911 = vpop.f32.mrb[0].mxu0
    %v5912 = vadd.f32 %v5869, %v5911
    %v5913 = vpop.f32.mrb[0].mxu0
    %v5914 = vadd.f32 %v5871, %v5913
    %5915 = vdwg.mxu0
    %5916 = vmatprep.subr.bf16.mxu0 %v4638
    %5917 = vmatpush1.bf16.msra.mxu0 %v4637
    %5918 = vmatprep.subr.bf16.mxu0 %v4646
    %5919 = vmatpush1.bf16.msra.mxu0 %v4645
    %5920 = vmatprep.subr.bf16.mxu0 %v4654
    %5921 = vmatpush1.bf16.msra.mxu0 %v4653
    %5922 = vmatprep.subr.bf16.mxu0 %v4662
    %5923 = vmatpush1.bf16.msra.mxu0 %v4661
    %5924 = vmatprep.subr.bf16.mxu0 %v4670
    %5925 = vmatpush1.bf16.msra.mxu0 %v4669
    %5926 = vmatprep.subr.bf16.mxu0 %v4678
    %5927 = vmatpush1.bf16.msra.mxu0 %v4677
    %5928 = vmatprep.subr.bf16.mxu0 %v4686
    %5929 = vmatpush1.bf16.msra.mxu0 %v4685
    %5930 = vmatprep.subr.bf16.mxu0 %v4694
    %5931 = vmatpush1.bf16.msra.mxu0 %v4693
    %5932 = vmatprep.subr.bf16.mxu0 %v4702
    %5933 = vmatpush1.bf16.msra.mxu0 %v4701
    %5934 = vmatprep.subr.bf16.mxu0 %v4710
    %5935 = vmatpush1.bf16.msra.mxu0 %v4709
    %5936 = vmatprep.subr.bf16.mxu0 %v4718
    %5937 = vmatpush1.bf16.msra.mxu0 %v4717
    %5938 = vmatprep.subr.bf16.mxu0 %v4726
    %5939 = vmatpush1.bf16.msra.mxu0 %v4725
    %5940 = vmatprep.subr.bf16.mxu0 %v4734
    %5941 = vmatpush1.bf16.msra.mxu0 %v4733
    %5942 = vmatprep.subr.bf16.mxu0 %v4742
    %5943 = vmatpush1.bf16.msra.mxu0 %v4741
    %5944 = vmatprep.subr.bf16.mxu0 %v4750
    %5945 = vmatpush1.bf16.msra.mxu0 %v4749
    %5946 = vmatprep.subr.bf16.mxu0 %v4758
    %5947 = vmatpush1.bf16.msra.mxu0 %v4757
    %5948 = vmatprep.mubr.bf16.mxu0 %v2710
    %5949 = vmatmul.mubr.bf16.gmra.mrb[0].mxu0 %v2709
    %v5950 = vpop.f32.mrb[0].mxu0
    %v5951 = vadd.f32 %v5908, %v5950
    %v5952 = vpop.f32.mrb[0].mxu0
    %v5953 = vadd.f32 %v5910, %v5952
    %v5954 = vpop.f32.mrb[0].mxu0
    %v5955 = vadd.f32 %v5912, %v5954
    %v5956 = vpop.f32.mrb[0].mxu0
    %v5957 = vadd.f32 %v5914, %v5956
    %5958 = vdwg.mxu0
    %v5959 = vmax.f32 %v5435, %v5437
    %v5960 = vmax.f32 %v5439, %v5441
    %v5961 = vmax.f32 %v5607, %v5609
    %v5962 = vmax.f32 %v5611, %v5613
    %v5963 = vmax.f32 %v5959, %v5961
    %v5964 = vmax.f32 %v5960, %v5962
    %v5965 = vlaneseq
    %v5966 = vshrl.u32 %v5965, 7
    %v5967 = vsub.s32 1, %v5966
    %v5968 = vrot.slane %v810, %v5967
    %v5969 = vadd.f32 %v5963, %v5968
    %v5970 = vadd.f32 %v5964, %v5968
    %v5971 = vmax.f32 %v5969, 0.0
    %v5972 = vmax.f32 %v5970, 0.0
    %v5973 = vpack.c.bf16 %v5972, %v5971
    %5974 = vst [vmem:[#allocation3] sm:$0xff] %v5973
    %v5975 = vmax.f32 %v5779, %v5781
    %v5976 = vmax.f32 %v5783, %v5785
    %v5977 = vmax.f32 %v5951, %v5953
    %v5978 = vmax.f32 %v5955, %v5957
    %v5979 = vmax.f32 %v5975, %v5977
    %v5980 = vmax.f32 %v5976, %v5978
    %v5981 = vadd.f32 %v5979, %v5968
    %v5982 = vadd.f32 %v5980, %v5968
    %v5983 = vmax.f32 %v5981, 0.0
    %v5984 = vmax.f32 %v5982, 0.0
    %v5985 = vpack.c.bf16 %v5984, %v5983
    %5986 = vst [vmem:[#allocation3 + $0x8] sm:$0xff] %v5985
    %v5987 = vld [vmem:[#allocation2 + $0x20] sm:$0xff]
    %v5988 = vld [vmem:[#allocation2 + $0x28] sm:$0xff]
    %v5989 = vld [vmem:[#allocation2 + $0x30] sm:$0xff]
    %v5990 = vld [vmem:[#allocation2 + $0x38] sm:$0xff]
    %v5991 = vld [vmem:[#allocation2 + $0x40] sm:$0xff]
    %v5992 = vld [vmem:[#allocation2 + $0x48] sm:$0xff]
    %v5993 = vld [vmem:[#allocation2 + $0x50] sm:$0xff]
    %v5994 = vld [vmem:[#allocation2 + $0x58] sm:$0xff]
    %5995 = vmatprep.subr.bf16.mxu0 %v4248
    %5996 = vmatpush1.bf16.msra.mxu0 %v4247
    %5997 = vmatprep.subr.bf16.mxu0 %v4256
    %5998 = vmatpush1.bf16.msra.mxu0 %v4255
    %5999 = vmatprep.subr.bf16.mxu0 %v4264
    %6000 = vmatpush1.bf16.msra.mxu0 %v4263
    %6001 = vmatprep.subr.bf16.mxu0 %v4272
    %6002 = vmatpush1.bf16.msra.mxu0 %v4271
    %6003 = vmatprep.subr.bf16.mxu0 %v4280
    %6004 = vmatpush1.bf16.msra.mxu0 %v4279
    %6005 = vmatprep.subr.bf16.mxu0 %v4288
    %6006 = vmatpush1.bf16.msra.mxu0 %v4287
    %6007 = vmatprep.subr.bf16.mxu0 %v4296
    %6008 = vmatpush1.bf16.msra.mxu0 %v4295
    %6009 = vmatprep.subr.bf16.mxu0 %v4304
    %6010 = vmatpush1.bf16.msra.mxu0 %v4303
    %6011 = vmatprep.subr.bf16.mxu0 %v4312
    %6012 = vmatpush1.bf16.msra.mxu0 %v4311
    %6013 = vmatprep.subr.bf16.mxu0 %v4320
    %6014 = vmatpush1.bf16.msra.mxu0 %v4319
    %6015 = vmatprep.subr.bf16.mxu0 %v4328
    %6016 = vmatpush1.bf16.msra.mxu0 %v4327
    %6017 = vmatprep.subr.bf16.mxu0 %v4336
    %6018 = vmatpush1.bf16.msra.mxu0 %v4335
    %6019 = vmatprep.subr.bf16.mxu0 %v4344
    %6020 = vmatpush1.bf16.msra.mxu0 %v4343
    %6021 = vmatprep.subr.bf16.mxu0 %v4352
    %6022 = vmatpush1.bf16.msra.mxu0 %v4351
    %6023 = vmatprep.subr.bf16.mxu0 %v4360
    %6024 = vmatpush1.bf16.msra.mxu0 %v4359
    %6025 = vmatprep.subr.bf16.mxu0 %v4368
    %6026 = vmatpush1.bf16.msra.mxu0 %v4367
    %6027 = vmatprep.mubr.bf16.mxu0 %v5988
    %6028 = vmatmul.mubr.bf16.gmra.mrb[0].mxu0 %v5987
    %v6029 = vpop.f32.mrb[0].mxu0
    %v6030 = vadd.f32 0.0, %v6029
    %v6031 = vpop.f32.mrb[0].mxu0
    %v6032 = vadd.f32 0.0, %v6031
    %v6033 = vpop.f32.mrb[0].mxu0
    %v6034 = vadd.f32 0.0, %v6033
    %v6035 = vpop.f32.mrb[0].mxu0
    %v6036 = vadd.f32 0.0, %v6035
    %6037 = vdwg.mxu0
    %6038 = vmatprep.subr.bf16.mxu0 %v4376
    %6039 = vmatpush1.bf16.msra.mxu0 %v4375
    %6040 = vmatprep.subr.bf16.mxu0 %v4384
    %6041 = vmatpush1.bf16.msra.mxu0 %v4383
    %6042 = vmatprep.subr.bf16.mxu0 %v4392
    %6043 = vmatpush1.bf16.msra.mxu0 %v4391
    %6044 = vmatprep.subr.bf16.mxu0 %v4400
    %6045 = vmatpush1.bf16.msra.mxu0 %v4399
    %6046 = vmatprep.subr.bf16.mxu0 %v4408
    %6047 = vmatpush1.bf16.msra.mxu0 %v4407
    %6048 = vmatprep.subr.bf16.mxu0 %v4416
    %6049 = vmatpush1.bf16.msra.mxu0 %v4415
    %6050 = vmatprep.subr.bf16.mxu0 %v4424
    %6051 = vmatpush1.bf16.msra.mxu0 %v4423
    %6052 = vmatprep.subr.bf16.mxu0 %v4432
    %6053 = vmatpush1.bf16.msra.mxu0 %v4431
    %6054 = vmatprep.subr.bf16.mxu0 %v4440
    %6055 = vmatpush1.bf16.msra.mxu0 %v4439
    %6056 = vmatprep.subr.bf16.mxu0 %v4448
    %6057 = vmatpush1.bf16.msra.mxu0 %v4447
    %6058 = vmatprep.subr.bf16.mxu0 %v4456
    %6059 = vmatpush1.bf16.msra.mxu0 %v4455
    %6060 = vmatprep.subr.bf16.mxu0 %v4464
    %6061 = vmatpush1.bf16.msra.mxu0 %v4463
    %6062 = vmatprep.subr.bf16.mxu0 %v4472
    %6063 = vmatpush1.bf16.msra.mxu0 %v4471
    %6064 = vmatprep.subr.bf16.mxu0 %v4480
    %6065 = vmatpush1.bf16.msra.mxu0 %v4479
    %6066 = vmatprep.subr.bf16.mxu0 %v4488
    %6067 = vmatpush1.bf16.msra.mxu0 %v4487
    %6068 = vmatprep.subr.bf16.mxu0 %v4496
    %6069 = vmatpush1.bf16.msra.mxu0 %v4495
    %6070 = vmatprep.mubr.bf16.mxu0 %v5990
    %6071 = vmatmul.mubr.bf16.gmra.mrb[0].mxu0 %v5989
    %v6072 = vpop.f32.mrb[0].mxu0
    %v6073 = vadd.f32 %v6030, %v6072
    %v6074 = vpop.f32.mrb[0].mxu0
    %v6075 = vadd.f32 %v6032, %v6074
    %v6076 = vpop.f32.mrb[0].mxu0
    %v6077 = vadd.f32 %v6034, %v6076
    %v6078 = vpop.f32.mrb[0].mxu0
    %v6079 = vadd.f32 %v6036, %v6078
    %6080 = vdwg.mxu0
    %6081 = vmatprep.subr.bf16.mxu0 %v4504
    %6082 = vmatpush1.bf16.msra.mxu0 %v4503
    %6083 = vmatprep.subr.bf16.mxu0 %v4512
    %6084 = vmatpush1.bf16.msra.mxu0 %v4511
    %6085 = vmatprep.subr.bf16.mxu0 %v4520
    %6086 = vmatpush1.bf16.msra.mxu0 %v4519
    %6087 = vmatprep.subr.bf16.mxu0 %v4528
    %6088 = vmatpush1.bf16.msra.mxu0 %v4527
    %6089 = vmatprep.subr.bf16.mxu0 %v4536
    %6090 = vmatpush1.bf16.msra.mxu0 %v4535
    %6091 = vmatprep.subr.bf16.mxu0 %v4544
    %6092 = vmatpush1.bf16.msra.mxu0 %v4543
    %6093 = vmatprep.subr.bf16.mxu0 %v4552
    %6094 = vmatpush1.bf16.msra.mxu0 %v4551
    %6095 = vmatprep.subr.bf16.mxu0 %v4560
    %6096 = vmatpush1.bf16.msra.mxu0 %v4559
    %6097 = vmatprep.subr.bf16.mxu0 %v4568
    %6098 = vmatpush1.bf16.msra.mxu0 %v4567
    %6099 = vmatprep.subr.bf16.mxu0 %v4576
    %6100 = vmatpush1.bf16.msra.mxu0 %v4575
    %6101 = vmatprep.subr.bf16.mxu0 %v4584
    %6102 = vmatpush1.bf16.msra.mxu0 %v4583
    %6103 = vmatprep.subr.bf16.mxu0 %v4592
    %6104 = vmatpush1.bf16.msra.mxu0 %v4591
    %6105 = vmatprep.subr.bf16.mxu0 %v4600
    %6106 = vmatpush1.bf16.msra.mxu0 %v4599
    %6107 = vmatprep.subr.bf16.mxu0 %v4608
    %6108 = vmatpush1.bf16.msra.mxu0 %v4607
    %6109 = vmatprep.subr.bf16.mxu0 %v4616
    %6110 = vmatpush1.bf16.msra.mxu0 %v4615
    %6111 = vmatprep.subr.bf16.mxu0 %v4624
    %6112 = vmatpush1.bf16.msra.mxu0 %v4623
    %6113 = vmatprep.mubr.bf16.mxu0 %v5992
    %6114 = vmatmul.mubr.bf16.gmra.mrb[0].mxu0 %v5991
    %v6115 = vpop.f32.mrb[0].mxu0
    %v6116 = vadd.f32 %v6073, %v6115
    %v6117 = vpop.f32.mrb[0].mxu0
    %v6118 = vadd.f32 %v6075, %v6117
    %v6119 = vpop.f32.mrb[0].mxu0
    %v6120 = vadd.f32 %v6077, %v6119
    %v6121 = vpop.f32.mrb[0].mxu0
    %v6122 = vadd.f32 %v6079, %v6121
    %6123 = vdwg.mxu0
    %6124 = vmatprep.subr.bf16.mxu0 %v4632
    %6125 = vmatpush1.bf16.msra.mxu0 %v4631
    %6126 = vmatprep.subr.bf16.mxu0 %v4640
    %6127 = vmatpush1.bf16.msra.mxu0 %v4639
    %6128 = vmatprep.subr.bf16.mxu0 %v4648
    %6129 = vmatpush1.bf16.msra.mxu0 %v4647
    %6130 = vmatprep.subr.bf16.mxu0 %v4656
    %6131 = vmatpush1.bf16.msra.mxu0 %v4655
    %6132 = vmatprep.subr.bf16.mxu0 %v4664
    %6133 = vmatpush1.bf16.msra.mxu0 %v4663
    %6134 = vmatprep.subr.bf16.mxu0 %v4672
    %6135 = vmatpush1.bf16.msra.mxu0 %v4671
    %6136 = vmatprep.subr.bf16.mxu0 %v4680
    %6137 = vmatpush1.bf16.msra.mxu0 %v4679
    %6138 = vmatprep.subr.bf16.mxu0 %v4688
    %6139 = vmatpush1.bf16.msra.mxu0 %v4687
    %6140 = vmatprep.subr.bf16.mxu0 %v4696
    %6141 = vmatpush1.bf16.msra.mxu0 %v4695
    %6142 = vmatprep.subr.bf16.mxu0 %v4704
    %6143 = vmatpush1.bf16.msra.mxu0 %v4703
    %6144 = vmatprep.subr.bf16.mxu0 %v4712
    %6145 = vmatpush1.bf16.msra.mxu0 %v4711
    %6146 = vmatprep.subr.bf16.mxu0 %v4720
    %6147 = vmatpush1.bf16.msra.mxu0 %v4719
    %6148 = vmatprep.subr.bf16.mxu0 %v4728
    %6149 = vmatpush1.bf16.msra.mxu0 %v4727
    %6150 = vmatprep.subr.bf16.mxu0 %v4736
    %6151 = vmatpush1.bf16.msra.mxu0 %v4735
    %6152 = vmatprep.subr.bf16.mxu0 %v4744
    %6153 = vmatpush1.bf16.msra.mxu0 %v4743
    %6154 = vmatprep.subr.bf16.mxu0 %v4752
    %6155 = vmatpush1.bf16.msra.mxu0 %v4751
    %6156 = vmatprep.mubr.bf16.mxu0 %v5994
    %6157 = vmatmul.mubr.bf16.gmra.mrb[0].mxu0 %v5993
    %v6158 = vpop.f32.mrb[0].mxu0
    %v6159 = vadd.f32 %v6116, %v6158
    %v6160 = vpop.f32.mrb[0].mxu0
    %v6161 = vadd.f32 %v6118, %v6160
    %v6162 = vpop.f32.mrb[0].mxu0
    %v6163 = vadd.f32 %v6120, %v6162
    %v6164 = vpop.f32.mrb[0].mxu0
    %v6165 = vadd.f32 %v6122, %v6164
    %6166 = vdwg.mxu0
    %6167 = vmatprep.subr.bf16.mxu0 %v4250
    %6168 = vmatpush1.bf16.msra.mxu0 %v4249
    %6169 = vmatprep.subr.bf16.mxu0 %v4258
    %6170 = vmatpush1.bf16.msra.mxu0 %v4257
    %6171 = vmatprep.subr.bf16.mxu0 %v4266
    %6172 = vmatpush1.bf16.msra.mxu0 %v4265
    %6173 = vmatprep.subr.bf16.mxu0 %v4274
    %6174 = vmatpush1.bf16.msra.mxu0 %v4273
    %6175 = vmatprep.subr.bf16.mxu0 %v4282
    %6176 = vmatpush1.bf16.msra.mxu0 %v4281
    %6177 = vmatprep.subr.bf16.mxu0 %v4290
    %6178 = vmatpush1.bf16.msra.mxu0 %v4289
    %6179 = vmatprep.subr.bf16.mxu0 %v4298
    %6180 = vmatpush1.bf16.msra.mxu0 %v4297
    %6181 = vmatprep.subr.bf16.mxu0 %v4306
    %6182 = vmatpush1.bf16.msra.mxu0 %v4305
    %6183 = vmatprep.subr.bf16.mxu0 %v4314
    %6184 = vmatpush1.bf16.msra.mxu0 %v4313
    %6185 = vmatprep.subr.bf16.mxu0 %v4322
    %6186 = vmatpush1.bf16.msra.mxu0 %v4321
    %6187 = vmatprep.subr.bf16.mxu0 %v4330
    %6188 = vmatpush1.bf16.msra.mxu0 %v4329
    %6189 = vmatprep.subr.bf16.mxu0 %v4338
    %6190 = vmatpush1.bf16.msra.mxu0 %v4337
    %6191 = vmatprep.subr.bf16.mxu0 %v4346
    %6192 = vmatpush1.bf16.msra.mxu0 %v4345
    %6193 = vmatprep.subr.bf16.mxu0 %v4354
    %6194 = vmatpush1.bf16.msra.mxu0 %v4353
    %6195 = vmatprep.subr.bf16.mxu0 %v4362
    %6196 = vmatpush1.bf16.msra.mxu0 %v4361
    %6197 = vmatprep.subr.bf16.mxu0 %v4370
    %6198 = vmatpush1.bf16.msra.mxu0 %v4369
    %6199 = vmatprep.mubr.bf16.mxu0 %v5988
    %6200 = vmatmul.mubr.bf16.gmra.mrb[0].mxu0 %v5987
    %v6201 = vpop.f32.mrb[0].mxu0
    %v6202 = vadd.f32 0.0, %v6201
    %v6203 = vpop.f32.mrb[0].mxu0
    %v6204 = vadd.f32 0.0, %v6203
    %v6205 = vpop.f32.mrb[0].mxu0
    %v6206 = vadd.f32 0.0, %v6205
    %v6207 = vpop.f32.mrb[0].mxu0
    %v6208 = vadd.f32 0.0, %v6207
    %6209 = vdwg.mxu0
    %6210 = vmatprep.subr.bf16.mxu0 %v4378
    %6211 = vmatpush1.bf16.msra.mxu0 %v4377
    %6212 = vmatprep.subr.bf16.mxu0 %v4386
    %6213 = vmatpush1.bf16.msra.mxu0 %v4385
    %6214 = vmatprep.subr.bf16.mxu0 %v4394
    %6215 = vmatpush1.bf16.msra.mxu0 %v4393
    %6216 = vmatprep.subr.bf16.mxu0 %v4402
    %6217 = vmatpush1.bf16.msra.mxu0 %v4401
    %6218 = vmatprep.subr.bf16.mxu0 %v4410
    %6219 = vmatpush1.bf16.msra.mxu0 %v4409
    %6220 = vmatprep.subr.bf16.mxu0 %v4418
    %6221 = vmatpush1.bf16.msra.mxu0 %v4417
    %6222 = vmatprep.subr.bf16.mxu0 %v4426
    %6223 = vmatpush1.bf16.msra.mxu0 %v4425
    %6224 = vmatprep.subr.bf16.mxu0 %v4434
    %6225 = vmatpush1.bf16.msra.mxu0 %v4433
    %6226 = vmatprep.subr.bf16.mxu0 %v4442
    %6227 = vmatpush1.bf16.msra.mxu0 %v4441
    %6228 = vmatprep.subr.bf16.mxu0 %v4450
    %6229 = vmatpush1.bf16.msra.mxu0 %v4449
    %6230 = vmatprep.subr.bf16.mxu0 %v4458
    %6231 = vmatpush1.bf16.msra.mxu0 %v4457
    %6232 = vmatprep.subr.bf16.mxu0 %v4466
    %6233 = vmatpush1.bf16.msra.mxu0 %v4465
    %6234 = vmatprep.subr.bf16.mxu0 %v4474
    %6235 = vmatpush1.bf16.msra.mxu0 %v4473
    %6236 = vmatprep.subr.bf16.mxu0 %v4482
    %6237 = vmatpush1.bf16.msra.mxu0 %v4481
    %6238 = vmatprep.subr.bf16.mxu0 %v4490
    %6239 = vmatpush1.bf16.msra.mxu0 %v4489
    %6240 = vmatprep.subr.bf16.mxu0 %v4498
    %6241 = vmatpush1.bf16.msra.mxu0 %v4497
    %6242 = vmatprep.mubr.bf16.mxu0 %v5990
    %6243 = vmatmul.mubr.bf16.gmra.mrb[0].mxu0 %v5989
    %v6244 = vpop.f32.mrb[0].mxu0
    %v6245 = vadd.f32 %v6202, %v6244
    %v6246 = vpop.f32.mrb[0].mxu0
    %v6247 = vadd.f32 %v6204, %v6246
    %v6248 = vpop.f32.mrb[0].mxu0
    %v6249 = vadd.f32 %v6206, %v6248
    %v6250 = vpop.f32.mrb[0].mxu0
    %v6251 = vadd.f32 %v6208, %v6250
    %6252 = vdwg.mxu0
    %6253 = vmatprep.subr.bf16.mxu0 %v4506
    %6254 = vmatpush1.bf16.msra.mxu0 %v4505
    %6255 = vmatprep.subr.bf16.mxu0 %v4514
    %6256 = vmatpush1.bf16.msra.mxu0 %v4513
    %6257 = vmatprep.subr.bf16.mxu0 %v4522
    %6258 = vmatpush1.bf16.msra.mxu0 %v4521
    %6259 = vmatprep.subr.bf16.mxu0 %v4530
    %6260 = vmatpush1.bf16.msra.mxu0 %v4529
    %6261 = vmatprep.subr.bf16.mxu0 %v4538
    %6262 = vmatpush1.bf16.msra.mxu0 %v4537
    %6263 = vmatprep.subr.bf16.mxu0 %v4546
    %6264 = vmatpush1.bf16.msra.mxu0 %v4545
    %6265 = vmatprep.subr.bf16.mxu0 %v4554
    %6266 = vmatpush1.bf16.msra.mxu0 %v4553
    %6267 = vmatprep.subr.bf16.mxu0 %v4562
    %6268 = vmatpush1.bf16.msra.mxu0 %v4561
    %6269 = vmatprep.subr.bf16.mxu0 %v4570
    %6270 = vmatpush1.bf16.msra.mxu0 %v4569
    %6271 = vmatprep.subr.bf16.mxu0 %v4578
    %6272 = vmatpush1.bf16.msra.mxu0 %v4577
    %6273 = vmatprep.subr.bf16.mxu0 %v4586
    %6274 = vmatpush1.bf16.msra.mxu0 %v4585
    %6275 = vmatprep.subr.bf16.mxu0 %v4594
    %6276 = vmatpush1.bf16.msra.mxu0 %v4593
    %6277 = vmatprep.subr.bf16.mxu0 %v4602
    %6278 = vmatpush1.bf16.msra.mxu0 %v4601
    %6279 = vmatprep.subr.bf16.mxu0 %v4610
    %6280 = vmatpush1.bf16.msra.mxu0 %v4609
    %6281 = vmatprep.subr.bf16.mxu0 %v4618
    %6282 = vmatpush1.bf16.msra.mxu0 %v4617
    %6283 = vmatprep.subr.bf16.mxu0 %v4626
    %6284 = vmatpush1.bf16.msra.mxu0 %v4625
    %6285 = vmatprep.mubr.bf16.mxu0 %v5992
    %6286 = vmatmul.mubr.bf16.gmra.mrb[0].mxu0 %v5991
    %v6287 = vpop.f32.mrb[0].mxu0
    %v6288 = vadd.f32 %v6245, %v6287
    %v6289 = vpop.f32.mrb[0].mxu0
    %v6290 = vadd.f32 %v6247, %v6289
    %v6291 = vpop.f32.mrb[0].mxu0
    %v6292 = vadd.f32 %v6249, %v6291
    %v6293 = vpop.f32.mrb[0].mxu0
    %v6294 = vadd.f32 %v6251, %v6293
    %6295 = vdwg.mxu0
    %6296 = vmatprep.subr.bf16.mxu0 %v4634
    %6297 = vmatpush1.bf16.msra.mxu0 %v4633
    %6298 = vmatprep.subr.bf16.mxu0 %v4642
    %6299 = vmatpush1.bf16.msra.mxu0 %v4641
    %6300 = vmatprep.subr.bf16.mxu0 %v4650
    %6301 = vmatpush1.bf16.msra.mxu0 %v4649
    %6302 = vmatprep.subr.bf16.mxu0 %v4658
    %6303 = vmatpush1.bf16.msra.mxu0 %v4657
    %6304 = vmatprep.subr.bf16.mxu0 %v4666
    %6305 = vmatpush1.bf16.msra.mxu0 %v4665
    %6306 = vmatprep.subr.bf16.mxu0 %v4674
    %6307 = vmatpush1.bf16.msra.mxu0 %v4673
    %6308 = vmatprep.subr.bf16.mxu0 %v4682
    %6309 = vmatpush1.bf16.msra.mxu0 %v4681
    %6310 = vmatprep.subr.bf16.mxu0 %v4690
    %6311 = vmatpush1.bf16.msra.mxu0 %v4689
    %6312 = vmatprep.subr.bf16.mxu0 %v4698
    %6313 = vmatpush1.bf16.msra.mxu0 %v4697
    %6314 = vmatprep.subr.bf16.mxu0 %v4706
    %6315 = vmatpush1.bf16.msra.mxu0 %v4705
    %6316 = vmatprep.subr.bf16.mxu0 %v4714
    %6317 = vmatpush1.bf16.msra.mxu0 %v4713
    %6318 = vmatprep.subr.bf16.mxu0 %v4722
    %6319 = vmatpush1.bf16.msra.mxu0 %v4721
    %6320 = vmatprep.subr.bf16.mxu0 %v4730
    %6321 = vmatpush1.bf16.msra.mxu0 %v4729
    %6322 = vmatprep.subr.bf16.mxu0 %v4738
    %6323 = vmatpush1.bf16.msra.mxu0 %v4737
    %6324 = vmatprep.subr.bf16.mxu0 %v4746
    %6325 = vmatpush1.bf16.msra.mxu0 %v4745
    %6326 = vmatprep.subr.bf16.mxu0 %v4754
    %6327 = vmatpush1.bf16.msra.mxu0 %v4753
    %6328 = vmatprep.mubr.bf16.mxu0 %v5994
    %6329 = vmatmul.mubr.bf16.gmra.mrb[0].mxu0 %v5993
    %v6330 = vpop.f32.mrb[0].mxu0
    %v6331 = vadd.f32 %v6288, %v6330
    %v6332 = vpop.f32.mrb[0].mxu0
    %v6333 = vadd.f32 %v6290, %v6332
    %v6334 = vpop.f32.mrb[0].mxu0
    %v6335 = vadd.f32 %v6292, %v6334
    %v6336 = vpop.f32.mrb[0].mxu0
    %v6337 = vadd.f32 %v6294, %v6336
    %6338 = vdwg.mxu0
    %6339 = vmatprep.subr.bf16.mxu0 %v4252
    %6340 = vmatpush1.bf16.msra.mxu0 %v4251
    %6341 = vmatprep.subr.bf16.mxu0 %v4260
    %6342 = vmatpush1.bf16.msra.mxu0 %v4259
    %6343 = vmatprep.subr.bf16.mxu0 %v4268
    %6344 = vmatpush1.bf16.msra.mxu0 %v4267
    %6345 = vmatprep.subr.bf16.mxu0 %v4276
    %6346 = vmatpush1.bf16.msra.mxu0 %v4275
    %6347 = vmatprep.subr.bf16.mxu0 %v4284
    %6348 = vmatpush1.bf16.msra.mxu0 %v4283
    %6349 = vmatprep.subr.bf16.mxu0 %v4292
    %6350 = vmatpush1.bf16.msra.mxu0 %v4291
    %6351 = vmatprep.subr.bf16.mxu0 %v4300
    %6352 = vmatpush1.bf16.msra.mxu0 %v4299
    %6353 = vmatprep.subr.bf16.mxu0 %v4308
    %6354 = vmatpush1.bf16.msra.mxu0 %v4307
    %6355 = vmatprep.subr.bf16.mxu0 %v4316
    %6356 = vmatpush1.bf16.msra.mxu0 %v4315
    %6357 = vmatprep.subr.bf16.mxu0 %v4324
    %6358 = vmatpush1.bf16.msra.mxu0 %v4323
    %6359 = vmatprep.subr.bf16.mxu0 %v4332
    %6360 = vmatpush1.bf16.msra.mxu0 %v4331
    %6361 = vmatprep.subr.bf16.mxu0 %v4340
    %6362 = vmatpush1.bf16.msra.mxu0 %v4339
    %6363 = vmatprep.subr.bf16.mxu0 %v4348
    %6364 = vmatpush1.bf16.msra.mxu0 %v4347
    %6365 = vmatprep.subr.bf16.mxu0 %v4356
    %6366 = vmatpush1.bf16.msra.mxu0 %v4355
    %6367 = vmatprep.subr.bf16.mxu0 %v4364
    %6368 = vmatpush1.bf16.msra.mxu0 %v4363
    %6369 = vmatprep.subr.bf16.mxu0 %v4372
    %6370 = vmatpush1.bf16.msra.mxu0 %v4371
    %6371 = vmatprep.mubr.bf16.mxu0 %v5988
    %6372 = vmatmul.mubr.bf16.gmra.mrb[0].mxu0 %v5987
    %v6373 = vpop.f32.mrb[0].mxu0
    %v6374 = vadd.f32 0.0, %v6373
    %v6375 = vpop.f32.mrb[0].mxu0
    %v6376 = vadd.f32 0.0, %v6375
    %v6377 = vpop.f32.mrb[0].mxu0
    %v6378 = vadd.f32 0.0, %v6377
    %v6379 = vpop.f32.mrb[0].mxu0
    %v6380 = vadd.f32 0.0, %v6379
    %6381 = vdwg.mxu0
    %6382 = vmatprep.subr.bf16.mxu0 %v4380
    %6383 = vmatpush1.bf16.msra.mxu0 %v4379
    %6384 = vmatprep.subr.bf16.mxu0 %v4388
    %6385 = vmatpush1.bf16.msra.mxu0 %v4387
    %6386 = vmatprep.subr.bf16.mxu0 %v4396
    %6387 = vmatpush1.bf16.msra.mxu0 %v4395
    %6388 = vmatprep.subr.bf16.mxu0 %v4404
    %6389 = vmatpush1.bf16.msra.mxu0 %v4403
    %6390 = vmatprep.subr.bf16.mxu0 %v4412
    %6391 = vmatpush1.bf16.msra.mxu0 %v4411
    %6392 = vmatprep.subr.bf16.mxu0 %v4420
    %6393 = vmatpush1.bf16.msra.mxu0 %v4419
    %6394 = vmatprep.subr.bf16.mxu0 %v4428
    %6395 = vmatpush1.bf16.msra.mxu0 %v4427
    %6396 = vmatprep.subr.bf16.mxu0 %v4436
    %6397 = vmatpush1.bf16.msra.mxu0 %v4435
    %6398 = vmatprep.subr.bf16.mxu0 %v4444
    %6399 = vmatpush1.bf16.msra.mxu0 %v4443
    %6400 = vmatprep.subr.bf16.mxu0 %v4452
    %6401 = vmatpush1.bf16.msra.mxu0 %v4451
    %6402 = vmatprep.subr.bf16.mxu0 %v4460
    %6403 = vmatpush1.bf16.msra.mxu0 %v4459
    %6404 = vmatprep.subr.bf16.mxu0 %v4468
    %6405 = vmatpush1.bf16.msra.mxu0 %v4467
    %6406 = vmatprep.subr.bf16.mxu0 %v4476
    %6407 = vmatpush1.bf16.msra.mxu0 %v4475
    %6408 = vmatprep.subr.bf16.mxu0 %v4484
    %6409 = vmatpush1.bf16.msra.mxu0 %v4483
    %6410 = vmatprep.subr.bf16.mxu0 %v4492
    %6411 = vmatpush1.bf16.msra.mxu0 %v4491
    %6412 = vmatprep.subr.bf16.mxu0 %v4500
    %6413 = vmatpush1.bf16.msra.mxu0 %v4499
    %6414 = vmatprep.mubr.bf16.mxu0 %v5990
    %6415 = vmatmul.mubr.bf16.gmra.mrb[0].mxu0 %v5989
    %v6416 = vpop.f32.mrb[0].mxu0
    %v6417 = vadd.f32 %v6374, %v6416
    %v6418 = vpop.f32.mrb[0].mxu0
    %v6419 = vadd.f32 %v6376, %v6418
    %v6420 = vpop.f32.mrb[0].mxu0
    %v6421 = vadd.f32 %v6378, %v6420
    %v6422 = vpop.f32.mrb[0].mxu0
    %v6423 = vadd.f32 %v6380, %v6422
    %6424 = vdwg.mxu0
    %6425 = vmatprep.subr.bf16.mxu0 %v4508
    %6426 = vmatpush1.bf16.msra.mxu0 %v4507
    %6427 = vmatprep.subr.bf16.mxu0 %v4516
    %6428 = vmatpush1.bf16.msra.mxu0 %v4515
    %6429 = vmatprep.subr.bf16.mxu0 %v4524
    %6430 = vmatpush1.bf16.msra.mxu0 %v4523
    %6431 = vmatprep.subr.bf16.mxu0 %v4532
    %6432 = vmatpush1.bf16.msra.mxu0 %v4531
    %6433 = vmatprep.subr.bf16.mxu0 %v4540
    %6434 = vmatpush1.bf16.msra.mxu0 %v4539
    %6435 = vmatprep.subr.bf16.mxu0 %v4548
    %6436 = vmatpush1.bf16.msra.mxu0 %v4547
    %6437 = vmatprep.subr.bf16.mxu0 %v4556
    %6438 = vmatpush1.bf16.msra.mxu0 %v4555
    %6439 = vmatprep.subr.bf16.mxu0 %v4564
    %6440 = vmatpush1.bf16.msra.mxu0 %v4563
    %6441 = vmatprep.subr.bf16.mxu0 %v4572
    %6442 = vmatpush1.bf16.msra.mxu0 %v4571
    %6443 = vmatprep.subr.bf16.mxu0 %v4580
    %6444 = vmatpush1.bf16.msra.mxu0 %v4579
    %6445 = vmatprep.subr.bf16.mxu0 %v4588
    %6446 = vmatpush1.bf16.msra.mxu0 %v4587
    %6447 = vmatprep.subr.bf16.mxu0 %v4596
    %6448 = vmatpush1.bf16.msra.mxu0 %v4595
    %6449 = vmatprep.subr.bf16.mxu0 %v4604
    %6450 = vmatpush1.bf16.msra.mxu0 %v4603
    %6451 = vmatprep.subr.bf16.mxu0 %v4612
    %6452 = vmatpush1.bf16.msra.mxu0 %v4611
    %6453 = vmatprep.subr.bf16.mxu0 %v4620
    %6454 = vmatpush1.bf16.msra.mxu0 %v4619
    %6455 = vmatprep.subr.bf16.mxu0 %v4628
    %6456 = vmatpush1.bf16.msra.mxu0 %v4627
    %6457 = vmatprep.mubr.bf16.mxu0 %v5992
    %6458 = vmatmul.mubr.bf16.gmra.mrb[0].mxu0 %v5991
    %v6459 = vpop.f32.mrb[0].mxu0
    %v6460 = vadd.f32 %v6417, %v6459
    %v6461 = vpop.f32.mrb[0].mxu0
    %v6462 = vadd.f32 %v6419, %v6461
    %v6463 = vpop.f32.mrb[0].mxu0
    %v6464 = vadd.f32 %v6421, %v6463
    %v6465 = vpop.f32.mrb[0].mxu0
    %v6466 = vadd.f32 %v6423, %v6465
    %6467 = vdwg.mxu0
    %6468 = vmatprep.subr.bf16.mxu0 %v4636
    %6469 = vmatpush1.bf16.msra.mxu0 %v4635
    %6470 = vmatprep.subr.bf16.mxu0 %v4644
    %6471 = vmatpush1.bf16.msra.mxu0 %v4643
    %6472 = vmatprep.subr.bf16.mxu0 %v4652
    %6473 = vmatpush1.bf16.msra.mxu0 %v4651
    %6474 = vmatprep.subr.bf16.mxu0 %v4660
    %6475 = vmatpush1.bf16.msra.mxu0 %v4659
    %6476 = vmatprep.subr.bf16.mxu0 %v4668
    %6477 = vmatpush1.bf16.msra.mxu0 %v4667
    %6478 = vmatprep.subr.bf16.mxu0 %v4676
    %6479 = vmatpush1.bf16.msra.mxu0 %v4675
    %6480 = vmatprep.subr.bf16.mxu0 %v4684
    %6481 = vmatpush1.bf16.msra.mxu0 %v4683
    %6482 = vmatprep.subr.bf16.mxu0 %v4692
    %6483 = vmatpush1.bf16.msra.mxu0 %v4691
    %6484 = vmatprep.subr.bf16.mxu0 %v4700
    %6485 = vmatpush1.bf16.msra.mxu0 %v4699
    %6486 = vmatprep.subr.bf16.mxu0 %v4708
    %6487 = vmatpush1.bf16.msra.mxu0 %v4707
    %6488 = vmatprep.subr.bf16.mxu0 %v4716
    %6489 = vmatpush1.bf16.msra.mxu0 %v4715
    %6490 = vmatprep.subr.bf16.mxu0 %v4724
    %6491 = vmatpush1.bf16.msra.mxu0 %v4723
    %6492 = vmatprep.subr.bf16.mxu0 %v4732
    %6493 = vmatpush1.bf16.msra.mxu0 %v4731
    %6494 = vmatprep.subr.bf16.mxu0 %v4740
    %6495 = vmatpush1.bf16.msra.mxu0 %v4739
    %6496 = vmatprep.subr.bf16.mxu0 %v4748
    %6497 = vmatpush1.bf16.msra.mxu0 %v4747
    %6498 = vmatprep.subr.bf16.mxu0 %v4756
    %6499 = vmatpush1.bf16.msra.mxu0 %v4755
    %6500 = vmatprep.mubr.bf16.mxu0 %v5994
    %6501 = vmatmul.mubr.bf16.gmra.mrb[0].mxu0 %v5993
    %v6502 = vpop.f32.mrb[0].mxu0
    %v6503 = vadd.f32 %v6460, %v6502
    %v6504 = vpop.f32.mrb[0].mxu0
    %v6505 = vadd.f32 %v6462, %v6504
    %v6506 = vpop.f32.mrb[0].mxu0
    %v6507 = vadd.f32 %v6464, %v6506
    %v6508 = vpop.f32.mrb[0].mxu0
    %v6509 = vadd.f32 %v6466, %v6508
    %6510 = vdwg.mxu0
    %6511 = vmatprep.subr.bf16.mxu0 %v4254
    %6512 = vmatpush1.bf16.msra.mxu0 %v4253
    %6513 = vmatprep.subr.bf16.mxu0 %v4262
    %6514 = vmatpush1.bf16.msra.mxu0 %v4261
    %6515 = vmatprep.subr.bf16.mxu0 %v4270
    %6516 = vmatpush1.bf16.msra.mxu0 %v4269
    %6517 = vmatprep.subr.bf16.mxu0 %v4278
    %6518 = vmatpush1.bf16.msra.mxu0 %v4277
    %6519 = vmatprep.subr.bf16.mxu0 %v4286
    %6520 = vmatpush1.bf16.msra.mxu0 %v4285
    %6521 = vmatprep.subr.bf16.mxu0 %v4294
    %6522 = vmatpush1.bf16.msra.mxu0 %v4293
    %6523 = vmatprep.subr.bf16.mxu0 %v4302
    %6524 = vmatpush1.bf16.msra.mxu0 %v4301
    %6525 = vmatprep.subr.bf16.mxu0 %v4310
    %6526 = vmatpush1.bf16.msra.mxu0 %v4309
    %6527 = vmatprep.subr.bf16.mxu0 %v4318
    %6528 = vmatpush1.bf16.msra.mxu0 %v4317
    %6529 = vmatprep.subr.bf16.mxu0 %v4326
    %6530 = vmatpush1.bf16.msra.mxu0 %v4325
    %6531 = vmatprep.subr.bf16.mxu0 %v4334
    %6532 = vmatpush1.bf16.msra.mxu0 %v4333
    %6533 = vmatprep.subr.bf16.mxu0 %v4342
    %6534 = vmatpush1.bf16.msra.mxu0 %v4341
    %6535 = vmatprep.subr.bf16.mxu0 %v4350
    %6536 = vmatpush1.bf16.msra.mxu0 %v4349
    %6537 = vmatprep.subr.bf16.mxu0 %v4358
    %6538 = vmatpush1.bf16.msra.mxu0 %v4357
    %6539 = vmatprep.subr.bf16.mxu0 %v4366
    %6540 = vmatpush1.bf16.msra.mxu0 %v4365
    %6541 = vmatprep.subr.bf16.mxu0 %v4374
    %6542 = vmatpush1.bf16.msra.mxu0 %v4373
    %6543 = vmatprep.mubr.bf16.mxu0 %v5988
    %6544 = vmatmul.mubr.bf16.gmra.mrb[0].mxu0 %v5987
    %v6545 = vpop.f32.mrb[0].mxu0
    %v6546 = vadd.f32 0.0, %v6545
    %v6547 = vpop.f32.mrb[0].mxu0
    %v6548 = vadd.f32 0.0, %v6547
    %v6549 = vpop.f32.mrb[0].mxu0
    %v6550 = vadd.f32 0.0, %v6549
    %v6551 = vpop.f32.mrb[0].mxu0
    %v6552 = vadd.f32 0.0, %v6551
    %6553 = vdwg.mxu0
    %6554 = vmatprep.subr.bf16.mxu0 %v4382
    %6555 = vmatpush1.bf16.msra.mxu0 %v4381
    %6556 = vmatprep.subr.bf16.mxu0 %v4390
    %6557 = vmatpush1.bf16.msra.mxu0 %v4389
    %6558 = vmatprep.subr.bf16.mxu0 %v4398
    %6559 = vmatpush1.bf16.msra.mxu0 %v4397
    %6560 = vmatprep.subr.bf16.mxu0 %v4406
    %6561 = vmatpush1.bf16.msra.mxu0 %v4405
    %6562 = vmatprep.subr.bf16.mxu0 %v4414
    %6563 = vmatpush1.bf16.msra.mxu0 %v4413
    %6564 = vmatprep.subr.bf16.mxu0 %v4422
    %6565 = vmatpush1.bf16.msra.mxu0 %v4421
    %6566 = vmatprep.subr.bf16.mxu0 %v4430
    %6567 = vmatpush1.bf16.msra.mxu0 %v4429
    %6568 = vmatprep.subr.bf16.mxu0 %v4438
    %6569 = vmatpush1.bf16.msra.mxu0 %v4437
    %6570 = vmatprep.subr.bf16.mxu0 %v4446
    %6571 = vmatpush1.bf16.msra.mxu0 %v4445
    %6572 = vmatprep.subr.bf16.mxu0 %v4454
    %6573 = vmatpush1.bf16.msra.mxu0 %v4453
    %6574 = vmatprep.subr.bf16.mxu0 %v4462
    %6575 = vmatpush1.bf16.msra.mxu0 %v4461
    %6576 = vmatprep.subr.bf16.mxu0 %v4470
    %6577 = vmatpush1.bf16.msra.mxu0 %v4469
    %6578 = vmatprep.subr.bf16.mxu0 %v4478
    %6579 = vmatpush1.bf16.msra.mxu0 %v4477
    %6580 = vmatprep.subr.bf16.mxu0 %v4486
    %6581 = vmatpush1.bf16.msra.mxu0 %v4485
    %6582 = vmatprep.subr.bf16.mxu0 %v4494
    %6583 = vmatpush1.bf16.msra.mxu0 %v4493
    %6584 = vmatprep.subr.bf16.mxu0 %v4502
    %6585 = vmatpush1.bf16.msra.mxu0 %v4501
    %6586 = vmatprep.mubr.bf16.mxu0 %v5990
    %6587 = vmatmul.mubr.bf16.gmra.mrb[0].mxu0 %v5989
    %v6588 = vpop.f32.mrb[0].mxu0
    %v6589 = vadd.f32 %v6546, %v6588
    %v6590 = vpop.f32.mrb[0].mxu0
    %v6591 = vadd.f32 %v6548, %v6590
    %v6592 = vpop.f32.mrb[0].mxu0
    %v6593 = vadd.f32 %v6550, %v6592
    %v6594 = vpop.f32.mrb[0].mxu0
    %v6595 = vadd.f32 %v6552, %v6594
    %6596 = vdwg.mxu0
    %6597 = vmatprep.subr.bf16.mxu0 %v4510
    %6598 = vmatpush1.bf16.msra.mxu0 %v4509
    %6599 = vmatprep.subr.bf16.mxu0 %v4518
    %6600 = vmatpush1.bf16.msra.mxu0 %v4517
    %6601 = vmatprep.subr.bf16.mxu0 %v4526
    %6602 = vmatpush1.bf16.msra.mxu0 %v4525
    %6603 = vmatprep.subr.bf16.mxu0 %v4534
    %6604 = vmatpush1.bf16.msra.mxu0 %v4533
    %6605 = vmatprep.subr.bf16.mxu0 %v4542
    %6606 = vmatpush1.bf16.msra.mxu0 %v4541
    %6607 = vmatprep.subr.bf16.mxu0 %v4550
    %6608 = vmatpush1.bf16.msra.mxu0 %v4549
    %6609 = vmatprep.subr.bf16.mxu0 %v4558
    %6610 = vmatpush1.bf16.msra.mxu0 %v4557
    %6611 = vmatprep.subr.bf16.mxu0 %v4566
    %6612 = vmatpush1.bf16.msra.mxu0 %v4565
    %6613 = vmatprep.subr.bf16.mxu0 %v4574
    %6614 = vmatpush1.bf16.msra.mxu0 %v4573
    %6615 = vmatprep.subr.bf16.mxu0 %v4582
    %6616 = vmatpush1.bf16.msra.mxu0 %v4581
    %6617 = vmatprep.subr.bf16.mxu0 %v4590
    %6618 = vmatpush1.bf16.msra.mxu0 %v4589
    %6619 = vmatprep.subr.bf16.mxu0 %v4598
    %6620 = vmatpush1.bf16.msra.mxu0 %v4597
    %6621 = vmatprep.subr.bf16.mxu0 %v4606
    %6622 = vmatpush1.bf16.msra.mxu0 %v4605
    %6623 = vmatprep.subr.bf16.mxu0 %v4614
    %6624 = vmatpush1.bf16.msra.mxu0 %v4613
    %6625 = vmatprep.subr.bf16.mxu0 %v4622
    %6626 = vmatpush1.bf16.msra.mxu0 %v4621
    %6627 = vmatprep.subr.bf16.mxu0 %v4630
    %6628 = vmatpush1.bf16.msra.mxu0 %v4629
    %6629 = vmatprep.mubr.bf16.mxu0 %v5992
    %6630 = vmatmul.mubr.bf16.gmra.mrb[0].mxu0 %v5991
    %v6631 = vpop.f32.mrb[0].mxu0
    %v6632 = vadd.f32 %v6589, %v6631
    %v6633 = vpop.f32.mrb[0].mxu0
    %v6634 = vadd.f32 %v6591, %v6633
    %v6635 = vpop.f32.mrb[0].mxu0
    %v6636 = vadd.f32 %v6593, %v6635
    %v6637 = vpop.f32.mrb[0].mxu0
    %v6638 = vadd.f32 %v6595, %v6637
    %6639 = vdwg.mxu0
    %6640 = vmatprep.subr.bf16.mxu0 %v4638
    %6641 = vmatpush1.bf16.msra.mxu0 %v4637
    %6642 = vmatprep.subr.bf16.mxu0 %v4646
    %6643 = vmatpush1.bf16.msra.mxu0 %v4645
    %6644 = vmatprep.subr.bf16.mxu0 %v4654
    %6645 = vmatpush1.bf16.msra.mxu0 %v4653
    %6646 = vmatprep.subr.bf16.mxu0 %v4662
    %6647 = vmatpush1.bf16.msra.mxu0 %v4661
    %6648 = vmatprep.subr.bf16.mxu0 %v4670
    %6649 = vmatpush1.bf16.msra.mxu0 %v4669
    %6650 = vmatprep.subr.bf16.mxu0 %v4678
    %6651 = vmatpush1.bf16.msra.mxu0 %v4677
    %6652 = vmatprep.subr.bf16.mxu0 %v4686
    %6653 = vmatpush1.bf16.msra.mxu0 %v4685
    %6654 = vmatprep.subr.bf16.mxu0 %v4694
    %6655 = vmatpush1.bf16.msra.mxu0 %v4693
    %6656 = vmatprep.subr.bf16.mxu0 %v4702
    %6657 = vmatpush1.bf16.msra.mxu0 %v4701
    %6658 = vmatprep.subr.bf16.mxu0 %v4710
    %6659 = vmatpush1.bf16.msra.mxu0 %v4709
    %6660 = vmatprep.subr.bf16.mxu0 %v4718
    %6661 = vmatpush1.bf16.msra.mxu0 %v4717
    %6662 = vmatprep.subr.bf16.mxu0 %v4726
    %6663 = vmatpush1.bf16.msra.mxu0 %v4725
    %6664 = vmatprep.subr.bf16.mxu0 %v4734
    %6665 = vmatpush1.bf16.msra.mxu0 %v4733
    %6666 = vmatprep.subr.bf16.mxu0 %v4742
    %6667 = vmatpush1.bf16.msra.mxu0 %v4741
    %6668 = vmatprep.subr.bf16.mxu0 %v4750
    %6669 = vmatpush1.bf16.msra.mxu0 %v4749
    %6670 = vmatprep.subr.bf16.mxu0 %v4758
    %6671 = vmatpush1.bf16.msra.mxu0 %v4757
    %6672 = vmatprep.mubr.bf16.mxu0 %v5994
    %6673 = vmatmul.mubr.bf16.gmra.mrb[0].mxu0 %v5993
    %v6674 = vpop.f32.mrb[0].mxu0
    %v6675 = vadd.f32 %v6632, %v6674
    %v6676 = vpop.f32.mrb[0].mxu0
    %v6677 = vadd.f32 %v6634, %v6676
    %v6678 = vpop.f32.mrb[0].mxu0
    %v6679 = vadd.f32 %v6636, %v6678
    %v6680 = vpop.f32.mrb[0].mxu0
    %v6681 = vadd.f32 %v6638, %v6680
    %6682 = vdwg.mxu0
    %v6683 = vmax.f32 %v6159, %v6161
    %v6684 = vmax.f32 %v6163, %v6165
    %v6685 = vmax.f32 %v6331, %v6333
    %v6686 = vmax.f32 %v6335, %v6337
    %v6687 = vmax.f32 %v6683, %v6685
    %v6688 = vmax.f32 %v6684, %v6686
    %v6689 = vadd.f32 %v6687, %v5968
    %v6690 = vadd.f32 %v6688, %v5968
    %v6691 = vmax.f32 %v6689, 0.0
    %v6692 = vmax.f32 %v6690, 0.0
    %v6693 = vpack.c.bf16 %v6692, %v6691
    %6694 = vst [vmem:[#allocation3 + $0x10] sm:$0xff] %v6693
    %v6695 = vmax.f32 %v6503, %v6505
    %v6696 = vmax.f32 %v6507, %v6509
    %v6697 = vmax.f32 %v6675, %v6677
    %v6698 = vmax.f32 %v6679, %v6681
    %v6699 = vmax.f32 %v6695, %v6697
    %v6700 = vmax.f32 %v6696, %v6698
    %v6701 = vadd.f32 %v6699, %v5968
    %v6702 = vadd.f32 %v6700, %v5968
    %v6703 = vmax.f32 %v6701, 0.0
    %v6704 = vmax.f32 %v6702, 0.0
    %v6705 = vpack.c.bf16 %v6704, %v6703
    %6706 = vst [vmem:[#allocation3 + $0x18] sm:$0xff] %v6705
    %v6707 = vld [vmem:[#allocation3] sm:$0xff]
    %v6708 = vld [vmem:[#allocation3 + $0x8] sm:$0xff]
    %v6709 = vld [vmem:[#allocation3 + $0x10] sm:$0xff]
    %v6710 = vld [vmem:[#allocation3 + $0x18] sm:$0xff]
    %v6711 = vlaneseq
    %v6712 = vshrl.u32 %v6711, 7
    %v6713 = vsub.s32 2, %v6712
    %v6714 = vrot.slane %v810, %v6713
    %v6779 = vunpack.c.l.b16 %v730
    %v6780 = vunpack.c.l.b16 %v731
    %v6781 = vunpack.c.l.b16 %v732
    %v6782 = vunpack.c.l.b16 %v733
    %v6783 = vunpack.c.l.b16 %v734
    %v6784 = vunpack.c.l.b16 %v735
    %v6785 = vunpack.c.l.b16 %v736
    %v6786 = vunpack.c.l.b16 %v737
    %v6787 = vunpack.c.l.b16 %v738
    %v6788 = vunpack.c.l.b16 %v739
    %v6789 = vunpack.c.l.b16 %v740
    %v6790 = vunpack.c.l.b16 %v741
    %v6791 = vunpack.c.l.b16 %v742
    %v6792 = vunpack.c.l.b16 %v743
    %v6793 = vunpack.c.l.b16 %v744
    %v6794 = vunpack.c.l.b16 %v745
    %v6795 = vunpack.c.l.b16 %v746
    %v6796 = vunpack.c.l.b16 %v747
    %v6797 = vunpack.c.l.b16 %v748
    %v6798 = vunpack.c.l.b16 %v749
    %v6799 = vunpack.c.l.b16 %v750
    %v6800 = vunpack.c.l.b16 %v751
    %v6801 = vunpack.c.l.b16 %v752
    %v6802 = vunpack.c.l.b16 %v753
    %v6803 = vunpack.c.l.b16 %v754
    %v6804 = vunpack.c.l.b16 %v755
    %v6805 = vunpack.c.l.b16 %v756
    %v6806 = vunpack.c.l.b16 %v757
    %v6807 = vunpack.c.l.b16 %v758
    %v6808 = vunpack.c.l.b16 %v759
    %v6809 = vunpack.c.l.b16 %v760
    %v6810 = vunpack.c.l.b16 %v761
    %v6811 = vunpack.c.l.b16 %v762
    %v6812 = vunpack.c.l.b16 %v763
    %v6813 = vunpack.c.l.b16 %v764
    %v6814 = vunpack.c.l.b16 %v765
    %v6815 = vunpack.c.l.b16 %v766
    %v6816 = vunpack.c.l.b16 %v767
    %v6817 = vunpack.c.l.b16 %v768
    %v6818 = vunpack.c.l.b16 %v769
    %v6819 = vunpack.c.l.b16 %v770
    %v6820 = vunpack.c.l.b16 %v771
    %v6821 = vunpack.c.l.b16 %v772
    %v6822 = vunpack.c.l.b16 %v773
    %v6823 = vunpack.c.l.b16 %v774
    %v6824 = vunpack.c.l.b16 %v775
    %v6825 = vunpack.c.l.b16 %v776
    %v6826 = vunpack.c.l.b16 %v777
    %v6827 = vunpack.c.l.b16 %v778
    %v6828 = vunpack.c.l.b16 %v779
    %v6829 = vunpack.c.l.b16 %v780
    %v6830 = vunpack.c.l.b16 %v781
    %v6831 = vunpack.c.l.b16 %v782
    %v6832 = vunpack.c.l.b16 %v783
    %v6833 = vunpack.c.l.b16 %v784
    %v6834 = vunpack.c.l.b16 %v785
    %v6835 = vunpack.c.l.b16 %v786
    %v6836 = vunpack.c.l.b16 %v787
    %v6837 = vunpack.c.l.b16 %v788
    %v6838 = vunpack.c.l.b16 %v789
    %v6839 = vunpack.c.l.b16 %v790
    %v6840 = vunpack.c.l.b16 %v791
    %v6841 = vunpack.c.l.b16 %v792
    %v6842 = vunpack.c.l.b16 %v793
    %v6843 = vpack.c.b16 %v6780, %v6779
    %v6844 = vpack.c.b16 %v6782, %v6781
    %v6845 = vpack.c.b16 %v6784, %v6783
    %v6846 = vpack.c.b16 %v6786, %v6785
    %v6847 = vpack.c.b16 %v6788, %v6787
    %v6848 = vpack.c.b16 %v6790, %v6789
    %v6849 = vpack.c.b16 %v6792, %v6791
    %v6850 = vpack.c.b16 %v6794, %v6793
    %v6851 = vpack.c.b16 %v6796, %v6795
    %v6852 = vpack.c.b16 %v6798, %v6797
    %v6853 = vpack.c.b16 %v6800, %v6799
    %v6854 = vpack.c.b16 %v6802, %v6801
    %v6855 = vpack.c.b16 %v6804, %v6803
    %v6856 = vpack.c.b16 %v6806, %v6805
    %v6857 = vpack.c.b16 %v6808, %v6807
    %v6858 = vpack.c.b16 %v6810, %v6809
    %v6859 = vpack.c.b16 %v6812, %v6811
    %v6860 = vpack.c.b16 %v6814, %v6813
    %v6861 = vpack.c.b16 %v6816, %v6815
    %v6862 = vpack.c.b16 %v6818, %v6817
    %v6863 = vpack.c.b16 %v6820, %v6819
    %v6864 = vpack.c.b16 %v6822, %v6821
    %v6865 = vpack.c.b16 %v6824, %v6823
    %v6866 = vpack.c.b16 %v6826, %v6825
    %v6867 = vpack.c.b16 %v6828, %v6827
    %v6868 = vpack.c.b16 %v6830, %v6829
    %v6869 = vpack.c.b16 %v6832, %v6831
    %v6870 = vpack.c.b16 %v6834, %v6833
    %v6871 = vpack.c.b16 %v6836, %v6835
    %v6872 = vpack.c.b16 %v6838, %v6837
    %v6873 = vpack.c.b16 %v6840, %v6839
    %v6874 = vpack.c.b16 %v6842, %v6841
    %6907 = vmatprep.subr.bf16.mxu0 0
    %6908 = vmatpush1.bf16.msra.mxu0 %v6843
    %6909 = vmatprep.subr.bf16.mxu0 0
    %6910 = vmatpush1.bf16.msra.mxu0 %v6844
    %6911 = vmatprep.subr.bf16.mxu0 0
    %6912 = vmatpush1.bf16.msra.mxu0 %v6845
    %6913 = vmatprep.subr.bf16.mxu0 0
    %6914 = vmatpush1.bf16.msra.mxu0 %v6846
    %6915 = vmatprep.subr.bf16.mxu0 0
    %6916 = vmatpush1.bf16.msra.mxu0 %v6847
    %6917 = vmatprep.subr.bf16.mxu0 0
    %6918 = vmatpush1.bf16.msra.mxu0 %v6848
    %6919 = vmatprep.subr.bf16.mxu0 0
    %6920 = vmatpush1.bf16.msra.mxu0 %v6849
    %6921 = vmatprep.subr.bf16.mxu0 0
    %6922 = vmatpush1.bf16.msra.mxu0 %v6850
    %6923 = vmatprep.subr.bf16.mxu0 0
    %6924 = vmatpush1.bf16.msra.mxu0 %v6851
    %6925 = vmatprep.subr.bf16.mxu0 0
    %6926 = vmatpush1.bf16.msra.mxu0 %v6852
    %6927 = vmatprep.subr.bf16.mxu0 0
    %6928 = vmatpush1.bf16.msra.mxu0 %v6853
    %6929 = vmatprep.subr.bf16.mxu0 0
    %6930 = vmatpush1.bf16.msra.mxu0 %v6854
    %6931 = vmatprep.subr.bf16.mxu0 0
    %6932 = vmatpush1.bf16.msra.mxu0 %v6855
    %6933 = vmatprep.subr.bf16.mxu0 0
    %6934 = vmatpush1.bf16.msra.mxu0 %v6856
    %6935 = vmatprep.subr.bf16.mxu0 0
    %6936 = vmatpush1.bf16.msra.mxu0 %v6857
    %6937 = vmatprep.subr.bf16.mxu0 0
    %6938 = vmatpush1.bf16.msra.mxu0 %v6858
    %6939 = vmatprep.mubr.bf16.mxu0 %v6708
    %6940 = vmatmul.mubr.bf16.gmra.mrb[0].mxu0 %v6707
    %v6941 = vpop.f32.mrb[0].mxu0
    %v6942 = vadd.f32 %v6714, %v6941
    %v6943 = vpop.f32.mrb[0].mxu0
    %v6944 = vpop.f32.mrb[0].mxu0
    %v6945 = vadd.f32 %v6714, %v6944
    %v6946 = vpop.f32.mrb[0].mxu0
    %6947 = vdwg.mxu0
    %6948 = vmatprep.subr.bf16.mxu0 0
    %6949 = vmatpush1.bf16.msra.mxu0 %v6859
    %6950 = vmatprep.subr.bf16.mxu0 0
    %6951 = vmatpush1.bf16.msra.mxu0 %v6860
    %6952 = vmatprep.subr.bf16.mxu0 0
    %6953 = vmatpush1.bf16.msra.mxu0 %v6861
    %6954 = vmatprep.subr.bf16.mxu0 0
    %6955 = vmatpush1.bf16.msra.mxu0 %v6862
    %6956 = vmatprep.subr.bf16.mxu0 0
    %6957 = vmatpush1.bf16.msra.mxu0 %v6863
    %6958 = vmatprep.subr.bf16.mxu0 0
    %6959 = vmatpush1.bf16.msra.mxu0 %v6864
    %6960 = vmatprep.subr.bf16.mxu0 0
    %6961 = vmatpush1.bf16.msra.mxu0 %v6865
    %6962 = vmatprep.subr.bf16.mxu0 0
    %6963 = vmatpush1.bf16.msra.mxu0 %v6866
    %6964 = vmatprep.subr.bf16.mxu0 0
    %6965 = vmatpush1.bf16.msra.mxu0 %v6867
    %6966 = vmatprep.subr.bf16.mxu0 0
    %6967 = vmatpush1.bf16.msra.mxu0 %v6868
    %6968 = vmatprep.subr.bf16.mxu0 0
    %6969 = vmatpush1.bf16.msra.mxu0 %v6869
    %6970 = vmatprep.subr.bf16.mxu0 0
    %6971 = vmatpush1.bf16.msra.mxu0 %v6870
    %6972 = vmatprep.subr.bf16.mxu0 0
    %6973 = vmatpush1.bf16.msra.mxu0 %v6871
    %6974 = vmatprep.subr.bf16.mxu0 0
    %6975 = vmatpush1.bf16.msra.mxu0 %v6872
    %6976 = vmatprep.subr.bf16.mxu0 0
    %6977 = vmatpush1.bf16.msra.mxu0 %v6873
    %6978 = vmatprep.subr.bf16.mxu0 0
    %6979 = vmatpush1.bf16.msra.mxu0 %v6874
    %6980 = vmatprep.mubr.bf16.mxu0 %v6710
    %6981 = vmatmul.mubr.bf16.gmra.mrb[0].mxu0 %v6709
    %v6982 = vpop.f32.mrb[0].mxu0
    %v6983 = vadd.f32 %v6942, %v6982
    %v6984 = vpop.f32.mrb[0].mxu0
    %v6985 = vpop.f32.mrb[0].mxu0
    %v6986 = vadd.f32 %v6945, %v6985
    %v6987 = vpop.f32.mrb[0].mxu0
    %6988 = vdwg.mxu0
    %v6989 = vmax.f32 %v6983, 0.0
    %v6990 = vmax.f32 %v6986, 0.0
    %v6991 = vpack.c.bf16 %v6990, %v6989
    %v6992 = vlaneseq
    %v6993 = vshrl.u32 %v6992, 7
    %v6994 = vsub.s32 3, %v6993
    %v6995 = vrot.slane %v810, %v6994
    %v7012 = vunpack.c.l.b16 %v794
    %v7013 = vunpack.c.l.b16 %v795
    %v7014 = vunpack.c.l.b16 %v796
    %v7015 = vunpack.c.l.b16 %v797
    %v7016 = vunpack.c.l.b16 %v798
    %v7017 = vunpack.c.l.b16 %v799
    %v7018 = vunpack.c.l.b16 %v800
    %v7019 = vunpack.c.l.b16 %v801
    %v7020 = vunpack.c.l.b16 %v802
    %v7021 = vunpack.c.l.b16 %v803
    %v7022 = vunpack.c.l.b16 %v804
    %v7023 = vunpack.c.l.b16 %v805
    %v7024 = vunpack.c.l.b16 %v806
    %v7025 = vunpack.c.l.b16 %v807
    %v7026 = vunpack.c.l.b16 %v808
    %v7027 = vunpack.c.l.b16 %v809
    %v7028 = vpack.c.b16 %v7013, %v7012
    %v7029 = vpack.c.b16 %v7015, %v7014
    %v7030 = vpack.c.b16 %v7017, %v7016
    %v7031 = vpack.c.b16 %v7019, %v7018
    %v7032 = vpack.c.b16 %v7021, %v7020
    %v7033 = vpack.c.b16 %v7023, %v7022
    %v7034 = vpack.c.b16 %v7025, %v7024
    %v7035 = vpack.c.b16 %v7027, %v7026
    %7044 = vmatprep.subr.bf16.mxu0 0
    %7045 = vmatpush1.bf16.msra.mxu0 %v7028
    %7046 = vmatprep.subr.bf16.mxu0 0
    %7047 = vmatpush1.bf16.msra.mxu0 %v7029
    %7048 = vmatprep.subr.bf16.mxu0 0
    %7049 = vmatpush1.bf16.msra.mxu0 %v7030
    %7050 = vmatprep.subr.bf16.mxu0 0
    %7051 = vmatpush1.bf16.msra.mxu0 %v7031
    %7052 = vmatprep.subr.bf16.mxu0 0
    %7053 = vmatpush1.bf16.msra.mxu0 %v7032
    %7054 = vmatprep.subr.bf16.mxu0 0
    %7055 = vmatpush1.bf16.msra.mxu0 %v7033
    %7056 = vmatprep.subr.bf16.mxu0 0
    %7057 = vmatpush1.bf16.msra.mxu0 %v7034
    %7058 = vmatprep.subr.bf16.mxu0 0
    %7059 = vmatpush1.bf16.msra.mxu0 %v7035
    %7060 = vmatprep.subr.bf16.mxu0 0
    %7061 = vmatpush1.bf16.msra.mxu0 0
    %7062 = vmatprep.subr.bf16.mxu0 0
    %7063 = vmatpush1.bf16.msra.mxu0 0
    %7064 = vmatprep.subr.bf16.mxu0 0
    %7065 = vmatpush1.bf16.msra.mxu0 0
    %7066 = vmatprep.subr.bf16.mxu0 0
    %7067 = vmatpush1.bf16.msra.mxu0 0
    %7068 = vmatprep.subr.bf16.mxu0 0
    %7069 = vmatpush1.bf16.msra.mxu0 0
    %7070 = vmatprep.subr.bf16.mxu0 0
    %7071 = vmatpush1.bf16.msra.mxu0 0
    %7072 = vmatprep.subr.bf16.mxu0 0
    %7073 = vmatpush1.bf16.msra.mxu0 0
    %7074 = vmatprep.subr.bf16.mxu0 0
    %7075 = vmatpush1.bf16.msra.mxu0 0
    %7076 = vmatprep.mubr.bf16.mxu0 0
    %7077 = vmatmul.mubr.bf16.gmra.mrb[0].mxu0 %v6991
    %v7078 = vpop.f32.mrb[0].mxu0
    %v7079 = vadd.f32 %v6995, %v7078
    %v7080 = vpop.f32.mrb[0].mxu0
    %v7081 = vpop.f32.mrb[0].mxu0
    %v7082 = vadd.f32 %v6995, %v7081
    %v7083 = vpop.f32.mrb[0].mxu0
    %7084 = vdwg.mxu0
    %7085 = vst [vmem:[%s6] sm:$0xff] %v7079
    %7086 = vst [vmem:[%s6 + $0x8] sm:$0xff] %v7082
    // Predicated region
    $region46: #{net_forward.1} parent=1 // pred_check
      _
    $region47: #{net_forward.1} parent=1 // pred_check_branch
      %7088 = sbr.rel (0) target = $region49
    $region48: #{net_forward.1} parent=1 // pred_region
      _
    $region49: #{net_forward.1} parent=1 // pred_fallthru
      _
    // Predicated region
    $region50: #{net_forward.1} parent=1 // pred_check
      _
    $region51: #{net_forward.1} parent=1 // pred_check_branch
      %7090 = sbr.rel (0) target = $region53
    $region52: #{net_forward.1} parent=1 // pred_region
      _
    $region53: #{net_forward.1} parent=1 // pred_fallthru
      _
    %7091 = vsyncpa [#allocation5], 1
    %7092 = vsyncpa [#allocation7], 1
    %7093 = vsyncpa [#allocation10], 1

</llo_original>
